<compile_context>
chip_gen: v7x
topology: tpu7x:2x2x1
jax: 0.10.0
libtpu: 0.0.40
codegen_flags: <defaults>
</compile_context>

<pallas_src>
import jax
import jax.numpy as jnp
from jax.experimental import pallas as pl
from jax.experimental.pallas import tpu as pltpu

EPS = 1e-5


def _resblock_kernel(x_ref, w1_ref, g1_ref, be1_ref, w2_ref, g2_ref, be2_ref,
                     out_ref, pad_ref):
    """Fused ResBlock forward.

    x_ref  : (N, H, W, C)        input, NHWC, f32
    w*_ref : (3, 3, C, C)        conv weights, (kh, kw, Cin, Cout), bf16
    g*_ref : (1, C)              BN gamma, f32
    be*_ref: (1, C)              BN beta, f32
    out_ref: (N*H*W, C)          output (flattened NHWC), f32
    pad_ref: (N, H+2, W+2, C)    VMEM scratch: zero-padded activation (reused)
    """
    N, Hp, Wp, C = pad_ref.shape
    H, W = Hp - 2, Wp - 2
    M = N * H * W

    def conv3x3(w_ref):
        # 3x3 "same" conv on the zero-padded scratch as 9 shifted bf16 MXU
        # matmuls with f32 accumulation.
        acc = jnp.zeros((M, C), jnp.float32)
        for dy in range(3):
            for dx in range(3):
                patch = pad_ref[:, dy:dy + H, dx:dx + W, :].reshape(M, C)
                acc = acc + jnp.dot(patch.astype(jnp.bfloat16), w_ref[dy, dx],
                                    preferred_element_type=jnp.float32)
        return acc

    def batchnorm(acc, g_ref, be_ref):
        # Training-mode BatchNorm2d: per-channel batch stats, biased variance.
        mean = jnp.mean(acc, axis=0, keepdims=True)                # (1, C)
        centered = acc - mean
        var = jnp.mean(centered * centered, axis=0, keepdims=True)
        scale = jax.lax.rsqrt(var + EPS) * g_ref[...]              # (1, C)
        return centered * scale + be_ref[...]

    # ---- build zero-padded input in VMEM (no jnp.pad / extra HBM copy) ----
    pad_ref[...] = jnp.zeros_like(pad_ref)
    x = x_ref[...]                                                 # (N, H, W, C)
    pad_ref[:, 1:1 + H, 1:1 + W, :] = x

    # ---- stage 1: relu(bn1(conv1(x))) ----
    h = jnp.maximum(batchnorm(conv3x3(w1_ref), g1_ref, be1_ref), 0.0)

    # ---- re-use padded scratch for stage 2 (zero border is preserved) ----
    pad_ref[:, 1:1 + H, 1:1 + W, :] = h.reshape(N, H, W, C)

    # ---- stage 2: relu(bn2(conv2(h)) + residual) ----
    y = batchnorm(conv3x3(w2_ref), g2_ref, be2_ref) + x.reshape(M, C)
    out_ref[...] = jnp.maximum(y, 0.0)


def resblock_forward(x_nchw, w1, b1, g1, be1, w2, b2, g2, be2):
    """ResBlock forward.  x_nchw: (N, C, H, W) float32, PyTorch convention."""
    del b1, b2  # conv bias is exactly cancelled by training-mode BatchNorm
    x = jnp.transpose(x_nchw, (0, 2, 3, 1)).astype(jnp.float32)    # -> NHWC
    N, H, W, C = x.shape
    M = N * H * W

    # PyTorch conv weight (Cout, Cin, kh, kw) -> (kh, kw, Cin, Cout), bf16.
    to_k = lambda w: jnp.transpose(w, (2, 3, 1, 0)).astype(jnp.bfloat16)
    vec = lambda v: v.reshape(1, C).astype(jnp.float32)

    y_flat = pl.pallas_call(
        _resblock_kernel,
        out_shape=jax.ShapeDtypeStruct((M, C), jnp.float32),
        grid=(1,),
        in_specs=[
            pl.BlockSpec((N, H, W, C), lambda i: (0, 0, 0, 0)),
            pl.BlockSpec((3, 3, C, C), lambda i: (0, 0, 0, 0)),
            pl.BlockSpec((1, C), lambda i: (0, 0)),
            pl.BlockSpec((1, C), lambda i: (0, 0)),
            pl.BlockSpec((3, 3, C, C), lambda i: (0, 0, 0, 0)),
            pl.BlockSpec((1, C), lambda i: (0, 0)),
            pl.BlockSpec((1, C), lambda i: (0, 0)),
        ],
        out_specs=pl.BlockSpec((M, C), lambda i: (0, 0)),
        scratch_shapes=[pltpu.VMEM((N, H + 2, W + 2, C), jnp.float32)],
        compiler_params=pltpu.CompilerParams(
            dimension_semantics=("arbitrary",)),
    )(x, to_k(w1), vec(g1), vec(be1), to_k(w2), vec(g2), vec(be2))

    y = y_flat.reshape(N, H, W, C)
    return jnp.transpose(y, (0, 3, 1, 2))                          # -> NCHW


# ------------------------- pure-JAX reference -------------------------------
def _ref_forward(x, w1, b1, g1, be1, w2, b2, g2, be2):
    def conv(t, w, b):
        y = jax.lax.conv_general_dilated(
            t, w, window_strides=(1, 1), padding=((1, 1), (1, 1)),
            dimension_numbers=("NCHW", "OIHW", "NCHW"))
        return y + b[None, :, None, None]

    def bn(t, g, be):
        mean = t.mean(axis=(0, 2, 3), keepdims=True)
        var = jnp.square(t - mean).mean(axis=(0, 2, 3), keepdims=True)
        return ((t - mean) * jax.lax.rsqrt(var + EPS)
                * g[None, :, None, None] + be[None, :, None, None])

    h = jax.nn.relu(bn(conv(x, w1, b1), g1, be1))
    y = bn(conv(h, w2, b2), g2, be2) + x
    return jax.nn.relu(y)


if __name__ == "__main__":
    N, C, H, W = 2, 32, 16, 16            # num_hidden = 32
    key = jax.random.PRNGKey(0)
    ks = jax.random.split(key, 9)

    x = jax.random.normal(ks[0], (N, C, H, W), jnp.float32)
    w1 = 0.1 * jax.random.normal(ks[1], (C, C, 3, 3), jnp.float32)
    b1 = 0.1 * jax.random.normal(ks[2], (C,), jnp.float32)
    g1 = 1.0 + 0.1 * jax.random.normal(ks[3], (C,), jnp.float32)
    be1 = 0.1 * jax.random.normal(ks[4], (C,), jnp.float32)
    w2 = 0.1 * jax.random.normal(ks[5], (C, C, 3, 3), jnp.float32)
    b2 = 0.1 * jax.random.normal(ks[6], (C,), jnp.float32)
    g2 = 1.0 + 0.1 * jax.random.normal(ks[7], (C,), jnp.float32)
    be2 = 0.1 * jax.random.normal(ks[8], (C,), jnp.float32)

    out = jax.block_until_ready(
        resblock_forward(x, w1, b1, g1, be1, w2, b2, g2, be2))
    ref = jax.block_until_ready(
        _ref_forward(x, w1, b1, g1, be1, w2, b2, g2, be2))

    assert out.shape == (N, C, H, W) and out.dtype == jnp.float32
    max_err = float(jnp.max(jnp.abs(out - ref)))
    assert max_err < 3e-2, f"mismatch vs reference: {max_err}"

    print("KERNEL_OK")
</pallas_src>

<mosaic_0001>
module attributes {stable_mosaic.version = 11 : i64} {
  func.func @_resblock_kernel(%arg0: i32, %arg1: memref<2x16x16x32xf32, #tpu.memory_space<vmem>>, %arg2: memref<3x3x32x32xbf16, #tpu.memory_space<vmem>>, %arg3: memref<1x32xf32, #tpu.memory_space<vmem>>, %arg4: memref<1x32xf32, #tpu.memory_space<vmem>>, %arg5: memref<3x3x32x32xbf16, #tpu.memory_space<vmem>>, %arg6: memref<1x32xf32, #tpu.memory_space<vmem>>, %arg7: memref<1x32xf32, #tpu.memory_space<vmem>>, %arg8: memref<512x32xf32, #tpu.memory_space<vmem>>, %arg9: memref<2x18x18x32xf32, #tpu.memory_space<vmem>>) attributes {dimension_semantics = [#tpu.dimension_semantics<arbitrary>], iteration_bounds = array<i64: 1>, scalar_prefetch = 0 : i64, scratch_operands = 1 : i64, tpu.core_type = #tpu.core_type<tc>, window_params = [{pipeline_mode = #tpu.pipeline_mode<synchronous>, transform_indices = @transform_0, window_bounds = array<i64: 2, 16, 16, 32>}, {pipeline_mode = #tpu.pipeline_mode<synchronous>, transform_indices = @transform_1, window_bounds = array<i64: 3, 3, 32, 32>}, {pipeline_mode = #tpu.pipeline_mode<synchronous>, transform_indices = @transform_2, window_bounds = array<i64: 1, 32>}, {pipeline_mode = #tpu.pipeline_mode<synchronous>, transform_indices = @transform_3, window_bounds = array<i64: 1, 32>}, {pipeline_mode = #tpu.pipeline_mode<synchronous>, transform_indices = @transform_4, window_bounds = array<i64: 3, 3, 32, 32>}, {pipeline_mode = #tpu.pipeline_mode<synchronous>, transform_indices = @transform_5, window_bounds = array<i64: 1, 32>}, {pipeline_mode = #tpu.pipeline_mode<synchronous>, transform_indices = @transform_6, window_bounds = array<i64: 1, 32>}, {pipeline_mode = #tpu.pipeline_mode<synchronous>, transform_indices = @transform_7, window_bounds = array<i64: 512, 32>}]} {
    %cst = arith.constant 0.000000e+00 : f32
    %0 = vector.broadcast %cst : f32 to vector<2x18x18x32xf32>
    %c0 = arith.constant 0 : index
    %c0_0 = arith.constant 0 : index
    %c0_1 = arith.constant 0 : index
    %c0_2 = arith.constant 0 : index
    %1 = vector.load %arg9[%c0, %c0_0, %c0_1, %c0_2] : memref<2x18x18x32xf32, #tpu.memory_space<vmem>>, vector<2x18x18x32xf32>
    tpu.vector_store %arg9[%c0, %c0_0, %c0_1, %c0_2], %0 {strides = array<i32>} : memref<2x18x18x32xf32, #tpu.memory_space<vmem>>, vector<2x18x18x32xf32>,
    %c0_3 = arith.constant 0 : index
    %c0_4 = arith.constant 0 : index
    %c0_5 = arith.constant 0 : index
    %c0_6 = arith.constant 0 : index
    %2 = vector.load %arg1[%c0_3, %c0_4, %c0_5, %c0_6] : memref<2x16x16x32xf32, #tpu.memory_space<vmem>>, vector<2x16x16x32xf32>
    %c0_7 = arith.constant 0 : index
    %c1 = arith.constant 1 : index
    %c1_8 = arith.constant 1 : index
    %c0_9 = arith.constant 0 : index
    %3 = vector.load %arg9[%c0_7, %c1, %c1_8, %c0_9] : memref<2x18x18x32xf32, #tpu.memory_space<vmem>>, vector<2x16x16x32xf32>
    tpu.vector_store %arg9[%c0_7, %c1, %c1_8, %c0_9], %2 {strides = array<i32>} : memref<2x18x18x32xf32, #tpu.memory_space<vmem>>, vector<2x16x16x32xf32>,
    %cst_10 = arith.constant 0.000000e+00 : f32
    %4 = vector.broadcast %cst_10 : f32 to vector<512x32xf32>
    %c0_11 = arith.constant 0 : index
    %c0_12 = arith.constant 0 : index
    %c0_13 = arith.constant 0 : index
    %c0_14 = arith.constant 0 : index
    %5 = vector.load %arg9[%c0_11, %c0_12, %c0_13, %c0_14] : memref<2x18x18x32xf32, #tpu.memory_space<vmem>>, vector<2x16x16x32xf32>
    %6 = vector.shape_cast %5 : vector<2x16x16x32xf32> to vector<512x32xf32>
    %7 = arith.truncf %6 : vector<512x32xf32> to vector<512x32xbf16>
    %c0_15 = arith.constant 0 : index
    %c0_16 = arith.constant 0 : index
    %c0_17 = arith.constant 0 : index
    %c0_18 = arith.constant 0 : index
    %8 = vector.load %arg2[%c0_15, %c0_16, %c0_17, %c0_18] : memref<3x3x32x32xbf16, #tpu.memory_space<vmem>>, vector<1x1x32x32xbf16>
    %9 = vector.shape_cast %8 : vector<1x1x32x32xbf16> to vector<32x32xbf16>
    %cst_19 = arith.constant dense<0.000000e+00> : vector<512x32xf32>
    %10 = tpu.matmul %7, %9, %cst_19 {dimension_numbers = #tpu.dot_dimension_numbers<[1], [0], [0], [1], [0, 0, 1, 1], [], []>} : vector<512x32xbf16>, vector<32x32xbf16>, vector<512x32xf32> -> vector<512x32xf32>
    %11 = arith.addf %4, %10 : vector<512x32xf32>
    %c0_20 = arith.constant 0 : index
    %c0_21 = arith.constant 0 : index
    %c1_22 = arith.constant 1 : index
    %c0_23 = arith.constant 0 : index
    %12 = vector.load %arg9[%c0_20, %c0_21, %c1_22, %c0_23] : memref<2x18x18x32xf32, #tpu.memory_space<vmem>>, vector<2x16x16x32xf32>
    %13 = vector.shape_cast %12 : vector<2x16x16x32xf32> to vector<512x32xf32>
    %14 = arith.truncf %13 : vector<512x32xf32> to vector<512x32xbf16>
    %c0_24 = arith.constant 0 : index
    %c1_25 = arith.constant 1 : index
    %c0_26 = arith.constant 0 : index
    %c0_27 = arith.constant 0 : index
    %15 = vector.load %arg2[%c0_24, %c1_25, %c0_26, %c0_27] : memref<3x3x32x32xbf16, #tpu.memory_space<vmem>>, vector<1x1x32x32xbf16>
    %16 = vector.shape_cast %15 : vector<1x1x32x32xbf16> to vector<32x32xbf16>
    %cst_28 = arith.constant dense<0.000000e+00> : vector<512x32xf32>
    %17 = tpu.matmul %14, %16, %cst_28 {dimension_numbers = #tpu.dot_dimension_numbers<[1], [0], [0], [1], [0, 0, 1, 1], [], []>} : vector<512x32xbf16>, vector<32x32xbf16>, vector<512x32xf32> -> vector<512x32xf32>
    %18 = arith.addf %11, %17 : vector<512x32xf32>
    %c0_29 = arith.constant 0 : index
    %c0_30 = arith.constant 0 : index
    %c2 = arith.constant 2 : index
    %c0_31 = arith.constant 0 : index
    %19 = vector.load %arg9[%c0_29, %c0_30, %c2, %c0_31] : memref<2x18x18x32xf32, #tpu.memory_space<vmem>>, vector<2x16x16x32xf32>
    %20 = vector.shape_cast %19 : vector<2x16x16x32xf32> to vector<512x32xf32>
    %21 = arith.truncf %20 : vector<512x32xf32> to vector<512x32xbf16>
    %c0_32 = arith.constant 0 : index
    %c2_33 = arith.constant 2 : index
    %c0_34 = arith.constant 0 : index
    %c0_35 = arith.constant 0 : index
    %22 = vector.load %arg2[%c0_32, %c2_33, %c0_34, %c0_35] : memref<3x3x32x32xbf16, #tpu.memory_space<vmem>>, vector<1x1x32x32xbf16>
    %23 = vector.shape_cast %22 : vector<1x1x32x32xbf16> to vector<32x32xbf16>
    %cst_36 = arith.constant dense<0.000000e+00> : vector<512x32xf32>
    %24 = tpu.matmul %21, %23, %cst_36 {dimension_numbers = #tpu.dot_dimension_numbers<[1], [0], [0], [1], [0, 0, 1, 1], [], []>} : vector<512x32xbf16>, vector<32x32xbf16>, vector<512x32xf32> -> vector<512x32xf32>
    %25 = arith.addf %18, %24 : vector<512x32xf32>
    %c0_37 = arith.constant 0 : index
    %c1_38 = arith.constant 1 : index
    %c0_39 = arith.constant 0 : index
    %c0_40 = arith.constant 0 : index
    %26 = vector.load %arg9[%c0_37, %c1_38, %c0_39, %c0_40] : memref<2x18x18x32xf32, #tpu.memory_space<vmem>>, vector<2x16x16x32xf32>
    %27 = vector.shape_cast %26 : vector<2x16x16x32xf32> to vector<512x32xf32>
    %28 = arith.truncf %27 : vector<512x32xf32> to vector<512x32xbf16>
    %c1_41 = arith.constant 1 : index
    %c0_42 = arith.constant 0 : index
    %c0_43 = arith.constant 0 : index
    %c0_44 = arith.constant 0 : index
    %29 = vector.load %arg2[%c1_41, %c0_42, %c0_43, %c0_44] : memref<3x3x32x32xbf16, #tpu.memory_space<vmem>>, vector<1x1x32x32xbf16>
    %30 = vector.shape_cast %29 : vector<1x1x32x32xbf16> to vector<32x32xbf16>
    %cst_45 = arith.constant dense<0.000000e+00> : vector<512x32xf32>
    %31 = tpu.matmul %28, %30, %cst_45 {dimension_numbers = #tpu.dot_dimension_numbers<[1], [0], [0], [1], [0, 0, 1, 1], [], []>} : vector<512x32xbf16>, vector<32x32xbf16>, vector<512x32xf32> -> vector<512x32xf32>
    %32 = arith.addf %25, %31 : vector<512x32xf32>
    %c0_46 = arith.constant 0 : index
    %c1_47 = arith.constant 1 : index
    %c1_48 = arith.constant 1 : index
    %c0_49 = arith.constant 0 : index
    %33 = vector.load %arg9[%c0_46, %c1_47, %c1_48, %c0_49] : memref<2x18x18x32xf32, #tpu.memory_space<vmem>>, vector<2x16x16x32xf32>
    %34 = vector.shape_cast %33 : vector<2x16x16x32xf32> to vector<512x32xf32>
    %35 = arith.truncf %34 : vector<512x32xf32> to vector<512x32xbf16>
    %c1_50 = arith.constant 1 : index
    %c1_51 = arith.constant 1 : index
    %c0_52 = arith.constant 0 : index
    %c0_53 = arith.constant 0 : index
    %36 = vector.load %arg2[%c1_50, %c1_51, %c0_52, %c0_53] : memref<3x3x32x32xbf16, #tpu.memory_space<vmem>>, vector<1x1x32x32xbf16>
    %37 = vector.shape_cast %36 : vector<1x1x32x32xbf16> to vector<32x32xbf16>
    %cst_54 = arith.constant dense<0.000000e+00> : vector<512x32xf32>
    %38 = tpu.matmul %35, %37, %cst_54 {dimension_numbers = #tpu.dot_dimension_numbers<[1], [0], [0], [1], [0, 0, 1, 1], [], []>} : vector<512x32xbf16>, vector<32x32xbf16>, vector<512x32xf32> -> vector<512x32xf32>
    %39 = arith.addf %32, %38 : vector<512x32xf32>
    %c0_55 = arith.constant 0 : index
    %c1_56 = arith.constant 1 : index
    %c2_57 = arith.constant 2 : index
    %c0_58 = arith.constant 0 : index
    %40 = vector.load %arg9[%c0_55, %c1_56, %c2_57, %c0_58] : memref<2x18x18x32xf32, #tpu.memory_space<vmem>>, vector<2x16x16x32xf32>
    %41 = vector.shape_cast %40 : vector<2x16x16x32xf32> to vector<512x32xf32>
    %42 = arith.truncf %41 : vector<512x32xf32> to vector<512x32xbf16>
    %c1_59 = arith.constant 1 : index
    %c2_60 = arith.constant 2 : index
    %c0_61 = arith.constant 0 : index
    %c0_62 = arith.constant 0 : index
    %43 = vector.load %arg2[%c1_59, %c2_60, %c0_61, %c0_62] : memref<3x3x32x32xbf16, #tpu.memory_space<vmem>>, vector<1x1x32x32xbf16>
    %44 = vector.shape_cast %43 : vector<1x1x32x32xbf16> to vector<32x32xbf16>
    %cst_63 = arith.constant dense<0.000000e+00> : vector<512x32xf32>
    %45 = tpu.matmul %42, %44, %cst_63 {dimension_numbers = #tpu.dot_dimension_numbers<[1], [0], [0], [1], [0, 0, 1, 1], [], []>} : vector<512x32xbf16>, vector<32x32xbf16>, vector<512x32xf32> -> vector<512x32xf32>
    %46 = arith.addf %39, %45 : vector<512x32xf32>
    %c0_64 = arith.constant 0 : index
    %c2_65 = arith.constant 2 : index
    %c0_66 = arith.constant 0 : index
    %c0_67 = arith.constant 0 : index
    %47 = vector.load %arg9[%c0_64, %c2_65, %c0_66, %c0_67] : memref<2x18x18x32xf32, #tpu.memory_space<vmem>>, vector<2x16x16x32xf32>
    %48 = vector.shape_cast %47 : vector<2x16x16x32xf32> to vector<512x32xf32>
    %49 = arith.truncf %48 : vector<512x32xf32> to vector<512x32xbf16>
    %c2_68 = arith.constant 2 : index
    %c0_69 = arith.constant 0 : index
    %c0_70 = arith.constant 0 : index
    %c0_71 = arith.constant 0 : index
    %50 = vector.load %arg2[%c2_68, %c0_69, %c0_70, %c0_71] : memref<3x3x32x32xbf16, #tpu.memory_space<vmem>>, vector<1x1x32x32xbf16>
    %51 = vector.shape_cast %50 : vector<1x1x32x32xbf16> to vector<32x32xbf16>
    %cst_72 = arith.constant dense<0.000000e+00> : vector<512x32xf32>
    %52 = tpu.matmul %49, %51, %cst_72 {dimension_numbers = #tpu.dot_dimension_numbers<[1], [0], [0], [1], [0, 0, 1, 1], [], []>} : vector<512x32xbf16>, vector<32x32xbf16>, vector<512x32xf32> -> vector<512x32xf32>
    %53 = arith.addf %46, %52 : vector<512x32xf32>
    %c0_73 = arith.constant 0 : index
    %c2_74 = arith.constant 2 : index
    %c1_75 = arith.constant 1 : index
    %c0_76 = arith.constant 0 : index
    %54 = vector.load %arg9[%c0_73, %c2_74, %c1_75, %c0_76] : memref<2x18x18x32xf32, #tpu.memory_space<vmem>>, vector<2x16x16x32xf32>
    %55 = vector.shape_cast %54 : vector<2x16x16x32xf32> to vector<512x32xf32>
    %56 = arith.truncf %55 : vector<512x32xf32> to vector<512x32xbf16>
    %c2_77 = arith.constant 2 : index
    %c1_78 = arith.constant 1 : index
    %c0_79 = arith.constant 0 : index
    %c0_80 = arith.constant 0 : index
    %57 = vector.load %arg2[%c2_77, %c1_78, %c0_79, %c0_80] : memref<3x3x32x32xbf16, #tpu.memory_space<vmem>>, vector<1x1x32x32xbf16>
    %58 = vector.shape_cast %57 : vector<1x1x32x32xbf16> to vector<32x32xbf16>
    %cst_81 = arith.constant dense<0.000000e+00> : vector<512x32xf32>
    %59 = tpu.matmul %56, %58, %cst_81 {dimension_numbers = #tpu.dot_dimension_numbers<[1], [0], [0], [1], [0, 0, 1, 1], [], []>} : vector<512x32xbf16>, vector<32x32xbf16>, vector<512x32xf32> -> vector<512x32xf32>
    %60 = arith.addf %53, %59 : vector<512x32xf32>
    %c0_82 = arith.constant 0 : index
    %c2_83 = arith.constant 2 : index
    %c2_84 = arith.constant 2 : index
    %c0_85 = arith.constant 0 : index
    %61 = vector.load %arg9[%c0_82, %c2_83, %c2_84, %c0_85] : memref<2x18x18x32xf32, #tpu.memory_space<vmem>>, vector<2x16x16x32xf32>
    %62 = vector.shape_cast %61 : vector<2x16x16x32xf32> to vector<512x32xf32>
    %63 = arith.truncf %62 : vector<512x32xf32> to vector<512x32xbf16>
    %c2_86 = arith.constant 2 : index
    %c2_87 = arith.constant 2 : index
    %c0_88 = arith.constant 0 : index
    %c0_89 = arith.constant 0 : index
    %64 = vector.load %arg2[%c2_86, %c2_87, %c0_88, %c0_89] : memref<3x3x32x32xbf16, #tpu.memory_space<vmem>>, vector<1x1x32x32xbf16>
    %65 = vector.shape_cast %64 : vector<1x1x32x32xbf16> to vector<32x32xbf16>
    %cst_90 = arith.constant dense<0.000000e+00> : vector<512x32xf32>
    %66 = tpu.matmul %63, %65, %cst_90 {dimension_numbers = #tpu.dot_dimension_numbers<[1], [0], [0], [1], [0, 0, 1, 1], [], []>} : vector<512x32xbf16>, vector<32x32xbf16>, vector<512x32xf32> -> vector<512x32xf32>
    %67 = arith.addf %60, %66 : vector<512x32xf32>
    %cst_91 = arith.constant dense<0.000000e+00> : vector<32xf32>
    %68 = vector.multi_reduction <add>, %67, %cst_91 [0] : vector<512x32xf32> to vector<32xf32>
    %69 = vector.shape_cast %68 : vector<32xf32> to vector<1x32xf32>
    %cst_92 = arith.constant 5.120000e+02 : f32
    %70 = vector.broadcast %cst_92 : f32 to vector<1x32xf32>
    %71 = arith.divf %69, %70 : vector<1x32xf32>
    %72 = vector.broadcast %71 : vector<1x32xf32> to vector<512x32xf32>
    %73 = arith.subf %67, %72 : vector<512x32xf32>
    %74 = arith.mulf %73, %73 : vector<512x32xf32>
    %cst_93 = arith.constant dense<0.000000e+00> : vector<32xf32>
    %75 = vector.multi_reduction <add>, %74, %cst_93 [0] : vector<512x32xf32> to vector<32xf32>
    %76 = vector.shape_cast %75 : vector<32xf32> to vector<1x32xf32>
    %cst_94 = arith.constant 5.120000e+02 : f32
    %77 = vector.broadcast %cst_94 : f32 to vector<1x32xf32>
    %78 = arith.divf %76, %77 : vector<1x32xf32>
    %cst_95 = arith.constant 9.99999974E-6 : f32
    %79 = vector.broadcast %cst_95 : f32 to vector<1x32xf32>
    %80 = arith.addf %78, %79 : vector<1x32xf32>
    %81 = math.rsqrt %80 : vector<1x32xf32>
    %c0_96 = arith.constant 0 : index
    %c0_97 = arith.constant 0 : index
    %82 = vector.load %arg3[%c0_96, %c0_97] : memref<1x32xf32, #tpu.memory_space<vmem>>, vector<1x32xf32>
    %83 = arith.mulf %81, %82 : vector<1x32xf32>
    %84 = vector.broadcast %83 : vector<1x32xf32> to vector<512x32xf32>
    %85 = arith.mulf %73, %84 : vector<512x32xf32>
    %c0_98 = arith.constant 0 : index
    %c0_99 = arith.constant 0 : index
    %86 = vector.load %arg4[%c0_98, %c0_99] : memref<1x32xf32, #tpu.memory_space<vmem>>, vector<1x32xf32>
    %87 = vector.broadcast %86 : vector<1x32xf32> to vector<512x32xf32>
    %88 = arith.addf %85, %87 : vector<512x32xf32>
    %cst_100 = arith.constant 0.000000e+00 : f32
    %89 = vector.broadcast %cst_100 : f32 to vector<512x32xf32>
    %90 = arith.maximumf %88, %89 : vector<512x32xf32>
    %91 = vector.shape_cast %90 : vector<512x32xf32> to vector<2x16x16x32xf32>
    %c0_101 = arith.constant 0 : index
    %c1_102 = arith.constant 1 : index
    %c1_103 = arith.constant 1 : index
    %c0_104 = arith.constant 0 : index
    %92 = vector.load %arg9[%c0_101, %c1_102, %c1_103, %c0_104] : memref<2x18x18x32xf32, #tpu.memory_space<vmem>>, vector<2x16x16x32xf32>
    tpu.vector_store %arg9[%c0_101, %c1_102, %c1_103, %c0_104], %91 {strides = array<i32>} : memref<2x18x18x32xf32, #tpu.memory_space<vmem>>, vector<2x16x16x32xf32>,
    %cst_105 = arith.constant 0.000000e+00 : f32
    %93 = vector.broadcast %cst_105 : f32 to vector<512x32xf32>
    %c0_106 = arith.constant 0 : index
    %c0_107 = arith.constant 0 : index
    %c0_108 = arith.constant 0 : index
    %c0_109 = arith.constant 0 : index
    %94 = vector.load %arg9[%c0_106, %c0_107, %c0_108, %c0_109] : memref<2x18x18x32xf32, #tpu.memory_space<vmem>>, vector<2x16x16x32xf32>
    %95 = vector.shape_cast %94 : vector<2x16x16x32xf32> to vector<512x32xf32>
    %96 = arith.truncf %95 : vector<512x32xf32> to vector<512x32xbf16>
    %c0_110 = arith.constant 0 : index
    %c0_111 = arith.constant 0 : index
    %c0_112 = arith.constant 0 : index
    %c0_113 = arith.constant 0 : index
    %97 = vector.load %arg5[%c0_110, %c0_111, %c0_112, %c0_113] : memref<3x3x32x32xbf16, #tpu.memory_space<vmem>>, vector<1x1x32x32xbf16>
    %98 = vector.shape_cast %97 : vector<1x1x32x32xbf16> to vector<32x32xbf16>
    %cst_114 = arith.constant dense<0.000000e+00> : vector<512x32xf32>
    %99 = tpu.matmul %96, %98, %cst_114 {dimension_numbers = #tpu.dot_dimension_numbers<[1], [0], [0], [1], [0, 0, 1, 1], [], []>} : vector<512x32xbf16>, vector<32x32xbf16>, vector<512x32xf32> -> vector<512x32xf32>
    %100 = arith.addf %93, %99 : vector<512x32xf32>
    %c0_115 = arith.constant 0 : index
    %c0_116 = arith.constant 0 : index
    %c1_117 = arith.constant 1 : index
    %c0_118 = arith.constant 0 : index
    %101 = vector.load %arg9[%c0_115, %c0_116, %c1_117, %c0_118] : memref<2x18x18x32xf32, #tpu.memory_space<vmem>>, vector<2x16x16x32xf32>
    %102 = vector.shape_cast %101 : vector<2x16x16x32xf32> to vector<512x32xf32>
    %103 = arith.truncf %102 : vector<512x32xf32> to vector<512x32xbf16>
    %c0_119 = arith.constant 0 : index
    %c1_120 = arith.constant 1 : index
    %c0_121 = arith.constant 0 : index
    %c0_122 = arith.constant 0 : index
    %104 = vector.load %arg5[%c0_119, %c1_120, %c0_121, %c0_122] : memref<3x3x32x32xbf16, #tpu.memory_space<vmem>>, vector<1x1x32x32xbf16>
    %105 = vector.shape_cast %104 : vector<1x1x32x32xbf16> to vector<32x32xbf16>
    %cst_123 = arith.constant dense<0.000000e+00> : vector<512x32xf32>
    %106 = tpu.matmul %103, %105, %cst_123 {dimension_numbers = #tpu.dot_dimension_numbers<[1], [0], [0], [1], [0, 0, 1, 1], [], []>} : vector<512x32xbf16>, vector<32x32xbf16>, vector<512x32xf32> -> vector<512x32xf32>
    %107 = arith.addf %100, %106 : vector<512x32xf32>
    %c0_124 = arith.constant 0 : index
    %c0_125 = arith.constant 0 : index
    %c2_126 = arith.constant 2 : index
    %c0_127 = arith.constant 0 : index
    %108 = vector.load %arg9[%c0_124, %c0_125, %c2_126, %c0_127] : memref<2x18x18x32xf32, #tpu.memory_space<vmem>>, vector<2x16x16x32xf32>
    %109 = vector.shape_cast %108 : vector<2x16x16x32xf32> to vector<512x32xf32>
    %110 = arith.truncf %109 : vector<512x32xf32> to vector<512x32xbf16>
    %c0_128 = arith.constant 0 : index
    %c2_129 = arith.constant 2 : index
    %c0_130 = arith.constant 0 : index
    %c0_131 = arith.constant 0 : index
    %111 = vector.load %arg5[%c0_128, %c2_129, %c0_130, %c0_131] : memref<3x3x32x32xbf16, #tpu.memory_space<vmem>>, vector<1x1x32x32xbf16>
    %112 = vector.shape_cast %111 : vector<1x1x32x32xbf16> to vector<32x32xbf16>
    %cst_132 = arith.constant dense<0.000000e+00> : vector<512x32xf32>
    %113 = tpu.matmul %110, %112, %cst_132 {dimension_numbers = #tpu.dot_dimension_numbers<[1], [0], [0], [1], [0, 0, 1, 1], [], []>} : vector<512x32xbf16>, vector<32x32xbf16>, vector<512x32xf32> -> vector<512x32xf32>
    %114 = arith.addf %107, %113 : vector<512x32xf32>
    %c0_133 = arith.constant 0 : index
    %c1_134 = arith.constant 1 : index
    %c0_135 = arith.constant 0 : index
    %c0_136 = arith.constant 0 : index
    %115 = vector.load %arg9[%c0_133, %c1_134, %c0_135, %c0_136] : memref<2x18x18x32xf32, #tpu.memory_space<vmem>>, vector<2x16x16x32xf32>
    %116 = vector.shape_cast %115 : vector<2x16x16x32xf32> to vector<512x32xf32>
    %117 = arith.truncf %116 : vector<512x32xf32> to vector<512x32xbf16>
    %c1_137 = arith.constant 1 : index
    %c0_138 = arith.constant 0 : index
    %c0_139 = arith.constant 0 : index
    %c0_140 = arith.constant 0 : index
    %118 = vector.load %arg5[%c1_137, %c0_138, %c0_139, %c0_140] : memref<3x3x32x32xbf16, #tpu.memory_space<vmem>>, vector<1x1x32x32xbf16>
    %119 = vector.shape_cast %118 : vector<1x1x32x32xbf16> to vector<32x32xbf16>
    %cst_141 = arith.constant dense<0.000000e+00> : vector<512x32xf32>
    %120 = tpu.matmul %117, %119, %cst_141 {dimension_numbers = #tpu.dot_dimension_numbers<[1], [0], [0], [1], [0, 0, 1, 1], [], []>} : vector<512x32xbf16>, vector<32x32xbf16>, vector<512x32xf32> -> vector<512x32xf32>
    %121 = arith.addf %114, %120 : vector<512x32xf32>
    %c0_142 = arith.constant 0 : index
    %c1_143 = arith.constant 1 : index
    %c1_144 = arith.constant 1 : index
    %c0_145 = arith.constant 0 : index
    %122 = vector.load %arg9[%c0_142, %c1_143, %c1_144, %c0_145] : memref<2x18x18x32xf32, #tpu.memory_space<vmem>>, vector<2x16x16x32xf32>
    %123 = vector.shape_cast %122 : vector<2x16x16x32xf32> to vector<512x32xf32>
    %124 = arith.truncf %123 : vector<512x32xf32> to vector<512x32xbf16>
    %c1_146 = arith.constant 1 : index
    %c1_147 = arith.constant 1 : index
    %c0_148 = arith.constant 0 : index
    %c0_149 = arith.constant 0 : index
    %125 = vector.load %arg5[%c1_146, %c1_147, %c0_148, %c0_149] : memref<3x3x32x32xbf16, #tpu.memory_space<vmem>>, vector<1x1x32x32xbf16>
    %126 = vector.shape_cast %125 : vector<1x1x32x32xbf16> to vector<32x32xbf16>
    %cst_150 = arith.constant dense<0.000000e+00> : vector<512x32xf32>
    %127 = tpu.matmul %124, %126, %cst_150 {dimension_numbers = #tpu.dot_dimension_numbers<[1], [0], [0], [1], [0, 0, 1, 1], [], []>} : vector<512x32xbf16>, vector<32x32xbf16>, vector<512x32xf32> -> vector<512x32xf32>
    %128 = arith.addf %121, %127 : vector<512x32xf32>
    %c0_151 = arith.constant 0 : index
    %c1_152 = arith.constant 1 : index
    %c2_153 = arith.constant 2 : index
    %c0_154 = arith.constant 0 : index
    %129 = vector.load %arg9[%c0_151, %c1_152, %c2_153, %c0_154] : memref<2x18x18x32xf32, #tpu.memory_space<vmem>>, vector<2x16x16x32xf32>
    %130 = vector.shape_cast %129 : vector<2x16x16x32xf32> to vector<512x32xf32>
    %131 = arith.truncf %130 : vector<512x32xf32> to vector<512x32xbf16>
    %c1_155 = arith.constant 1 : index
    %c2_156 = arith.constant 2 : index
    %c0_157 = arith.constant 0 : index
    %c0_158 = arith.constant 0 : index
    %132 = vector.load %arg5[%c1_155, %c2_156, %c0_157, %c0_158] : memref<3x3x32x32xbf16, #tpu.memory_space<vmem>>, vector<1x1x32x32xbf16>
    %133 = vector.shape_cast %132 : vector<1x1x32x32xbf16> to vector<32x32xbf16>
    %cst_159 = arith.constant dense<0.000000e+00> : vector<512x32xf32>
    %134 = tpu.matmul %131, %133, %cst_159 {dimension_numbers = #tpu.dot_dimension_numbers<[1], [0], [0], [1], [0, 0, 1, 1], [], []>} : vector<512x32xbf16>, vector<32x32xbf16>, vector<512x32xf32> -> vector<512x32xf32>
    %135 = arith.addf %128, %134 : vector<512x32xf32>
    %c0_160 = arith.constant 0 : index
    %c2_161 = arith.constant 2 : index
    %c0_162 = arith.constant 0 : index
    %c0_163 = arith.constant 0 : index
    %136 = vector.load %arg9[%c0_160, %c2_161, %c0_162, %c0_163] : memref<2x18x18x32xf32, #tpu.memory_space<vmem>>, vector<2x16x16x32xf32>
    %137 = vector.shape_cast %136 : vector<2x16x16x32xf32> to vector<512x32xf32>
    %138 = arith.truncf %137 : vector<512x32xf32> to vector<512x32xbf16>
    %c2_164 = arith.constant 2 : index
    %c0_165 = arith.constant 0 : index
    %c0_166 = arith.constant 0 : index
    %c0_167 = arith.constant 0 : index
    %139 = vector.load %arg5[%c2_164, %c0_165, %c0_166, %c0_167] : memref<3x3x32x32xbf16, #tpu.memory_space<vmem>>, vector<1x1x32x32xbf16>
    %140 = vector.shape_cast %139 : vector<1x1x32x32xbf16> to vector<32x32xbf16>
    %cst_168 = arith.constant dense<0.000000e+00> : vector<512x32xf32>
    %141 = tpu.matmul %138, %140, %cst_168 {dimension_numbers = #tpu.dot_dimension_numbers<[1], [0], [0], [1], [0, 0, 1, 1], [], []>} : vector<512x32xbf16>, vector<32x32xbf16>, vector<512x32xf32> -> vector<512x32xf32>
    %142 = arith.addf %135, %141 : vector<512x32xf32>
    %c0_169 = arith.constant 0 : index
    %c2_170 = arith.constant 2 : index
    %c1_171 = arith.constant 1 : index
    %c0_172 = arith.constant 0 : index
    %143 = vector.load %arg9[%c0_169, %c2_170, %c1_171, %c0_172] : memref<2x18x18x32xf32, #tpu.memory_space<vmem>>, vector<2x16x16x32xf32>
    %144 = vector.shape_cast %143 : vector<2x16x16x32xf32> to vector<512x32xf32>
    %145 = arith.truncf %144 : vector<512x32xf32> to vector<512x32xbf16>
    %c2_173 = arith.constant 2 : index
    %c1_174 = arith.constant 1 : index
    %c0_175 = arith.constant 0 : index
    %c0_176 = arith.constant 0 : index
    %146 = vector.load %arg5[%c2_173, %c1_174, %c0_175, %c0_176] : memref<3x3x32x32xbf16, #tpu.memory_space<vmem>>, vector<1x1x32x32xbf16>
    %147 = vector.shape_cast %146 : vector<1x1x32x32xbf16> to vector<32x32xbf16>
    %cst_177 = arith.constant dense<0.000000e+00> : vector<512x32xf32>
    %148 = tpu.matmul %145, %147, %cst_177 {dimension_numbers = #tpu.dot_dimension_numbers<[1], [0], [0], [1], [0, 0, 1, 1], [], []>} : vector<512x32xbf16>, vector<32x32xbf16>, vector<512x32xf32> -> vector<512x32xf32>
    %149 = arith.addf %142, %148 : vector<512x32xf32>
    %c0_178 = arith.constant 0 : index
    %c2_179 = arith.constant 2 : index
    %c2_180 = arith.constant 2 : index
    %c0_181 = arith.constant 0 : index
    %150 = vector.load %arg9[%c0_178, %c2_179, %c2_180, %c0_181] : memref<2x18x18x32xf32, #tpu.memory_space<vmem>>, vector<2x16x16x32xf32>
    %151 = vector.shape_cast %150 : vector<2x16x16x32xf32> to vector<512x32xf32>
    %152 = arith.truncf %151 : vector<512x32xf32> to vector<512x32xbf16>
    %c2_182 = arith.constant 2 : index
    %c2_183 = arith.constant 2 : index
    %c0_184 = arith.constant 0 : index
    %c0_185 = arith.constant 0 : index
    %153 = vector.load %arg5[%c2_182, %c2_183, %c0_184, %c0_185] : memref<3x3x32x32xbf16, #tpu.memory_space<vmem>>, vector<1x1x32x32xbf16>
    %154 = vector.shape_cast %153 : vector<1x1x32x32xbf16> to vector<32x32xbf16>
    %cst_186 = arith.constant dense<0.000000e+00> : vector<512x32xf32>
    %155 = tpu.matmul %152, %154, %cst_186 {dimension_numbers = #tpu.dot_dimension_numbers<[1], [0], [0], [1], [0, 0, 1, 1], [], []>} : vector<512x32xbf16>, vector<32x32xbf16>, vector<512x32xf32> -> vector<512x32xf32>
    %156 = arith.addf %149, %155 : vector<512x32xf32>
    %cst_187 = arith.constant dense<0.000000e+00> : vector<32xf32>
    %157 = vector.multi_reduction <add>, %156, %cst_187 [0] : vector<512x32xf32> to vector<32xf32>
    %158 = vector.shape_cast %157 : vector<32xf32> to vector<1x32xf32>
    %cst_188 = arith.constant 5.120000e+02 : f32
    %159 = vector.broadcast %cst_188 : f32 to vector<1x32xf32>
    %160 = arith.divf %158, %159 : vector<1x32xf32>
    %161 = vector.broadcast %160 : vector<1x32xf32> to vector<512x32xf32>
    %162 = arith.subf %156, %161 : vector<512x32xf32>
    %163 = arith.mulf %162, %162 : vector<512x32xf32>
    %cst_189 = arith.constant dense<0.000000e+00> : vector<32xf32>
    %164 = vector.multi_reduction <add>, %163, %cst_189 [0] : vector<512x32xf32> to vector<32xf32>
    %165 = vector.shape_cast %164 : vector<32xf32> to vector<1x32xf32>
    %cst_190 = arith.constant 5.120000e+02 : f32
    %166 = vector.broadcast %cst_190 : f32 to vector<1x32xf32>
    %167 = arith.divf %165, %166 : vector<1x32xf32>
    %cst_191 = arith.constant 9.99999974E-6 : f32
    %168 = vector.broadcast %cst_191 : f32 to vector<1x32xf32>
    %169 = arith.addf %167, %168 : vector<1x32xf32>
    %170 = math.rsqrt %169 : vector<1x32xf32>
    %c0_192 = arith.constant 0 : index
    %c0_193 = arith.constant 0 : index
    %171 = vector.load %arg6[%c0_192, %c0_193] : memref<1x32xf32, #tpu.memory_space<vmem>>, vector<1x32xf32>
    %172 = arith.mulf %170, %171 : vector<1x32xf32>
    %173 = vector.broadcast %172 : vector<1x32xf32> to vector<512x32xf32>
    %174 = arith.mulf %162, %173 : vector<512x32xf32>
    %c0_194 = arith.constant 0 : index
    %c0_195 = arith.constant 0 : index
    %175 = vector.load %arg7[%c0_194, %c0_195] : memref<1x32xf32, #tpu.memory_space<vmem>>, vector<1x32xf32>
    %176 = vector.broadcast %175 : vector<1x32xf32> to vector<512x32xf32>
    %177 = arith.addf %174, %176 : vector<512x32xf32>
    %178 = vector.shape_cast %2 : vector<2x16x16x32xf32> to vector<512x32xf32>
    %179 = arith.addf %177, %178 : vector<512x32xf32>
    %cst_196 = arith.constant 0.000000e+00 : f32
    %180 = vector.broadcast %cst_196 : f32 to vector<512x32xf32>
    %181 = arith.maximumf %179, %180 : vector<512x32xf32>
    %c0_197 = arith.constant 0 : index
    %c0_198 = arith.constant 0 : index
    %182 = vector.load %arg8[%c0_197, %c0_198] : memref<512x32xf32, #tpu.memory_space<vmem>>, vector<512x32xf32>
    tpu.vector_store %arg8[%c0_197, %c0_198], %181 {strides = array<i32>} : memref<512x32xf32, #tpu.memory_space<vmem>>, vector<512x32xf32>,
    return
  }
  func.func @transform_0(%arg0: i32) -> (i32, i32, i32, i32) {
    %c0_i32 = arith.constant 0 : i32
    %c0_i32_0 = arith.constant 0 : i32
    %c0_i32_1 = arith.constant 0 : i32
    %c0_i32_2 = arith.constant 0 : i32
    %c0_i32_3 = arith.constant 0 : i32
    return %c0_i32, %c0_i32_0, %c0_i32_1, %c0_i32_2 : i32, i32, i32, i32
  }
  func.func @transform_1(%arg0: i32) -> (i32, i32, i32, i32) {
    %c0_i32 = arith.constant 0 : i32
    %c0_i32_0 = arith.constant 0 : i32
    %c0_i32_1 = arith.constant 0 : i32
    %c0_i32_2 = arith.constant 0 : i32
    %c0_i32_3 = arith.constant 0 : i32
    return %c0_i32, %c0_i32_0, %c0_i32_1, %c0_i32_2 : i32, i32, i32, i32
  }
  func.func @transform_2(%arg0: i32) -> (i32, i32) {
    %c0_i32 = arith.constant 0 : i32
    %c0_i32_0 = arith.constant 0 : i32
    %c0_i32_1 = arith.constant 0 : i32
    return %c0_i32, %c0_i32_0 : i32, i32
  }
  func.func @transform_3(%arg0: i32) -> (i32, i32) {
    %c0_i32 = arith.constant 0 : i32
    %c0_i32_0 = arith.constant 0 : i32
    %c0_i32_1 = arith.constant 0 : i32
    return %c0_i32, %c0_i32_0 : i32, i32
  }
  func.func @transform_4(%arg0: i32) -> (i32, i32, i32, i32) {
    %c0_i32 = arith.constant 0 : i32
    %c0_i32_0 = arith.constant 0 : i32
    %c0_i32_1 = arith.constant 0 : i32
    %c0_i32_2 = arith.constant 0 : i32
    %c0_i32_3 = arith.constant 0 : i32
    return %c0_i32, %c0_i32_0, %c0_i32_1, %c0_i32_2 : i32, i32, i32, i32
  }
  func.func @transform_5(%arg0: i32) -> (i32, i32) {
    %c0_i32 = arith.constant 0 : i32
    %c0_i32_0 = arith.constant 0 : i32
    %c0_i32_1 = arith.constant 0 : i32
    return %c0_i32, %c0_i32_0 : i32, i32
  }
  func.func @transform_6(%arg0: i32) -> (i32, i32) {
    %c0_i32 = arith.constant 0 : i32
    %c0_i32_0 = arith.constant 0 : i32
    %c0_i32_1 = arith.constant 0 : i32
    return %c0_i32, %c0_i32_0 : i32, i32
  }
  func.func @transform_7(%arg0: i32) -> (i32, i32) {
    %c0_i32 = arith.constant 0 : i32
    %c0_i32_0 = arith.constant 0 : i32
    %c0_i32_1 = arith.constant 0 : i32
    return %c0_i32, %c0_i32_0 : i32, i32
  }
}

</mosaic_0001>

<llo_original>
// kernel: tpu_custom_call.1
$region0: #{tpu_custom_call.1}
  #allocation0 [shape = 'u32[]', space=smem, size = 0x4, offset = 0x4, fixed_abs, tag = 'smem constant byte address 0x4 - core index']
  #allocation1 [shape = 'u32[144,128]{1,0:T(1,128)}', space=vmem, size = 0x12000, scoped, tag = 'internal scratch']
  #allocation2 [shape = 'f32[2,18,18,32]{3,2,1,0:T(8,128)}', space=vmem, size = 0x6c000, scoped, tag = 'scratch operand']
  %s0 = inlined_call_operand.hbm [shape: f32[2,16,16,32], index: 0, kind: input, shape index: {}]
  %s1 = inlined_call_operand.hbm [shape: bf16[3,3,32,32], index: 1, kind: input, shape index: {}]
  %s2 = inlined_call_operand.vmem [shape: f32[1,32], index: 2, kind: input, shape index: {}]
  %s3 = inlined_call_operand.vmem [shape: f32[1,32], index: 3, kind: input, shape index: {}]
  %s4 = inlined_call_operand.hbm [shape: bf16[3,3,32,32], index: 4, kind: input, shape index: {}]
  %s5 = inlined_call_operand.vmem [shape: f32[1,32], index: 5, kind: input, shape index: {}]
  %s6 = inlined_call_operand.vmem [shape: f32[1,32], index: 6, kind: input, shape index: {}]
  %s7 = inlined_call_operand.vmem [shape: f32[512,32], index: 7, kind: output, shape index: {}]
  %s8 = sld [smem:[#allocation0]]
  $region50: #{tpu_custom_call.1} parent=0
    _
  %s10 = ssub.s32 1, %s8
  %s11 = scalar_select 0, %s10, %s8
  $region1: #{tpu_custom_call.1} parent=0
    #allocation3 [shape = 'u8[262144]{0}', space=vmem, size = 0x40000, scoped, tag = 'input window, operand 0, single buffered']
    #allocation4 [shape = 's32[1]{0}', space=sflag, size = 0x4, scoped, tag = 'scoped memory for tpu_custom_call.1']
    #allocation5 [shape = 'u8[73728]{0}', space=vmem, size = 0x12000, scoped, tag = 'input window, operand 1, single buffered']
    #allocation6 [shape = 's32[1]{0}', space=sflag, size = 0x4, scoped, tag = 'scoped memory for tpu_custom_call.1']
    #allocation7 [shape = 'u8[73728]{0}', space=vmem, size = 0x12000, scoped, tag = 'input window, operand 4, single buffered']
    %12 = vsyncpa [#allocation4], 0
    %13 = vsyncpa [#allocation6], 0
    // Predicated region
    $region2: #{tpu_custom_call.1} parent=1 // pred_check
      _
    $region3: #{tpu_custom_call.1} parent=1 // pred_check_branch
      %15 = sbr.rel (0) target = $region5
    $region4: #{tpu_custom_call.1} parent=1 // pred_region
      %s17 = ssub.s32 8192, 8192
      %18 = vsyncadd [#allocation4], %s17
      %s19 = sshll.u32 [#allocation3], 4
      %s20 = int_to_ptr.vmem [resolvable:$true] %s19
      %25 = dma.hbm_to_vmem [thread:$0]  %s0, 8192, %s20, [#allocation4], 128, 128, 8
    $region5: #{tpu_custom_call.1} parent=1 // pred_fallthru
      _
    // Predicated region
    $region6: #{tpu_custom_call.1} parent=1 // pred_check
      _
    $region7: #{tpu_custom_call.1} parent=1 // pred_check_branch
      %27 = sbr.rel (0) target = $region9
    $region8: #{tpu_custom_call.1} parent=1 // pred_region
      %s29 = ssub.s32 2304, 2304
      %30 = vsyncadd [#allocation6], %s29
      %s31 = sshll.u32 [#allocation5], 4
      %s32 = int_to_ptr.vmem [resolvable:$true] %s31
      %37 = dma.hbm_to_vmem [thread:$0]  %s1, 2304, %s32, [#allocation6], 64, 64, 4
    $region9: #{tpu_custom_call.1} parent=1 // pred_fallthru
      _
    // Predicated region
    $region10: #{tpu_custom_call.1} parent=1 // pred_check
      _
    $region11: #{tpu_custom_call.1} parent=1 // pred_check_branch
      %39 = sbr.rel (0) target = $region13
    $region12: #{tpu_custom_call.1} parent=1 // pred_region
      _
    $region13: #{tpu_custom_call.1} parent=1 // pred_fallthru
      _
    // Predicated region
    $region14: #{tpu_custom_call.1} parent=1 // pred_check
      _
    $region15: #{tpu_custom_call.1} parent=1 // pred_check_branch
      %41 = sbr.rel (0) target = $region17
    $region16: #{tpu_custom_call.1} parent=1 // pred_region
      _
    $region17: #{tpu_custom_call.1} parent=1 // pred_fallthru
      _
    // Predicated region
    $region18: #{tpu_custom_call.1} parent=1 // pred_check
      _
    $region19: #{tpu_custom_call.1} parent=1 // pred_check_branch
      %43 = sbr.rel (0) target = $region21
    $region20: #{tpu_custom_call.1} parent=1 // pred_region
      %s45 = ssub.s32 2304, 2304
      %46 = vsyncadd [#allocation6], %s45
      %s47 = sshll.u32 [#allocation7], 4
      %s48 = int_to_ptr.vmem [resolvable:$true] %s47
      %53 = dma.hbm_to_vmem [thread:$0]  %s4, 2304, %s48, [#allocation6], 64, 64, 4
    $region21: #{tpu_custom_call.1} parent=1 // pred_fallthru
      _
    // Predicated region
    $region22: #{tpu_custom_call.1} parent=1 // pred_check
      _
    $region23: #{tpu_custom_call.1} parent=1 // pred_check_branch
      %55 = sbr.rel (0) target = $region25
    $region24: #{tpu_custom_call.1} parent=1 // pred_region
      _
    $region25: #{tpu_custom_call.1} parent=1 // pred_fallthru
      _
    // Predicated region
    $region26: #{tpu_custom_call.1} parent=1 // pred_check
      _
    $region27: #{tpu_custom_call.1} parent=1 // pred_check_branch
      %57 = sbr.rel (0) target = $region29
    $region28: #{tpu_custom_call.1} parent=1 // pred_region
      _
    $region29: #{tpu_custom_call.1} parent=1 // pred_fallthru
      _
    // Predicated region
    $region30: #{tpu_custom_call.1} parent=1 // pred_check
      _
    $region31: #{tpu_custom_call.1} parent=1 // pred_check_branch
      %59 = sbr.rel (0) target = $region33
    $region32: #{tpu_custom_call.1} parent=1 // pred_region
      %60 = dma.done [#allocation4], 8192
    $region33: #{tpu_custom_call.1} parent=1 // pred_fallthru
      _
    // Predicated region
    $region34: #{tpu_custom_call.1} parent=1 // pred_check
      _
    $region35: #{tpu_custom_call.1} parent=1 // pred_check_branch
      %62 = sbr.rel (0) target = $region37
    $region36: #{tpu_custom_call.1} parent=1 // pred_region
      %63 = dma.done [#allocation6], 2304
    $region37: #{tpu_custom_call.1} parent=1 // pred_fallthru
      _
    // Predicated region
    $region38: #{tpu_custom_call.1} parent=1 // pred_check
      _
    $region39: #{tpu_custom_call.1} parent=1 // pred_check_branch
      %65 = sbr.rel (0) target = $region41
    $region40: #{tpu_custom_call.1} parent=1 // pred_region
      %66 = dma.done [#allocation6], 2304
    $region41: #{tpu_custom_call.1} parent=1 // pred_fallthru
      _
    %vm68 = vcmask 261120
    %69 = vst.msk [vmem:[#allocation2] sm:$0xff] %vm68, 0.0
    %70 = vst.msk [vmem:[#allocation2 + $0x8] sm:$0xff] %vm68, 0.0
    %vm71 = vcmask 254976
    %72 = vst.msk [vmem:[#allocation2 + $0x10] sm:$0x3] %vm71, 0.0
    %73 = vst.msk [vmem:[#allocation2 + $0x18] sm:$0xff] %vm68, 0.0
    %74 = vst.msk [vmem:[#allocation2 + $0x20] sm:$0xff] %vm68, 0.0
    %75 = vst.msk [vmem:[#allocation2 + $0x28] sm:$0x3] %vm71, 0.0
    %76 = vst.msk [vmem:[#allocation2 + $0x30] sm:$0xff] %vm68, 0.0
    %77 = vst.msk [vmem:[#allocation2 + $0x38] sm:$0xff] %vm68, 0.0
    %78 = vst.msk [vmem:[#allocation2 + $0x40] sm:$0x3] %vm71, 0.0
    %79 = vst.msk [vmem:[#allocation2 + $0x48] sm:$0xff] %vm68, 0.0
    %80 = vst.msk [vmem:[#allocation2 + $0x50] sm:$0xff] %vm68, 0.0
    %81 = vst.msk [vmem:[#allocation2 + $0x58] sm:$0x3] %vm71, 0.0
    %82 = vst.msk [vmem:[#allocation2 + $0x60] sm:$0xff] %vm68, 0.0
    %83 = vst.msk [vmem:[#allocation2 + $0x68] sm:$0xff] %vm68, 0.0
    %84 = vst.msk [vmem:[#allocation2 + $0x70] sm:$0x3] %vm71, 0.0
    %85 = vst.msk [vmem:[#allocation2 + $0x78] sm:$0xff] %vm68, 0.0
    %86 = vst.msk [vmem:[#allocation2 + $0x80] sm:$0xff] %vm68, 0.0
    %87 = vst.msk [vmem:[#allocation2 + $0x88] sm:$0x3] %vm71, 0.0
    %88 = vst.msk [vmem:[#allocation2 + $0x90] sm:$0xff] %vm68, 0.0
    %89 = vst.msk [vmem:[#allocation2 + $0x98] sm:$0xff] %vm68, 0.0
    %90 = vst.msk [vmem:[#allocation2 + $0xa0] sm:$0x3] %vm71, 0.0
    %91 = vst.msk [vmem:[#allocation2 + $0xa8] sm:$0xff] %vm68, 0.0
    %92 = vst.msk [vmem:[#allocation2 + $0xb0] sm:$0xff] %vm68, 0.0
    %93 = vst.msk [vmem:[#allocation2 + $0xb8] sm:$0x3] %vm71, 0.0
    %94 = vst.msk [vmem:[#allocation2 + $0xc0] sm:$0xff] %vm68, 0.0
    %95 = vst.msk [vmem:[#allocation2 + $0xc8] sm:$0xff] %vm68, 0.0
    %96 = vst.msk [vmem:[#allocation2 + $0xd0] sm:$0x3] %vm71, 0.0
    %97 = vst.msk [vmem:[#allocation2 + $0xd8] sm:$0xff] %vm68, 0.0
    %98 = vst.msk [vmem:[#allocation2 + $0xe0] sm:$0xff] %vm68, 0.0
    %99 = vst.msk [vmem:[#allocation2 + $0xe8] sm:$0x3] %vm71, 0.0
    %100 = vst.msk [vmem:[#allocation2 + $0xf0] sm:$0xff] %vm68, 0.0
    %101 = vst.msk [vmem:[#allocation2 + $0xf8] sm:$0xff] %vm68, 0.0
    %102 = vst.msk [vmem:[#allocation2 + $0x100] sm:$0x3] %vm71, 0.0
    %103 = vst.msk [vmem:[#allocation2 + $0x108] sm:$0xff] %vm68, 0.0
    %104 = vst.msk [vmem:[#allocation2 + $0x110] sm:$0xff] %vm68, 0.0
    %105 = vst.msk [vmem:[#allocation2 + $0x118] sm:$0x3] %vm71, 0.0
    %106 = vst.msk [vmem:[#allocation2 + $0x120] sm:$0xff] %vm68, 0.0
    %107 = vst.msk [vmem:[#allocation2 + $0x128] sm:$0xff] %vm68, 0.0
    %108 = vst.msk [vmem:[#allocation2 + $0x130] sm:$0x3] %vm71, 0.0
    %109 = vst.msk [vmem:[#allocation2 + $0x138] sm:$0xff] %vm68, 0.0
    %110 = vst.msk [vmem:[#allocation2 + $0x140] sm:$0xff] %vm68, 0.0
    %111 = vst.msk [vmem:[#allocation2 + $0x148] sm:$0x3] %vm71, 0.0
    %112 = vst.msk [vmem:[#allocation2 + $0x150] sm:$0xff] %vm68, 0.0
    %113 = vst.msk [vmem:[#allocation2 + $0x158] sm:$0xff] %vm68, 0.0
    %114 = vst.msk [vmem:[#allocation2 + $0x160] sm:$0x3] %vm71, 0.0
    %115 = vst.msk [vmem:[#allocation2 + $0x168] sm:$0xff] %vm68, 0.0
    %116 = vst.msk [vmem:[#allocation2 + $0x170] sm:$0xff] %vm68, 0.0
    %117 = vst.msk [vmem:[#allocation2 + $0x178] sm:$0x3] %vm71, 0.0
    %118 = vst.msk [vmem:[#allocation2 + $0x180] sm:$0xff] %vm68, 0.0
    %119 = vst.msk [vmem:[#allocation2 + $0x188] sm:$0xff] %vm68, 0.0
    %120 = vst.msk [vmem:[#allocation2 + $0x190] sm:$0x3] %vm71, 0.0
    %121 = vst.msk [vmem:[#allocation2 + $0x198] sm:$0xff] %vm68, 0.0
    %122 = vst.msk [vmem:[#allocation2 + $0x1a0] sm:$0xff] %vm68, 0.0
    %123 = vst.msk [vmem:[#allocation2 + $0x1a8] sm:$0x3] %vm71, 0.0
    %124 = vst.msk [vmem:[#allocation2 + $0x1b0] sm:$0xff] %vm68, 0.0
    %125 = vst.msk [vmem:[#allocation2 + $0x1b8] sm:$0xff] %vm68, 0.0
    %126 = vst.msk [vmem:[#allocation2 + $0x1c0] sm:$0x3] %vm71, 0.0
    %127 = vst.msk [vmem:[#allocation2 + $0x1c8] sm:$0xff] %vm68, 0.0
    %128 = vst.msk [vmem:[#allocation2 + $0x1d0] sm:$0xff] %vm68, 0.0
    %129 = vst.msk [vmem:[#allocation2 + $0x1d8] sm:$0x3] %vm71, 0.0
    %130 = vst.msk [vmem:[#allocation2 + $0x1e0] sm:$0xff] %vm68, 0.0
    %131 = vst.msk [vmem:[#allocation2 + $0x1e8] sm:$0xff] %vm68, 0.0
    %132 = vst.msk [vmem:[#allocation2 + $0x1f0] sm:$0x3] %vm71, 0.0
    %133 = vst.msk [vmem:[#allocation2 + $0x1f8] sm:$0xff] %vm68, 0.0
    %134 = vst.msk [vmem:[#allocation2 + $0x200] sm:$0xff] %vm68, 0.0
    %135 = vst.msk [vmem:[#allocation2 + $0x208] sm:$0x3] %vm71, 0.0
    %136 = vst.msk [vmem:[#allocation2 + $0x210] sm:$0xff] %vm68, 0.0
    %137 = vst.msk [vmem:[#allocation2 + $0x218] sm:$0xff] %vm68, 0.0
    %138 = vst.msk [vmem:[#allocation2 + $0x220] sm:$0x3] %vm71, 0.0
    %139 = vst.msk [vmem:[#allocation2 + $0x228] sm:$0xff] %vm68, 0.0
    %140 = vst.msk [vmem:[#allocation2 + $0x230] sm:$0xff] %vm68, 0.0
    %141 = vst.msk [vmem:[#allocation2 + $0x238] sm:$0x3] %vm71, 0.0
    %142 = vst.msk [vmem:[#allocation2 + $0x240] sm:$0xff] %vm68, 0.0
    %143 = vst.msk [vmem:[#allocation2 + $0x248] sm:$0xff] %vm68, 0.0
    %144 = vst.msk [vmem:[#allocation2 + $0x250] sm:$0x3] %vm71, 0.0
    %145 = vst.msk [vmem:[#allocation2 + $0x258] sm:$0xff] %vm68, 0.0
    %146 = vst.msk [vmem:[#allocation2 + $0x260] sm:$0xff] %vm68, 0.0
    %147 = vst.msk [vmem:[#allocation2 + $0x268] sm:$0x3] %vm71, 0.0
    %148 = vst.msk [vmem:[#allocation2 + $0x270] sm:$0xff] %vm68, 0.0
    %149 = vst.msk [vmem:[#allocation2 + $0x278] sm:$0xff] %vm68, 0.0
    %150 = vst.msk [vmem:[#allocation2 + $0x280] sm:$0x3] %vm71, 0.0
    %151 = vst.msk [vmem:[#allocation2 + $0x288] sm:$0xff] %vm68, 0.0
    %152 = vst.msk [vmem:[#allocation2 + $0x290] sm:$0xff] %vm68, 0.0
    %153 = vst.msk [vmem:[#allocation2 + $0x298] sm:$0x3] %vm71, 0.0
    %154 = vst.msk [vmem:[#allocation2 + $0x2a0] sm:$0xff] %vm68, 0.0
    %155 = vst.msk [vmem:[#allocation2 + $0x2a8] sm:$0xff] %vm68, 0.0
    %156 = vst.msk [vmem:[#allocation2 + $0x2b0] sm:$0x3] %vm71, 0.0
    %157 = vst.msk [vmem:[#allocation2 + $0x2b8] sm:$0xff] %vm68, 0.0
    %158 = vst.msk [vmem:[#allocation2 + $0x2c0] sm:$0xff] %vm68, 0.0
    %159 = vst.msk [vmem:[#allocation2 + $0x2c8] sm:$0x3] %vm71, 0.0
    %160 = vst.msk [vmem:[#allocation2 + $0x2d0] sm:$0xff] %vm68, 0.0
    %161 = vst.msk [vmem:[#allocation2 + $0x2d8] sm:$0xff] %vm68, 0.0
    %162 = vst.msk [vmem:[#allocation2 + $0x2e0] sm:$0x3] %vm71, 0.0
    %163 = vst.msk [vmem:[#allocation2 + $0x2e8] sm:$0xff] %vm68, 0.0
    %164 = vst.msk [vmem:[#allocation2 + $0x2f0] sm:$0xff] %vm68, 0.0
    %165 = vst.msk [vmem:[#allocation2 + $0x2f8] sm:$0x3] %vm71, 0.0
    %166 = vst.msk [vmem:[#allocation2 + $0x300] sm:$0xff] %vm68, 0.0
    %167 = vst.msk [vmem:[#allocation2 + $0x308] sm:$0xff] %vm68, 0.0
    %168 = vst.msk [vmem:[#allocation2 + $0x310] sm:$0x3] %vm71, 0.0
    %169 = vst.msk [vmem:[#allocation2 + $0x318] sm:$0xff] %vm68, 0.0
    %170 = vst.msk [vmem:[#allocation2 + $0x320] sm:$0xff] %vm68, 0.0
    %171 = vst.msk [vmem:[#allocation2 + $0x328] sm:$0x3] %vm71, 0.0
    %172 = vst.msk [vmem:[#allocation2 + $0x330] sm:$0xff] %vm68, 0.0
    %173 = vst.msk [vmem:[#allocation2 + $0x338] sm:$0xff] %vm68, 0.0
    %174 = vst.msk [vmem:[#allocation2 + $0x340] sm:$0x3] %vm71, 0.0
    %175 = vst.msk [vmem:[#allocation2 + $0x348] sm:$0xff] %vm68, 0.0
    %176 = vst.msk [vmem:[#allocation2 + $0x350] sm:$0xff] %vm68, 0.0
    %177 = vst.msk [vmem:[#allocation2 + $0x358] sm:$0x3] %vm71, 0.0
    %v178 = vld [vmem:[#allocation3] sm:$0xff]
    %v179 = vld [vmem:[#allocation3 + $0x8] sm:$0xff]
    %v180 = vld [vmem:[#allocation3 + $0x10] sm:$0xff]
    %v181 = vld [vmem:[#allocation3 + $0x18] sm:$0xff]
    %v182 = vld [vmem:[#allocation3 + $0x20] sm:$0xff]
    %v183 = vld [vmem:[#allocation3 + $0x28] sm:$0xff]
    %v184 = vld [vmem:[#allocation3 + $0x30] sm:$0xff]
    %v185 = vld [vmem:[#allocation3 + $0x38] sm:$0xff]
    %v186 = vld [vmem:[#allocation3 + $0x40] sm:$0xff]
    %v187 = vld [vmem:[#allocation3 + $0x48] sm:$0xff]
    %v188 = vld [vmem:[#allocation3 + $0x50] sm:$0xff]
    %v189 = vld [vmem:[#allocation3 + $0x58] sm:$0xff]
    %v190 = vld [vmem:[#allocation3 + $0x60] sm:$0xff]
    %v191 = vld [vmem:[#allocation3 + $0x68] sm:$0xff]
    %v192 = vld [vmem:[#allocation3 + $0x70] sm:$0xff]
    %v193 = vld [vmem:[#allocation3 + $0x78] sm:$0xff]
    %v194 = vld [vmem:[#allocation3 + $0x80] sm:$0xff]
    %v195 = vld [vmem:[#allocation3 + $0x88] sm:$0xff]
    %v196 = vld [vmem:[#allocation3 + $0x90] sm:$0xff]
    %v197 = vld [vmem:[#allocation3 + $0x98] sm:$0xff]
    %v198 = vld [vmem:[#allocation3 + $0xa0] sm:$0xff]
    %v199 = vld [vmem:[#allocation3 + $0xa8] sm:$0xff]
    %v200 = vld [vmem:[#allocation3 + $0xb0] sm:$0xff]
    %v201 = vld [vmem:[#allocation3 + $0xb8] sm:$0xff]
    %v202 = vld [vmem:[#allocation3 + $0xc0] sm:$0xff]
    %v203 = vld [vmem:[#allocation3 + $0xc8] sm:$0xff]
    %v204 = vld [vmem:[#allocation3 + $0xd0] sm:$0xff]
    %v205 = vld [vmem:[#allocation3 + $0xd8] sm:$0xff]
    %v206 = vld [vmem:[#allocation3 + $0xe0] sm:$0xff]
    %v207 = vld [vmem:[#allocation3 + $0xe8] sm:$0xff]
    %v208 = vld [vmem:[#allocation3 + $0xf0] sm:$0xff]
    %v209 = vld [vmem:[#allocation3 + $0xf8] sm:$0xff]
    %v210 = vld [vmem:[#allocation3 + $0x100] sm:$0xff]
    %v211 = vld [vmem:[#allocation3 + $0x108] sm:$0xff]
    %v212 = vld [vmem:[#allocation3 + $0x110] sm:$0xff]
    %v213 = vld [vmem:[#allocation3 + $0x118] sm:$0xff]
    %v214 = vld [vmem:[#allocation3 + $0x120] sm:$0xff]
    %v215 = vld [vmem:[#allocation3 + $0x128] sm:$0xff]
    %v216 = vld [vmem:[#allocation3 + $0x130] sm:$0xff]
    %v217 = vld [vmem:[#allocation3 + $0x138] sm:$0xff]
    %v218 = vld [vmem:[#allocation3 + $0x140] sm:$0xff]
    %v219 = vld [vmem:[#allocation3 + $0x148] sm:$0xff]
    %v220 = vld [vmem:[#allocation3 + $0x150] sm:$0xff]
    %v221 = vld [vmem:[#allocation3 + $0x158] sm:$0xff]
    %v222 = vld [vmem:[#allocation3 + $0x160] sm:$0xff]
    %v223 = vld [vmem:[#allocation3 + $0x168] sm:$0xff]
    %v224 = vld [vmem:[#allocation3 + $0x170] sm:$0xff]
    %v225 = vld [vmem:[#allocation3 + $0x178] sm:$0xff]
    %v226 = vld [vmem:[#allocation3 + $0x180] sm:$0xff]
    %v227 = vld [vmem:[#allocation3 + $0x188] sm:$0xff]
    %v228 = vld [vmem:[#allocation3 + $0x190] sm:$0xff]
    %v229 = vld [vmem:[#allocation3 + $0x198] sm:$0xff]
    %v230 = vld [vmem:[#allocation3 + $0x1a0] sm:$0xff]
    %v231 = vld [vmem:[#allocation3 + $0x1a8] sm:$0xff]
    %v232 = vld [vmem:[#allocation3 + $0x1b0] sm:$0xff]
    %v233 = vld [vmem:[#allocation3 + $0x1b8] sm:$0xff]
    %v234 = vld [vmem:[#allocation3 + $0x1c0] sm:$0xff]
    %v235 = vld [vmem:[#allocation3 + $0x1c8] sm:$0xff]
    %v236 = vld [vmem:[#allocation3 + $0x1d0] sm:$0xff]
    %v237 = vld [vmem:[#allocation3 + $0x1d8] sm:$0xff]
    %v238 = vld [vmem:[#allocation3 + $0x1e0] sm:$0xff]
    %v239 = vld [vmem:[#allocation3 + $0x1e8] sm:$0xff]
    %v240 = vld [vmem:[#allocation3 + $0x1f0] sm:$0xff]
    %v241 = vld [vmem:[#allocation3 + $0x1f8] sm:$0xff]
    %s242 = scalar_lea.vmem [#allocation2], 24
    %243 = vst.msk [vmem:[%s242 + $0x1] sm:$0xff] %vm68, %v178
    %244 = vst.msk [vmem:[%s242 + $0x9] sm:$0xff] %vm68, %v179
    %245 = vst.msk [vmem:[%s242 + $0x19] sm:$0xff] %vm68, %v180
    %246 = vst.msk [vmem:[%s242 + $0x21] sm:$0xff] %vm68, %v181
    %247 = vst.msk [vmem:[%s242 + $0x31] sm:$0xff] %vm68, %v182
    %248 = vst.msk [vmem:[%s242 + $0x39] sm:$0xff] %vm68, %v183
    %249 = vst.msk [vmem:[%s242 + $0x49] sm:$0xff] %vm68, %v184
    %250 = vst.msk [vmem:[%s242 + $0x51] sm:$0xff] %vm68, %v185
    %251 = vst.msk [vmem:[%s242 + $0x61] sm:$0xff] %vm68, %v186
    %252 = vst.msk [vmem:[%s242 + $0x69] sm:$0xff] %vm68, %v187
    %253 = vst.msk [vmem:[%s242 + $0x79] sm:$0xff] %vm68, %v188
    %254 = vst.msk [vmem:[%s242 + $0x81] sm:$0xff] %vm68, %v189
    %255 = vst.msk [vmem:[%s242 + $0x91] sm:$0xff] %vm68, %v190
    %256 = vst.msk [vmem:[%s242 + $0x99] sm:$0xff] %vm68, %v191
    %257 = vst.msk [vmem:[%s242 + $0xa9] sm:$0xff] %vm68, %v192
    %258 = vst.msk [vmem:[%s242 + $0xb1] sm:$0xff] %vm68, %v193
    %259 = vst.msk [vmem:[%s242 + $0xc1] sm:$0xff] %vm68, %v194
    %260 = vst.msk [vmem:[%s242 + $0xc9] sm:$0xff] %vm68, %v195
    %261 = vst.msk [vmem:[%s242 + $0xd9] sm:$0xff] %vm68, %v196
    %262 = vst.msk [vmem:[%s242 + $0xe1] sm:$0xff] %vm68, %v197
    %263 = vst.msk [vmem:[%s242 + $0xf1] sm:$0xff] %vm68, %v198
    %264 = vst.msk [vmem:[%s242 + $0xf9] sm:$0xff] %vm68, %v199
    %265 = vst.msk [vmem:[%s242 + $0x109] sm:$0xff] %vm68, %v200
    %266 = vst.msk [vmem:[%s242 + $0x111] sm:$0xff] %vm68, %v201
    %267 = vst.msk [vmem:[%s242 + $0x121] sm:$0xff] %vm68, %v202
    %268 = vst.msk [vmem:[%s242 + $0x129] sm:$0xff] %vm68, %v203
    %269 = vst.msk [vmem:[%s242 + $0x139] sm:$0xff] %vm68, %v204
    %270 = vst.msk [vmem:[%s242 + $0x141] sm:$0xff] %vm68, %v205
    %271 = vst.msk [vmem:[%s242 + $0x151] sm:$0xff] %vm68, %v206
    %272 = vst.msk [vmem:[%s242 + $0x159] sm:$0xff] %vm68, %v207
    %273 = vst.msk [vmem:[%s242 + $0x169] sm:$0xff] %vm68, %v208
    %274 = vst.msk [vmem:[%s242 + $0x171] sm:$0xff] %vm68, %v209
    %275 = vst.msk [vmem:[%s242 + $0x1b1] sm:$0xff] %vm68, %v210
    %276 = vst.msk [vmem:[%s242 + $0x1b9] sm:$0xff] %vm68, %v211
    %277 = vst.msk [vmem:[%s242 + $0x1c9] sm:$0xff] %vm68, %v212
    %278 = vst.msk [vmem:[%s242 + $0x1d1] sm:$0xff] %vm68, %v213
    %279 = vst.msk [vmem:[%s242 + $0x1e1] sm:$0xff] %vm68, %v214
    %280 = vst.msk [vmem:[%s242 + $0x1e9] sm:$0xff] %vm68, %v215
    %281 = vst.msk [vmem:[%s242 + $0x1f9] sm:$0xff] %vm68, %v216
    %282 = vst.msk [vmem:[%s242 + $0x201] sm:$0xff] %vm68, %v217
    %283 = vst.msk [vmem:[%s242 + $0x211] sm:$0xff] %vm68, %v218
    %284 = vst.msk [vmem:[%s242 + $0x219] sm:$0xff] %vm68, %v219
    %285 = vst.msk [vmem:[%s242 + $0x229] sm:$0xff] %vm68, %v220
    %286 = vst.msk [vmem:[%s242 + $0x231] sm:$0xff] %vm68, %v221
    %287 = vst.msk [vmem:[%s242 + $0x241] sm:$0xff] %vm68, %v222
    %288 = vst.msk [vmem:[%s242 + $0x249] sm:$0xff] %vm68, %v223
    %289 = vst.msk [vmem:[%s242 + $0x259] sm:$0xff] %vm68, %v224
    %290 = vst.msk [vmem:[%s242 + $0x261] sm:$0xff] %vm68, %v225
    %291 = vst.msk [vmem:[%s242 + $0x271] sm:$0xff] %vm68, %v226
    %292 = vst.msk [vmem:[%s242 + $0x279] sm:$0xff] %vm68, %v227
    %293 = vst.msk [vmem:[%s242 + $0x289] sm:$0xff] %vm68, %v228
    %294 = vst.msk [vmem:[%s242 + $0x291] sm:$0xff] %vm68, %v229
    %295 = vst.msk [vmem:[%s242 + $0x2a1] sm:$0xff] %vm68, %v230
    %296 = vst.msk [vmem:[%s242 + $0x2a9] sm:$0xff] %vm68, %v231
    %297 = vst.msk [vmem:[%s242 + $0x2b9] sm:$0xff] %vm68, %v232
    %298 = vst.msk [vmem:[%s242 + $0x2c1] sm:$0xff] %vm68, %v233
    %299 = vst.msk [vmem:[%s242 + $0x2d1] sm:$0xff] %vm68, %v234
    %300 = vst.msk [vmem:[%s242 + $0x2d9] sm:$0xff] %vm68, %v235
    %301 = vst.msk [vmem:[%s242 + $0x2e9] sm:$0xff] %vm68, %v236
    %302 = vst.msk [vmem:[%s242 + $0x2f1] sm:$0xff] %vm68, %v237
    %303 = vst.msk [vmem:[%s242 + $0x301] sm:$0xff] %vm68, %v238
    %304 = vst.msk [vmem:[%s242 + $0x309] sm:$0xff] %vm68, %v239
    %305 = vst.msk [vmem:[%s242 + $0x319] sm:$0xff] %vm68, %v240
    %306 = vst.msk [vmem:[%s242 + $0x321] sm:$0xff] %vm68, %v241
    %v307 = vld [vmem:[#allocation2] sm:$0xff]
    %v308 = vld [vmem:[#allocation2 + $0x8] sm:$0xff]
    %v309 = vld [vmem:[#allocation2 + $0x18] sm:$0xff]
    %v310 = vld [vmem:[#allocation2 + $0x20] sm:$0xff]
    %v311 = vld [vmem:[#allocation2 + $0x30] sm:$0xff]
    %v312 = vld [vmem:[#allocation2 + $0x38] sm:$0xff]
    %v313 = vld [vmem:[#allocation2 + $0x48] sm:$0xff]
    %v314 = vld [vmem:[#allocation2 + $0x50] sm:$0xff]
    %v315 = vld [vmem:[#allocation2 + $0x60] sm:$0xff]
    %v316 = vld [vmem:[#allocation2 + $0x68] sm:$0xff]
    %v317 = vld [vmem:[#allocation2 + $0x78] sm:$0xff]
    %v318 = vld [vmem:[#allocation2 + $0x80] sm:$0xff]
    %v319 = vld [vmem:[#allocation2 + $0x90] sm:$0xff]
    %v320 = vld [vmem:[#allocation2 + $0x98] sm:$0xff]
    %v321 = vld [vmem:[#allocation2 + $0xa8] sm:$0xff]
    %v322 = vld [vmem:[#allocation2 + $0xb0] sm:$0xff]
    %v323 = vld [vmem:[#allocation2 + $0xc0] sm:$0xff]
    %v324 = vld [vmem:[#allocation2 + $0xc8] sm:$0xff]
    %v325 = vld [vmem:[#allocation2 + $0xd8] sm:$0xff]
    %v326 = vld [vmem:[#allocation2 + $0xe0] sm:$0xff]
    %v327 = vld [vmem:[#allocation2 + $0xf0] sm:$0xff]
    %v328 = vld [vmem:[#allocation2 + $0xf8] sm:$0xff]
    %v329 = vld [vmem:[#allocation2 + $0x108] sm:$0xff]
    %v330 = vld [vmem:[#allocation2 + $0x110] sm:$0xff]
    %v331 = vld [vmem:[#allocation2 + $0x120] sm:$0xff]
    %v332 = vld [vmem:[#allocation2 + $0x128] sm:$0xff]
    %v333 = vld [vmem:[#allocation2 + $0x138] sm:$0xff]
    %v334 = vld [vmem:[#allocation2 + $0x140] sm:$0xff]
    %v335 = vld [vmem:[#allocation2 + $0x150] sm:$0xff]
    %v336 = vld [vmem:[#allocation2 + $0x158] sm:$0xff]
    %v337 = vld [vmem:[#allocation2 + $0x168] sm:$0xff]
    %v338 = vld [vmem:[#allocation2 + $0x170] sm:$0xff]
    %v339 = vld [vmem:[#allocation2 + $0x1b0] sm:$0xff]
    %v340 = vld [vmem:[#allocation2 + $0x1b8] sm:$0xff]
    %v341 = vld [vmem:[#allocation2 + $0x1c8] sm:$0xff]
    %v342 = vld [vmem:[#allocation2 + $0x1d0] sm:$0xff]
    %v343 = vld [vmem:[#allocation2 + $0x1e0] sm:$0xff]
    %v344 = vld [vmem:[#allocation2 + $0x1e8] sm:$0xff]
    %v345 = vld [vmem:[#allocation2 + $0x1f8] sm:$0xff]
    %v346 = vld [vmem:[#allocation2 + $0x200] sm:$0xff]
    %v347 = vld [vmem:[#allocation2 + $0x210] sm:$0xff]
    %v348 = vld [vmem:[#allocation2 + $0x218] sm:$0xff]
    %v349 = vld [vmem:[#allocation2 + $0x228] sm:$0xff]
    %v350 = vld [vmem:[#allocation2 + $0x230] sm:$0xff]
    %v351 = vld [vmem:[#allocation2 + $0x240] sm:$0xff]
    %v352 = vld [vmem:[#allocation2 + $0x248] sm:$0xff]
    %v353 = vld [vmem:[#allocation2 + $0x258] sm:$0xff]
    %v354 = vld [vmem:[#allocation2 + $0x260] sm:$0xff]
    %v355 = vld [vmem:[#allocation2 + $0x270] sm:$0xff]
    %v356 = vld [vmem:[#allocation2 + $0x278] sm:$0xff]
    %v357 = vld [vmem:[#allocation2 + $0x288] sm:$0xff]
    %v358 = vld [vmem:[#allocation2 + $0x290] sm:$0xff]
    %v359 = vld [vmem:[#allocation2 + $0x2a0] sm:$0xff]
    %v360 = vld [vmem:[#allocation2 + $0x2a8] sm:$0xff]
    %v361 = vld [vmem:[#allocation2 + $0x2b8] sm:$0xff]
    %v362 = vld [vmem:[#allocation2 + $0x2c0] sm:$0xff]
    %v363 = vld [vmem:[#allocation2 + $0x2d0] sm:$0xff]
    %v364 = vld [vmem:[#allocation2 + $0x2d8] sm:$0xff]
    %v365 = vld [vmem:[#allocation2 + $0x2e8] sm:$0xff]
    %v366 = vld [vmem:[#allocation2 + $0x2f0] sm:$0xff]
    %v367 = vld [vmem:[#allocation2 + $0x300] sm:$0xff]
    %v368 = vld [vmem:[#allocation2 + $0x308] sm:$0xff]
    %v369 = vld [vmem:[#allocation2 + $0x318] sm:$0xff]
    %v370 = vld [vmem:[#allocation2 + $0x320] sm:$0xff]
    %v371 = vpack.c.bf16 %v308, %v307
    %v372 = vpack.c.bf16 %v310, %v309
    %v373 = vpack.c.bf16 %v312, %v311
    %v374 = vpack.c.bf16 %v314, %v313
    %v375 = vpack.c.bf16 %v316, %v315
    %v376 = vpack.c.bf16 %v318, %v317
    %v377 = vpack.c.bf16 %v320, %v319
    %v378 = vpack.c.bf16 %v322, %v321
    %v379 = vpack.c.bf16 %v324, %v323
    %v380 = vpack.c.bf16 %v326, %v325
    %v381 = vpack.c.bf16 %v328, %v327
    %v382 = vpack.c.bf16 %v330, %v329
    %v383 = vpack.c.bf16 %v332, %v331
    %v384 = vpack.c.bf16 %v334, %v333
    %v385 = vpack.c.bf16 %v336, %v335
    %v386 = vpack.c.bf16 %v338, %v337
    %v387 = vpack.c.bf16 %v340, %v339
    %v388 = vpack.c.bf16 %v342, %v341
    %v389 = vpack.c.bf16 %v344, %v343
    %v390 = vpack.c.bf16 %v346, %v345
    %v391 = vpack.c.bf16 %v348, %v347
    %v392 = vpack.c.bf16 %v350, %v349
    %v393 = vpack.c.bf16 %v352, %v351
    %v394 = vpack.c.bf16 %v354, %v353
    %v395 = vpack.c.bf16 %v356, %v355
    %v396 = vpack.c.bf16 %v358, %v357
    %v397 = vpack.c.bf16 %v360, %v359
    %v398 = vpack.c.bf16 %v362, %v361
    %v399 = vpack.c.bf16 %v364, %v363
    %v400 = vpack.c.bf16 %v366, %v365
    %v401 = vpack.c.bf16 %v368, %v367
    %v402 = vpack.c.bf16 %v370, %v369
    %v403 = vld [vmem:[#allocation5] sm:$0xf]
    %v404 = vld [vmem:[#allocation5 + $0x4] sm:$0xf]
    %v405 = vld [vmem:[#allocation5 + $0x8] sm:$0xf]
    %v406 = vld [vmem:[#allocation5 + $0xc] sm:$0xf]
    %v407 = vld [vmem:[#allocation2 + $0x1] sm:$0xff]
    %v408 = vld [vmem:[#allocation2 + $0x9] sm:$0xff]
    %v409 = vld [vmem:[#allocation2 + $0x19] sm:$0xff]
    %v410 = vld [vmem:[#allocation2 + $0x21] sm:$0xff]
    %v411 = vld [vmem:[#allocation2 + $0x31] sm:$0xff]
    %v412 = vld [vmem:[#allocation2 + $0x39] sm:$0xff]
    %v413 = vld [vmem:[#allocation2 + $0x49] sm:$0xff]
    %v414 = vld [vmem:[#allocation2 + $0x51] sm:$0xff]
    %v415 = vld [vmem:[#allocation2 + $0x61] sm:$0xff]
    %v416 = vld [vmem:[#allocation2 + $0x69] sm:$0xff]
    %v417 = vld [vmem:[#allocation2 + $0x79] sm:$0xff]
    %v418 = vld [vmem:[#allocation2 + $0x81] sm:$0xff]
    %v419 = vld [vmem:[#allocation2 + $0x91] sm:$0xff]
    %v420 = vld [vmem:[#allocation2 + $0x99] sm:$0xff]
    %v421 = vld [vmem:[#allocation2 + $0xa9] sm:$0xff]
    %v422 = vld [vmem:[#allocation2 + $0xb1] sm:$0xff]
    %v423 = vld [vmem:[#allocation2 + $0xc1] sm:$0xff]
    %v424 = vld [vmem:[#allocation2 + $0xc9] sm:$0xff]
    %v425 = vld [vmem:[#allocation2 + $0xd9] sm:$0xff]
    %v426 = vld [vmem:[#allocation2 + $0xe1] sm:$0xff]
    %v427 = vld [vmem:[#allocation2 + $0xf1] sm:$0xff]
    %v428 = vld [vmem:[#allocation2 + $0xf9] sm:$0xff]
    %v429 = vld [vmem:[#allocation2 + $0x109] sm:$0xff]
    %v430 = vld [vmem:[#allocation2 + $0x111] sm:$0xff]
    %v431 = vld [vmem:[#allocation2 + $0x121] sm:$0xff]
    %v432 = vld [vmem:[#allocation2 + $0x129] sm:$0xff]
    %v433 = vld [vmem:[#allocation2 + $0x139] sm:$0xff]
    %v434 = vld [vmem:[#allocation2 + $0x141] sm:$0xff]
    %v435 = vld [vmem:[#allocation2 + $0x151] sm:$0xff]
    %v436 = vld [vmem:[#allocation2 + $0x159] sm:$0xff]
    %v437 = vld [vmem:[#allocation2 + $0x169] sm:$0xff]
    %v438 = vld [vmem:[#allocation2 + $0x171] sm:$0xff]
    %v439 = vld [vmem:[#allocation2 + $0x1b1] sm:$0xff]
    %v440 = vld [vmem:[#allocation2 + $0x1b9] sm:$0xff]
    %v441 = vld [vmem:[#allocation2 + $0x1c9] sm:$0xff]
    %v442 = vld [vmem:[#allocation2 + $0x1d1] sm:$0xff]
    %v443 = vld [vmem:[#allocation2 + $0x1e1] sm:$0xff]
    %v444 = vld [vmem:[#allocation2 + $0x1e9] sm:$0xff]
    %v445 = vld [vmem:[#allocation2 + $0x1f9] sm:$0xff]
    %v446 = vld [vmem:[#allocation2 + $0x201] sm:$0xff]
    %v447 = vld [vmem:[#allocation2 + $0x211] sm:$0xff]
    %v448 = vld [vmem:[#allocation2 + $0x219] sm:$0xff]
    %v449 = vld [vmem:[#allocation2 + $0x229] sm:$0xff]
    %v450 = vld [vmem:[#allocation2 + $0x231] sm:$0xff]
    %v451 = vld [vmem:[#allocation2 + $0x241] sm:$0xff]
    %v452 = vld [vmem:[#allocation2 + $0x249] sm:$0xff]
    %v453 = vld [vmem:[#allocation2 + $0x259] sm:$0xff]
    %v454 = vld [vmem:[#allocation2 + $0x261] sm:$0xff]
    %v455 = vld [vmem:[#allocation2 + $0x271] sm:$0xff]
    %v456 = vld [vmem:[#allocation2 + $0x279] sm:$0xff]
    %v457 = vld [vmem:[#allocation2 + $0x289] sm:$0xff]
    %v458 = vld [vmem:[#allocation2 + $0x291] sm:$0xff]
    %v459 = vld [vmem:[#allocation2 + $0x2a1] sm:$0xff]
    %v460 = vld [vmem:[#allocation2 + $0x2a9] sm:$0xff]
    %v461 = vld [vmem:[#allocation2 + $0x2b9] sm:$0xff]
    %v462 = vld [vmem:[#allocation2 + $0x2c1] sm:$0xff]
    %v463 = vld [vmem:[#allocation2 + $0x2d1] sm:$0xff]
    %v464 = vld [vmem:[#allocation2 + $0x2d9] sm:$0xff]
    %v465 = vld [vmem:[#allocation2 + $0x2e9] sm:$0xff]
    %v466 = vld [vmem:[#allocation2 + $0x2f1] sm:$0xff]
    %v467 = vld [vmem:[#allocation2 + $0x301] sm:$0xff]
    %v468 = vld [vmem:[#allocation2 + $0x309] sm:$0xff]
    %v469 = vld [vmem:[#allocation2 + $0x319] sm:$0xff]
    %v470 = vld [vmem:[#allocation2 + $0x321] sm:$0xff]
    %v471 = vpack.c.bf16 %v408, %v407
    %v472 = vpack.c.bf16 %v410, %v409
    %v473 = vpack.c.bf16 %v412, %v411
    %v474 = vpack.c.bf16 %v414, %v413
    %v475 = vpack.c.bf16 %v416, %v415
    %v476 = vpack.c.bf16 %v418, %v417
    %v477 = vpack.c.bf16 %v420, %v419
    %v478 = vpack.c.bf16 %v422, %v421
    %v479 = vpack.c.bf16 %v424, %v423
    %v480 = vpack.c.bf16 %v426, %v425
    %v481 = vpack.c.bf16 %v428, %v427
    %v482 = vpack.c.bf16 %v430, %v429
    %v483 = vpack.c.bf16 %v432, %v431
    %v484 = vpack.c.bf16 %v434, %v433
    %v485 = vpack.c.bf16 %v436, %v435
    %v486 = vpack.c.bf16 %v438, %v437
    %v487 = vpack.c.bf16 %v440, %v439
    %v488 = vpack.c.bf16 %v442, %v441
    %v489 = vpack.c.bf16 %v444, %v443
    %v490 = vpack.c.bf16 %v446, %v445
    %v491 = vpack.c.bf16 %v448, %v447
    %v492 = vpack.c.bf16 %v450, %v449
    %v493 = vpack.c.bf16 %v452, %v451
    %v494 = vpack.c.bf16 %v454, %v453
    %v495 = vpack.c.bf16 %v456, %v455
    %v496 = vpack.c.bf16 %v458, %v457
    %v497 = vpack.c.bf16 %v460, %v459
    %v498 = vpack.c.bf16 %v462, %v461
    %v499 = vpack.c.bf16 %v464, %v463
    %v500 = vpack.c.bf16 %v466, %v465
    %v501 = vpack.c.bf16 %v468, %v467
    %v502 = vpack.c.bf16 %v470, %v469
    %s503 = scalar_lea.vmem [#allocation5], 16
    %v504 = vld [vmem:[%s503] sm:$0xf]
    %v505 = vld [vmem:[%s503 + $0x4] sm:$0xf]
    %v506 = vld [vmem:[%s503 + $0x8] sm:$0xf]
    %v507 = vld [vmem:[%s503 + $0xc] sm:$0xf]
    %v512 = vunpack.c.l.b16 %v504
    %v513 = vunpack.c.l.b16 %v505
    %v514 = vunpack.c.l.b16 %v506
    %v515 = vunpack.c.l.b16 %v507
    %v516 = vpack.c.b16 %v513, %v512
    %v517 = vpack.c.b16 %v515, %v514
    %v521 = vsel %vm68, %v471, 0
    %v524 = vsel %vm68, %v472, 0
    %v527 = vsel %vm68, %v473, 0
    %v530 = vsel %vm68, %v474, 0
    %v533 = vsel %vm68, %v475, 0
    %v536 = vsel %vm68, %v476, 0
    %v539 = vsel %vm68, %v477, 0
    %v542 = vsel %vm68, %v478, 0
    %v545 = vsel %vm68, %v479, 0
    %v548 = vsel %vm68, %v480, 0
    %v551 = vsel %vm68, %v481, 0
    %v554 = vsel %vm68, %v482, 0
    %v557 = vsel %vm68, %v483, 0
    %v560 = vsel %vm68, %v484, 0
    %v563 = vsel %vm68, %v485, 0
    %v566 = vsel %vm68, %v486, 0
    %v569 = vsel %vm68, %v487, 0
    %v572 = vsel %vm68, %v488, 0
    %v575 = vsel %vm68, %v489, 0
    %v578 = vsel %vm68, %v490, 0
    %v581 = vsel %vm68, %v491, 0
    %v584 = vsel %vm68, %v492, 0
    %v587 = vsel %vm68, %v493, 0
    %v590 = vsel %vm68, %v494, 0
    %v593 = vsel %vm68, %v495, 0
    %v596 = vsel %vm68, %v496, 0
    %v599 = vsel %vm68, %v497, 0
    %v602 = vsel %vm68, %v498, 0
    %v605 = vsel %vm68, %v499, 0
    %v608 = vsel %vm68, %v500, 0
    %v611 = vsel %vm68, %v501, 0
    %v614 = vsel %vm68, %v502, 0
    %616 = vmatprep.subr.bf16.mxu0 0
    %617 = vmatpush1.bf16.msra.mxu0 %v516
    %618 = vmatprep.subr.bf16.mxu0 0
    %619 = vmatpush1.bf16.msra.mxu0 %v517
    %620 = vmatprep.subr.bf16.mxu0 0
    %621 = vmatpush1.bf16.msra.mxu0 0
    %622 = vmatprep.subr.bf16.mxu0 0
    %623 = vmatpush1.bf16.msra.mxu0 0
    %624 = vmatprep.subr.bf16.mxu0 0
    %625 = vmatpush1.bf16.msra.mxu0 0
    %626 = vmatprep.subr.bf16.mxu0 0
    %627 = vmatpush1.bf16.msra.mxu0 0
    %628 = vmatprep.subr.bf16.mxu0 0
    %629 = vmatpush1.bf16.msra.mxu0 0
    %630 = vmatprep.subr.bf16.mxu0 0
    %631 = vmatpush1.bf16.msra.mxu0 0
    %632 = vmatprep.subr.bf16.mxu0 0
    %633 = vmatpush1.bf16.msra.mxu0 0
    %634 = vmatprep.subr.bf16.mxu0 0
    %635 = vmatpush1.bf16.msra.mxu0 0
    %636 = vmatprep.subr.bf16.mxu0 0
    %637 = vmatpush1.bf16.msra.mxu0 0
    %638 = vmatprep.subr.bf16.mxu0 0
    %639 = vmatpush1.bf16.msra.mxu0 0
    %640 = vmatprep.subr.bf16.mxu0 0
    %641 = vmatpush1.bf16.msra.mxu0 0
    %642 = vmatprep.subr.bf16.mxu0 0
    %643 = vmatpush1.bf16.msra.mxu0 0
    %644 = vmatprep.subr.bf16.mxu0 0
    %645 = vmatpush1.bf16.msra.mxu0 0
    %646 = vmatprep.subr.bf16.mxu0 0
    %647 = vmatpush1.bf16.msra.mxu0 0
    %648 = vmatprep.mubr.bf16.mxu0 0
    %649 = vmatmul.mubr.bf16.gmra.mrb[0].mxu0 %v521
    %v650 = vpop.f32.mrb[0].mxu0
    %v651 = vadd.f32 0.0, %v650
    %v652 = vpop.f32.mrb[0].mxu0
    %v653 = vpop.f32.mrb[0].mxu0
    %v654 = vadd.f32 0.0, %v653
    %v655 = vpop.f32.mrb[0].mxu0
    %656 = vmatprep.mubr.bf16.mxu0 0
    %657 = vmatmul.mubr.bf16.gmra.mrb[0].mxu0 %v524
    %v658 = vpop.f32.mrb[0].mxu0
    %v659 = vadd.f32 0.0, %v658
    %v660 = vpop.f32.mrb[0].mxu0
    %v661 = vpop.f32.mrb[0].mxu0
    %v662 = vadd.f32 0.0, %v661
    %v663 = vpop.f32.mrb[0].mxu0
    %664 = vmatprep.mubr.bf16.mxu0 0
    %665 = vmatmul.mubr.bf16.gmra.mrb[0].mxu0 %v527
    %v666 = vpop.f32.mrb[0].mxu0
    %v667 = vadd.f32 0.0, %v666
    %v668 = vpop.f32.mrb[0].mxu0
    %v669 = vpop.f32.mrb[0].mxu0
    %v670 = vadd.f32 0.0, %v669
    %v671 = vpop.f32.mrb[0].mxu0
    %672 = vmatprep.mubr.bf16.mxu0 0
    %673 = vmatmul.mubr.bf16.gmra.mrb[0].mxu0 %v530
    %v674 = vpop.f32.mrb[0].mxu0
    %v675 = vadd.f32 0.0, %v674
    %v676 = vpop.f32.mrb[0].mxu0
    %v677 = vpop.f32.mrb[0].mxu0
    %v678 = vadd.f32 0.0, %v677
    %v679 = vpop.f32.mrb[0].mxu0
    %680 = vmatprep.mubr.bf16.mxu0 0
    %681 = vmatmul.mubr.bf16.gmra.mrb[0].mxu0 %v533
    %v682 = vpop.f32.mrb[0].mxu0
    %v683 = vadd.f32 0.0, %v682
    %v684 = vpop.f32.mrb[0].mxu0
    %v685 = vpop.f32.mrb[0].mxu0
    %v686 = vadd.f32 0.0, %v685
    %v687 = vpop.f32.mrb[0].mxu0
    %688 = vmatprep.mubr.bf16.mxu0 0
    %689 = vmatmul.mubr.bf16.gmra.mrb[0].mxu0 %v536
    %v690 = vpop.f32.mrb[0].mxu0
    %v691 = vadd.f32 0.0, %v690
    %v692 = vpop.f32.mrb[0].mxu0
    %v693 = vpop.f32.mrb[0].mxu0
    %v694 = vadd.f32 0.0, %v693
    %v695 = vpop.f32.mrb[0].mxu0
    %696 = vmatprep.mubr.bf16.mxu0 0
    %697 = vmatmul.mubr.bf16.gmra.mrb[0].mxu0 %v539
    %v698 = vpop.f32.mrb[0].mxu0
    %v699 = vadd.f32 0.0, %v698
    %v700 = vpop.f32.mrb[0].mxu0
    %v701 = vpop.f32.mrb[0].mxu0
    %v702 = vadd.f32 0.0, %v701
    %v703 = vpop.f32.mrb[0].mxu0
    %704 = vmatprep.mubr.bf16.mxu0 0
    %705 = vmatmul.mubr.bf16.gmra.mrb[0].mxu0 %v542
    %v706 = vpop.f32.mrb[0].mxu0
    %v707 = vadd.f32 0.0, %v706
    %v708 = vpop.f32.mrb[0].mxu0
    %v709 = vpop.f32.mrb[0].mxu0
    %v710 = vadd.f32 0.0, %v709
    %v711 = vpop.f32.mrb[0].mxu0
    %712 = vmatprep.mubr.bf16.mxu0 0
    %713 = vmatmul.mubr.bf16.gmra.mrb[0].mxu0 %v545
    %v714 = vpop.f32.mrb[0].mxu0
    %v715 = vadd.f32 0.0, %v714
    %v716 = vpop.f32.mrb[0].mxu0
    %v717 = vpop.f32.mrb[0].mxu0
    %v718 = vadd.f32 0.0, %v717
    %v719 = vpop.f32.mrb[0].mxu0
    %720 = vmatprep.mubr.bf16.mxu0 0
    %721 = vmatmul.mubr.bf16.gmra.mrb[0].mxu0 %v548
    %v722 = vpop.f32.mrb[0].mxu0
    %v723 = vadd.f32 0.0, %v722
    %v724 = vpop.f32.mrb[0].mxu0
    %v725 = vpop.f32.mrb[0].mxu0
    %v726 = vadd.f32 0.0, %v725
    %v727 = vpop.f32.mrb[0].mxu0
    %728 = vmatprep.mubr.bf16.mxu0 0
    %729 = vmatmul.mubr.bf16.gmra.mrb[0].mxu0 %v551
    %v730 = vpop.f32.mrb[0].mxu0
    %v731 = vadd.f32 0.0, %v730
    %v732 = vpop.f32.mrb[0].mxu0
    %v733 = vpop.f32.mrb[0].mxu0
    %v734 = vadd.f32 0.0, %v733
    %v735 = vpop.f32.mrb[0].mxu0
    %736 = vmatprep.mubr.bf16.mxu0 0
    %737 = vmatmul.mubr.bf16.gmra.mrb[0].mxu0 %v554
    %v738 = vpop.f32.mrb[0].mxu0
    %v739 = vadd.f32 0.0, %v738
    %v740 = vpop.f32.mrb[0].mxu0
    %v741 = vpop.f32.mrb[0].mxu0
    %v742 = vadd.f32 0.0, %v741
    %v743 = vpop.f32.mrb[0].mxu0
    %744 = vmatprep.mubr.bf16.mxu0 0
    %745 = vmatmul.mubr.bf16.gmra.mrb[0].mxu0 %v557
    %v746 = vpop.f32.mrb[0].mxu0
    %v747 = vadd.f32 0.0, %v746
    %v748 = vpop.f32.mrb[0].mxu0
    %v749 = vpop.f32.mrb[0].mxu0
    %v750 = vadd.f32 0.0, %v749
    %v751 = vpop.f32.mrb[0].mxu0
    %752 = vmatprep.mubr.bf16.mxu0 0
    %753 = vmatmul.mubr.bf16.gmra.mrb[0].mxu0 %v560
    %v754 = vpop.f32.mrb[0].mxu0
    %v755 = vadd.f32 0.0, %v754
    %v756 = vpop.f32.mrb[0].mxu0
    %v757 = vpop.f32.mrb[0].mxu0
    %v758 = vadd.f32 0.0, %v757
    %v759 = vpop.f32.mrb[0].mxu0
    %760 = vmatprep.mubr.bf16.mxu0 0
    %761 = vmatmul.mubr.bf16.gmra.mrb[0].mxu0 %v563
    %v762 = vpop.f32.mrb[0].mxu0
    %v763 = vadd.f32 0.0, %v762
    %v764 = vpop.f32.mrb[0].mxu0
    %v765 = vpop.f32.mrb[0].mxu0
    %v766 = vadd.f32 0.0, %v765
    %v767 = vpop.f32.mrb[0].mxu0
    %768 = vmatprep.mubr.bf16.mxu0 0
    %769 = vmatmul.mubr.bf16.gmra.mrb[0].mxu0 %v566
    %v770 = vpop.f32.mrb[0].mxu0
    %v771 = vadd.f32 0.0, %v770
    %v772 = vpop.f32.mrb[0].mxu0
    %v773 = vpop.f32.mrb[0].mxu0
    %v774 = vadd.f32 0.0, %v773
    %v775 = vpop.f32.mrb[0].mxu0
    %776 = vmatprep.mubr.bf16.mxu0 0
    %777 = vmatmul.mubr.bf16.gmra.mrb[0].mxu0 %v569
    %v778 = vpop.f32.mrb[0].mxu0
    %v779 = vadd.f32 0.0, %v778
    %v780 = vpop.f32.mrb[0].mxu0
    %v781 = vpop.f32.mrb[0].mxu0
    %v782 = vadd.f32 0.0, %v781
    %v783 = vpop.f32.mrb[0].mxu0
    %784 = vmatprep.mubr.bf16.mxu0 0
    %785 = vmatmul.mubr.bf16.gmra.mrb[0].mxu0 %v572
    %v786 = vpop.f32.mrb[0].mxu0
    %v787 = vadd.f32 0.0, %v786
    %v788 = vpop.f32.mrb[0].mxu0
    %v789 = vpop.f32.mrb[0].mxu0
    %v790 = vadd.f32 0.0, %v789
    %v791 = vpop.f32.mrb[0].mxu0
    %792 = vmatprep.mubr.bf16.mxu0 0
    %793 = vmatmul.mubr.bf16.gmra.mrb[0].mxu0 %v575
    %v794 = vpop.f32.mrb[0].mxu0
    %v795 = vadd.f32 0.0, %v794
    %v796 = vpop.f32.mrb[0].mxu0
    %v797 = vpop.f32.mrb[0].mxu0
    %v798 = vadd.f32 0.0, %v797
    %v799 = vpop.f32.mrb[0].mxu0
    %800 = vmatprep.mubr.bf16.mxu0 0
    %801 = vmatmul.mubr.bf16.gmra.mrb[0].mxu0 %v578
    %v802 = vpop.f32.mrb[0].mxu0
    %v803 = vadd.f32 0.0, %v802
    %v804 = vpop.f32.mrb[0].mxu0
    %v805 = vpop.f32.mrb[0].mxu0
    %v806 = vadd.f32 0.0, %v805
    %v807 = vpop.f32.mrb[0].mxu0
    %808 = vmatprep.mubr.bf16.mxu0 0
    %809 = vmatmul.mubr.bf16.gmra.mrb[0].mxu0 %v581
    %v810 = vpop.f32.mrb[0].mxu0
    %v811 = vadd.f32 0.0, %v810
    %v812 = vpop.f32.mrb[0].mxu0
    %v813 = vpop.f32.mrb[0].mxu0
    %v814 = vadd.f32 0.0, %v813
    %v815 = vpop.f32.mrb[0].mxu0
    %816 = vmatprep.mubr.bf16.mxu0 0
    %817 = vmatmul.mubr.bf16.gmra.mrb[0].mxu0 %v584
    %v818 = vpop.f32.mrb[0].mxu0
    %v819 = vadd.f32 0.0, %v818
    %v820 = vpop.f32.mrb[0].mxu0
    %v821 = vpop.f32.mrb[0].mxu0
    %v822 = vadd.f32 0.0, %v821
    %v823 = vpop.f32.mrb[0].mxu0
    %824 = vmatprep.mubr.bf16.mxu0 0
    %825 = vmatmul.mubr.bf16.gmra.mrb[0].mxu0 %v587
    %v826 = vpop.f32.mrb[0].mxu0
    %v827 = vadd.f32 0.0, %v826
    %v828 = vpop.f32.mrb[0].mxu0
    %v829 = vpop.f32.mrb[0].mxu0
    %v830 = vadd.f32 0.0, %v829
    %v831 = vpop.f32.mrb[0].mxu0
    %832 = vmatprep.mubr.bf16.mxu0 0
    %833 = vmatmul.mubr.bf16.gmra.mrb[0].mxu0 %v590
    %v834 = vpop.f32.mrb[0].mxu0
    %v835 = vadd.f32 0.0, %v834
    %v836 = vpop.f32.mrb[0].mxu0
    %v837 = vpop.f32.mrb[0].mxu0
    %v838 = vadd.f32 0.0, %v837
    %v839 = vpop.f32.mrb[0].mxu0
    %840 = vmatprep.mubr.bf16.mxu0 0
    %841 = vmatmul.mubr.bf16.gmra.mrb[0].mxu0 %v593
    %v842 = vpop.f32.mrb[0].mxu0
    %v843 = vadd.f32 0.0, %v842
    %v844 = vpop.f32.mrb[0].mxu0
    %v845 = vpop.f32.mrb[0].mxu0
    %v846 = vadd.f32 0.0, %v845
    %v847 = vpop.f32.mrb[0].mxu0
    %848 = vmatprep.mubr.bf16.mxu0 0
    %849 = vmatmul.mubr.bf16.gmra.mrb[0].mxu0 %v596
    %v850 = vpop.f32.mrb[0].mxu0
    %v851 = vadd.f32 0.0, %v850
    %v852 = vpop.f32.mrb[0].mxu0
    %v853 = vpop.f32.mrb[0].mxu0
    %v854 = vadd.f32 0.0, %v853
    %v855 = vpop.f32.mrb[0].mxu0
    %856 = vmatprep.mubr.bf16.mxu0 0
    %857 = vmatmul.mubr.bf16.gmra.mrb[0].mxu0 %v599
    %v858 = vpop.f32.mrb[0].mxu0
    %v859 = vadd.f32 0.0, %v858
    %v860 = vpop.f32.mrb[0].mxu0
    %v861 = vpop.f32.mrb[0].mxu0
    %v862 = vadd.f32 0.0, %v861
    %v863 = vpop.f32.mrb[0].mxu0
    %864 = vmatprep.mubr.bf16.mxu0 0
    %865 = vmatmul.mubr.bf16.gmra.mrb[0].mxu0 %v602
    %v866 = vpop.f32.mrb[0].mxu0
    %v867 = vadd.f32 0.0, %v866
    %v868 = vpop.f32.mrb[0].mxu0
    %v869 = vpop.f32.mrb[0].mxu0
    %v870 = vadd.f32 0.0, %v869
    %v871 = vpop.f32.mrb[0].mxu0
    %872 = vmatprep.mubr.bf16.mxu0 0
    %873 = vmatmul.mubr.bf16.gmra.mrb[0].mxu0 %v605
    %v874 = vpop.f32.mrb[0].mxu0
    %v875 = vadd.f32 0.0, %v874
    %v876 = vpop.f32.mrb[0].mxu0
    %v877 = vpop.f32.mrb[0].mxu0
    %v878 = vadd.f32 0.0, %v877
    %v879 = vpop.f32.mrb[0].mxu0
    %880 = vmatprep.mubr.bf16.mxu0 0
    %881 = vmatmul.mubr.bf16.gmra.mrb[0].mxu0 %v608
    %v882 = vpop.f32.mrb[0].mxu0
    %v883 = vadd.f32 0.0, %v882
    %v884 = vpop.f32.mrb[0].mxu0
    %v885 = vpop.f32.mrb[0].mxu0
    %v886 = vadd.f32 0.0, %v885
    %v887 = vpop.f32.mrb[0].mxu0
    %888 = vmatprep.mubr.bf16.mxu0 0
    %889 = vmatmul.mubr.bf16.gmra.mrb[0].mxu0 %v611
    %v890 = vpop.f32.mrb[0].mxu0
    %v891 = vadd.f32 0.0, %v890
    %v892 = vpop.f32.mrb[0].mxu0
    %v893 = vpop.f32.mrb[0].mxu0
    %v894 = vadd.f32 0.0, %v893
    %v895 = vpop.f32.mrb[0].mxu0
    %896 = vmatprep.mubr.bf16.mxu0 0
    %897 = vmatmul.mubr.bf16.gmra.mrb[0].mxu0 %v614
    %v898 = vpop.f32.mrb[0].mxu0
    %v899 = vadd.f32 0.0, %v898
    %v900 = vpop.f32.mrb[0].mxu0
    %v901 = vpop.f32.mrb[0].mxu0
    %v902 = vadd.f32 0.0, %v901
    %v903 = vpop.f32.mrb[0].mxu0
    %904 = vdwg.mxu0
    %v909 = vunpack.c.l.b16 %v403
    %v910 = vunpack.c.l.b16 %v404
    %v911 = vunpack.c.l.b16 %v405
    %v912 = vunpack.c.l.b16 %v406
    %v913 = vpack.c.b16 %v910, %v909
    %v914 = vpack.c.b16 %v912, %v911
    %v918 = vsel %vm68, %v371, 0
    %v921 = vsel %vm68, %v372, 0
    %v924 = vsel %vm68, %v373, 0
    %v927 = vsel %vm68, %v374, 0
    %v930 = vsel %vm68, %v375, 0
    %v933 = vsel %vm68, %v376, 0
    %v936 = vsel %vm68, %v377, 0
    %v939 = vsel %vm68, %v378, 0
    %v942 = vsel %vm68, %v379, 0
    %v945 = vsel %vm68, %v380, 0
    %v948 = vsel %vm68, %v381, 0
    %v951 = vsel %vm68, %v382, 0
    %v954 = vsel %vm68, %v383, 0
    %v957 = vsel %vm68, %v384, 0
    %v960 = vsel %vm68, %v385, 0
    %v963 = vsel %vm68, %v386, 0
    %v966 = vsel %vm68, %v387, 0
    %v969 = vsel %vm68, %v388, 0
    %v972 = vsel %vm68, %v389, 0
    %v975 = vsel %vm68, %v390, 0
    %v978 = vsel %vm68, %v391, 0
    %v981 = vsel %vm68, %v392, 0
    %v984 = vsel %vm68, %v393, 0
    %v987 = vsel %vm68, %v394, 0
    %v990 = vsel %vm68, %v395, 0
    %v993 = vsel %vm68, %v396, 0
    %v996 = vsel %vm68, %v397, 0
    %v999 = vsel %vm68, %v398, 0
    %v1002 = vsel %vm68, %v399, 0
    %v1005 = vsel %vm68, %v400, 0
    %v1008 = vsel %vm68, %v401, 0
    %v1011 = vsel %vm68, %v402, 0
    %1013 = vmatprep.subr.bf16.mxu0 0
    %1014 = vmatpush1.bf16.msra.mxu0 %v913
    %1015 = vmatprep.subr.bf16.mxu0 0
    %1016 = vmatpush1.bf16.msra.mxu0 %v914
    %1017 = vmatprep.subr.bf16.mxu0 0
    %1018 = vmatpush1.bf16.msra.mxu0 0
    %1019 = vmatprep.subr.bf16.mxu0 0
    %1020 = vmatpush1.bf16.msra.mxu0 0
    %1021 = vmatprep.subr.bf16.mxu0 0
    %1022 = vmatpush1.bf16.msra.mxu0 0
    %1023 = vmatprep.subr.bf16.mxu0 0
    %1024 = vmatpush1.bf16.msra.mxu0 0
    %1025 = vmatprep.subr.bf16.mxu0 0
    %1026 = vmatpush1.bf16.msra.mxu0 0
    %1027 = vmatprep.subr.bf16.mxu0 0
    %1028 = vmatpush1.bf16.msra.mxu0 0
    %1029 = vmatprep.subr.bf16.mxu0 0
    %1030 = vmatpush1.bf16.msra.mxu0 0
    %1031 = vmatprep.subr.bf16.mxu0 0
    %1032 = vmatpush1.bf16.msra.mxu0 0
    %1033 = vmatprep.subr.bf16.mxu0 0
    %1034 = vmatpush1.bf16.msra.mxu0 0
    %1035 = vmatprep.subr.bf16.mxu0 0
    %1036 = vmatpush1.bf16.msra.mxu0 0
    %1037 = vmatprep.subr.bf16.mxu0 0
    %1038 = vmatpush1.bf16.msra.mxu0 0
    %1039 = vmatprep.subr.bf16.mxu0 0
    %1040 = vmatpush1.bf16.msra.mxu0 0
    %1041 = vmatprep.subr.bf16.mxu0 0
    %1042 = vmatpush1.bf16.msra.mxu0 0
    %1043 = vmatprep.subr.bf16.mxu0 0
    %1044 = vmatpush1.bf16.msra.mxu0 0
    %1045 = vmatprep.mubr.bf16.mxu0 0
    %1046 = vmatmul.mubr.bf16.gmra.mrb[0].mxu0 %v918
    %v1047 = vpop.f32.mrb[0].mxu0
    %v1048 = vadd.f32 %v651, %v1047
    %v1049 = vpop.f32.mrb[0].mxu0
    %v1050 = vpop.f32.mrb[0].mxu0
    %v1051 = vadd.f32 %v654, %v1050
    %v1052 = vpop.f32.mrb[0].mxu0
    %1053 = vmatprep.mubr.bf16.mxu0 0
    %1054 = vmatmul.mubr.bf16.gmra.mrb[0].mxu0 %v921
    %v1055 = vpop.f32.mrb[0].mxu0
    %v1056 = vadd.f32 %v659, %v1055
    %v1057 = vpop.f32.mrb[0].mxu0
    %v1058 = vpop.f32.mrb[0].mxu0
    %v1059 = vadd.f32 %v662, %v1058
    %v1060 = vpop.f32.mrb[0].mxu0
    %1061 = vmatprep.mubr.bf16.mxu0 0
    %1062 = vmatmul.mubr.bf16.gmra.mrb[0].mxu0 %v924
    %v1063 = vpop.f32.mrb[0].mxu0
    %v1064 = vadd.f32 %v667, %v1063
    %v1065 = vpop.f32.mrb[0].mxu0
    %v1066 = vpop.f32.mrb[0].mxu0
    %v1067 = vadd.f32 %v670, %v1066
    %v1068 = vpop.f32.mrb[0].mxu0
    %1069 = vmatprep.mubr.bf16.mxu0 0
    %1070 = vmatmul.mubr.bf16.gmra.mrb[0].mxu0 %v927
    %v1071 = vpop.f32.mrb[0].mxu0
    %v1072 = vadd.f32 %v675, %v1071
    %v1073 = vpop.f32.mrb[0].mxu0
    %v1074 = vpop.f32.mrb[0].mxu0
    %v1075 = vadd.f32 %v678, %v1074
    %v1076 = vpop.f32.mrb[0].mxu0
    %1077 = vmatprep.mubr.bf16.mxu0 0
    %1078 = vmatmul.mubr.bf16.gmra.mrb[0].mxu0 %v930
    %v1079 = vpop.f32.mrb[0].mxu0
    %v1080 = vadd.f32 %v683, %v1079
    %v1081 = vpop.f32.mrb[0].mxu0
    %v1082 = vpop.f32.mrb[0].mxu0
    %v1083 = vadd.f32 %v686, %v1082
    %v1084 = vpop.f32.mrb[0].mxu0
    %1085 = vmatprep.mubr.bf16.mxu0 0
    %1086 = vmatmul.mubr.bf16.gmra.mrb[0].mxu0 %v933
    %v1087 = vpop.f32.mrb[0].mxu0
    %v1088 = vadd.f32 %v691, %v1087
    %v1089 = vpop.f32.mrb[0].mxu0
    %v1090 = vpop.f32.mrb[0].mxu0
    %v1091 = vadd.f32 %v694, %v1090
    %v1092 = vpop.f32.mrb[0].mxu0
    %1093 = vmatprep.mubr.bf16.mxu0 0
    %1094 = vmatmul.mubr.bf16.gmra.mrb[0].mxu0 %v936
    %v1095 = vpop.f32.mrb[0].mxu0
    %v1096 = vadd.f32 %v699, %v1095
    %v1097 = vpop.f32.mrb[0].mxu0
    %v1098 = vpop.f32.mrb[0].mxu0
    %v1099 = vadd.f32 %v702, %v1098
    %v1100 = vpop.f32.mrb[0].mxu0
    %1101 = vmatprep.mubr.bf16.mxu0 0
    %1102 = vmatmul.mubr.bf16.gmra.mrb[0].mxu0 %v939
    %v1103 = vpop.f32.mrb[0].mxu0
    %v1104 = vadd.f32 %v707, %v1103
    %v1105 = vpop.f32.mrb[0].mxu0
    %v1106 = vpop.f32.mrb[0].mxu0
    %v1107 = vadd.f32 %v710, %v1106
    %v1108 = vpop.f32.mrb[0].mxu0
    %1109 = vmatprep.mubr.bf16.mxu0 0
    %1110 = vmatmul.mubr.bf16.gmra.mrb[0].mxu0 %v942
    %v1111 = vpop.f32.mrb[0].mxu0
    %v1112 = vadd.f32 %v715, %v1111
    %v1113 = vpop.f32.mrb[0].mxu0
    %v1114 = vpop.f32.mrb[0].mxu0
    %v1115 = vadd.f32 %v718, %v1114
    %v1116 = vpop.f32.mrb[0].mxu0
    %1117 = vmatprep.mubr.bf16.mxu0 0
    %1118 = vmatmul.mubr.bf16.gmra.mrb[0].mxu0 %v945
    %v1119 = vpop.f32.mrb[0].mxu0
    %v1120 = vadd.f32 %v723, %v1119
    %v1121 = vpop.f32.mrb[0].mxu0
    %v1122 = vpop.f32.mrb[0].mxu0
    %v1123 = vadd.f32 %v726, %v1122
    %v1124 = vpop.f32.mrb[0].mxu0
    %1125 = vmatprep.mubr.bf16.mxu0 0
    %1126 = vmatmul.mubr.bf16.gmra.mrb[0].mxu0 %v948
    %v1127 = vpop.f32.mrb[0].mxu0
    %v1128 = vadd.f32 %v731, %v1127
    %v1129 = vpop.f32.mrb[0].mxu0
    %v1130 = vpop.f32.mrb[0].mxu0
    %v1131 = vadd.f32 %v734, %v1130
    %v1132 = vpop.f32.mrb[0].mxu0
    %1133 = vmatprep.mubr.bf16.mxu0 0
    %1134 = vmatmul.mubr.bf16.gmra.mrb[0].mxu0 %v951
    %v1135 = vpop.f32.mrb[0].mxu0
    %v1136 = vadd.f32 %v739, %v1135
    %v1137 = vpop.f32.mrb[0].mxu0
    %v1138 = vpop.f32.mrb[0].mxu0
    %v1139 = vadd.f32 %v742, %v1138
    %v1140 = vpop.f32.mrb[0].mxu0
    %1141 = vmatprep.mubr.bf16.mxu0 0
    %1142 = vmatmul.mubr.bf16.gmra.mrb[0].mxu0 %v954
    %v1143 = vpop.f32.mrb[0].mxu0
    %v1144 = vadd.f32 %v747, %v1143
    %v1145 = vpop.f32.mrb[0].mxu0
    %v1146 = vpop.f32.mrb[0].mxu0
    %v1147 = vadd.f32 %v750, %v1146
    %v1148 = vpop.f32.mrb[0].mxu0
    %1149 = vmatprep.mubr.bf16.mxu0 0
    %1150 = vmatmul.mubr.bf16.gmra.mrb[0].mxu0 %v957
    %v1151 = vpop.f32.mrb[0].mxu0
    %v1152 = vadd.f32 %v755, %v1151
    %v1153 = vpop.f32.mrb[0].mxu0
    %v1154 = vpop.f32.mrb[0].mxu0
    %v1155 = vadd.f32 %v758, %v1154
    %v1156 = vpop.f32.mrb[0].mxu0
    %1157 = vmatprep.mubr.bf16.mxu0 0
    %1158 = vmatmul.mubr.bf16.gmra.mrb[0].mxu0 %v960
    %v1159 = vpop.f32.mrb[0].mxu0
    %v1160 = vadd.f32 %v763, %v1159
    %v1161 = vpop.f32.mrb[0].mxu0
    %v1162 = vpop.f32.mrb[0].mxu0
    %v1163 = vadd.f32 %v766, %v1162
    %v1164 = vpop.f32.mrb[0].mxu0
    %1165 = vmatprep.mubr.bf16.mxu0 0
    %1166 = vmatmul.mubr.bf16.gmra.mrb[0].mxu0 %v963
    %v1167 = vpop.f32.mrb[0].mxu0
    %v1168 = vadd.f32 %v771, %v1167
    %v1169 = vpop.f32.mrb[0].mxu0
    %v1170 = vpop.f32.mrb[0].mxu0
    %v1171 = vadd.f32 %v774, %v1170
    %v1172 = vpop.f32.mrb[0].mxu0
    %1173 = vmatprep.mubr.bf16.mxu0 0
    %1174 = vmatmul.mubr.bf16.gmra.mrb[0].mxu0 %v966
    %v1175 = vpop.f32.mrb[0].mxu0
    %v1176 = vadd.f32 %v779, %v1175
    %v1177 = vpop.f32.mrb[0].mxu0
    %v1178 = vpop.f32.mrb[0].mxu0
    %v1179 = vadd.f32 %v782, %v1178
    %v1180 = vpop.f32.mrb[0].mxu0
    %1181 = vmatprep.mubr.bf16.mxu0 0
    %1182 = vmatmul.mubr.bf16.gmra.mrb[0].mxu0 %v969
    %v1183 = vpop.f32.mrb[0].mxu0
    %v1184 = vadd.f32 %v787, %v1183
    %v1185 = vpop.f32.mrb[0].mxu0
    %v1186 = vpop.f32.mrb[0].mxu0
    %v1187 = vadd.f32 %v790, %v1186
    %v1188 = vpop.f32.mrb[0].mxu0
    %1189 = vmatprep.mubr.bf16.mxu0 0
    %1190 = vmatmul.mubr.bf16.gmra.mrb[0].mxu0 %v972
    %v1191 = vpop.f32.mrb[0].mxu0
    %v1192 = vadd.f32 %v795, %v1191
    %v1193 = vpop.f32.mrb[0].mxu0
    %v1194 = vpop.f32.mrb[0].mxu0
    %v1195 = vadd.f32 %v798, %v1194
    %v1196 = vpop.f32.mrb[0].mxu0
    %1197 = vmatprep.mubr.bf16.mxu0 0
    %1198 = vmatmul.mubr.bf16.gmra.mrb[0].mxu0 %v975
    %v1199 = vpop.f32.mrb[0].mxu0
    %v1200 = vadd.f32 %v803, %v1199
    %v1201 = vpop.f32.mrb[0].mxu0
    %v1202 = vpop.f32.mrb[0].mxu0
    %v1203 = vadd.f32 %v806, %v1202
    %v1204 = vpop.f32.mrb[0].mxu0
    %1205 = vmatprep.mubr.bf16.mxu0 0
    %1206 = vmatmul.mubr.bf16.gmra.mrb[0].mxu0 %v978
    %v1207 = vpop.f32.mrb[0].mxu0
    %v1208 = vadd.f32 %v811, %v1207
    %v1209 = vpop.f32.mrb[0].mxu0
    %v1210 = vpop.f32.mrb[0].mxu0
    %v1211 = vadd.f32 %v814, %v1210
    %v1212 = vpop.f32.mrb[0].mxu0
    %1213 = vmatprep.mubr.bf16.mxu0 0
    %1214 = vmatmul.mubr.bf16.gmra.mrb[0].mxu0 %v981
    %v1215 = vpop.f32.mrb[0].mxu0
    %v1216 = vadd.f32 %v819, %v1215
    %v1217 = vpop.f32.mrb[0].mxu0
    %v1218 = vpop.f32.mrb[0].mxu0
    %v1219 = vadd.f32 %v822, %v1218
    %v1220 = vpop.f32.mrb[0].mxu0
    %1221 = vmatprep.mubr.bf16.mxu0 0
    %1222 = vmatmul.mubr.bf16.gmra.mrb[0].mxu0 %v984
    %v1223 = vpop.f32.mrb[0].mxu0
    %v1224 = vadd.f32 %v827, %v1223
    %v1225 = vpop.f32.mrb[0].mxu0
    %v1226 = vpop.f32.mrb[0].mxu0
    %v1227 = vadd.f32 %v830, %v1226
    %v1228 = vpop.f32.mrb[0].mxu0
    %1229 = vmatprep.mubr.bf16.mxu0 0
    %1230 = vmatmul.mubr.bf16.gmra.mrb[0].mxu0 %v987
    %v1231 = vpop.f32.mrb[0].mxu0
    %v1232 = vadd.f32 %v835, %v1231
    %v1233 = vpop.f32.mrb[0].mxu0
    %v1234 = vpop.f32.mrb[0].mxu0
    %v1235 = vadd.f32 %v838, %v1234
    %v1236 = vpop.f32.mrb[0].mxu0
    %1237 = vmatprep.mubr.bf16.mxu0 0
    %1238 = vmatmul.mubr.bf16.gmra.mrb[0].mxu0 %v990
    %v1239 = vpop.f32.mrb[0].mxu0
    %v1240 = vadd.f32 %v843, %v1239
    %v1241 = vpop.f32.mrb[0].mxu0
    %v1242 = vpop.f32.mrb[0].mxu0
    %v1243 = vadd.f32 %v846, %v1242
    %v1244 = vpop.f32.mrb[0].mxu0
    %1245 = vmatprep.mubr.bf16.mxu0 0
    %1246 = vmatmul.mubr.bf16.gmra.mrb[0].mxu0 %v993
    %v1247 = vpop.f32.mrb[0].mxu0
    %v1248 = vadd.f32 %v851, %v1247
    %v1249 = vpop.f32.mrb[0].mxu0
    %v1250 = vpop.f32.mrb[0].mxu0
    %v1251 = vadd.f32 %v854, %v1250
    %v1252 = vpop.f32.mrb[0].mxu0
    %1253 = vmatprep.mubr.bf16.mxu0 0
    %1254 = vmatmul.mubr.bf16.gmra.mrb[0].mxu0 %v996
    %v1255 = vpop.f32.mrb[0].mxu0
    %v1256 = vadd.f32 %v859, %v1255
    %v1257 = vpop.f32.mrb[0].mxu0
    %v1258 = vpop.f32.mrb[0].mxu0
    %v1259 = vadd.f32 %v862, %v1258
    %v1260 = vpop.f32.mrb[0].mxu0
    %1261 = vmatprep.mubr.bf16.mxu0 0
    %1262 = vmatmul.mubr.bf16.gmra.mrb[0].mxu0 %v999
    %v1263 = vpop.f32.mrb[0].mxu0
    %v1264 = vadd.f32 %v867, %v1263
    %v1265 = vpop.f32.mrb[0].mxu0
    %v1266 = vpop.f32.mrb[0].mxu0
    %v1267 = vadd.f32 %v870, %v1266
    %v1268 = vpop.f32.mrb[0].mxu0
    %1269 = vmatprep.mubr.bf16.mxu0 0
    %1270 = vmatmul.mubr.bf16.gmra.mrb[0].mxu0 %v1002
    %v1271 = vpop.f32.mrb[0].mxu0
    %v1272 = vadd.f32 %v875, %v1271
    %v1273 = vpop.f32.mrb[0].mxu0
    %v1274 = vpop.f32.mrb[0].mxu0
    %v1275 = vadd.f32 %v878, %v1274
    %v1276 = vpop.f32.mrb[0].mxu0
    %1277 = vmatprep.mubr.bf16.mxu0 0
    %1278 = vmatmul.mubr.bf16.gmra.mrb[0].mxu0 %v1005
    %v1279 = vpop.f32.mrb[0].mxu0
    %v1280 = vadd.f32 %v883, %v1279
    %v1281 = vpop.f32.mrb[0].mxu0
    %v1282 = vpop.f32.mrb[0].mxu0
    %v1283 = vadd.f32 %v886, %v1282
    %v1284 = vpop.f32.mrb[0].mxu0
    %1285 = vmatprep.mubr.bf16.mxu0 0
    %1286 = vmatmul.mubr.bf16.gmra.mrb[0].mxu0 %v1008
    %v1287 = vpop.f32.mrb[0].mxu0
    %v1288 = vadd.f32 %v891, %v1287
    %v1289 = vpop.f32.mrb[0].mxu0
    %v1290 = vpop.f32.mrb[0].mxu0
    %v1291 = vadd.f32 %v894, %v1290
    %v1292 = vpop.f32.mrb[0].mxu0
    %1293 = vmatprep.mubr.bf16.mxu0 0
    %1294 = vmatmul.mubr.bf16.gmra.mrb[0].mxu0 %v1011
    %v1295 = vpop.f32.mrb[0].mxu0
    %v1296 = vadd.f32 %v899, %v1295
    %v1297 = vpop.f32.mrb[0].mxu0
    %v1298 = vpop.f32.mrb[0].mxu0
    %v1299 = vadd.f32 %v902, %v1298
    %v1300 = vpop.f32.mrb[0].mxu0
    %1301 = vdwg.mxu0
    %v1302 = vld [vmem:[#allocation2 + $0x2] sm:$0xff]
    %v1303 = vld [vmem:[#allocation2 + $0xa] sm:$0xff]
    %v1304 = vld [vmem:[#allocation2 + $0x1a] sm:$0xff]
    %v1305 = vld [vmem:[#allocation2 + $0x22] sm:$0xff]
    %v1306 = vld [vmem:[#allocation2 + $0x32] sm:$0xff]
    %v1307 = vld [vmem:[#allocation2 + $0x3a] sm:$0xff]
    %v1308 = vld [vmem:[#allocation2 + $0x4a] sm:$0xff]
    %v1309 = vld [vmem:[#allocation2 + $0x52] sm:$0xff]
    %v1310 = vld [vmem:[#allocation2 + $0x62] sm:$0xff]
    %v1311 = vld [vmem:[#allocation2 + $0x6a] sm:$0xff]
    %v1312 = vld [vmem:[#allocation2 + $0x7a] sm:$0xff]
    %v1313 = vld [vmem:[#allocation2 + $0x82] sm:$0xff]
    %v1314 = vld [vmem:[#allocation2 + $0x92] sm:$0xff]
    %v1315 = vld [vmem:[#allocation2 + $0x9a] sm:$0xff]
    %v1316 = vld [vmem:[#allocation2 + $0xaa] sm:$0xff]
    %v1317 = vld [vmem:[#allocation2 + $0xb2] sm:$0xff]
    %v1318 = vld [vmem:[#allocation2 + $0xc2] sm:$0xff]
    %v1319 = vld [vmem:[#allocation2 + $0xca] sm:$0xff]
    %v1320 = vld [vmem:[#allocation2 + $0xda] sm:$0xff]
    %v1321 = vld [vmem:[#allocation2 + $0xe2] sm:$0xff]
    %v1322 = vld [vmem:[#allocation2 + $0xf2] sm:$0xff]
    %v1323 = vld [vmem:[#allocation2 + $0xfa] sm:$0xff]
    %v1324 = vld [vmem:[#allocation2 + $0x10a] sm:$0xff]
    %v1325 = vld [vmem:[#allocation2 + $0x112] sm:$0xff]
    %v1326 = vld [vmem:[#allocation2 + $0x122] sm:$0xff]
    %v1327 = vld [vmem:[#allocation2 + $0x12a] sm:$0xff]
    %v1328 = vld [vmem:[#allocation2 + $0x13a] sm:$0xff]
    %v1329 = vld [vmem:[#allocation2 + $0x142] sm:$0xff]
    %v1330 = vld [vmem:[#allocation2 + $0x152] sm:$0xff]
    %v1331 = vld [vmem:[#allocation2 + $0x15a] sm:$0xff]
    %v1332 = vld [vmem:[#allocation2 + $0x16a] sm:$0xff]
    %v1333 = vld [vmem:[#allocation2 + $0x172] sm:$0xff]
    %v1334 = vld [vmem:[#allocation2 + $0x1b2] sm:$0xff]
    %v1335 = vld [vmem:[#allocation2 + $0x1ba] sm:$0xff]
    %v1336 = vld [vmem:[#allocation2 + $0x1ca] sm:$0xff]
    %v1337 = vld [vmem:[#allocation2 + $0x1d2] sm:$0xff]
    %v1338 = vld [vmem:[#allocation2 + $0x1e2] sm:$0xff]
    %v1339 = vld [vmem:[#allocation2 + $0x1ea] sm:$0xff]
    %v1340 = vld [vmem:[#allocation2 + $0x1fa] sm:$0xff]
    %v1341 = vld [vmem:[#allocation2 + $0x202] sm:$0xff]
    %v1342 = vld [vmem:[#allocation2 + $0x212] sm:$0xff]
    %v1343 = vld [vmem:[#allocation2 + $0x21a] sm:$0xff]
    %v1344 = vld [vmem:[#allocation2 + $0x22a] sm:$0xff]
    %v1345 = vld [vmem:[#allocation2 + $0x232] sm:$0xff]
    %v1346 = vld [vmem:[#allocation2 + $0x242] sm:$0xff]
    %v1347 = vld [vmem:[#allocation2 + $0x24a] sm:$0xff]
    %v1348 = vld [vmem:[#allocation2 + $0x25a] sm:$0xff]
    %v1349 = vld [vmem:[#allocation2 + $0x262] sm:$0xff]
    %v1350 = vld [vmem:[#allocation2 + $0x272] sm:$0xff]
    %v1351 = vld [vmem:[#allocation2 + $0x27a] sm:$0xff]
    %v1352 = vld [vmem:[#allocation2 + $0x28a] sm:$0xff]
    %v1353 = vld [vmem:[#allocation2 + $0x292] sm:$0xff]
    %v1354 = vld [vmem:[#allocation2 + $0x2a2] sm:$0xff]
    %v1355 = vld [vmem:[#allocation2 + $0x2aa] sm:$0xff]
    %v1356 = vld [vmem:[#allocation2 + $0x2ba] sm:$0xff]
    %v1357 = vld [vmem:[#allocation2 + $0x2c2] sm:$0xff]
    %v1358 = vld [vmem:[#allocation2 + $0x2d2] sm:$0xff]
    %v1359 = vld [vmem:[#allocation2 + $0x2da] sm:$0xff]
    %v1360 = vld [vmem:[#allocation2 + $0x2ea] sm:$0xff]
    %v1361 = vld [vmem:[#allocation2 + $0x2f2] sm:$0xff]
    %v1362 = vld [vmem:[#allocation2 + $0x302] sm:$0xff]
    %v1363 = vld [vmem:[#allocation2 + $0x30a] sm:$0xff]
    %v1364 = vld [vmem:[#allocation2 + $0x31a] sm:$0xff]
    %v1365 = vld [vmem:[#allocation2 + $0x322] sm:$0xff]
    %v1366 = vpack.c.bf16 %v1303, %v1302
    %v1367 = vpack.c.bf16 %v1305, %v1304
    %v1368 = vpack.c.bf16 %v1307, %v1306
    %v1369 = vpack.c.bf16 %v1309, %v1308
    %v1370 = vpack.c.bf16 %v1311, %v1310
    %v1371 = vpack.c.bf16 %v1313, %v1312
    %v1372 = vpack.c.bf16 %v1315, %v1314
    %v1373 = vpack.c.bf16 %v1317, %v1316
    %v1374 = vpack.c.bf16 %v1319, %v1318
    %v1375 = vpack.c.bf16 %v1321, %v1320
    %v1376 = vpack.c.bf16 %v1323, %v1322
    %v1377 = vpack.c.bf16 %v1325, %v1324
    %v1378 = vpack.c.bf16 %v1327, %v1326
    %v1379 = vpack.c.bf16 %v1329, %v1328
    %v1380 = vpack.c.bf16 %v1331, %v1330
    %v1381 = vpack.c.bf16 %v1333, %v1332
    %v1382 = vpack.c.bf16 %v1335, %v1334
    %v1383 = vpack.c.bf16 %v1337, %v1336
    %v1384 = vpack.c.bf16 %v1339, %v1338
    %v1385 = vpack.c.bf16 %v1341, %v1340
    %v1386 = vpack.c.bf16 %v1343, %v1342
    %v1387 = vpack.c.bf16 %v1345, %v1344
    %v1388 = vpack.c.bf16 %v1347, %v1346
    %v1389 = vpack.c.bf16 %v1349, %v1348
    %v1390 = vpack.c.bf16 %v1351, %v1350
    %v1391 = vpack.c.bf16 %v1353, %v1352
    %v1392 = vpack.c.bf16 %v1355, %v1354
    %v1393 = vpack.c.bf16 %v1357, %v1356
    %v1394 = vpack.c.bf16 %v1359, %v1358
    %v1395 = vpack.c.bf16 %v1361, %v1360
    %v1396 = vpack.c.bf16 %v1363, %v1362
    %v1397 = vpack.c.bf16 %v1365, %v1364
    %s1398 = scalar_lea.vmem [#allocation5], 32
    %v1399 = vld [vmem:[%s1398] sm:$0xf]
    %v1400 = vld [vmem:[%s1398 + $0x4] sm:$0xf]
    %v1401 = vld [vmem:[%s1398 + $0x8] sm:$0xf]
    %v1402 = vld [vmem:[%s1398 + $0xc] sm:$0xf]
    %v1407 = vunpack.c.l.b16 %v1399
    %v1408 = vunpack.c.l.b16 %v1400
    %v1409 = vunpack.c.l.b16 %v1401
    %v1410 = vunpack.c.l.b16 %v1402
    %v1411 = vpack.c.b16 %v1408, %v1407
    %v1412 = vpack.c.b16 %v1410, %v1409
    %v1416 = vsel %vm68, %v1366, 0
    %v1419 = vsel %vm68, %v1367, 0
    %v1422 = vsel %vm68, %v1368, 0
    %v1425 = vsel %vm68, %v1369, 0
    %v1428 = vsel %vm68, %v1370, 0
    %v1431 = vsel %vm68, %v1371, 0
    %v1434 = vsel %vm68, %v1372, 0
    %v1437 = vsel %vm68, %v1373, 0
    %v1440 = vsel %vm68, %v1374, 0
    %v1443 = vsel %vm68, %v1375, 0
    %v1446 = vsel %vm68, %v1376, 0
    %v1449 = vsel %vm68, %v1377, 0
    %v1452 = vsel %vm68, %v1378, 0
    %v1455 = vsel %vm68, %v1379, 0
    %v1458 = vsel %vm68, %v1380, 0
    %v1461 = vsel %vm68, %v1381, 0
    %v1464 = vsel %vm68, %v1382, 0
    %v1467 = vsel %vm68, %v1383, 0
    %v1470 = vsel %vm68, %v1384, 0
    %v1473 = vsel %vm68, %v1385, 0
    %v1476 = vsel %vm68, %v1386, 0
    %v1479 = vsel %vm68, %v1387, 0
    %v1482 = vsel %vm68, %v1388, 0
    %v1485 = vsel %vm68, %v1389, 0
    %v1488 = vsel %vm68, %v1390, 0
    %v1491 = vsel %vm68, %v1391, 0
    %v1494 = vsel %vm68, %v1392, 0
    %v1497 = vsel %vm68, %v1393, 0
    %v1500 = vsel %vm68, %v1394, 0
    %v1503 = vsel %vm68, %v1395, 0
    %v1506 = vsel %vm68, %v1396, 0
    %v1509 = vsel %vm68, %v1397, 0
    %1511 = vmatprep.subr.bf16.mxu0 0
    %1512 = vmatpush1.bf16.msra.mxu0 %v1411
    %1513 = vmatprep.subr.bf16.mxu0 0
    %1514 = vmatpush1.bf16.msra.mxu0 %v1412
    %1515 = vmatprep.subr.bf16.mxu0 0
    %1516 = vmatpush1.bf16.msra.mxu0 0
    %1517 = vmatprep.subr.bf16.mxu0 0
    %1518 = vmatpush1.bf16.msra.mxu0 0
    %1519 = vmatprep.subr.bf16.mxu0 0
    %1520 = vmatpush1.bf16.msra.mxu0 0
    %1521 = vmatprep.subr.bf16.mxu0 0
    %1522 = vmatpush1.bf16.msra.mxu0 0
    %1523 = vmatprep.subr.bf16.mxu0 0
    %1524 = vmatpush1.bf16.msra.mxu0 0
    %1525 = vmatprep.subr.bf16.mxu0 0
    %1526 = vmatpush1.bf16.msra.mxu0 0
    %1527 = vmatprep.subr.bf16.mxu0 0
    %1528 = vmatpush1.bf16.msra.mxu0 0
    %1529 = vmatprep.subr.bf16.mxu0 0
    %1530 = vmatpush1.bf16.msra.mxu0 0
    %1531 = vmatprep.subr.bf16.mxu0 0
    %1532 = vmatpush1.bf16.msra.mxu0 0
    %1533 = vmatprep.subr.bf16.mxu0 0
    %1534 = vmatpush1.bf16.msra.mxu0 0
    %1535 = vmatprep.subr.bf16.mxu0 0
    %1536 = vmatpush1.bf16.msra.mxu0 0
    %1537 = vmatprep.subr.bf16.mxu0 0
    %1538 = vmatpush1.bf16.msra.mxu0 0
    %1539 = vmatprep.subr.bf16.mxu0 0
    %1540 = vmatpush1.bf16.msra.mxu0 0
    %1541 = vmatprep.subr.bf16.mxu0 0
    %1542 = vmatpush1.bf16.msra.mxu0 0
    %1543 = vmatprep.mubr.bf16.mxu0 0
    %1544 = vmatmul.mubr.bf16.gmra.mrb[0].mxu0 %v1416
    %v1545 = vpop.f32.mrb[0].mxu0
    %v1546 = vadd.f32 0.0, %v1545
    %v1547 = vpop.f32.mrb[0].mxu0
    %v1548 = vpop.f32.mrb[0].mxu0
    %v1549 = vadd.f32 0.0, %v1548
    %v1550 = vpop.f32.mrb[0].mxu0
    %1551 = vmatprep.mubr.bf16.mxu0 0
    %1552 = vmatmul.mubr.bf16.gmra.mrb[0].mxu0 %v1419
    %v1553 = vpop.f32.mrb[0].mxu0
    %v1554 = vadd.f32 0.0, %v1553
    %v1555 = vpop.f32.mrb[0].mxu0
    %v1556 = vpop.f32.mrb[0].mxu0
    %v1557 = vadd.f32 0.0, %v1556
    %v1558 = vpop.f32.mrb[0].mxu0
    %1559 = vmatprep.mubr.bf16.mxu0 0
    %1560 = vmatmul.mubr.bf16.gmra.mrb[0].mxu0 %v1422
    %v1561 = vpop.f32.mrb[0].mxu0
    %v1562 = vadd.f32 0.0, %v1561
    %v1563 = vpop.f32.mrb[0].mxu0
    %v1564 = vpop.f32.mrb[0].mxu0
    %v1565 = vadd.f32 0.0, %v1564
    %v1566 = vpop.f32.mrb[0].mxu0
    %1567 = vmatprep.mubr.bf16.mxu0 0
    %1568 = vmatmul.mubr.bf16.gmra.mrb[0].mxu0 %v1425
    %v1569 = vpop.f32.mrb[0].mxu0
    %v1570 = vadd.f32 0.0, %v1569
    %v1571 = vpop.f32.mrb[0].mxu0
    %v1572 = vpop.f32.mrb[0].mxu0
    %v1573 = vadd.f32 0.0, %v1572
    %v1574 = vpop.f32.mrb[0].mxu0
    %1575 = vmatprep.mubr.bf16.mxu0 0
    %1576 = vmatmul.mubr.bf16.gmra.mrb[0].mxu0 %v1428
    %v1577 = vpop.f32.mrb[0].mxu0
    %v1578 = vadd.f32 0.0, %v1577
    %v1579 = vpop.f32.mrb[0].mxu0
    %v1580 = vpop.f32.mrb[0].mxu0
    %v1581 = vadd.f32 0.0, %v1580
    %v1582 = vpop.f32.mrb[0].mxu0
    %1583 = vmatprep.mubr.bf16.mxu0 0
    %1584 = vmatmul.mubr.bf16.gmra.mrb[0].mxu0 %v1431
    %v1585 = vpop.f32.mrb[0].mxu0
    %v1586 = vadd.f32 0.0, %v1585
    %v1587 = vpop.f32.mrb[0].mxu0
    %v1588 = vpop.f32.mrb[0].mxu0
    %v1589 = vadd.f32 0.0, %v1588
    %v1590 = vpop.f32.mrb[0].mxu0
    %1591 = vmatprep.mubr.bf16.mxu0 0
    %1592 = vmatmul.mubr.bf16.gmra.mrb[0].mxu0 %v1434
    %v1593 = vpop.f32.mrb[0].mxu0
    %v1594 = vadd.f32 0.0, %v1593
    %v1595 = vpop.f32.mrb[0].mxu0
    %v1596 = vpop.f32.mrb[0].mxu0
    %v1597 = vadd.f32 0.0, %v1596
    %v1598 = vpop.f32.mrb[0].mxu0
    %1599 = vmatprep.mubr.bf16.mxu0 0
    %1600 = vmatmul.mubr.bf16.gmra.mrb[0].mxu0 %v1437
    %v1601 = vpop.f32.mrb[0].mxu0
    %v1602 = vadd.f32 0.0, %v1601
    %v1603 = vpop.f32.mrb[0].mxu0
    %v1604 = vpop.f32.mrb[0].mxu0
    %v1605 = vadd.f32 0.0, %v1604
    %v1606 = vpop.f32.mrb[0].mxu0
    %1607 = vmatprep.mubr.bf16.mxu0 0
    %1608 = vmatmul.mubr.bf16.gmra.mrb[0].mxu0 %v1440
    %v1609 = vpop.f32.mrb[0].mxu0
    %v1610 = vadd.f32 0.0, %v1609
    %v1611 = vpop.f32.mrb[0].mxu0
    %v1612 = vpop.f32.mrb[0].mxu0
    %v1613 = vadd.f32 0.0, %v1612
    %v1614 = vpop.f32.mrb[0].mxu0
    %1615 = vmatprep.mubr.bf16.mxu0 0
    %1616 = vmatmul.mubr.bf16.gmra.mrb[0].mxu0 %v1443
    %v1617 = vpop.f32.mrb[0].mxu0
    %v1618 = vadd.f32 0.0, %v1617
    %v1619 = vpop.f32.mrb[0].mxu0
    %v1620 = vpop.f32.mrb[0].mxu0
    %v1621 = vadd.f32 0.0, %v1620
    %v1622 = vpop.f32.mrb[0].mxu0
    %1623 = vmatprep.mubr.bf16.mxu0 0
    %1624 = vmatmul.mubr.bf16.gmra.mrb[0].mxu0 %v1446
    %v1625 = vpop.f32.mrb[0].mxu0
    %v1626 = vadd.f32 0.0, %v1625
    %v1627 = vpop.f32.mrb[0].mxu0
    %v1628 = vpop.f32.mrb[0].mxu0
    %v1629 = vadd.f32 0.0, %v1628
    %v1630 = vpop.f32.mrb[0].mxu0
    %1631 = vmatprep.mubr.bf16.mxu0 0
    %1632 = vmatmul.mubr.bf16.gmra.mrb[0].mxu0 %v1449
    %v1633 = vpop.f32.mrb[0].mxu0
    %v1634 = vadd.f32 0.0, %v1633
    %v1635 = vpop.f32.mrb[0].mxu0
    %v1636 = vpop.f32.mrb[0].mxu0
    %v1637 = vadd.f32 0.0, %v1636
    %v1638 = vpop.f32.mrb[0].mxu0
    %1639 = vmatprep.mubr.bf16.mxu0 0
    %1640 = vmatmul.mubr.bf16.gmra.mrb[0].mxu0 %v1452
    %v1641 = vpop.f32.mrb[0].mxu0
    %v1642 = vadd.f32 0.0, %v1641
    %v1643 = vpop.f32.mrb[0].mxu0
    %v1644 = vpop.f32.mrb[0].mxu0
    %v1645 = vadd.f32 0.0, %v1644
    %v1646 = vpop.f32.mrb[0].mxu0
    %1647 = vmatprep.mubr.bf16.mxu0 0
    %1648 = vmatmul.mubr.bf16.gmra.mrb[0].mxu0 %v1455
    %v1649 = vpop.f32.mrb[0].mxu0
    %v1650 = vadd.f32 0.0, %v1649
    %v1651 = vpop.f32.mrb[0].mxu0
    %v1652 = vpop.f32.mrb[0].mxu0
    %v1653 = vadd.f32 0.0, %v1652
    %v1654 = vpop.f32.mrb[0].mxu0
    %1655 = vmatprep.mubr.bf16.mxu0 0
    %1656 = vmatmul.mubr.bf16.gmra.mrb[0].mxu0 %v1458
    %v1657 = vpop.f32.mrb[0].mxu0
    %v1658 = vadd.f32 0.0, %v1657
    %v1659 = vpop.f32.mrb[0].mxu0
    %v1660 = vpop.f32.mrb[0].mxu0
    %v1661 = vadd.f32 0.0, %v1660
    %v1662 = vpop.f32.mrb[0].mxu0
    %1663 = vmatprep.mubr.bf16.mxu0 0
    %1664 = vmatmul.mubr.bf16.gmra.mrb[0].mxu0 %v1461
    %v1665 = vpop.f32.mrb[0].mxu0
    %v1666 = vadd.f32 0.0, %v1665
    %v1667 = vpop.f32.mrb[0].mxu0
    %v1668 = vpop.f32.mrb[0].mxu0
    %v1669 = vadd.f32 0.0, %v1668
    %v1670 = vpop.f32.mrb[0].mxu0
    %1671 = vmatprep.mubr.bf16.mxu0 0
    %1672 = vmatmul.mubr.bf16.gmra.mrb[0].mxu0 %v1464
    %v1673 = vpop.f32.mrb[0].mxu0
    %v1674 = vadd.f32 0.0, %v1673
    %v1675 = vpop.f32.mrb[0].mxu0
    %v1676 = vpop.f32.mrb[0].mxu0
    %v1677 = vadd.f32 0.0, %v1676
    %v1678 = vpop.f32.mrb[0].mxu0
    %1679 = vmatprep.mubr.bf16.mxu0 0
    %1680 = vmatmul.mubr.bf16.gmra.mrb[0].mxu0 %v1467
    %v1681 = vpop.f32.mrb[0].mxu0
    %v1682 = vadd.f32 0.0, %v1681
    %v1683 = vpop.f32.mrb[0].mxu0
    %v1684 = vpop.f32.mrb[0].mxu0
    %v1685 = vadd.f32 0.0, %v1684
    %v1686 = vpop.f32.mrb[0].mxu0
    %1687 = vmatprep.mubr.bf16.mxu0 0
    %1688 = vmatmul.mubr.bf16.gmra.mrb[0].mxu0 %v1470
    %v1689 = vpop.f32.mrb[0].mxu0
    %v1690 = vadd.f32 0.0, %v1689
    %v1691 = vpop.f32.mrb[0].mxu0
    %v1692 = vpop.f32.mrb[0].mxu0
    %v1693 = vadd.f32 0.0, %v1692
    %v1694 = vpop.f32.mrb[0].mxu0
    %1695 = vmatprep.mubr.bf16.mxu0 0
    %1696 = vmatmul.mubr.bf16.gmra.mrb[0].mxu0 %v1473
    %v1697 = vpop.f32.mrb[0].mxu0
    %v1698 = vadd.f32 0.0, %v1697
    %v1699 = vpop.f32.mrb[0].mxu0
    %v1700 = vpop.f32.mrb[0].mxu0
    %v1701 = vadd.f32 0.0, %v1700
    %v1702 = vpop.f32.mrb[0].mxu0
    %1703 = vmatprep.mubr.bf16.mxu0 0
    %1704 = vmatmul.mubr.bf16.gmra.mrb[0].mxu0 %v1476
    %v1705 = vpop.f32.mrb[0].mxu0
    %v1706 = vadd.f32 0.0, %v1705
    %v1707 = vpop.f32.mrb[0].mxu0
    %v1708 = vpop.f32.mrb[0].mxu0
    %v1709 = vadd.f32 0.0, %v1708
    %v1710 = vpop.f32.mrb[0].mxu0
    %1711 = vmatprep.mubr.bf16.mxu0 0
    %1712 = vmatmul.mubr.bf16.gmra.mrb[0].mxu0 %v1479
    %v1713 = vpop.f32.mrb[0].mxu0
    %v1714 = vadd.f32 0.0, %v1713
    %v1715 = vpop.f32.mrb[0].mxu0
    %v1716 = vpop.f32.mrb[0].mxu0
    %v1717 = vadd.f32 0.0, %v1716
    %v1718 = vpop.f32.mrb[0].mxu0
    %1719 = vmatprep.mubr.bf16.mxu0 0
    %1720 = vmatmul.mubr.bf16.gmra.mrb[0].mxu0 %v1482
    %v1721 = vpop.f32.mrb[0].mxu0
    %v1722 = vadd.f32 0.0, %v1721
    %v1723 = vpop.f32.mrb[0].mxu0
    %v1724 = vpop.f32.mrb[0].mxu0
    %v1725 = vadd.f32 0.0, %v1724
    %v1726 = vpop.f32.mrb[0].mxu0
    %1727 = vmatprep.mubr.bf16.mxu0 0
    %1728 = vmatmul.mubr.bf16.gmra.mrb[0].mxu0 %v1485
    %v1729 = vpop.f32.mrb[0].mxu0
    %v1730 = vadd.f32 0.0, %v1729
    %v1731 = vpop.f32.mrb[0].mxu0
    %v1732 = vpop.f32.mrb[0].mxu0
    %v1733 = vadd.f32 0.0, %v1732
    %v1734 = vpop.f32.mrb[0].mxu0
    %1735 = vmatprep.mubr.bf16.mxu0 0
    %1736 = vmatmul.mubr.bf16.gmra.mrb[0].mxu0 %v1488
    %v1737 = vpop.f32.mrb[0].mxu0
    %v1738 = vadd.f32 0.0, %v1737
    %v1739 = vpop.f32.mrb[0].mxu0
    %v1740 = vpop.f32.mrb[0].mxu0
    %v1741 = vadd.f32 0.0, %v1740
    %v1742 = vpop.f32.mrb[0].mxu0
    %1743 = vmatprep.mubr.bf16.mxu0 0
    %1744 = vmatmul.mubr.bf16.gmra.mrb[0].mxu0 %v1491
    %v1745 = vpop.f32.mrb[0].mxu0
    %v1746 = vadd.f32 0.0, %v1745
    %v1747 = vpop.f32.mrb[0].mxu0
    %v1748 = vpop.f32.mrb[0].mxu0
    %v1749 = vadd.f32 0.0, %v1748
    %v1750 = vpop.f32.mrb[0].mxu0
    %1751 = vmatprep.mubr.bf16.mxu0 0
    %1752 = vmatmul.mubr.bf16.gmra.mrb[0].mxu0 %v1494
    %v1753 = vpop.f32.mrb[0].mxu0
    %v1754 = vadd.f32 0.0, %v1753
    %v1755 = vpop.f32.mrb[0].mxu0
    %v1756 = vpop.f32.mrb[0].mxu0
    %v1757 = vadd.f32 0.0, %v1756
    %v1758 = vpop.f32.mrb[0].mxu0
    %1759 = vmatprep.mubr.bf16.mxu0 0
    %1760 = vmatmul.mubr.bf16.gmra.mrb[0].mxu0 %v1497
    %v1761 = vpop.f32.mrb[0].mxu0
    %v1762 = vadd.f32 0.0, %v1761
    %v1763 = vpop.f32.mrb[0].mxu0
    %v1764 = vpop.f32.mrb[0].mxu0
    %v1765 = vadd.f32 0.0, %v1764
    %v1766 = vpop.f32.mrb[0].mxu0
    %1767 = vmatprep.mubr.bf16.mxu0 0
    %1768 = vmatmul.mubr.bf16.gmra.mrb[0].mxu0 %v1500
    %v1769 = vpop.f32.mrb[0].mxu0
    %v1770 = vadd.f32 0.0, %v1769
    %v1771 = vpop.f32.mrb[0].mxu0
    %v1772 = vpop.f32.mrb[0].mxu0
    %v1773 = vadd.f32 0.0, %v1772
    %v1774 = vpop.f32.mrb[0].mxu0
    %1775 = vmatprep.mubr.bf16.mxu0 0
    %1776 = vmatmul.mubr.bf16.gmra.mrb[0].mxu0 %v1503
    %v1777 = vpop.f32.mrb[0].mxu0
    %v1778 = vadd.f32 0.0, %v1777
    %v1779 = vpop.f32.mrb[0].mxu0
    %v1780 = vpop.f32.mrb[0].mxu0
    %v1781 = vadd.f32 0.0, %v1780
    %v1782 = vpop.f32.mrb[0].mxu0
    %1783 = vmatprep.mubr.bf16.mxu0 0
    %1784 = vmatmul.mubr.bf16.gmra.mrb[0].mxu0 %v1506
    %v1785 = vpop.f32.mrb[0].mxu0
    %v1786 = vadd.f32 0.0, %v1785
    %v1787 = vpop.f32.mrb[0].mxu0
    %v1788 = vpop.f32.mrb[0].mxu0
    %v1789 = vadd.f32 0.0, %v1788
    %v1790 = vpop.f32.mrb[0].mxu0
    %1791 = vmatprep.mubr.bf16.mxu0 0
    %1792 = vmatmul.mubr.bf16.gmra.mrb[0].mxu0 %v1509
    %v1793 = vpop.f32.mrb[0].mxu0
    %v1794 = vadd.f32 0.0, %v1793
    %v1795 = vpop.f32.mrb[0].mxu0
    %v1796 = vpop.f32.mrb[0].mxu0
    %v1797 = vadd.f32 0.0, %v1796
    %v1798 = vpop.f32.mrb[0].mxu0
    %1799 = vdwg.mxu0
    %v1800 = vadd.f32 %v1048, %v1546
    %v1801 = vadd.f32 %v1051, %v1549
    %v1802 = vadd.f32 %v1056, %v1554
    %v1803 = vadd.f32 %v1059, %v1557
    %v1804 = vadd.f32 %v1064, %v1562
    %v1805 = vadd.f32 %v1067, %v1565
    %v1806 = vadd.f32 %v1072, %v1570
    %v1807 = vadd.f32 %v1075, %v1573
    %v1808 = vadd.f32 %v1080, %v1578
    %v1809 = vadd.f32 %v1083, %v1581
    %v1810 = vadd.f32 %v1088, %v1586
    %v1811 = vadd.f32 %v1091, %v1589
    %v1812 = vadd.f32 %v1096, %v1594
    %v1813 = vadd.f32 %v1099, %v1597
    %v1814 = vadd.f32 %v1104, %v1602
    %v1815 = vadd.f32 %v1107, %v1605
    %v1816 = vadd.f32 %v1112, %v1610
    %v1817 = vadd.f32 %v1115, %v1613
    %v1818 = vadd.f32 %v1120, %v1618
    %v1819 = vadd.f32 %v1123, %v1621
    %v1820 = vadd.f32 %v1128, %v1626
    %v1821 = vadd.f32 %v1131, %v1629
    %v1822 = vadd.f32 %v1136, %v1634
    %v1823 = vadd.f32 %v1139, %v1637
    %v1824 = vadd.f32 %v1144, %v1642
    %v1825 = vadd.f32 %v1147, %v1645
    %v1826 = vadd.f32 %v1152, %v1650
    %v1827 = vadd.f32 %v1155, %v1653
    %v1828 = vadd.f32 %v1160, %v1658
    %v1829 = vadd.f32 %v1163, %v1661
    %v1830 = vadd.f32 %v1168, %v1666
    %v1831 = vadd.f32 %v1171, %v1669
    %v1832 = vadd.f32 %v1176, %v1674
    %v1833 = vadd.f32 %v1179, %v1677
    %v1834 = vadd.f32 %v1184, %v1682
    %v1835 = vadd.f32 %v1187, %v1685
    %v1836 = vadd.f32 %v1192, %v1690
    %v1837 = vadd.f32 %v1195, %v1693
    %v1838 = vadd.f32 %v1200, %v1698
    %v1839 = vadd.f32 %v1203, %v1701
    %v1840 = vadd.f32 %v1208, %v1706
    %v1841 = vadd.f32 %v1211, %v1709
    %v1842 = vadd.f32 %v1216, %v1714
    %v1843 = vadd.f32 %v1219, %v1717
    %v1844 = vadd.f32 %v1224, %v1722
    %v1845 = vadd.f32 %v1227, %v1725
    %v1846 = vadd.f32 %v1232, %v1730
    %v1847 = vadd.f32 %v1235, %v1733
    %v1848 = vadd.f32 %v1240, %v1738
    %v1849 = vadd.f32 %v1243, %v1741
    %v1850 = vadd.f32 %v1248, %v1746
    %v1851 = vadd.f32 %v1251, %v1749
    %v1852 = vadd.f32 %v1256, %v1754
    %v1853 = vadd.f32 %v1259, %v1757
    %v1854 = vadd.f32 %v1264, %v1762
    %v1855 = vadd.f32 %v1267, %v1765
    %v1856 = vadd.f32 %v1272, %v1770
    %v1857 = vadd.f32 %v1275, %v1773
    %v1858 = vadd.f32 %v1280, %v1778
    %v1859 = vadd.f32 %v1283, %v1781
    %v1860 = vadd.f32 %v1288, %v1786
    %v1861 = vadd.f32 %v1291, %v1789
    %v1862 = vadd.f32 %v1296, %v1794
    %v1863 = vadd.f32 %v1299, %v1797
    %v1864 = vld [vmem:[%s242] sm:$0xff]
    %v1865 = vld [vmem:[%s242 + $0x8] sm:$0xff]
    %v1866 = vld [vmem:[%s242 + $0x18] sm:$0xff]
    %v1867 = vld [vmem:[%s242 + $0x20] sm:$0xff]
    %v1868 = vld [vmem:[%s242 + $0x30] sm:$0xff]
    %v1869 = vld [vmem:[%s242 + $0x38] sm:$0xff]
    %v1870 = vld [vmem:[%s242 + $0x48] sm:$0xff]
    %v1871 = vld [vmem:[%s242 + $0x50] sm:$0xff]
    %v1872 = vld [vmem:[%s242 + $0x60] sm:$0xff]
    %v1873 = vld [vmem:[%s242 + $0x68] sm:$0xff]
    %v1874 = vld [vmem:[%s242 + $0x78] sm:$0xff]
    %v1875 = vld [vmem:[%s242 + $0x80] sm:$0xff]
    %v1876 = vld [vmem:[%s242 + $0x90] sm:$0xff]
    %v1877 = vld [vmem:[%s242 + $0x98] sm:$0xff]
    %v1878 = vld [vmem:[%s242 + $0xa8] sm:$0xff]
    %v1879 = vld [vmem:[%s242 + $0xb0] sm:$0xff]
    %v1880 = vld [vmem:[%s242 + $0xc0] sm:$0xff]
    %v1881 = vld [vmem:[%s242 + $0xc8] sm:$0xff]
    %v1882 = vld [vmem:[%s242 + $0xd8] sm:$0xff]
    %v1883 = vld [vmem:[%s242 + $0xe0] sm:$0xff]
    %v1884 = vld [vmem:[%s242 + $0xf0] sm:$0xff]
    %v1885 = vld [vmem:[%s242 + $0xf8] sm:$0xff]
    %v1886 = vld [vmem:[%s242 + $0x108] sm:$0xff]
    %v1887 = vld [vmem:[%s242 + $0x110] sm:$0xff]
    %v1888 = vld [vmem:[%s242 + $0x120] sm:$0xff]
    %v1889 = vld [vmem:[%s242 + $0x128] sm:$0xff]
    %v1890 = vld [vmem:[%s242 + $0x138] sm:$0xff]
    %v1891 = vld [vmem:[%s242 + $0x140] sm:$0xff]
    %v1892 = vld [vmem:[%s242 + $0x150] sm:$0xff]
    %v1893 = vld [vmem:[%s242 + $0x158] sm:$0xff]
    %v1894 = vld [vmem:[%s242 + $0x168] sm:$0xff]
    %v1895 = vld [vmem:[%s242 + $0x170] sm:$0xff]
    %v1896 = vld [vmem:[%s242 + $0x1b0] sm:$0xff]
    %v1897 = vld [vmem:[%s242 + $0x1b8] sm:$0xff]
    %v1898 = vld [vmem:[%s242 + $0x1c8] sm:$0xff]
    %v1899 = vld [vmem:[%s242 + $0x1d0] sm:$0xff]
    %v1900 = vld [vmem:[%s242 + $0x1e0] sm:$0xff]
    %v1901 = vld [vmem:[%s242 + $0x1e8] sm:$0xff]
    %v1902 = vld [vmem:[%s242 + $0x1f8] sm:$0xff]
    %v1903 = vld [vmem:[%s242 + $0x200] sm:$0xff]
    %v1904 = vld [vmem:[%s242 + $0x210] sm:$0xff]
    %v1905 = vld [vmem:[%s242 + $0x218] sm:$0xff]
    %v1906 = vld [vmem:[%s242 + $0x228] sm:$0xff]
    %v1907 = vld [vmem:[%s242 + $0x230] sm:$0xff]
    %v1908 = vld [vmem:[%s242 + $0x240] sm:$0xff]
    %v1909 = vld [vmem:[%s242 + $0x248] sm:$0xff]
    %v1910 = vld [vmem:[%s242 + $0x258] sm:$0xff]
    %v1911 = vld [vmem:[%s242 + $0x260] sm:$0xff]
    %v1912 = vld [vmem:[%s242 + $0x270] sm:$0xff]
    %v1913 = vld [vmem:[%s242 + $0x278] sm:$0xff]
    %v1914 = vld [vmem:[%s242 + $0x288] sm:$0xff]
    %v1915 = vld [vmem:[%s242 + $0x290] sm:$0xff]
    %v1916 = vld [vmem:[%s242 + $0x2a0] sm:$0xff]
    %v1917 = vld [vmem:[%s242 + $0x2a8] sm:$0xff]
    %v1918 = vld [vmem:[%s242 + $0x2b8] sm:$0xff]
    %v1919 = vld [vmem:[%s242 + $0x2c0] sm:$0xff]
    %v1920 = vld [vmem:[%s242 + $0x2d0] sm:$0xff]
    %v1921 = vld [vmem:[%s242 + $0x2d8] sm:$0xff]
    %v1922 = vld [vmem:[%s242 + $0x2e8] sm:$0xff]
    %v1923 = vld [vmem:[%s242 + $0x2f0] sm:$0xff]
    %v1924 = vld [vmem:[%s242 + $0x300] sm:$0xff]
    %v1925 = vld [vmem:[%s242 + $0x308] sm:$0xff]
    %v1926 = vld [vmem:[%s242 + $0x318] sm:$0xff]
    %v1927 = vld [vmem:[%s242 + $0x320] sm:$0xff]
    %v1928 = vpack.c.bf16 %v1865, %v1864
    %v1929 = vpack.c.bf16 %v1867, %v1866
    %v1930 = vpack.c.bf16 %v1869, %v1868
    %v1931 = vpack.c.bf16 %v1871, %v1870
    %v1932 = vpack.c.bf16 %v1873, %v1872
    %v1933 = vpack.c.bf16 %v1875, %v1874
    %v1934 = vpack.c.bf16 %v1877, %v1876
    %v1935 = vpack.c.bf16 %v1879, %v1878
    %v1936 = vpack.c.bf16 %v1881, %v1880
    %v1937 = vpack.c.bf16 %v1883, %v1882
    %v1938 = vpack.c.bf16 %v1885, %v1884
    %v1939 = vpack.c.bf16 %v1887, %v1886
    %v1940 = vpack.c.bf16 %v1889, %v1888
    %v1941 = vpack.c.bf16 %v1891, %v1890
    %v1942 = vpack.c.bf16 %v1893, %v1892
    %v1943 = vpack.c.bf16 %v1895, %v1894
    %v1944 = vpack.c.bf16 %v1897, %v1896
    %v1945 = vpack.c.bf16 %v1899, %v1898
    %v1946 = vpack.c.bf16 %v1901, %v1900
    %v1947 = vpack.c.bf16 %v1903, %v1902
    %v1948 = vpack.c.bf16 %v1905, %v1904
    %v1949 = vpack.c.bf16 %v1907, %v1906
    %v1950 = vpack.c.bf16 %v1909, %v1908
    %v1951 = vpack.c.bf16 %v1911, %v1910
    %v1952 = vpack.c.bf16 %v1913, %v1912
    %v1953 = vpack.c.bf16 %v1915, %v1914
    %v1954 = vpack.c.bf16 %v1917, %v1916
    %v1955 = vpack.c.bf16 %v1919, %v1918
    %v1956 = vpack.c.bf16 %v1921, %v1920
    %v1957 = vpack.c.bf16 %v1923, %v1922
    %v1958 = vpack.c.bf16 %v1925, %v1924
    %v1959 = vpack.c.bf16 %v1927, %v1926
    %s1960 = scalar_lea.vmem [#allocation5], 48
    %v1961 = vld [vmem:[%s1960] sm:$0xf]
    %v1962 = vld [vmem:[%s1960 + $0x4] sm:$0xf]
    %v1963 = vld [vmem:[%s1960 + $0x8] sm:$0xf]
    %v1964 = vld [vmem:[%s1960 + $0xc] sm:$0xf]
    %v1969 = vunpack.c.l.b16 %v1961
    %v1970 = vunpack.c.l.b16 %v1962
    %v1971 = vunpack.c.l.b16 %v1963
    %v1972 = vunpack.c.l.b16 %v1964
    %v1973 = vpack.c.b16 %v1970, %v1969
    %v1974 = vpack.c.b16 %v1972, %v1971
    %v1978 = vsel %vm68, %v1928, 0
    %v1981 = vsel %vm68, %v1929, 0
    %v1984 = vsel %vm68, %v1930, 0
    %v1987 = vsel %vm68, %v1931, 0
    %v1990 = vsel %vm68, %v1932, 0
    %v1993 = vsel %vm68, %v1933, 0
    %v1996 = vsel %vm68, %v1934, 0
    %v1999 = vsel %vm68, %v1935, 0
    %v2002 = vsel %vm68, %v1936, 0
    %v2005 = vsel %vm68, %v1937, 0
    %v2008 = vsel %vm68, %v1938, 0
    %v2011 = vsel %vm68, %v1939, 0
    %v2014 = vsel %vm68, %v1940, 0
    %v2017 = vsel %vm68, %v1941, 0
    %v2020 = vsel %vm68, %v1942, 0
    %v2023 = vsel %vm68, %v1943, 0
    %v2026 = vsel %vm68, %v1944, 0
    %v2029 = vsel %vm68, %v1945, 0
    %v2032 = vsel %vm68, %v1946, 0
    %v2035 = vsel %vm68, %v1947, 0
    %v2038 = vsel %vm68, %v1948, 0
    %v2041 = vsel %vm68, %v1949, 0
    %v2044 = vsel %vm68, %v1950, 0
    %v2047 = vsel %vm68, %v1951, 0
    %v2050 = vsel %vm68, %v1952, 0
    %v2053 = vsel %vm68, %v1953, 0
    %v2056 = vsel %vm68, %v1954, 0
    %v2059 = vsel %vm68, %v1955, 0
    %v2062 = vsel %vm68, %v1956, 0
    %v2065 = vsel %vm68, %v1957, 0
    %v2068 = vsel %vm68, %v1958, 0
    %v2071 = vsel %vm68, %v1959, 0
    %2073 = vmatprep.subr.bf16.mxu0 0
    %2074 = vmatpush1.bf16.msra.mxu0 %v1973
    %2075 = vmatprep.subr.bf16.mxu0 0
    %2076 = vmatpush1.bf16.msra.mxu0 %v1974
    %2077 = vmatprep.subr.bf16.mxu0 0
    %2078 = vmatpush1.bf16.msra.mxu0 0
    %2079 = vmatprep.subr.bf16.mxu0 0
    %2080 = vmatpush1.bf16.msra.mxu0 0
    %2081 = vmatprep.subr.bf16.mxu0 0
    %2082 = vmatpush1.bf16.msra.mxu0 0
    %2083 = vmatprep.subr.bf16.mxu0 0
    %2084 = vmatpush1.bf16.msra.mxu0 0
    %2085 = vmatprep.subr.bf16.mxu0 0
    %2086 = vmatpush1.bf16.msra.mxu0 0
    %2087 = vmatprep.subr.bf16.mxu0 0
    %2088 = vmatpush1.bf16.msra.mxu0 0
    %2089 = vmatprep.subr.bf16.mxu0 0
    %2090 = vmatpush1.bf16.msra.mxu0 0
    %2091 = vmatprep.subr.bf16.mxu0 0
    %2092 = vmatpush1.bf16.msra.mxu0 0
    %2093 = vmatprep.subr.bf16.mxu0 0
    %2094 = vmatpush1.bf16.msra.mxu0 0
    %2095 = vmatprep.subr.bf16.mxu0 0
    %2096 = vmatpush1.bf16.msra.mxu0 0
    %2097 = vmatprep.subr.bf16.mxu0 0
    %2098 = vmatpush1.bf16.msra.mxu0 0
    %2099 = vmatprep.subr.bf16.mxu0 0
    %2100 = vmatpush1.bf16.msra.mxu0 0
    %2101 = vmatprep.subr.bf16.mxu0 0
    %2102 = vmatpush1.bf16.msra.mxu0 0
    %2103 = vmatprep.subr.bf16.mxu0 0
    %2104 = vmatpush1.bf16.msra.mxu0 0
    %2105 = vmatprep.mubr.bf16.mxu0 0
    %2106 = vmatmul.mubr.bf16.gmra.mrb[0].mxu0 %v1978
    %v2107 = vpop.f32.mrb[0].mxu0
    %v2108 = vadd.f32 0.0, %v2107
    %v2109 = vpop.f32.mrb[0].mxu0
    %v2110 = vpop.f32.mrb[0].mxu0
    %v2111 = vadd.f32 0.0, %v2110
    %v2112 = vpop.f32.mrb[0].mxu0
    %2113 = vmatprep.mubr.bf16.mxu0 0
    %2114 = vmatmul.mubr.bf16.gmra.mrb[0].mxu0 %v1981
    %v2115 = vpop.f32.mrb[0].mxu0
    %v2116 = vadd.f32 0.0, %v2115
    %v2117 = vpop.f32.mrb[0].mxu0
    %v2118 = vpop.f32.mrb[0].mxu0
    %v2119 = vadd.f32 0.0, %v2118
    %v2120 = vpop.f32.mrb[0].mxu0
    %2121 = vmatprep.mubr.bf16.mxu0 0
    %2122 = vmatmul.mubr.bf16.gmra.mrb[0].mxu0 %v1984
    %v2123 = vpop.f32.mrb[0].mxu0
    %v2124 = vadd.f32 0.0, %v2123
    %v2125 = vpop.f32.mrb[0].mxu0
    %v2126 = vpop.f32.mrb[0].mxu0
    %v2127 = vadd.f32 0.0, %v2126
    %v2128 = vpop.f32.mrb[0].mxu0
    %2129 = vmatprep.mubr.bf16.mxu0 0
    %2130 = vmatmul.mubr.bf16.gmra.mrb[0].mxu0 %v1987
    %v2131 = vpop.f32.mrb[0].mxu0
    %v2132 = vadd.f32 0.0, %v2131
    %v2133 = vpop.f32.mrb[0].mxu0
    %v2134 = vpop.f32.mrb[0].mxu0
    %v2135 = vadd.f32 0.0, %v2134
    %v2136 = vpop.f32.mrb[0].mxu0
    %2137 = vmatprep.mubr.bf16.mxu0 0
    %2138 = vmatmul.mubr.bf16.gmra.mrb[0].mxu0 %v1990
    %v2139 = vpop.f32.mrb[0].mxu0
    %v2140 = vadd.f32 0.0, %v2139
    %v2141 = vpop.f32.mrb[0].mxu0
    %v2142 = vpop.f32.mrb[0].mxu0
    %v2143 = vadd.f32 0.0, %v2142
    %v2144 = vpop.f32.mrb[0].mxu0
    %2145 = vmatprep.mubr.bf16.mxu0 0
    %2146 = vmatmul.mubr.bf16.gmra.mrb[0].mxu0 %v1993
    %v2147 = vpop.f32.mrb[0].mxu0
    %v2148 = vadd.f32 0.0, %v2147
    %v2149 = vpop.f32.mrb[0].mxu0
    %v2150 = vpop.f32.mrb[0].mxu0
    %v2151 = vadd.f32 0.0, %v2150
    %v2152 = vpop.f32.mrb[0].mxu0
    %2153 = vmatprep.mubr.bf16.mxu0 0
    %2154 = vmatmul.mubr.bf16.gmra.mrb[0].mxu0 %v1996
    %v2155 = vpop.f32.mrb[0].mxu0
    %v2156 = vadd.f32 0.0, %v2155
    %v2157 = vpop.f32.mrb[0].mxu0
    %v2158 = vpop.f32.mrb[0].mxu0
    %v2159 = vadd.f32 0.0, %v2158
    %v2160 = vpop.f32.mrb[0].mxu0
    %2161 = vmatprep.mubr.bf16.mxu0 0
    %2162 = vmatmul.mubr.bf16.gmra.mrb[0].mxu0 %v1999
    %v2163 = vpop.f32.mrb[0].mxu0
    %v2164 = vadd.f32 0.0, %v2163
    %v2165 = vpop.f32.mrb[0].mxu0
    %v2166 = vpop.f32.mrb[0].mxu0
    %v2167 = vadd.f32 0.0, %v2166
    %v2168 = vpop.f32.mrb[0].mxu0
    %2169 = vmatprep.mubr.bf16.mxu0 0
    %2170 = vmatmul.mubr.bf16.gmra.mrb[0].mxu0 %v2002
    %v2171 = vpop.f32.mrb[0].mxu0
    %v2172 = vadd.f32 0.0, %v2171
    %v2173 = vpop.f32.mrb[0].mxu0
    %v2174 = vpop.f32.mrb[0].mxu0
    %v2175 = vadd.f32 0.0, %v2174
    %v2176 = vpop.f32.mrb[0].mxu0
    %2177 = vmatprep.mubr.bf16.mxu0 0
    %2178 = vmatmul.mubr.bf16.gmra.mrb[0].mxu0 %v2005
    %v2179 = vpop.f32.mrb[0].mxu0
    %v2180 = vadd.f32 0.0, %v2179
    %v2181 = vpop.f32.mrb[0].mxu0
    %v2182 = vpop.f32.mrb[0].mxu0
    %v2183 = vadd.f32 0.0, %v2182
    %v2184 = vpop.f32.mrb[0].mxu0
    %2185 = vmatprep.mubr.bf16.mxu0 0
    %2186 = vmatmul.mubr.bf16.gmra.mrb[0].mxu0 %v2008
    %v2187 = vpop.f32.mrb[0].mxu0
    %v2188 = vadd.f32 0.0, %v2187
    %v2189 = vpop.f32.mrb[0].mxu0
    %v2190 = vpop.f32.mrb[0].mxu0
    %v2191 = vadd.f32 0.0, %v2190
    %v2192 = vpop.f32.mrb[0].mxu0
    %2193 = vmatprep.mubr.bf16.mxu0 0
    %2194 = vmatmul.mubr.bf16.gmra.mrb[0].mxu0 %v2011
    %v2195 = vpop.f32.mrb[0].mxu0
    %v2196 = vadd.f32 0.0, %v2195
    %v2197 = vpop.f32.mrb[0].mxu0
    %v2198 = vpop.f32.mrb[0].mxu0
    %v2199 = vadd.f32 0.0, %v2198
    %v2200 = vpop.f32.mrb[0].mxu0
    %2201 = vmatprep.mubr.bf16.mxu0 0
    %2202 = vmatmul.mubr.bf16.gmra.mrb[0].mxu0 %v2014
    %v2203 = vpop.f32.mrb[0].mxu0
    %v2204 = vadd.f32 0.0, %v2203
    %v2205 = vpop.f32.mrb[0].mxu0
    %v2206 = vpop.f32.mrb[0].mxu0
    %v2207 = vadd.f32 0.0, %v2206
    %v2208 = vpop.f32.mrb[0].mxu0
    %2209 = vmatprep.mubr.bf16.mxu0 0
    %2210 = vmatmul.mubr.bf16.gmra.mrb[0].mxu0 %v2017
    %v2211 = vpop.f32.mrb[0].mxu0
    %v2212 = vadd.f32 0.0, %v2211
    %v2213 = vpop.f32.mrb[0].mxu0
    %v2214 = vpop.f32.mrb[0].mxu0
    %v2215 = vadd.f32 0.0, %v2214
    %v2216 = vpop.f32.mrb[0].mxu0
    %2217 = vmatprep.mubr.bf16.mxu0 0
    %2218 = vmatmul.mubr.bf16.gmra.mrb[0].mxu0 %v2020
    %v2219 = vpop.f32.mrb[0].mxu0
    %v2220 = vadd.f32 0.0, %v2219
    %v2221 = vpop.f32.mrb[0].mxu0
    %v2222 = vpop.f32.mrb[0].mxu0
    %v2223 = vadd.f32 0.0, %v2222
    %v2224 = vpop.f32.mrb[0].mxu0
    %2225 = vmatprep.mubr.bf16.mxu0 0
    %2226 = vmatmul.mubr.bf16.gmra.mrb[0].mxu0 %v2023
    %v2227 = vpop.f32.mrb[0].mxu0
    %v2228 = vadd.f32 0.0, %v2227
    %v2229 = vpop.f32.mrb[0].mxu0
    %v2230 = vpop.f32.mrb[0].mxu0
    %v2231 = vadd.f32 0.0, %v2230
    %v2232 = vpop.f32.mrb[0].mxu0
    %2233 = vmatprep.mubr.bf16.mxu0 0
    %2234 = vmatmul.mubr.bf16.gmra.mrb[0].mxu0 %v2026
    %v2235 = vpop.f32.mrb[0].mxu0
    %v2236 = vadd.f32 0.0, %v2235
    %v2237 = vpop.f32.mrb[0].mxu0
    %v2238 = vpop.f32.mrb[0].mxu0
    %v2239 = vadd.f32 0.0, %v2238
    %v2240 = vpop.f32.mrb[0].mxu0
    %2241 = vmatprep.mubr.bf16.mxu0 0
    %2242 = vmatmul.mubr.bf16.gmra.mrb[0].mxu0 %v2029
    %v2243 = vpop.f32.mrb[0].mxu0
    %v2244 = vadd.f32 0.0, %v2243
    %v2245 = vpop.f32.mrb[0].mxu0
    %v2246 = vpop.f32.mrb[0].mxu0
    %v2247 = vadd.f32 0.0, %v2246
    %v2248 = vpop.f32.mrb[0].mxu0
    %2249 = vmatprep.mubr.bf16.mxu0 0
    %2250 = vmatmul.mubr.bf16.gmra.mrb[0].mxu0 %v2032
    %v2251 = vpop.f32.mrb[0].mxu0
    %v2252 = vadd.f32 0.0, %v2251
    %v2253 = vpop.f32.mrb[0].mxu0
    %v2254 = vpop.f32.mrb[0].mxu0
    %v2255 = vadd.f32 0.0, %v2254
    %v2256 = vpop.f32.mrb[0].mxu0
    %2257 = vmatprep.mubr.bf16.mxu0 0
    %2258 = vmatmul.mubr.bf16.gmra.mrb[0].mxu0 %v2035
    %v2259 = vpop.f32.mrb[0].mxu0
    %v2260 = vadd.f32 0.0, %v2259
    %v2261 = vpop.f32.mrb[0].mxu0
    %v2262 = vpop.f32.mrb[0].mxu0
    %v2263 = vadd.f32 0.0, %v2262
    %v2264 = vpop.f32.mrb[0].mxu0
    %2265 = vmatprep.mubr.bf16.mxu0 0
    %2266 = vmatmul.mubr.bf16.gmra.mrb[0].mxu0 %v2038
    %v2267 = vpop.f32.mrb[0].mxu0
    %v2268 = vadd.f32 0.0, %v2267
    %v2269 = vpop.f32.mrb[0].mxu0
    %v2270 = vpop.f32.mrb[0].mxu0
    %v2271 = vadd.f32 0.0, %v2270
    %v2272 = vpop.f32.mrb[0].mxu0
    %2273 = vmatprep.mubr.bf16.mxu0 0
    %2274 = vmatmul.mubr.bf16.gmra.mrb[0].mxu0 %v2041
    %v2275 = vpop.f32.mrb[0].mxu0
    %v2276 = vadd.f32 0.0, %v2275
    %v2277 = vpop.f32.mrb[0].mxu0
    %v2278 = vpop.f32.mrb[0].mxu0
    %v2279 = vadd.f32 0.0, %v2278
    %v2280 = vpop.f32.mrb[0].mxu0
    %2281 = vmatprep.mubr.bf16.mxu0 0
    %2282 = vmatmul.mubr.bf16.gmra.mrb[0].mxu0 %v2044
    %v2283 = vpop.f32.mrb[0].mxu0
    %v2284 = vadd.f32 0.0, %v2283
    %v2285 = vpop.f32.mrb[0].mxu0
    %v2286 = vpop.f32.mrb[0].mxu0
    %v2287 = vadd.f32 0.0, %v2286
    %v2288 = vpop.f32.mrb[0].mxu0
    %2289 = vmatprep.mubr.bf16.mxu0 0
    %2290 = vmatmul.mubr.bf16.gmra.mrb[0].mxu0 %v2047
    %v2291 = vpop.f32.mrb[0].mxu0
    %v2292 = vadd.f32 0.0, %v2291
    %v2293 = vpop.f32.mrb[0].mxu0
    %v2294 = vpop.f32.mrb[0].mxu0
    %v2295 = vadd.f32 0.0, %v2294
    %v2296 = vpop.f32.mrb[0].mxu0
    %2297 = vmatprep.mubr.bf16.mxu0 0
    %2298 = vmatmul.mubr.bf16.gmra.mrb[0].mxu0 %v2050
    %v2299 = vpop.f32.mrb[0].mxu0
    %v2300 = vadd.f32 0.0, %v2299
    %v2301 = vpop.f32.mrb[0].mxu0
    %v2302 = vpop.f32.mrb[0].mxu0
    %v2303 = vadd.f32 0.0, %v2302
    %v2304 = vpop.f32.mrb[0].mxu0
    %2305 = vmatprep.mubr.bf16.mxu0 0
    %2306 = vmatmul.mubr.bf16.gmra.mrb[0].mxu0 %v2053
    %v2307 = vpop.f32.mrb[0].mxu0
    %v2308 = vadd.f32 0.0, %v2307
    %v2309 = vpop.f32.mrb[0].mxu0
    %v2310 = vpop.f32.mrb[0].mxu0
    %v2311 = vadd.f32 0.0, %v2310
    %v2312 = vpop.f32.mrb[0].mxu0
    %2313 = vmatprep.mubr.bf16.mxu0 0
    %2314 = vmatmul.mubr.bf16.gmra.mrb[0].mxu0 %v2056
    %v2315 = vpop.f32.mrb[0].mxu0
    %v2316 = vadd.f32 0.0, %v2315
    %v2317 = vpop.f32.mrb[0].mxu0
    %v2318 = vpop.f32.mrb[0].mxu0
    %v2319 = vadd.f32 0.0, %v2318
    %v2320 = vpop.f32.mrb[0].mxu0
    %2321 = vmatprep.mubr.bf16.mxu0 0
    %2322 = vmatmul.mubr.bf16.gmra.mrb[0].mxu0 %v2059
    %v2323 = vpop.f32.mrb[0].mxu0
    %v2324 = vadd.f32 0.0, %v2323
    %v2325 = vpop.f32.mrb[0].mxu0
    %v2326 = vpop.f32.mrb[0].mxu0
    %v2327 = vadd.f32 0.0, %v2326
    %v2328 = vpop.f32.mrb[0].mxu0
    %2329 = vmatprep.mubr.bf16.mxu0 0
    %2330 = vmatmul.mubr.bf16.gmra.mrb[0].mxu0 %v2062
    %v2331 = vpop.f32.mrb[0].mxu0
    %v2332 = vadd.f32 0.0, %v2331
    %v2333 = vpop.f32.mrb[0].mxu0
    %v2334 = vpop.f32.mrb[0].mxu0
    %v2335 = vadd.f32 0.0, %v2334
    %v2336 = vpop.f32.mrb[0].mxu0
    %2337 = vmatprep.mubr.bf16.mxu0 0
    %2338 = vmatmul.mubr.bf16.gmra.mrb[0].mxu0 %v2065
    %v2339 = vpop.f32.mrb[0].mxu0
    %v2340 = vadd.f32 0.0, %v2339
    %v2341 = vpop.f32.mrb[0].mxu0
    %v2342 = vpop.f32.mrb[0].mxu0
    %v2343 = vadd.f32 0.0, %v2342
    %v2344 = vpop.f32.mrb[0].mxu0
    %2345 = vmatprep.mubr.bf16.mxu0 0
    %2346 = vmatmul.mubr.bf16.gmra.mrb[0].mxu0 %v2068
    %v2347 = vpop.f32.mrb[0].mxu0
    %v2348 = vadd.f32 0.0, %v2347
    %v2349 = vpop.f32.mrb[0].mxu0
    %v2350 = vpop.f32.mrb[0].mxu0
    %v2351 = vadd.f32 0.0, %v2350
    %v2352 = vpop.f32.mrb[0].mxu0
    %2353 = vmatprep.mubr.bf16.mxu0 0
    %2354 = vmatmul.mubr.bf16.gmra.mrb[0].mxu0 %v2071
    %v2355 = vpop.f32.mrb[0].mxu0
    %v2356 = vadd.f32 0.0, %v2355
    %v2357 = vpop.f32.mrb[0].mxu0
    %v2358 = vpop.f32.mrb[0].mxu0
    %v2359 = vadd.f32 0.0, %v2358
    %v2360 = vpop.f32.mrb[0].mxu0
    %2361 = vdwg.mxu0
    %v2362 = vadd.f32 %v1800, %v2108
    %v2363 = vadd.f32 %v1801, %v2111
    %v2364 = vadd.f32 %v1802, %v2116
    %v2365 = vadd.f32 %v1803, %v2119
    %v2366 = vadd.f32 %v1804, %v2124
    %v2367 = vadd.f32 %v1805, %v2127
    %v2368 = vadd.f32 %v1806, %v2132
    %v2369 = vadd.f32 %v1807, %v2135
    %v2370 = vadd.f32 %v1808, %v2140
    %v2371 = vadd.f32 %v1809, %v2143
    %v2372 = vadd.f32 %v1810, %v2148
    %v2373 = vadd.f32 %v1811, %v2151
    %v2374 = vadd.f32 %v1812, %v2156
    %v2375 = vadd.f32 %v1813, %v2159
    %v2376 = vadd.f32 %v1814, %v2164
    %v2377 = vadd.f32 %v1815, %v2167
    %v2378 = vadd.f32 %v1816, %v2172
    %v2379 = vadd.f32 %v1817, %v2175
    %v2380 = vadd.f32 %v1818, %v2180
    %v2381 = vadd.f32 %v1819, %v2183
    %v2382 = vadd.f32 %v1820, %v2188
    %v2383 = vadd.f32 %v1821, %v2191
    %v2384 = vadd.f32 %v1822, %v2196
    %v2385 = vadd.f32 %v1823, %v2199
    %v2386 = vadd.f32 %v1824, %v2204
    %v2387 = vadd.f32 %v1825, %v2207
    %v2388 = vadd.f32 %v1826, %v2212
    %v2389 = vadd.f32 %v1827, %v2215
    %v2390 = vadd.f32 %v1828, %v2220
    %v2391 = vadd.f32 %v1829, %v2223
    %v2392 = vadd.f32 %v1830, %v2228
    %v2393 = vadd.f32 %v1831, %v2231
    %v2394 = vadd.f32 %v1832, %v2236
    %v2395 = vadd.f32 %v1833, %v2239
    %v2396 = vadd.f32 %v1834, %v2244
    %v2397 = vadd.f32 %v1835, %v2247
    %v2398 = vadd.f32 %v1836, %v2252
    %v2399 = vadd.f32 %v1837, %v2255
    %v2400 = vadd.f32 %v1838, %v2260
    %v2401 = vadd.f32 %v1839, %v2263
    %v2402 = vadd.f32 %v1840, %v2268
    %v2403 = vadd.f32 %v1841, %v2271
    %v2404 = vadd.f32 %v1842, %v2276
    %v2405 = vadd.f32 %v1843, %v2279
    %v2406 = vadd.f32 %v1844, %v2284
    %v2407 = vadd.f32 %v1845, %v2287
    %v2408 = vadd.f32 %v1846, %v2292
    %v2409 = vadd.f32 %v1847, %v2295
    %v2410 = vadd.f32 %v1848, %v2300
    %v2411 = vadd.f32 %v1849, %v2303
    %v2412 = vadd.f32 %v1850, %v2308
    %v2413 = vadd.f32 %v1851, %v2311
    %v2414 = vadd.f32 %v1852, %v2316
    %v2415 = vadd.f32 %v1853, %v2319
    %v2416 = vadd.f32 %v1854, %v2324
    %v2417 = vadd.f32 %v1855, %v2327
    %v2418 = vadd.f32 %v1856, %v2332
    %v2419 = vadd.f32 %v1857, %v2335
    %v2420 = vadd.f32 %v1858, %v2340
    %v2421 = vadd.f32 %v1859, %v2343
    %v2422 = vadd.f32 %v1860, %v2348
    %v2423 = vadd.f32 %v1861, %v2351
    %v2424 = vadd.f32 %v1862, %v2356
    %v2425 = vadd.f32 %v1863, %v2359
    %v2426 = vld [vmem:[%s242 + $0x1] sm:$0xff]
    %v2427 = vld [vmem:[%s242 + $0x9] sm:$0xff]
    %v2428 = vld [vmem:[%s242 + $0x19] sm:$0xff]
    %v2429 = vld [vmem:[%s242 + $0x21] sm:$0xff]
    %v2430 = vld [vmem:[%s242 + $0x31] sm:$0xff]
    %v2431 = vld [vmem:[%s242 + $0x39] sm:$0xff]
    %v2432 = vld [vmem:[%s242 + $0x49] sm:$0xff]
    %v2433 = vld [vmem:[%s242 + $0x51] sm:$0xff]
    %v2434 = vld [vmem:[%s242 + $0x61] sm:$0xff]
    %v2435 = vld [vmem:[%s242 + $0x69] sm:$0xff]
    %v2436 = vld [vmem:[%s242 + $0x79] sm:$0xff]
    %v2437 = vld [vmem:[%s242 + $0x81] sm:$0xff]
    %v2438 = vld [vmem:[%s242 + $0x91] sm:$0xff]
    %v2439 = vld [vmem:[%s242 + $0x99] sm:$0xff]
    %v2440 = vld [vmem:[%s242 + $0xa9] sm:$0xff]
    %v2441 = vld [vmem:[%s242 + $0xb1] sm:$0xff]
    %v2442 = vld [vmem:[%s242 + $0xc1] sm:$0xff]
    %v2443 = vld [vmem:[%s242 + $0xc9] sm:$0xff]
    %v2444 = vld [vmem:[%s242 + $0xd9] sm:$0xff]
    %v2445 = vld [vmem:[%s242 + $0xe1] sm:$0xff]
    %v2446 = vld [vmem:[%s242 + $0xf1] sm:$0xff]
    %v2447 = vld [vmem:[%s242 + $0xf9] sm:$0xff]
    %v2448 = vld [vmem:[%s242 + $0x109] sm:$0xff]
    %v2449 = vld [vmem:[%s242 + $0x111] sm:$0xff]
    %v2450 = vld [vmem:[%s242 + $0x121] sm:$0xff]
    %v2451 = vld [vmem:[%s242 + $0x129] sm:$0xff]
    %v2452 = vld [vmem:[%s242 + $0x139] sm:$0xff]
    %v2453 = vld [vmem:[%s242 + $0x141] sm:$0xff]
    %v2454 = vld [vmem:[%s242 + $0x151] sm:$0xff]
    %v2455 = vld [vmem:[%s242 + $0x159] sm:$0xff]
    %v2456 = vld [vmem:[%s242 + $0x169] sm:$0xff]
    %v2457 = vld [vmem:[%s242 + $0x171] sm:$0xff]
    %v2458 = vld [vmem:[%s242 + $0x1b1] sm:$0xff]
    %v2459 = vld [vmem:[%s242 + $0x1b9] sm:$0xff]
    %v2460 = vld [vmem:[%s242 + $0x1c9] sm:$0xff]
    %v2461 = vld [vmem:[%s242 + $0x1d1] sm:$0xff]
    %v2462 = vld [vmem:[%s242 + $0x1e1] sm:$0xff]
    %v2463 = vld [vmem:[%s242 + $0x1e9] sm:$0xff]
    %v2464 = vld [vmem:[%s242 + $0x1f9] sm:$0xff]
    %v2465 = vld [vmem:[%s242 + $0x201] sm:$0xff]
    %v2466 = vld [vmem:[%s242 + $0x211] sm:$0xff]
    %v2467 = vld [vmem:[%s242 + $0x219] sm:$0xff]
    %v2468 = vld [vmem:[%s242 + $0x229] sm:$0xff]
    %v2469 = vld [vmem:[%s242 + $0x231] sm:$0xff]
    %v2470 = vld [vmem:[%s242 + $0x241] sm:$0xff]
    %v2471 = vld [vmem:[%s242 + $0x249] sm:$0xff]
    %v2472 = vld [vmem:[%s242 + $0x259] sm:$0xff]
    %v2473 = vld [vmem:[%s242 + $0x261] sm:$0xff]
    %v2474 = vld [vmem:[%s242 + $0x271] sm:$0xff]
    %v2475 = vld [vmem:[%s242 + $0x279] sm:$0xff]
    %v2476 = vld [vmem:[%s242 + $0x289] sm:$0xff]
    %v2477 = vld [vmem:[%s242 + $0x291] sm:$0xff]
    %v2478 = vld [vmem:[%s242 + $0x2a1] sm:$0xff]
    %v2479 = vld [vmem:[%s242 + $0x2a9] sm:$0xff]
    %v2480 = vld [vmem:[%s242 + $0x2b9] sm:$0xff]
    %v2481 = vld [vmem:[%s242 + $0x2c1] sm:$0xff]
    %v2482 = vld [vmem:[%s242 + $0x2d1] sm:$0xff]
    %v2483 = vld [vmem:[%s242 + $0x2d9] sm:$0xff]
    %v2484 = vld [vmem:[%s242 + $0x2e9] sm:$0xff]
    %v2485 = vld [vmem:[%s242 + $0x2f1] sm:$0xff]
    %v2486 = vld [vmem:[%s242 + $0x301] sm:$0xff]
    %v2487 = vld [vmem:[%s242 + $0x309] sm:$0xff]
    %v2488 = vld [vmem:[%s242 + $0x319] sm:$0xff]
    %v2489 = vld [vmem:[%s242 + $0x321] sm:$0xff]
    %v2490 = vpack.c.bf16 %v2427, %v2426
    %v2491 = vpack.c.bf16 %v2429, %v2428
    %v2492 = vpack.c.bf16 %v2431, %v2430
    %v2493 = vpack.c.bf16 %v2433, %v2432
    %v2494 = vpack.c.bf16 %v2435, %v2434
    %v2495 = vpack.c.bf16 %v2437, %v2436
    %v2496 = vpack.c.bf16 %v2439, %v2438
    %v2497 = vpack.c.bf16 %v2441, %v2440
    %v2498 = vpack.c.bf16 %v2443, %v2442
    %v2499 = vpack.c.bf16 %v2445, %v2444
    %v2500 = vpack.c.bf16 %v2447, %v2446
    %v2501 = vpack.c.bf16 %v2449, %v2448
    %v2502 = vpack.c.bf16 %v2451, %v2450
    %v2503 = vpack.c.bf16 %v2453, %v2452
    %v2504 = vpack.c.bf16 %v2455, %v2454
    %v2505 = vpack.c.bf16 %v2457, %v2456
    %v2506 = vpack.c.bf16 %v2459, %v2458
    %v2507 = vpack.c.bf16 %v2461, %v2460
    %v2508 = vpack.c.bf16 %v2463, %v2462
    %v2509 = vpack.c.bf16 %v2465, %v2464
    %v2510 = vpack.c.bf16 %v2467, %v2466
    %v2511 = vpack.c.bf16 %v2469, %v2468
    %v2512 = vpack.c.bf16 %v2471, %v2470
    %v2513 = vpack.c.bf16 %v2473, %v2472
    %v2514 = vpack.c.bf16 %v2475, %v2474
    %v2515 = vpack.c.bf16 %v2477, %v2476
    %v2516 = vpack.c.bf16 %v2479, %v2478
    %v2517 = vpack.c.bf16 %v2481, %v2480
    %v2518 = vpack.c.bf16 %v2483, %v2482
    %v2519 = vpack.c.bf16 %v2485, %v2484
    %v2520 = vpack.c.bf16 %v2487, %v2486
    %v2521 = vpack.c.bf16 %v2489, %v2488
    %s2522 = scalar_lea.vmem [#allocation5], 64
    %v2523 = vld [vmem:[%s2522] sm:$0xf]
    %v2524 = vld [vmem:[%s2522 + $0x4] sm:$0xf]
    %v2525 = vld [vmem:[%s2522 + $0x8] sm:$0xf]
    %v2526 = vld [vmem:[%s2522 + $0xc] sm:$0xf]
    %v2531 = vunpack.c.l.b16 %v2523
    %v2532 = vunpack.c.l.b16 %v2524
    %v2533 = vunpack.c.l.b16 %v2525
    %v2534 = vunpack.c.l.b16 %v2526
    %v2535 = vpack.c.b16 %v2532, %v2531
    %v2536 = vpack.c.b16 %v2534, %v2533
    %v2540 = vsel %vm68, %v2490, 0
    %v2543 = vsel %vm68, %v2491, 0
    %v2546 = vsel %vm68, %v2492, 0
    %v2549 = vsel %vm68, %v2493, 0
    %v2552 = vsel %vm68, %v2494, 0
    %v2555 = vsel %vm68, %v2495, 0
    %v2558 = vsel %vm68, %v2496, 0
    %v2561 = vsel %vm68, %v2497, 0
    %v2564 = vsel %vm68, %v2498, 0
    %v2567 = vsel %vm68, %v2499, 0
    %v2570 = vsel %vm68, %v2500, 0
    %v2573 = vsel %vm68, %v2501, 0
    %v2576 = vsel %vm68, %v2502, 0
    %v2579 = vsel %vm68, %v2503, 0
    %v2582 = vsel %vm68, %v2504, 0
    %v2585 = vsel %vm68, %v2505, 0
    %v2588 = vsel %vm68, %v2506, 0
    %v2591 = vsel %vm68, %v2507, 0
    %v2594 = vsel %vm68, %v2508, 0
    %v2597 = vsel %vm68, %v2509, 0
    %v2600 = vsel %vm68, %v2510, 0
    %v2603 = vsel %vm68, %v2511, 0
    %v2606 = vsel %vm68, %v2512, 0
    %v2609 = vsel %vm68, %v2513, 0
    %v2612 = vsel %vm68, %v2514, 0
    %v2615 = vsel %vm68, %v2515, 0
    %v2618 = vsel %vm68, %v2516, 0
    %v2621 = vsel %vm68, %v2517, 0
    %v2624 = vsel %vm68, %v2518, 0
    %v2627 = vsel %vm68, %v2519, 0
    %v2630 = vsel %vm68, %v2520, 0
    %v2633 = vsel %vm68, %v2521, 0
    %2635 = vmatprep.subr.bf16.mxu0 0
    %2636 = vmatpush1.bf16.msra.mxu0 %v2535
    %2637 = vmatprep.subr.bf16.mxu0 0
    %2638 = vmatpush1.bf16.msra.mxu0 %v2536
    %2639 = vmatprep.subr.bf16.mxu0 0
    %2640 = vmatpush1.bf16.msra.mxu0 0
    %2641 = vmatprep.subr.bf16.mxu0 0
    %2642 = vmatpush1.bf16.msra.mxu0 0
    %2643 = vmatprep.subr.bf16.mxu0 0
    %2644 = vmatpush1.bf16.msra.mxu0 0
    %2645 = vmatprep.subr.bf16.mxu0 0
    %2646 = vmatpush1.bf16.msra.mxu0 0
    %2647 = vmatprep.subr.bf16.mxu0 0
    %2648 = vmatpush1.bf16.msra.mxu0 0
    %2649 = vmatprep.subr.bf16.mxu0 0
    %2650 = vmatpush1.bf16.msra.mxu0 0
    %2651 = vmatprep.subr.bf16.mxu0 0
    %2652 = vmatpush1.bf16.msra.mxu0 0
    %2653 = vmatprep.subr.bf16.mxu0 0
    %2654 = vmatpush1.bf16.msra.mxu0 0
    %2655 = vmatprep.subr.bf16.mxu0 0
    %2656 = vmatpush1.bf16.msra.mxu0 0
    %2657 = vmatprep.subr.bf16.mxu0 0
    %2658 = vmatpush1.bf16.msra.mxu0 0
    %2659 = vmatprep.subr.bf16.mxu0 0
    %2660 = vmatpush1.bf16.msra.mxu0 0
    %2661 = vmatprep.subr.bf16.mxu0 0
    %2662 = vmatpush1.bf16.msra.mxu0 0
    %2663 = vmatprep.subr.bf16.mxu0 0
    %2664 = vmatpush1.bf16.msra.mxu0 0
    %2665 = vmatprep.subr.bf16.mxu0 0
    %2666 = vmatpush1.bf16.msra.mxu0 0
    %2667 = vmatprep.mubr.bf16.mxu0 0
    %2668 = vmatmul.mubr.bf16.gmra.mrb[0].mxu0 %v2540
    %v2669 = vpop.f32.mrb[0].mxu0
    %v2670 = vadd.f32 0.0, %v2669
    %v2671 = vpop.f32.mrb[0].mxu0
    %v2672 = vpop.f32.mrb[0].mxu0
    %v2673 = vadd.f32 0.0, %v2672
    %v2674 = vpop.f32.mrb[0].mxu0
    %2675 = vmatprep.mubr.bf16.mxu0 0
    %2676 = vmatmul.mubr.bf16.gmra.mrb[0].mxu0 %v2543
    %v2677 = vpop.f32.mrb[0].mxu0
    %v2678 = vadd.f32 0.0, %v2677
    %v2679 = vpop.f32.mrb[0].mxu0
    %v2680 = vpop.f32.mrb[0].mxu0
    %v2681 = vadd.f32 0.0, %v2680
    %v2682 = vpop.f32.mrb[0].mxu0
    %2683 = vmatprep.mubr.bf16.mxu0 0
    %2684 = vmatmul.mubr.bf16.gmra.mrb[0].mxu0 %v2546
    %v2685 = vpop.f32.mrb[0].mxu0
    %v2686 = vadd.f32 0.0, %v2685
    %v2687 = vpop.f32.mrb[0].mxu0
    %v2688 = vpop.f32.mrb[0].mxu0
    %v2689 = vadd.f32 0.0, %v2688
    %v2690 = vpop.f32.mrb[0].mxu0
    %2691 = vmatprep.mubr.bf16.mxu0 0
    %2692 = vmatmul.mubr.bf16.gmra.mrb[0].mxu0 %v2549
    %v2693 = vpop.f32.mrb[0].mxu0
    %v2694 = vadd.f32 0.0, %v2693
    %v2695 = vpop.f32.mrb[0].mxu0
    %v2696 = vpop.f32.mrb[0].mxu0
    %v2697 = vadd.f32 0.0, %v2696
    %v2698 = vpop.f32.mrb[0].mxu0
    %2699 = vmatprep.mubr.bf16.mxu0 0
    %2700 = vmatmul.mubr.bf16.gmra.mrb[0].mxu0 %v2552
    %v2701 = vpop.f32.mrb[0].mxu0
    %v2702 = vadd.f32 0.0, %v2701
    %v2703 = vpop.f32.mrb[0].mxu0
    %v2704 = vpop.f32.mrb[0].mxu0
    %v2705 = vadd.f32 0.0, %v2704
    %v2706 = vpop.f32.mrb[0].mxu0
    %2707 = vmatprep.mubr.bf16.mxu0 0
    %2708 = vmatmul.mubr.bf16.gmra.mrb[0].mxu0 %v2555
    %v2709 = vpop.f32.mrb[0].mxu0
    %v2710 = vadd.f32 0.0, %v2709
    %v2711 = vpop.f32.mrb[0].mxu0
    %v2712 = vpop.f32.mrb[0].mxu0
    %v2713 = vadd.f32 0.0, %v2712
    %v2714 = vpop.f32.mrb[0].mxu0
    %2715 = vmatprep.mubr.bf16.mxu0 0
    %2716 = vmatmul.mubr.bf16.gmra.mrb[0].mxu0 %v2558
    %v2717 = vpop.f32.mrb[0].mxu0
    %v2718 = vadd.f32 0.0, %v2717
    %v2719 = vpop.f32.mrb[0].mxu0
    %v2720 = vpop.f32.mrb[0].mxu0
    %v2721 = vadd.f32 0.0, %v2720
    %v2722 = vpop.f32.mrb[0].mxu0
    %2723 = vmatprep.mubr.bf16.mxu0 0
    %2724 = vmatmul.mubr.bf16.gmra.mrb[0].mxu0 %v2561
    %v2725 = vpop.f32.mrb[0].mxu0
    %v2726 = vadd.f32 0.0, %v2725
    %v2727 = vpop.f32.mrb[0].mxu0
    %v2728 = vpop.f32.mrb[0].mxu0
    %v2729 = vadd.f32 0.0, %v2728
    %v2730 = vpop.f32.mrb[0].mxu0
    %2731 = vmatprep.mubr.bf16.mxu0 0
    %2732 = vmatmul.mubr.bf16.gmra.mrb[0].mxu0 %v2564
    %v2733 = vpop.f32.mrb[0].mxu0
    %v2734 = vadd.f32 0.0, %v2733
    %v2735 = vpop.f32.mrb[0].mxu0
    %v2736 = vpop.f32.mrb[0].mxu0
    %v2737 = vadd.f32 0.0, %v2736
    %v2738 = vpop.f32.mrb[0].mxu0
    %2739 = vmatprep.mubr.bf16.mxu0 0
    %2740 = vmatmul.mubr.bf16.gmra.mrb[0].mxu0 %v2567
    %v2741 = vpop.f32.mrb[0].mxu0
    %v2742 = vadd.f32 0.0, %v2741
    %v2743 = vpop.f32.mrb[0].mxu0
    %v2744 = vpop.f32.mrb[0].mxu0
    %v2745 = vadd.f32 0.0, %v2744
    %v2746 = vpop.f32.mrb[0].mxu0
    %2747 = vmatprep.mubr.bf16.mxu0 0
    %2748 = vmatmul.mubr.bf16.gmra.mrb[0].mxu0 %v2570
    %v2749 = vpop.f32.mrb[0].mxu0
    %v2750 = vadd.f32 0.0, %v2749
    %v2751 = vpop.f32.mrb[0].mxu0
    %v2752 = vpop.f32.mrb[0].mxu0
    %v2753 = vadd.f32 0.0, %v2752
    %v2754 = vpop.f32.mrb[0].mxu0
    %2755 = vmatprep.mubr.bf16.mxu0 0
    %2756 = vmatmul.mubr.bf16.gmra.mrb[0].mxu0 %v2573
    %v2757 = vpop.f32.mrb[0].mxu0
    %v2758 = vadd.f32 0.0, %v2757
    %v2759 = vpop.f32.mrb[0].mxu0
    %v2760 = vpop.f32.mrb[0].mxu0
    %v2761 = vadd.f32 0.0, %v2760
    %v2762 = vpop.f32.mrb[0].mxu0
    %2763 = vmatprep.mubr.bf16.mxu0 0
    %2764 = vmatmul.mubr.bf16.gmra.mrb[0].mxu0 %v2576
    %v2765 = vpop.f32.mrb[0].mxu0
    %v2766 = vadd.f32 0.0, %v2765
    %v2767 = vpop.f32.mrb[0].mxu0
    %v2768 = vpop.f32.mrb[0].mxu0
    %v2769 = vadd.f32 0.0, %v2768
    %v2770 = vpop.f32.mrb[0].mxu0
    %2771 = vmatprep.mubr.bf16.mxu0 0
    %2772 = vmatmul.mubr.bf16.gmra.mrb[0].mxu0 %v2579
    %v2773 = vpop.f32.mrb[0].mxu0
    %v2774 = vadd.f32 0.0, %v2773
    %v2775 = vpop.f32.mrb[0].mxu0
    %v2776 = vpop.f32.mrb[0].mxu0
    %v2777 = vadd.f32 0.0, %v2776
    %v2778 = vpop.f32.mrb[0].mxu0
    %2779 = vmatprep.mubr.bf16.mxu0 0
    %2780 = vmatmul.mubr.bf16.gmra.mrb[0].mxu0 %v2582
    %v2781 = vpop.f32.mrb[0].mxu0
    %v2782 = vadd.f32 0.0, %v2781
    %v2783 = vpop.f32.mrb[0].mxu0
    %v2784 = vpop.f32.mrb[0].mxu0
    %v2785 = vadd.f32 0.0, %v2784
    %v2786 = vpop.f32.mrb[0].mxu0
    %2787 = vmatprep.mubr.bf16.mxu0 0
    %2788 = vmatmul.mubr.bf16.gmra.mrb[0].mxu0 %v2585
    %v2789 = vpop.f32.mrb[0].mxu0
    %v2790 = vadd.f32 0.0, %v2789
    %v2791 = vpop.f32.mrb[0].mxu0
    %v2792 = vpop.f32.mrb[0].mxu0
    %v2793 = vadd.f32 0.0, %v2792
    %v2794 = vpop.f32.mrb[0].mxu0
    %2795 = vmatprep.mubr.bf16.mxu0 0
    %2796 = vmatmul.mubr.bf16.gmra.mrb[0].mxu0 %v2588
    %v2797 = vpop.f32.mrb[0].mxu0
    %v2798 = vadd.f32 0.0, %v2797
    %v2799 = vpop.f32.mrb[0].mxu0
    %v2800 = vpop.f32.mrb[0].mxu0
    %v2801 = vadd.f32 0.0, %v2800
    %v2802 = vpop.f32.mrb[0].mxu0
    %2803 = vmatprep.mubr.bf16.mxu0 0
    %2804 = vmatmul.mubr.bf16.gmra.mrb[0].mxu0 %v2591
    %v2805 = vpop.f32.mrb[0].mxu0
    %v2806 = vadd.f32 0.0, %v2805
    %v2807 = vpop.f32.mrb[0].mxu0
    %v2808 = vpop.f32.mrb[0].mxu0
    %v2809 = vadd.f32 0.0, %v2808
    %v2810 = vpop.f32.mrb[0].mxu0
    %2811 = vmatprep.mubr.bf16.mxu0 0
    %2812 = vmatmul.mubr.bf16.gmra.mrb[0].mxu0 %v2594
    %v2813 = vpop.f32.mrb[0].mxu0
    %v2814 = vadd.f32 0.0, %v2813
    %v2815 = vpop.f32.mrb[0].mxu0
    %v2816 = vpop.f32.mrb[0].mxu0
    %v2817 = vadd.f32 0.0, %v2816
    %v2818 = vpop.f32.mrb[0].mxu0
    %2819 = vmatprep.mubr.bf16.mxu0 0
    %2820 = vmatmul.mubr.bf16.gmra.mrb[0].mxu0 %v2597
    %v2821 = vpop.f32.mrb[0].mxu0
    %v2822 = vadd.f32 0.0, %v2821
    %v2823 = vpop.f32.mrb[0].mxu0
    %v2824 = vpop.f32.mrb[0].mxu0
    %v2825 = vadd.f32 0.0, %v2824
    %v2826 = vpop.f32.mrb[0].mxu0
    %2827 = vmatprep.mubr.bf16.mxu0 0
    %2828 = vmatmul.mubr.bf16.gmra.mrb[0].mxu0 %v2600
    %v2829 = vpop.f32.mrb[0].mxu0
    %v2830 = vadd.f32 0.0, %v2829
    %v2831 = vpop.f32.mrb[0].mxu0
    %v2832 = vpop.f32.mrb[0].mxu0
    %v2833 = vadd.f32 0.0, %v2832
    %v2834 = vpop.f32.mrb[0].mxu0
    %2835 = vmatprep.mubr.bf16.mxu0 0
    %2836 = vmatmul.mubr.bf16.gmra.mrb[0].mxu0 %v2603
    %v2837 = vpop.f32.mrb[0].mxu0
    %v2838 = vadd.f32 0.0, %v2837
    %v2839 = vpop.f32.mrb[0].mxu0
    %v2840 = vpop.f32.mrb[0].mxu0
    %v2841 = vadd.f32 0.0, %v2840
    %v2842 = vpop.f32.mrb[0].mxu0
    %2843 = vmatprep.mubr.bf16.mxu0 0
    %2844 = vmatmul.mubr.bf16.gmra.mrb[0].mxu0 %v2606
    %v2845 = vpop.f32.mrb[0].mxu0
    %v2846 = vadd.f32 0.0, %v2845
    %v2847 = vpop.f32.mrb[0].mxu0
    %v2848 = vpop.f32.mrb[0].mxu0
    %v2849 = vadd.f32 0.0, %v2848
    %v2850 = vpop.f32.mrb[0].mxu0
    %2851 = vmatprep.mubr.bf16.mxu0 0
    %2852 = vmatmul.mubr.bf16.gmra.mrb[0].mxu0 %v2609
    %v2853 = vpop.f32.mrb[0].mxu0
    %v2854 = vadd.f32 0.0, %v2853
    %v2855 = vpop.f32.mrb[0].mxu0
    %v2856 = vpop.f32.mrb[0].mxu0
    %v2857 = vadd.f32 0.0, %v2856
    %v2858 = vpop.f32.mrb[0].mxu0
    %2859 = vmatprep.mubr.bf16.mxu0 0
    %2860 = vmatmul.mubr.bf16.gmra.mrb[0].mxu0 %v2612
    %v2861 = vpop.f32.mrb[0].mxu0
    %v2862 = vadd.f32 0.0, %v2861
    %v2863 = vpop.f32.mrb[0].mxu0
    %v2864 = vpop.f32.mrb[0].mxu0
    %v2865 = vadd.f32 0.0, %v2864
    %v2866 = vpop.f32.mrb[0].mxu0
    %2867 = vmatprep.mubr.bf16.mxu0 0
    %2868 = vmatmul.mubr.bf16.gmra.mrb[0].mxu0 %v2615
    %v2869 = vpop.f32.mrb[0].mxu0
    %v2870 = vadd.f32 0.0, %v2869
    %v2871 = vpop.f32.mrb[0].mxu0
    %v2872 = vpop.f32.mrb[0].mxu0
    %v2873 = vadd.f32 0.0, %v2872
    %v2874 = vpop.f32.mrb[0].mxu0
    %2875 = vmatprep.mubr.bf16.mxu0 0
    %2876 = vmatmul.mubr.bf16.gmra.mrb[0].mxu0 %v2618
    %v2877 = vpop.f32.mrb[0].mxu0
    %v2878 = vadd.f32 0.0, %v2877
    %v2879 = vpop.f32.mrb[0].mxu0
    %v2880 = vpop.f32.mrb[0].mxu0
    %v2881 = vadd.f32 0.0, %v2880
    %v2882 = vpop.f32.mrb[0].mxu0
    %2883 = vmatprep.mubr.bf16.mxu0 0
    %2884 = vmatmul.mubr.bf16.gmra.mrb[0].mxu0 %v2621
    %v2885 = vpop.f32.mrb[0].mxu0
    %v2886 = vadd.f32 0.0, %v2885
    %v2887 = vpop.f32.mrb[0].mxu0
    %v2888 = vpop.f32.mrb[0].mxu0
    %v2889 = vadd.f32 0.0, %v2888
    %v2890 = vpop.f32.mrb[0].mxu0
    %2891 = vmatprep.mubr.bf16.mxu0 0
    %2892 = vmatmul.mubr.bf16.gmra.mrb[0].mxu0 %v2624
    %v2893 = vpop.f32.mrb[0].mxu0
    %v2894 = vadd.f32 0.0, %v2893
    %v2895 = vpop.f32.mrb[0].mxu0
    %v2896 = vpop.f32.mrb[0].mxu0
    %v2897 = vadd.f32 0.0, %v2896
    %v2898 = vpop.f32.mrb[0].mxu0
    %2899 = vmatprep.mubr.bf16.mxu0 0
    %2900 = vmatmul.mubr.bf16.gmra.mrb[0].mxu0 %v2627
    %v2901 = vpop.f32.mrb[0].mxu0
    %v2902 = vadd.f32 0.0, %v2901
    %v2903 = vpop.f32.mrb[0].mxu0
    %v2904 = vpop.f32.mrb[0].mxu0
    %v2905 = vadd.f32 0.0, %v2904
    %v2906 = vpop.f32.mrb[0].mxu0
    %2907 = vmatprep.mubr.bf16.mxu0 0
    %2908 = vmatmul.mubr.bf16.gmra.mrb[0].mxu0 %v2630
    %v2909 = vpop.f32.mrb[0].mxu0
    %v2910 = vadd.f32 0.0, %v2909
    %v2911 = vpop.f32.mrb[0].mxu0
    %v2912 = vpop.f32.mrb[0].mxu0
    %v2913 = vadd.f32 0.0, %v2912
    %v2914 = vpop.f32.mrb[0].mxu0
    %2915 = vmatprep.mubr.bf16.mxu0 0
    %2916 = vmatmul.mubr.bf16.gmra.mrb[0].mxu0 %v2633
    %v2917 = vpop.f32.mrb[0].mxu0
    %v2918 = vadd.f32 0.0, %v2917
    %v2919 = vpop.f32.mrb[0].mxu0
    %v2920 = vpop.f32.mrb[0].mxu0
    %v2921 = vadd.f32 0.0, %v2920
    %v2922 = vpop.f32.mrb[0].mxu0
    %2923 = vdwg.mxu0
    %v2924 = vadd.f32 %v2362, %v2670
    %v2925 = vadd.f32 %v2363, %v2673
    %v2926 = vadd.f32 %v2364, %v2678
    %v2927 = vadd.f32 %v2365, %v2681
    %v2928 = vadd.f32 %v2366, %v2686
    %v2929 = vadd.f32 %v2367, %v2689
    %v2930 = vadd.f32 %v2368, %v2694
    %v2931 = vadd.f32 %v2369, %v2697
    %v2932 = vadd.f32 %v2370, %v2702
    %v2933 = vadd.f32 %v2371, %v2705
    %v2934 = vadd.f32 %v2372, %v2710
    %v2935 = vadd.f32 %v2373, %v2713
    %v2936 = vadd.f32 %v2374, %v2718
    %v2937 = vadd.f32 %v2375, %v2721
    %v2938 = vadd.f32 %v2376, %v2726
    %v2939 = vadd.f32 %v2377, %v2729
    %v2940 = vadd.f32 %v2378, %v2734
    %v2941 = vadd.f32 %v2379, %v2737
    %v2942 = vadd.f32 %v2380, %v2742
    %v2943 = vadd.f32 %v2381, %v2745
    %v2944 = vadd.f32 %v2382, %v2750
    %v2945 = vadd.f32 %v2383, %v2753
    %v2946 = vadd.f32 %v2384, %v2758
    %v2947 = vadd.f32 %v2385, %v2761
    %v2948 = vadd.f32 %v2386, %v2766
    %v2949 = vadd.f32 %v2387, %v2769
    %v2950 = vadd.f32 %v2388, %v2774
    %v2951 = vadd.f32 %v2389, %v2777
    %v2952 = vadd.f32 %v2390, %v2782
    %v2953 = vadd.f32 %v2391, %v2785
    %v2954 = vadd.f32 %v2392, %v2790
    %v2955 = vadd.f32 %v2393, %v2793
    %v2956 = vadd.f32 %v2394, %v2798
    %v2957 = vadd.f32 %v2395, %v2801
    %v2958 = vadd.f32 %v2396, %v2806
    %v2959 = vadd.f32 %v2397, %v2809
    %v2960 = vadd.f32 %v2398, %v2814
    %v2961 = vadd.f32 %v2399, %v2817
    %v2962 = vadd.f32 %v2400, %v2822
    %v2963 = vadd.f32 %v2401, %v2825
    %v2964 = vadd.f32 %v2402, %v2830
    %v2965 = vadd.f32 %v2403, %v2833
    %v2966 = vadd.f32 %v2404, %v2838
    %v2967 = vadd.f32 %v2405, %v2841
    %v2968 = vadd.f32 %v2406, %v2846
    %v2969 = vadd.f32 %v2407, %v2849
    %v2970 = vadd.f32 %v2408, %v2854
    %v2971 = vadd.f32 %v2409, %v2857
    %v2972 = vadd.f32 %v2410, %v2862
    %v2973 = vadd.f32 %v2411, %v2865
    %v2974 = vadd.f32 %v2412, %v2870
    %v2975 = vadd.f32 %v2413, %v2873
    %v2976 = vadd.f32 %v2414, %v2878
    %v2977 = vadd.f32 %v2415, %v2881
    %v2978 = vadd.f32 %v2416, %v2886
    %v2979 = vadd.f32 %v2417, %v2889
    %v2980 = vadd.f32 %v2418, %v2894
    %v2981 = vadd.f32 %v2419, %v2897
    %v2982 = vadd.f32 %v2420, %v2902
    %v2983 = vadd.f32 %v2421, %v2905
    %v2984 = vadd.f32 %v2422, %v2910
    %v2985 = vadd.f32 %v2423, %v2913
    %v2986 = vadd.f32 %v2424, %v2918
    %v2987 = vadd.f32 %v2425, %v2921
    %v2988 = vld [vmem:[%s242 + $0x2] sm:$0xff]
    %v2989 = vld [vmem:[%s242 + $0xa] sm:$0xff]
    %v2990 = vld [vmem:[%s242 + $0x1a] sm:$0xff]
    %v2991 = vld [vmem:[%s242 + $0x22] sm:$0xff]
    %v2992 = vld [vmem:[%s242 + $0x32] sm:$0xff]
    %v2993 = vld [vmem:[%s242 + $0x3a] sm:$0xff]
    %v2994 = vld [vmem:[%s242 + $0x4a] sm:$0xff]
    %v2995 = vld [vmem:[%s242 + $0x52] sm:$0xff]
    %v2996 = vld [vmem:[%s242 + $0x62] sm:$0xff]
    %v2997 = vld [vmem:[%s242 + $0x6a] sm:$0xff]
    %v2998 = vld [vmem:[%s242 + $0x7a] sm:$0xff]
    %v2999 = vld [vmem:[%s242 + $0x82] sm:$0xff]
    %v3000 = vld [vmem:[%s242 + $0x92] sm:$0xff]
    %v3001 = vld [vmem:[%s242 + $0x9a] sm:$0xff]
    %v3002 = vld [vmem:[%s242 + $0xaa] sm:$0xff]
    %v3003 = vld [vmem:[%s242 + $0xb2] sm:$0xff]
    %v3004 = vld [vmem:[%s242 + $0xc2] sm:$0xff]
    %v3005 = vld [vmem:[%s242 + $0xca] sm:$0xff]
    %v3006 = vld [vmem:[%s242 + $0xda] sm:$0xff]
    %v3007 = vld [vmem:[%s242 + $0xe2] sm:$0xff]
    %v3008 = vld [vmem:[%s242 + $0xf2] sm:$0xff]
    %v3009 = vld [vmem:[%s242 + $0xfa] sm:$0xff]
    %v3010 = vld [vmem:[%s242 + $0x10a] sm:$0xff]
    %v3011 = vld [vmem:[%s242 + $0x112] sm:$0xff]
    %v3012 = vld [vmem:[%s242 + $0x122] sm:$0xff]
    %v3013 = vld [vmem:[%s242 + $0x12a] sm:$0xff]
    %v3014 = vld [vmem:[%s242 + $0x13a] sm:$0xff]
    %v3015 = vld [vmem:[%s242 + $0x142] sm:$0xff]
    %v3016 = vld [vmem:[%s242 + $0x152] sm:$0xff]
    %v3017 = vld [vmem:[%s242 + $0x15a] sm:$0xff]
    %v3018 = vld [vmem:[%s242 + $0x16a] sm:$0xff]
    %v3019 = vld [vmem:[%s242 + $0x172] sm:$0xff]
    %v3020 = vld [vmem:[%s242 + $0x1b2] sm:$0xff]
    %v3021 = vld [vmem:[%s242 + $0x1ba] sm:$0xff]
    %v3022 = vld [vmem:[%s242 + $0x1ca] sm:$0xff]
    %v3023 = vld [vmem:[%s242 + $0x1d2] sm:$0xff]
    %v3024 = vld [vmem:[%s242 + $0x1e2] sm:$0xff]
    %v3025 = vld [vmem:[%s242 + $0x1ea] sm:$0xff]
    %v3026 = vld [vmem:[%s242 + $0x1fa] sm:$0xff]
    %v3027 = vld [vmem:[%s242 + $0x202] sm:$0xff]
    %v3028 = vld [vmem:[%s242 + $0x212] sm:$0xff]
    %v3029 = vld [vmem:[%s242 + $0x21a] sm:$0xff]
    %v3030 = vld [vmem:[%s242 + $0x22a] sm:$0xff]
    %v3031 = vld [vmem:[%s242 + $0x232] sm:$0xff]
    %v3032 = vld [vmem:[%s242 + $0x242] sm:$0xff]
    %v3033 = vld [vmem:[%s242 + $0x24a] sm:$0xff]
    %v3034 = vld [vmem:[%s242 + $0x25a] sm:$0xff]
    %v3035 = vld [vmem:[%s242 + $0x262] sm:$0xff]
    %v3036 = vld [vmem:[%s242 + $0x272] sm:$0xff]
    %v3037 = vld [vmem:[%s242 + $0x27a] sm:$0xff]
    %v3038 = vld [vmem:[%s242 + $0x28a] sm:$0xff]
    %v3039 = vld [vmem:[%s242 + $0x292] sm:$0xff]
    %v3040 = vld [vmem:[%s242 + $0x2a2] sm:$0xff]
    %v3041 = vld [vmem:[%s242 + $0x2aa] sm:$0xff]
    %v3042 = vld [vmem:[%s242 + $0x2ba] sm:$0xff]
    %v3043 = vld [vmem:[%s242 + $0x2c2] sm:$0xff]
    %v3044 = vld [vmem:[%s242 + $0x2d2] sm:$0xff]
    %v3045 = vld [vmem:[%s242 + $0x2da] sm:$0xff]
    %v3046 = vld [vmem:[%s242 + $0x2ea] sm:$0xff]
    %v3047 = vld [vmem:[%s242 + $0x2f2] sm:$0xff]
    %v3048 = vld [vmem:[%s242 + $0x302] sm:$0xff]
    %v3049 = vld [vmem:[%s242 + $0x30a] sm:$0xff]
    %v3050 = vld [vmem:[%s242 + $0x31a] sm:$0xff]
    %v3051 = vld [vmem:[%s242 + $0x322] sm:$0xff]
    %v3052 = vpack.c.bf16 %v2989, %v2988
    %v3053 = vpack.c.bf16 %v2991, %v2990
    %v3054 = vpack.c.bf16 %v2993, %v2992
    %v3055 = vpack.c.bf16 %v2995, %v2994
    %v3056 = vpack.c.bf16 %v2997, %v2996
    %v3057 = vpack.c.bf16 %v2999, %v2998
    %v3058 = vpack.c.bf16 %v3001, %v3000
    %v3059 = vpack.c.bf16 %v3003, %v3002
    %v3060 = vpack.c.bf16 %v3005, %v3004
    %v3061 = vpack.c.bf16 %v3007, %v3006
    %v3062 = vpack.c.bf16 %v3009, %v3008
    %v3063 = vpack.c.bf16 %v3011, %v3010
    %v3064 = vpack.c.bf16 %v3013, %v3012
    %v3065 = vpack.c.bf16 %v3015, %v3014
    %v3066 = vpack.c.bf16 %v3017, %v3016
    %v3067 = vpack.c.bf16 %v3019, %v3018
    %v3068 = vpack.c.bf16 %v3021, %v3020
    %v3069 = vpack.c.bf16 %v3023, %v3022
    %v3070 = vpack.c.bf16 %v3025, %v3024
    %v3071 = vpack.c.bf16 %v3027, %v3026
    %v3072 = vpack.c.bf16 %v3029, %v3028
    %v3073 = vpack.c.bf16 %v3031, %v3030
    %v3074 = vpack.c.bf16 %v3033, %v3032
    %v3075 = vpack.c.bf16 %v3035, %v3034
    %v3076 = vpack.c.bf16 %v3037, %v3036
    %v3077 = vpack.c.bf16 %v3039, %v3038
    %v3078 = vpack.c.bf16 %v3041, %v3040
    %v3079 = vpack.c.bf16 %v3043, %v3042
    %v3080 = vpack.c.bf16 %v3045, %v3044
    %v3081 = vpack.c.bf16 %v3047, %v3046
    %v3082 = vpack.c.bf16 %v3049, %v3048
    %v3083 = vpack.c.bf16 %v3051, %v3050
    %s3084 = scalar_lea.vmem [#allocation5], 80
    %v3085 = vld [vmem:[%s3084] sm:$0xf]
    %v3086 = vld [vmem:[%s3084 + $0x4] sm:$0xf]
    %v3087 = vld [vmem:[%s3084 + $0x8] sm:$0xf]
    %v3088 = vld [vmem:[%s3084 + $0xc] sm:$0xf]
    %v3093 = vunpack.c.l.b16 %v3085
    %v3094 = vunpack.c.l.b16 %v3086
    %v3095 = vunpack.c.l.b16 %v3087
    %v3096 = vunpack.c.l.b16 %v3088
    %v3097 = vpack.c.b16 %v3094, %v3093
    %v3098 = vpack.c.b16 %v3096, %v3095
    %v3102 = vsel %vm68, %v3052, 0
    %v3105 = vsel %vm68, %v3053, 0
    %v3108 = vsel %vm68, %v3054, 0
    %v3111 = vsel %vm68, %v3055, 0
    %v3114 = vsel %vm68, %v3056, 0
    %v3117 = vsel %vm68, %v3057, 0
    %v3120 = vsel %vm68, %v3058, 0
    %v3123 = vsel %vm68, %v3059, 0
    %v3126 = vsel %vm68, %v3060, 0
    %v3129 = vsel %vm68, %v3061, 0
    %v3132 = vsel %vm68, %v3062, 0
    %v3135 = vsel %vm68, %v3063, 0
    %v3138 = vsel %vm68, %v3064, 0
    %v3141 = vsel %vm68, %v3065, 0
    %v3144 = vsel %vm68, %v3066, 0
    %v3147 = vsel %vm68, %v3067, 0
    %v3150 = vsel %vm68, %v3068, 0
    %v3153 = vsel %vm68, %v3069, 0
    %v3156 = vsel %vm68, %v3070, 0
    %v3159 = vsel %vm68, %v3071, 0
    %v3162 = vsel %vm68, %v3072, 0
    %v3165 = vsel %vm68, %v3073, 0
    %v3168 = vsel %vm68, %v3074, 0
    %v3171 = vsel %vm68, %v3075, 0
    %v3174 = vsel %vm68, %v3076, 0
    %v3177 = vsel %vm68, %v3077, 0
    %v3180 = vsel %vm68, %v3078, 0
    %v3183 = vsel %vm68, %v3079, 0
    %v3186 = vsel %vm68, %v3080, 0
    %v3189 = vsel %vm68, %v3081, 0
    %v3192 = vsel %vm68, %v3082, 0
    %v3195 = vsel %vm68, %v3083, 0
    %3197 = vmatprep.subr.bf16.mxu0 0
    %3198 = vmatpush1.bf16.msra.mxu0 %v3097
    %3199 = vmatprep.subr.bf16.mxu0 0
    %3200 = vmatpush1.bf16.msra.mxu0 %v3098
    %3201 = vmatprep.subr.bf16.mxu0 0
    %3202 = vmatpush1.bf16.msra.mxu0 0
    %3203 = vmatprep.subr.bf16.mxu0 0
    %3204 = vmatpush1.bf16.msra.mxu0 0
    %3205 = vmatprep.subr.bf16.mxu0 0
    %3206 = vmatpush1.bf16.msra.mxu0 0
    %3207 = vmatprep.subr.bf16.mxu0 0
    %3208 = vmatpush1.bf16.msra.mxu0 0
    %3209 = vmatprep.subr.bf16.mxu0 0
    %3210 = vmatpush1.bf16.msra.mxu0 0
    %3211 = vmatprep.subr.bf16.mxu0 0
    %3212 = vmatpush1.bf16.msra.mxu0 0
    %3213 = vmatprep.subr.bf16.mxu0 0
    %3214 = vmatpush1.bf16.msra.mxu0 0
    %3215 = vmatprep.subr.bf16.mxu0 0
    %3216 = vmatpush1.bf16.msra.mxu0 0
    %3217 = vmatprep.subr.bf16.mxu0 0
    %3218 = vmatpush1.bf16.msra.mxu0 0
    %3219 = vmatprep.subr.bf16.mxu0 0
    %3220 = vmatpush1.bf16.msra.mxu0 0
    %3221 = vmatprep.subr.bf16.mxu0 0
    %3222 = vmatpush1.bf16.msra.mxu0 0
    %3223 = vmatprep.subr.bf16.mxu0 0
    %3224 = vmatpush1.bf16.msra.mxu0 0
    %3225 = vmatprep.subr.bf16.mxu0 0
    %3226 = vmatpush1.bf16.msra.mxu0 0
    %3227 = vmatprep.subr.bf16.mxu0 0
    %3228 = vmatpush1.bf16.msra.mxu0 0
    %3229 = vmatprep.mubr.bf16.mxu0 0
    %3230 = vmatmul.mubr.bf16.gmra.mrb[0].mxu0 %v3102
    %v3231 = vpop.f32.mrb[0].mxu0
    %v3232 = vadd.f32 0.0, %v3231
    %v3233 = vpop.f32.mrb[0].mxu0
    %v3234 = vpop.f32.mrb[0].mxu0
    %v3235 = vadd.f32 0.0, %v3234
    %v3236 = vpop.f32.mrb[0].mxu0
    %3237 = vmatprep.mubr.bf16.mxu0 0
    %3238 = vmatmul.mubr.bf16.gmra.mrb[0].mxu0 %v3105
    %v3239 = vpop.f32.mrb[0].mxu0
    %v3240 = vadd.f32 0.0, %v3239
    %v3241 = vpop.f32.mrb[0].mxu0
    %v3242 = vpop.f32.mrb[0].mxu0
    %v3243 = vadd.f32 0.0, %v3242
    %v3244 = vpop.f32.mrb[0].mxu0
    %3245 = vmatprep.mubr.bf16.mxu0 0
    %3246 = vmatmul.mubr.bf16.gmra.mrb[0].mxu0 %v3108
    %v3247 = vpop.f32.mrb[0].mxu0
    %v3248 = vadd.f32 0.0, %v3247
    %v3249 = vpop.f32.mrb[0].mxu0
    %v3250 = vpop.f32.mrb[0].mxu0
    %v3251 = vadd.f32 0.0, %v3250
    %v3252 = vpop.f32.mrb[0].mxu0
    %3253 = vmatprep.mubr.bf16.mxu0 0
    %3254 = vmatmul.mubr.bf16.gmra.mrb[0].mxu0 %v3111
    %v3255 = vpop.f32.mrb[0].mxu0
    %v3256 = vadd.f32 0.0, %v3255
    %v3257 = vpop.f32.mrb[0].mxu0
    %v3258 = vpop.f32.mrb[0].mxu0
    %v3259 = vadd.f32 0.0, %v3258
    %v3260 = vpop.f32.mrb[0].mxu0
    %3261 = vmatprep.mubr.bf16.mxu0 0
    %3262 = vmatmul.mubr.bf16.gmra.mrb[0].mxu0 %v3114
    %v3263 = vpop.f32.mrb[0].mxu0
    %v3264 = vadd.f32 0.0, %v3263
    %v3265 = vpop.f32.mrb[0].mxu0
    %v3266 = vpop.f32.mrb[0].mxu0
    %v3267 = vadd.f32 0.0, %v3266
    %v3268 = vpop.f32.mrb[0].mxu0
    %3269 = vmatprep.mubr.bf16.mxu0 0
    %3270 = vmatmul.mubr.bf16.gmra.mrb[0].mxu0 %v3117
    %v3271 = vpop.f32.mrb[0].mxu0
    %v3272 = vadd.f32 0.0, %v3271
    %v3273 = vpop.f32.mrb[0].mxu0
    %v3274 = vpop.f32.mrb[0].mxu0
    %v3275 = vadd.f32 0.0, %v3274
    %v3276 = vpop.f32.mrb[0].mxu0
    %3277 = vmatprep.mubr.bf16.mxu0 0
    %3278 = vmatmul.mubr.bf16.gmra.mrb[0].mxu0 %v3120
    %v3279 = vpop.f32.mrb[0].mxu0
    %v3280 = vadd.f32 0.0, %v3279
    %v3281 = vpop.f32.mrb[0].mxu0
    %v3282 = vpop.f32.mrb[0].mxu0
    %v3283 = vadd.f32 0.0, %v3282
    %v3284 = vpop.f32.mrb[0].mxu0
    %3285 = vmatprep.mubr.bf16.mxu0 0
    %3286 = vmatmul.mubr.bf16.gmra.mrb[0].mxu0 %v3123
    %v3287 = vpop.f32.mrb[0].mxu0
    %v3288 = vadd.f32 0.0, %v3287
    %v3289 = vpop.f32.mrb[0].mxu0
    %v3290 = vpop.f32.mrb[0].mxu0
    %v3291 = vadd.f32 0.0, %v3290
    %v3292 = vpop.f32.mrb[0].mxu0
    %3293 = vmatprep.mubr.bf16.mxu0 0
    %3294 = vmatmul.mubr.bf16.gmra.mrb[0].mxu0 %v3126
    %v3295 = vpop.f32.mrb[0].mxu0
    %v3296 = vadd.f32 0.0, %v3295
    %v3297 = vpop.f32.mrb[0].mxu0
    %v3298 = vpop.f32.mrb[0].mxu0
    %v3299 = vadd.f32 0.0, %v3298
    %v3300 = vpop.f32.mrb[0].mxu0
    %3301 = vmatprep.mubr.bf16.mxu0 0
    %3302 = vmatmul.mubr.bf16.gmra.mrb[0].mxu0 %v3129
    %v3303 = vpop.f32.mrb[0].mxu0
    %v3304 = vadd.f32 0.0, %v3303
    %v3305 = vpop.f32.mrb[0].mxu0
    %v3306 = vpop.f32.mrb[0].mxu0
    %v3307 = vadd.f32 0.0, %v3306
    %v3308 = vpop.f32.mrb[0].mxu0
    %3309 = vmatprep.mubr.bf16.mxu0 0
    %3310 = vmatmul.mubr.bf16.gmra.mrb[0].mxu0 %v3132
    %v3311 = vpop.f32.mrb[0].mxu0
    %v3312 = vadd.f32 0.0, %v3311
    %v3313 = vpop.f32.mrb[0].mxu0
    %v3314 = vpop.f32.mrb[0].mxu0
    %v3315 = vadd.f32 0.0, %v3314
    %v3316 = vpop.f32.mrb[0].mxu0
    %3317 = vmatprep.mubr.bf16.mxu0 0
    %3318 = vmatmul.mubr.bf16.gmra.mrb[0].mxu0 %v3135
    %v3319 = vpop.f32.mrb[0].mxu0
    %v3320 = vadd.f32 0.0, %v3319
    %v3321 = vpop.f32.mrb[0].mxu0
    %v3322 = vpop.f32.mrb[0].mxu0
    %v3323 = vadd.f32 0.0, %v3322
    %v3324 = vpop.f32.mrb[0].mxu0
    %3325 = vmatprep.mubr.bf16.mxu0 0
    %3326 = vmatmul.mubr.bf16.gmra.mrb[0].mxu0 %v3138
    %v3327 = vpop.f32.mrb[0].mxu0
    %v3328 = vadd.f32 0.0, %v3327
    %v3329 = vpop.f32.mrb[0].mxu0
    %v3330 = vpop.f32.mrb[0].mxu0
    %v3331 = vadd.f32 0.0, %v3330
    %v3332 = vpop.f32.mrb[0].mxu0
    %3333 = vmatprep.mubr.bf16.mxu0 0
    %3334 = vmatmul.mubr.bf16.gmra.mrb[0].mxu0 %v3141
    %v3335 = vpop.f32.mrb[0].mxu0
    %v3336 = vadd.f32 0.0, %v3335
    %v3337 = vpop.f32.mrb[0].mxu0
    %v3338 = vpop.f32.mrb[0].mxu0
    %v3339 = vadd.f32 0.0, %v3338
    %v3340 = vpop.f32.mrb[0].mxu0
    %3341 = vmatprep.mubr.bf16.mxu0 0
    %3342 = vmatmul.mubr.bf16.gmra.mrb[0].mxu0 %v3144
    %v3343 = vpop.f32.mrb[0].mxu0
    %v3344 = vadd.f32 0.0, %v3343
    %v3345 = vpop.f32.mrb[0].mxu0
    %v3346 = vpop.f32.mrb[0].mxu0
    %v3347 = vadd.f32 0.0, %v3346
    %v3348 = vpop.f32.mrb[0].mxu0
    %3349 = vmatprep.mubr.bf16.mxu0 0
    %3350 = vmatmul.mubr.bf16.gmra.mrb[0].mxu0 %v3147
    %v3351 = vpop.f32.mrb[0].mxu0
    %v3352 = vadd.f32 0.0, %v3351
    %v3353 = vpop.f32.mrb[0].mxu0
    %v3354 = vpop.f32.mrb[0].mxu0
    %v3355 = vadd.f32 0.0, %v3354
    %v3356 = vpop.f32.mrb[0].mxu0
    %3357 = vmatprep.mubr.bf16.mxu0 0
    %3358 = vmatmul.mubr.bf16.gmra.mrb[0].mxu0 %v3150
    %v3359 = vpop.f32.mrb[0].mxu0
    %v3360 = vadd.f32 0.0, %v3359
    %v3361 = vpop.f32.mrb[0].mxu0
    %v3362 = vpop.f32.mrb[0].mxu0
    %v3363 = vadd.f32 0.0, %v3362
    %v3364 = vpop.f32.mrb[0].mxu0
    %3365 = vmatprep.mubr.bf16.mxu0 0
    %3366 = vmatmul.mubr.bf16.gmra.mrb[0].mxu0 %v3153
    %v3367 = vpop.f32.mrb[0].mxu0
    %v3368 = vadd.f32 0.0, %v3367
    %v3369 = vpop.f32.mrb[0].mxu0
    %v3370 = vpop.f32.mrb[0].mxu0
    %v3371 = vadd.f32 0.0, %v3370
    %v3372 = vpop.f32.mrb[0].mxu0
    %3373 = vmatprep.mubr.bf16.mxu0 0
    %3374 = vmatmul.mubr.bf16.gmra.mrb[0].mxu0 %v3156
    %v3375 = vpop.f32.mrb[0].mxu0
    %v3376 = vadd.f32 0.0, %v3375
    %v3377 = vpop.f32.mrb[0].mxu0
    %v3378 = vpop.f32.mrb[0].mxu0
    %v3379 = vadd.f32 0.0, %v3378
    %v3380 = vpop.f32.mrb[0].mxu0
    %3381 = vmatprep.mubr.bf16.mxu0 0
    %3382 = vmatmul.mubr.bf16.gmra.mrb[0].mxu0 %v3159
    %v3383 = vpop.f32.mrb[0].mxu0
    %v3384 = vadd.f32 0.0, %v3383
    %v3385 = vpop.f32.mrb[0].mxu0
    %v3386 = vpop.f32.mrb[0].mxu0
    %v3387 = vadd.f32 0.0, %v3386
    %v3388 = vpop.f32.mrb[0].mxu0
    %3389 = vmatprep.mubr.bf16.mxu0 0
    %3390 = vmatmul.mubr.bf16.gmra.mrb[0].mxu0 %v3162
    %v3391 = vpop.f32.mrb[0].mxu0
    %v3392 = vadd.f32 0.0, %v3391
    %v3393 = vpop.f32.mrb[0].mxu0
    %v3394 = vpop.f32.mrb[0].mxu0
    %v3395 = vadd.f32 0.0, %v3394
    %v3396 = vpop.f32.mrb[0].mxu0
    %3397 = vmatprep.mubr.bf16.mxu0 0
    %3398 = vmatmul.mubr.bf16.gmra.mrb[0].mxu0 %v3165
    %v3399 = vpop.f32.mrb[0].mxu0
    %v3400 = vadd.f32 0.0, %v3399
    %v3401 = vpop.f32.mrb[0].mxu0
    %v3402 = vpop.f32.mrb[0].mxu0
    %v3403 = vadd.f32 0.0, %v3402
    %v3404 = vpop.f32.mrb[0].mxu0
    %3405 = vmatprep.mubr.bf16.mxu0 0
    %3406 = vmatmul.mubr.bf16.gmra.mrb[0].mxu0 %v3168
    %v3407 = vpop.f32.mrb[0].mxu0
    %v3408 = vadd.f32 0.0, %v3407
    %v3409 = vpop.f32.mrb[0].mxu0
    %v3410 = vpop.f32.mrb[0].mxu0
    %v3411 = vadd.f32 0.0, %v3410
    %v3412 = vpop.f32.mrb[0].mxu0
    %3413 = vmatprep.mubr.bf16.mxu0 0
    %3414 = vmatmul.mubr.bf16.gmra.mrb[0].mxu0 %v3171
    %v3415 = vpop.f32.mrb[0].mxu0
    %v3416 = vadd.f32 0.0, %v3415
    %v3417 = vpop.f32.mrb[0].mxu0
    %v3418 = vpop.f32.mrb[0].mxu0
    %v3419 = vadd.f32 0.0, %v3418
    %v3420 = vpop.f32.mrb[0].mxu0
    %3421 = vmatprep.mubr.bf16.mxu0 0
    %3422 = vmatmul.mubr.bf16.gmra.mrb[0].mxu0 %v3174
    %v3423 = vpop.f32.mrb[0].mxu0
    %v3424 = vadd.f32 0.0, %v3423
    %v3425 = vpop.f32.mrb[0].mxu0
    %v3426 = vpop.f32.mrb[0].mxu0
    %v3427 = vadd.f32 0.0, %v3426
    %v3428 = vpop.f32.mrb[0].mxu0
    %3429 = vmatprep.mubr.bf16.mxu0 0
    %3430 = vmatmul.mubr.bf16.gmra.mrb[0].mxu0 %v3177
    %v3431 = vpop.f32.mrb[0].mxu0
    %v3432 = vadd.f32 0.0, %v3431
    %v3433 = vpop.f32.mrb[0].mxu0
    %v3434 = vpop.f32.mrb[0].mxu0
    %v3435 = vadd.f32 0.0, %v3434
    %v3436 = vpop.f32.mrb[0].mxu0
    %3437 = vmatprep.mubr.bf16.mxu0 0
    %3438 = vmatmul.mubr.bf16.gmra.mrb[0].mxu0 %v3180
    %v3439 = vpop.f32.mrb[0].mxu0
    %v3440 = vadd.f32 0.0, %v3439
    %v3441 = vpop.f32.mrb[0].mxu0
    %v3442 = vpop.f32.mrb[0].mxu0
    %v3443 = vadd.f32 0.0, %v3442
    %v3444 = vpop.f32.mrb[0].mxu0
    %3445 = vmatprep.mubr.bf16.mxu0 0
    %3446 = vmatmul.mubr.bf16.gmra.mrb[0].mxu0 %v3183
    %v3447 = vpop.f32.mrb[0].mxu0
    %v3448 = vadd.f32 0.0, %v3447
    %v3449 = vpop.f32.mrb[0].mxu0
    %v3450 = vpop.f32.mrb[0].mxu0
    %v3451 = vadd.f32 0.0, %v3450
    %v3452 = vpop.f32.mrb[0].mxu0
    %3453 = vmatprep.mubr.bf16.mxu0 0
    %3454 = vmatmul.mubr.bf16.gmra.mrb[0].mxu0 %v3186
    %v3455 = vpop.f32.mrb[0].mxu0
    %v3456 = vadd.f32 0.0, %v3455
    %v3457 = vpop.f32.mrb[0].mxu0
    %v3458 = vpop.f32.mrb[0].mxu0
    %v3459 = vadd.f32 0.0, %v3458
    %v3460 = vpop.f32.mrb[0].mxu0
    %3461 = vmatprep.mubr.bf16.mxu0 0
    %3462 = vmatmul.mubr.bf16.gmra.mrb[0].mxu0 %v3189
    %v3463 = vpop.f32.mrb[0].mxu0
    %v3464 = vadd.f32 0.0, %v3463
    %v3465 = vpop.f32.mrb[0].mxu0
    %v3466 = vpop.f32.mrb[0].mxu0
    %v3467 = vadd.f32 0.0, %v3466
    %v3468 = vpop.f32.mrb[0].mxu0
    %3469 = vmatprep.mubr.bf16.mxu0 0
    %3470 = vmatmul.mubr.bf16.gmra.mrb[0].mxu0 %v3192
    %v3471 = vpop.f32.mrb[0].mxu0
    %v3472 = vadd.f32 0.0, %v3471
    %v3473 = vpop.f32.mrb[0].mxu0
    %v3474 = vpop.f32.mrb[0].mxu0
    %v3475 = vadd.f32 0.0, %v3474
    %v3476 = vpop.f32.mrb[0].mxu0
    %3477 = vmatprep.mubr.bf16.mxu0 0
    %3478 = vmatmul.mubr.bf16.gmra.mrb[0].mxu0 %v3195
    %v3479 = vpop.f32.mrb[0].mxu0
    %v3480 = vadd.f32 0.0, %v3479
    %v3481 = vpop.f32.mrb[0].mxu0
    %v3482 = vpop.f32.mrb[0].mxu0
    %v3483 = vadd.f32 0.0, %v3482
    %v3484 = vpop.f32.mrb[0].mxu0
    %3485 = vdwg.mxu0
    %v3486 = vadd.f32 %v2924, %v3232
    %v3487 = vadd.f32 %v2925, %v3235
    %v3488 = vadd.f32 %v2926, %v3240
    %v3489 = vadd.f32 %v2927, %v3243
    %v3490 = vadd.f32 %v2928, %v3248
    %v3491 = vadd.f32 %v2929, %v3251
    %v3492 = vadd.f32 %v2930, %v3256
    %v3493 = vadd.f32 %v2931, %v3259
    %v3494 = vadd.f32 %v2932, %v3264
    %v3495 = vadd.f32 %v2933, %v3267
    %v3496 = vadd.f32 %v2934, %v3272
    %v3497 = vadd.f32 %v2935, %v3275
    %v3498 = vadd.f32 %v2936, %v3280
    %v3499 = vadd.f32 %v2937, %v3283
    %v3500 = vadd.f32 %v2938, %v3288
    %v3501 = vadd.f32 %v2939, %v3291
    %v3502 = vadd.f32 %v2940, %v3296
    %v3503 = vadd.f32 %v2941, %v3299
    %v3504 = vadd.f32 %v2942, %v3304
    %v3505 = vadd.f32 %v2943, %v3307
    %v3506 = vadd.f32 %v2944, %v3312
    %v3507 = vadd.f32 %v2945, %v3315
    %v3508 = vadd.f32 %v2946, %v3320
    %v3509 = vadd.f32 %v2947, %v3323
    %v3510 = vadd.f32 %v2948, %v3328
    %v3511 = vadd.f32 %v2949, %v3331
    %v3512 = vadd.f32 %v2950, %v3336
    %v3513 = vadd.f32 %v2951, %v3339
    %v3514 = vadd.f32 %v2952, %v3344
    %v3515 = vadd.f32 %v2953, %v3347
    %v3516 = vadd.f32 %v2954, %v3352
    %v3517 = vadd.f32 %v2955, %v3355
    %v3518 = vadd.f32 %v2956, %v3360
    %v3519 = vadd.f32 %v2957, %v3363
    %v3520 = vadd.f32 %v2958, %v3368
    %v3521 = vadd.f32 %v2959, %v3371
    %v3522 = vadd.f32 %v2960, %v3376
    %v3523 = vadd.f32 %v2961, %v3379
    %v3524 = vadd.f32 %v2962, %v3384
    %v3525 = vadd.f32 %v2963, %v3387
    %v3526 = vadd.f32 %v2964, %v3392
    %v3527 = vadd.f32 %v2965, %v3395
    %v3528 = vadd.f32 %v2966, %v3400
    %v3529 = vadd.f32 %v2967, %v3403
    %v3530 = vadd.f32 %v2968, %v3408
    %v3531 = vadd.f32 %v2969, %v3411
    %v3532 = vadd.f32 %v2970, %v3416
    %v3533 = vadd.f32 %v2971, %v3419
    %v3534 = vadd.f32 %v2972, %v3424
    %v3535 = vadd.f32 %v2973, %v3427
    %v3536 = vadd.f32 %v2974, %v3432
    %v3537 = vadd.f32 %v2975, %v3435
    %v3538 = vadd.f32 %v2976, %v3440
    %v3539 = vadd.f32 %v2977, %v3443
    %v3540 = vadd.f32 %v2978, %v3448
    %v3541 = vadd.f32 %v2979, %v3451
    %v3542 = vadd.f32 %v2980, %v3456
    %v3543 = vadd.f32 %v2981, %v3459
    %v3544 = vadd.f32 %v2982, %v3464
    %v3545 = vadd.f32 %v2983, %v3467
    %v3546 = vadd.f32 %v2984, %v3472
    %v3547 = vadd.f32 %v2985, %v3475
    %v3548 = vadd.f32 %v2986, %v3480
    %v3549 = vadd.f32 %v2987, %v3483
    %s3550 = scalar_lea.vmem [#allocation2], 48
    %v3551 = vld [vmem:[%s3550] sm:$0xff]
    %v3552 = vld [vmem:[%s3550 + $0x8] sm:$0xff]
    %v3553 = vld [vmem:[%s3550 + $0x18] sm:$0xff]
    %v3554 = vld [vmem:[%s3550 + $0x20] sm:$0xff]
    %v3555 = vld [vmem:[%s3550 + $0x30] sm:$0xff]
    %v3556 = vld [vmem:[%s3550 + $0x38] sm:$0xff]
    %v3557 = vld [vmem:[%s3550 + $0x48] sm:$0xff]
    %v3558 = vld [vmem:[%s3550 + $0x50] sm:$0xff]
    %v3559 = vld [vmem:[%s3550 + $0x60] sm:$0xff]
    %v3560 = vld [vmem:[%s3550 + $0x68] sm:$0xff]
    %v3561 = vld [vmem:[%s3550 + $0x78] sm:$0xff]
    %v3562 = vld [vmem:[%s3550 + $0x80] sm:$0xff]
    %v3563 = vld [vmem:[%s3550 + $0x90] sm:$0xff]
    %v3564 = vld [vmem:[%s3550 + $0x98] sm:$0xff]
    %v3565 = vld [vmem:[%s3550 + $0xa8] sm:$0xff]
    %v3566 = vld [vmem:[%s3550 + $0xb0] sm:$0xff]
    %v3567 = vld [vmem:[%s3550 + $0xc0] sm:$0xff]
    %v3568 = vld [vmem:[%s3550 + $0xc8] sm:$0xff]
    %v3569 = vld [vmem:[%s3550 + $0xd8] sm:$0xff]
    %v3570 = vld [vmem:[%s3550 + $0xe0] sm:$0xff]
    %v3571 = vld [vmem:[%s3550 + $0xf0] sm:$0xff]
    %v3572 = vld [vmem:[%s3550 + $0xf8] sm:$0xff]
    %v3573 = vld [vmem:[%s3550 + $0x108] sm:$0xff]
    %v3574 = vld [vmem:[%s3550 + $0x110] sm:$0xff]
    %v3575 = vld [vmem:[%s3550 + $0x120] sm:$0xff]
    %v3576 = vld [vmem:[%s3550 + $0x128] sm:$0xff]
    %v3577 = vld [vmem:[%s3550 + $0x138] sm:$0xff]
    %v3578 = vld [vmem:[%s3550 + $0x140] sm:$0xff]
    %v3579 = vld [vmem:[%s3550 + $0x150] sm:$0xff]
    %v3580 = vld [vmem:[%s3550 + $0x158] sm:$0xff]
    %v3581 = vld [vmem:[%s3550 + $0x168] sm:$0xff]
    %v3582 = vld [vmem:[%s3550 + $0x170] sm:$0xff]
    %v3583 = vld [vmem:[%s3550 + $0x1b0] sm:$0xff]
    %v3584 = vld [vmem:[%s3550 + $0x1b8] sm:$0xff]
    %v3585 = vld [vmem:[%s3550 + $0x1c8] sm:$0xff]
    %v3586 = vld [vmem:[%s3550 + $0x1d0] sm:$0xff]
    %v3587 = vld [vmem:[%s3550 + $0x1e0] sm:$0xff]
    %v3588 = vld [vmem:[%s3550 + $0x1e8] sm:$0xff]
    %v3589 = vld [vmem:[%s3550 + $0x1f8] sm:$0xff]
    %v3590 = vld [vmem:[%s3550 + $0x200] sm:$0xff]
    %v3591 = vld [vmem:[%s3550 + $0x210] sm:$0xff]
    %v3592 = vld [vmem:[%s3550 + $0x218] sm:$0xff]
    %v3593 = vld [vmem:[%s3550 + $0x228] sm:$0xff]
    %v3594 = vld [vmem:[%s3550 + $0x230] sm:$0xff]
    %v3595 = vld [vmem:[%s3550 + $0x240] sm:$0xff]
    %v3596 = vld [vmem:[%s3550 + $0x248] sm:$0xff]
    %v3597 = vld [vmem:[%s3550 + $0x258] sm:$0xff]
    %v3598 = vld [vmem:[%s3550 + $0x260] sm:$0xff]
    %v3599 = vld [vmem:[%s3550 + $0x270] sm:$0xff]
    %v3600 = vld [vmem:[%s3550 + $0x278] sm:$0xff]
    %v3601 = vld [vmem:[%s3550 + $0x288] sm:$0xff]
    %v3602 = vld [vmem:[%s3550 + $0x290] sm:$0xff]
    %v3603 = vld [vmem:[%s3550 + $0x2a0] sm:$0xff]
    %v3604 = vld [vmem:[%s3550 + $0x2a8] sm:$0xff]
    %v3605 = vld [vmem:[%s3550 + $0x2b8] sm:$0xff]
    %v3606 = vld [vmem:[%s3550 + $0x2c0] sm:$0xff]
    %v3607 = vld [vmem:[%s3550 + $0x2d0] sm:$0xff]
    %v3608 = vld [vmem:[%s3550 + $0x2d8] sm:$0xff]
    %v3609 = vld [vmem:[%s3550 + $0x2e8] sm:$0xff]
    %v3610 = vld [vmem:[%s3550 + $0x2f0] sm:$0xff]
    %v3611 = vld [vmem:[%s3550 + $0x300] sm:$0xff]
    %v3612 = vld [vmem:[%s3550 + $0x308] sm:$0xff]
    %v3613 = vld [vmem:[%s3550 + $0x318] sm:$0xff]
    %v3614 = vld [vmem:[%s3550 + $0x320] sm:$0xff]
    %v3615 = vpack.c.bf16 %v3552, %v3551
    %v3616 = vpack.c.bf16 %v3554, %v3553
    %v3617 = vpack.c.bf16 %v3556, %v3555
    %v3618 = vpack.c.bf16 %v3558, %v3557
    %v3619 = vpack.c.bf16 %v3560, %v3559
    %v3620 = vpack.c.bf16 %v3562, %v3561
    %v3621 = vpack.c.bf16 %v3564, %v3563
    %v3622 = vpack.c.bf16 %v3566, %v3565
    %v3623 = vpack.c.bf16 %v3568, %v3567
    %v3624 = vpack.c.bf16 %v3570, %v3569
    %v3625 = vpack.c.bf16 %v3572, %v3571
    %v3626 = vpack.c.bf16 %v3574, %v3573
    %v3627 = vpack.c.bf16 %v3576, %v3575
    %v3628 = vpack.c.bf16 %v3578, %v3577
    %v3629 = vpack.c.bf16 %v3580, %v3579
    %v3630 = vpack.c.bf16 %v3582, %v3581
    %v3631 = vpack.c.bf16 %v3584, %v3583
    %v3632 = vpack.c.bf16 %v3586, %v3585
    %v3633 = vpack.c.bf16 %v3588, %v3587
    %v3634 = vpack.c.bf16 %v3590, %v3589
    %v3635 = vpack.c.bf16 %v3592, %v3591
    %v3636 = vpack.c.bf16 %v3594, %v3593
    %v3637 = vpack.c.bf16 %v3596, %v3595
    %v3638 = vpack.c.bf16 %v3598, %v3597
    %v3639 = vpack.c.bf16 %v3600, %v3599
    %v3640 = vpack.c.bf16 %v3602, %v3601
    %v3641 = vpack.c.bf16 %v3604, %v3603
    %v3642 = vpack.c.bf16 %v3606, %v3605
    %v3643 = vpack.c.bf16 %v3608, %v3607
    %v3644 = vpack.c.bf16 %v3610, %v3609
    %v3645 = vpack.c.bf16 %v3612, %v3611
    %v3646 = vpack.c.bf16 %v3614, %v3613
    %s3647 = scalar_lea.vmem [#allocation5], 96
    %v3648 = vld [vmem:[%s3647] sm:$0xf]
    %v3649 = vld [vmem:[%s3647 + $0x4] sm:$0xf]
    %v3650 = vld [vmem:[%s3647 + $0x8] sm:$0xf]
    %v3651 = vld [vmem:[%s3647 + $0xc] sm:$0xf]
    %v3656 = vunpack.c.l.b16 %v3648
    %v3657 = vunpack.c.l.b16 %v3649
    %v3658 = vunpack.c.l.b16 %v3650
    %v3659 = vunpack.c.l.b16 %v3651
    %v3660 = vpack.c.b16 %v3657, %v3656
    %v3661 = vpack.c.b16 %v3659, %v3658
    %v3665 = vsel %vm68, %v3615, 0
    %v3668 = vsel %vm68, %v3616, 0
    %v3671 = vsel %vm68, %v3617, 0
    %v3674 = vsel %vm68, %v3618, 0
    %v3677 = vsel %vm68, %v3619, 0
    %v3680 = vsel %vm68, %v3620, 0
    %v3683 = vsel %vm68, %v3621, 0
    %v3686 = vsel %vm68, %v3622, 0
    %v3689 = vsel %vm68, %v3623, 0
    %v3692 = vsel %vm68, %v3624, 0
    %v3695 = vsel %vm68, %v3625, 0
    %v3698 = vsel %vm68, %v3626, 0
    %v3701 = vsel %vm68, %v3627, 0
    %v3704 = vsel %vm68, %v3628, 0
    %v3707 = vsel %vm68, %v3629, 0
    %v3710 = vsel %vm68, %v3630, 0
    %v3713 = vsel %vm68, %v3631, 0
    %v3716 = vsel %vm68, %v3632, 0
    %v3719 = vsel %vm68, %v3633, 0
    %v3722 = vsel %vm68, %v3634, 0
    %v3725 = vsel %vm68, %v3635, 0
    %v3728 = vsel %vm68, %v3636, 0
    %v3731 = vsel %vm68, %v3637, 0
    %v3734 = vsel %vm68, %v3638, 0
    %v3737 = vsel %vm68, %v3639, 0
    %v3740 = vsel %vm68, %v3640, 0
    %v3743 = vsel %vm68, %v3641, 0
    %v3746 = vsel %vm68, %v3642, 0
    %v3749 = vsel %vm68, %v3643, 0
    %v3752 = vsel %vm68, %v3644, 0
    %v3755 = vsel %vm68, %v3645, 0
    %v3758 = vsel %vm68, %v3646, 0
    %3760 = vmatprep.subr.bf16.mxu0 0
    %3761 = vmatpush1.bf16.msra.mxu0 %v3660
    %3762 = vmatprep.subr.bf16.mxu0 0
    %3763 = vmatpush1.bf16.msra.mxu0 %v3661
    %3764 = vmatprep.subr.bf16.mxu0 0
    %3765 = vmatpush1.bf16.msra.mxu0 0
    %3766 = vmatprep.subr.bf16.mxu0 0
    %3767 = vmatpush1.bf16.msra.mxu0 0
    %3768 = vmatprep.subr.bf16.mxu0 0
    %3769 = vmatpush1.bf16.msra.mxu0 0
    %3770 = vmatprep.subr.bf16.mxu0 0
    %3771 = vmatpush1.bf16.msra.mxu0 0
    %3772 = vmatprep.subr.bf16.mxu0 0
    %3773 = vmatpush1.bf16.msra.mxu0 0
    %3774 = vmatprep.subr.bf16.mxu0 0
    %3775 = vmatpush1.bf16.msra.mxu0 0
    %3776 = vmatprep.subr.bf16.mxu0 0
    %3777 = vmatpush1.bf16.msra.mxu0 0
    %3778 = vmatprep.subr.bf16.mxu0 0
    %3779 = vmatpush1.bf16.msra.mxu0 0
    %3780 = vmatprep.subr.bf16.mxu0 0
    %3781 = vmatpush1.bf16.msra.mxu0 0
    %3782 = vmatprep.subr.bf16.mxu0 0
    %3783 = vmatpush1.bf16.msra.mxu0 0
    %3784 = vmatprep.subr.bf16.mxu0 0
    %3785 = vmatpush1.bf16.msra.mxu0 0
    %3786 = vmatprep.subr.bf16.mxu0 0
    %3787 = vmatpush1.bf16.msra.mxu0 0
    %3788 = vmatprep.subr.bf16.mxu0 0
    %3789 = vmatpush1.bf16.msra.mxu0 0
    %3790 = vmatprep.subr.bf16.mxu0 0
    %3791 = vmatpush1.bf16.msra.mxu0 0
    %3792 = vmatprep.mubr.bf16.mxu0 0
    %3793 = vmatmul.mubr.bf16.gmra.mrb[0].mxu0 %v3665
    %v3794 = vpop.f32.mrb[0].mxu0
    %v3795 = vadd.f32 0.0, %v3794
    %v3796 = vpop.f32.mrb[0].mxu0
    %v3797 = vpop.f32.mrb[0].mxu0
    %v3798 = vadd.f32 0.0, %v3797
    %v3799 = vpop.f32.mrb[0].mxu0
    %3800 = vmatprep.mubr.bf16.mxu0 0
    %3801 = vmatmul.mubr.bf16.gmra.mrb[0].mxu0 %v3668
    %v3802 = vpop.f32.mrb[0].mxu0
    %v3803 = vadd.f32 0.0, %v3802
    %v3804 = vpop.f32.mrb[0].mxu0
    %v3805 = vpop.f32.mrb[0].mxu0
    %v3806 = vadd.f32 0.0, %v3805
    %v3807 = vpop.f32.mrb[0].mxu0
    %3808 = vmatprep.mubr.bf16.mxu0 0
    %3809 = vmatmul.mubr.bf16.gmra.mrb[0].mxu0 %v3671
    %v3810 = vpop.f32.mrb[0].mxu0
    %v3811 = vadd.f32 0.0, %v3810
    %v3812 = vpop.f32.mrb[0].mxu0
    %v3813 = vpop.f32.mrb[0].mxu0
    %v3814 = vadd.f32 0.0, %v3813
    %v3815 = vpop.f32.mrb[0].mxu0
    %3816 = vmatprep.mubr.bf16.mxu0 0
    %3817 = vmatmul.mubr.bf16.gmra.mrb[0].mxu0 %v3674
    %v3818 = vpop.f32.mrb[0].mxu0
    %v3819 = vadd.f32 0.0, %v3818
    %v3820 = vpop.f32.mrb[0].mxu0
    %v3821 = vpop.f32.mrb[0].mxu0
    %v3822 = vadd.f32 0.0, %v3821
    %v3823 = vpop.f32.mrb[0].mxu0
    %3824 = vmatprep.mubr.bf16.mxu0 0
    %3825 = vmatmul.mubr.bf16.gmra.mrb[0].mxu0 %v3677
    %v3826 = vpop.f32.mrb[0].mxu0
    %v3827 = vadd.f32 0.0, %v3826
    %v3828 = vpop.f32.mrb[0].mxu0
    %v3829 = vpop.f32.mrb[0].mxu0
    %v3830 = vadd.f32 0.0, %v3829
    %v3831 = vpop.f32.mrb[0].mxu0
    %3832 = vmatprep.mubr.bf16.mxu0 0
    %3833 = vmatmul.mubr.bf16.gmra.mrb[0].mxu0 %v3680
    %v3834 = vpop.f32.mrb[0].mxu0
    %v3835 = vadd.f32 0.0, %v3834
    %v3836 = vpop.f32.mrb[0].mxu0
    %v3837 = vpop.f32.mrb[0].mxu0
    %v3838 = vadd.f32 0.0, %v3837
    %v3839 = vpop.f32.mrb[0].mxu0
    %3840 = vmatprep.mubr.bf16.mxu0 0
    %3841 = vmatmul.mubr.bf16.gmra.mrb[0].mxu0 %v3683
    %v3842 = vpop.f32.mrb[0].mxu0
    %v3843 = vadd.f32 0.0, %v3842
    %v3844 = vpop.f32.mrb[0].mxu0
    %v3845 = vpop.f32.mrb[0].mxu0
    %v3846 = vadd.f32 0.0, %v3845
    %v3847 = vpop.f32.mrb[0].mxu0
    %3848 = vmatprep.mubr.bf16.mxu0 0
    %3849 = vmatmul.mubr.bf16.gmra.mrb[0].mxu0 %v3686
    %v3850 = vpop.f32.mrb[0].mxu0
    %v3851 = vadd.f32 0.0, %v3850
    %v3852 = vpop.f32.mrb[0].mxu0
    %v3853 = vpop.f32.mrb[0].mxu0
    %v3854 = vadd.f32 0.0, %v3853
    %v3855 = vpop.f32.mrb[0].mxu0
    %3856 = vmatprep.mubr.bf16.mxu0 0
    %3857 = vmatmul.mubr.bf16.gmra.mrb[0].mxu0 %v3689
    %v3858 = vpop.f32.mrb[0].mxu0
    %v3859 = vadd.f32 0.0, %v3858
    %v3860 = vpop.f32.mrb[0].mxu0
    %v3861 = vpop.f32.mrb[0].mxu0
    %v3862 = vadd.f32 0.0, %v3861
    %v3863 = vpop.f32.mrb[0].mxu0
    %3864 = vmatprep.mubr.bf16.mxu0 0
    %3865 = vmatmul.mubr.bf16.gmra.mrb[0].mxu0 %v3692
    %v3866 = vpop.f32.mrb[0].mxu0
    %v3867 = vadd.f32 0.0, %v3866
    %v3868 = vpop.f32.mrb[0].mxu0
    %v3869 = vpop.f32.mrb[0].mxu0
    %v3870 = vadd.f32 0.0, %v3869
    %v3871 = vpop.f32.mrb[0].mxu0
    %3872 = vmatprep.mubr.bf16.mxu0 0
    %3873 = vmatmul.mubr.bf16.gmra.mrb[0].mxu0 %v3695
    %v3874 = vpop.f32.mrb[0].mxu0
    %v3875 = vadd.f32 0.0, %v3874
    %v3876 = vpop.f32.mrb[0].mxu0
    %v3877 = vpop.f32.mrb[0].mxu0
    %v3878 = vadd.f32 0.0, %v3877
    %v3879 = vpop.f32.mrb[0].mxu0
    %3880 = vmatprep.mubr.bf16.mxu0 0
    %3881 = vmatmul.mubr.bf16.gmra.mrb[0].mxu0 %v3698
    %v3882 = vpop.f32.mrb[0].mxu0
    %v3883 = vadd.f32 0.0, %v3882
    %v3884 = vpop.f32.mrb[0].mxu0
    %v3885 = vpop.f32.mrb[0].mxu0
    %v3886 = vadd.f32 0.0, %v3885
    %v3887 = vpop.f32.mrb[0].mxu0
    %3888 = vmatprep.mubr.bf16.mxu0 0
    %3889 = vmatmul.mubr.bf16.gmra.mrb[0].mxu0 %v3701
    %v3890 = vpop.f32.mrb[0].mxu0
    %v3891 = vadd.f32 0.0, %v3890
    %v3892 = vpop.f32.mrb[0].mxu0
    %v3893 = vpop.f32.mrb[0].mxu0
    %v3894 = vadd.f32 0.0, %v3893
    %v3895 = vpop.f32.mrb[0].mxu0
    %3896 = vmatprep.mubr.bf16.mxu0 0
    %3897 = vmatmul.mubr.bf16.gmra.mrb[0].mxu0 %v3704
    %v3898 = vpop.f32.mrb[0].mxu0
    %v3899 = vadd.f32 0.0, %v3898
    %v3900 = vpop.f32.mrb[0].mxu0
    %v3901 = vpop.f32.mrb[0].mxu0
    %v3902 = vadd.f32 0.0, %v3901
    %v3903 = vpop.f32.mrb[0].mxu0
    %3904 = vmatprep.mubr.bf16.mxu0 0
    %3905 = vmatmul.mubr.bf16.gmra.mrb[0].mxu0 %v3707
    %v3906 = vpop.f32.mrb[0].mxu0
    %v3907 = vadd.f32 0.0, %v3906
    %v3908 = vpop.f32.mrb[0].mxu0
    %v3909 = vpop.f32.mrb[0].mxu0
    %v3910 = vadd.f32 0.0, %v3909
    %v3911 = vpop.f32.mrb[0].mxu0
    %3912 = vmatprep.mubr.bf16.mxu0 0
    %3913 = vmatmul.mubr.bf16.gmra.mrb[0].mxu0 %v3710
    %v3914 = vpop.f32.mrb[0].mxu0
    %v3915 = vadd.f32 0.0, %v3914
    %v3916 = vpop.f32.mrb[0].mxu0
    %v3917 = vpop.f32.mrb[0].mxu0
    %v3918 = vadd.f32 0.0, %v3917
    %v3919 = vpop.f32.mrb[0].mxu0
    %3920 = vmatprep.mubr.bf16.mxu0 0
    %3921 = vmatmul.mubr.bf16.gmra.mrb[0].mxu0 %v3713
    %v3922 = vpop.f32.mrb[0].mxu0
    %v3923 = vadd.f32 0.0, %v3922
    %v3924 = vpop.f32.mrb[0].mxu0
    %v3925 = vpop.f32.mrb[0].mxu0
    %v3926 = vadd.f32 0.0, %v3925
    %v3927 = vpop.f32.mrb[0].mxu0
    %3928 = vmatprep.mubr.bf16.mxu0 0
    %3929 = vmatmul.mubr.bf16.gmra.mrb[0].mxu0 %v3716
    %v3930 = vpop.f32.mrb[0].mxu0
    %v3931 = vadd.f32 0.0, %v3930
    %v3932 = vpop.f32.mrb[0].mxu0
    %v3933 = vpop.f32.mrb[0].mxu0
    %v3934 = vadd.f32 0.0, %v3933
    %v3935 = vpop.f32.mrb[0].mxu0
    %3936 = vmatprep.mubr.bf16.mxu0 0
    %3937 = vmatmul.mubr.bf16.gmra.mrb[0].mxu0 %v3719
    %v3938 = vpop.f32.mrb[0].mxu0
    %v3939 = vadd.f32 0.0, %v3938
    %v3940 = vpop.f32.mrb[0].mxu0
    %v3941 = vpop.f32.mrb[0].mxu0
    %v3942 = vadd.f32 0.0, %v3941
    %v3943 = vpop.f32.mrb[0].mxu0
    %3944 = vmatprep.mubr.bf16.mxu0 0
    %3945 = vmatmul.mubr.bf16.gmra.mrb[0].mxu0 %v3722
    %v3946 = vpop.f32.mrb[0].mxu0
    %v3947 = vadd.f32 0.0, %v3946
    %v3948 = vpop.f32.mrb[0].mxu0
    %v3949 = vpop.f32.mrb[0].mxu0
    %v3950 = vadd.f32 0.0, %v3949
    %v3951 = vpop.f32.mrb[0].mxu0
    %3952 = vmatprep.mubr.bf16.mxu0 0
    %3953 = vmatmul.mubr.bf16.gmra.mrb[0].mxu0 %v3725
    %v3954 = vpop.f32.mrb[0].mxu0
    %v3955 = vadd.f32 0.0, %v3954
    %v3956 = vpop.f32.mrb[0].mxu0
    %v3957 = vpop.f32.mrb[0].mxu0
    %v3958 = vadd.f32 0.0, %v3957
    %v3959 = vpop.f32.mrb[0].mxu0
    %3960 = vmatprep.mubr.bf16.mxu0 0
    %3961 = vmatmul.mubr.bf16.gmra.mrb[0].mxu0 %v3728
    %v3962 = vpop.f32.mrb[0].mxu0
    %v3963 = vadd.f32 0.0, %v3962
    %v3964 = vpop.f32.mrb[0].mxu0
    %v3965 = vpop.f32.mrb[0].mxu0
    %v3966 = vadd.f32 0.0, %v3965
    %v3967 = vpop.f32.mrb[0].mxu0
    %3968 = vmatprep.mubr.bf16.mxu0 0
    %3969 = vmatmul.mubr.bf16.gmra.mrb[0].mxu0 %v3731
    %v3970 = vpop.f32.mrb[0].mxu0
    %v3971 = vadd.f32 0.0, %v3970
    %v3972 = vpop.f32.mrb[0].mxu0
    %v3973 = vpop.f32.mrb[0].mxu0
    %v3974 = vadd.f32 0.0, %v3973
    %v3975 = vpop.f32.mrb[0].mxu0
    %3976 = vmatprep.mubr.bf16.mxu0 0
    %3977 = vmatmul.mubr.bf16.gmra.mrb[0].mxu0 %v3734
    %v3978 = vpop.f32.mrb[0].mxu0
    %v3979 = vadd.f32 0.0, %v3978
    %v3980 = vpop.f32.mrb[0].mxu0
    %v3981 = vpop.f32.mrb[0].mxu0
    %v3982 = vadd.f32 0.0, %v3981
    %v3983 = vpop.f32.mrb[0].mxu0
    %3984 = vmatprep.mubr.bf16.mxu0 0
    %3985 = vmatmul.mubr.bf16.gmra.mrb[0].mxu0 %v3737
    %v3986 = vpop.f32.mrb[0].mxu0
    %v3987 = vadd.f32 0.0, %v3986
    %v3988 = vpop.f32.mrb[0].mxu0
    %v3989 = vpop.f32.mrb[0].mxu0
    %v3990 = vadd.f32 0.0, %v3989
    %v3991 = vpop.f32.mrb[0].mxu0
    %3992 = vmatprep.mubr.bf16.mxu0 0
    %3993 = vmatmul.mubr.bf16.gmra.mrb[0].mxu0 %v3740
    %v3994 = vpop.f32.mrb[0].mxu0
    %v3995 = vadd.f32 0.0, %v3994
    %v3996 = vpop.f32.mrb[0].mxu0
    %v3997 = vpop.f32.mrb[0].mxu0
    %v3998 = vadd.f32 0.0, %v3997
    %v3999 = vpop.f32.mrb[0].mxu0
    %4000 = vmatprep.mubr.bf16.mxu0 0
    %4001 = vmatmul.mubr.bf16.gmra.mrb[0].mxu0 %v3743
    %v4002 = vpop.f32.mrb[0].mxu0
    %v4003 = vadd.f32 0.0, %v4002
    %v4004 = vpop.f32.mrb[0].mxu0
    %v4005 = vpop.f32.mrb[0].mxu0
    %v4006 = vadd.f32 0.0, %v4005
    %v4007 = vpop.f32.mrb[0].mxu0
    %4008 = vmatprep.mubr.bf16.mxu0 0
    %4009 = vmatmul.mubr.bf16.gmra.mrb[0].mxu0 %v3746
    %v4010 = vpop.f32.mrb[0].mxu0
    %v4011 = vadd.f32 0.0, %v4010
    %v4012 = vpop.f32.mrb[0].mxu0
    %v4013 = vpop.f32.mrb[0].mxu0
    %v4014 = vadd.f32 0.0, %v4013
    %v4015 = vpop.f32.mrb[0].mxu0
    %4016 = vmatprep.mubr.bf16.mxu0 0
    %4017 = vmatmul.mubr.bf16.gmra.mrb[0].mxu0 %v3749
    %v4018 = vpop.f32.mrb[0].mxu0
    %v4019 = vadd.f32 0.0, %v4018
    %v4020 = vpop.f32.mrb[0].mxu0
    %v4021 = vpop.f32.mrb[0].mxu0
    %v4022 = vadd.f32 0.0, %v4021
    %v4023 = vpop.f32.mrb[0].mxu0
    %4024 = vmatprep.mubr.bf16.mxu0 0
    %4025 = vmatmul.mubr.bf16.gmra.mrb[0].mxu0 %v3752
    %v4026 = vpop.f32.mrb[0].mxu0
    %v4027 = vadd.f32 0.0, %v4026
    %v4028 = vpop.f32.mrb[0].mxu0
    %v4029 = vpop.f32.mrb[0].mxu0
    %v4030 = vadd.f32 0.0, %v4029
    %v4031 = vpop.f32.mrb[0].mxu0
    %4032 = vmatprep.mubr.bf16.mxu0 0
    %4033 = vmatmul.mubr.bf16.gmra.mrb[0].mxu0 %v3755
    %v4034 = vpop.f32.mrb[0].mxu0
    %v4035 = vadd.f32 0.0, %v4034
    %v4036 = vpop.f32.mrb[0].mxu0
    %v4037 = vpop.f32.mrb[0].mxu0
    %v4038 = vadd.f32 0.0, %v4037
    %v4039 = vpop.f32.mrb[0].mxu0
    %4040 = vmatprep.mubr.bf16.mxu0 0
    %4041 = vmatmul.mubr.bf16.gmra.mrb[0].mxu0 %v3758
    %v4042 = vpop.f32.mrb[0].mxu0
    %v4043 = vadd.f32 0.0, %v4042
    %v4044 = vpop.f32.mrb[0].mxu0
    %v4045 = vpop.f32.mrb[0].mxu0
    %v4046 = vadd.f32 0.0, %v4045
    %v4047 = vpop.f32.mrb[0].mxu0
    %4048 = vdwg.mxu0
    %v4049 = vadd.f32 %v3486, %v3795
    %v4050 = vadd.f32 %v3487, %v3798
    %v4051 = vadd.f32 %v3488, %v3803
    %v4052 = vadd.f32 %v3489, %v3806
    %v4053 = vadd.f32 %v3490, %v3811
    %v4054 = vadd.f32 %v3491, %v3814
    %v4055 = vadd.f32 %v3492, %v3819
    %v4056 = vadd.f32 %v3493, %v3822
    %v4057 = vadd.f32 %v3494, %v3827
    %v4058 = vadd.f32 %v3495, %v3830
    %v4059 = vadd.f32 %v3496, %v3835
    %v4060 = vadd.f32 %v3497, %v3838
    %v4061 = vadd.f32 %v3498, %v3843
    %v4062 = vadd.f32 %v3499, %v3846
    %v4063 = vadd.f32 %v3500, %v3851
    %v4064 = vadd.f32 %v3501, %v3854
    %v4065 = vadd.f32 %v3502, %v3859
    %v4066 = vadd.f32 %v3503, %v3862
    %v4067 = vadd.f32 %v3504, %v3867
    %v4068 = vadd.f32 %v3505, %v3870
    %v4069 = vadd.f32 %v3506, %v3875
    %v4070 = vadd.f32 %v3507, %v3878
    %v4071 = vadd.f32 %v3508, %v3883
    %v4072 = vadd.f32 %v3509, %v3886
    %v4073 = vadd.f32 %v3510, %v3891
    %v4074 = vadd.f32 %v3511, %v3894
    %v4075 = vadd.f32 %v3512, %v3899
    %v4076 = vadd.f32 %v3513, %v3902
    %v4077 = vadd.f32 %v3514, %v3907
    %v4078 = vadd.f32 %v3515, %v3910
    %v4079 = vadd.f32 %v3516, %v3915
    %v4080 = vadd.f32 %v3517, %v3918
    %v4081 = vadd.f32 %v3518, %v3923
    %v4082 = vadd.f32 %v3519, %v3926
    %v4083 = vadd.f32 %v3520, %v3931
    %v4084 = vadd.f32 %v3521, %v3934
    %v4085 = vadd.f32 %v3522, %v3939
    %v4086 = vadd.f32 %v3523, %v3942
    %v4087 = vadd.f32 %v3524, %v3947
    %v4088 = vadd.f32 %v3525, %v3950
    %v4089 = vadd.f32 %v3526, %v3955
    %v4090 = vadd.f32 %v3527, %v3958
    %v4091 = vadd.f32 %v3528, %v3963
    %v4092 = vadd.f32 %v3529, %v3966
    %v4093 = vadd.f32 %v3530, %v3971
    %v4094 = vadd.f32 %v3531, %v3974
    %v4095 = vadd.f32 %v3532, %v3979
    %v4096 = vadd.f32 %v3533, %v3982
    %v4097 = vadd.f32 %v3534, %v3987
    %v4098 = vadd.f32 %v3535, %v3990
    %v4099 = vadd.f32 %v3536, %v3995
    %v4100 = vadd.f32 %v3537, %v3998
    %v4101 = vadd.f32 %v3538, %v4003
    %v4102 = vadd.f32 %v3539, %v4006
    %v4103 = vadd.f32 %v3540, %v4011
    %v4104 = vadd.f32 %v3541, %v4014
    %v4105 = vadd.f32 %v3542, %v4019
    %v4106 = vadd.f32 %v3543, %v4022
    %v4107 = vadd.f32 %v3544, %v4027
    %v4108 = vadd.f32 %v3545, %v4030
    %v4109 = vadd.f32 %v3546, %v4035
    %v4110 = vadd.f32 %v3547, %v4038
    %v4111 = vadd.f32 %v3548, %v4043
    %v4112 = vadd.f32 %v3549, %v4046
    %v4113 = vld [vmem:[%s3550 + $0x1] sm:$0xff]
    %v4114 = vld [vmem:[%s3550 + $0x9] sm:$0xff]
    %v4115 = vld [vmem:[%s3550 + $0x19] sm:$0xff]
    %v4116 = vld [vmem:[%s3550 + $0x21] sm:$0xff]
    %v4117 = vld [vmem:[%s3550 + $0x31] sm:$0xff]
    %v4118 = vld [vmem:[%s3550 + $0x39] sm:$0xff]
    %v4119 = vld [vmem:[%s3550 + $0x49] sm:$0xff]
    %v4120 = vld [vmem:[%s3550 + $0x51] sm:$0xff]
    %v4121 = vld [vmem:[%s3550 + $0x61] sm:$0xff]
    %v4122 = vld [vmem:[%s3550 + $0x69] sm:$0xff]
    %v4123 = vld [vmem:[%s3550 + $0x79] sm:$0xff]
    %v4124 = vld [vmem:[%s3550 + $0x81] sm:$0xff]
    %v4125 = vld [vmem:[%s3550 + $0x91] sm:$0xff]
    %v4126 = vld [vmem:[%s3550 + $0x99] sm:$0xff]
    %v4127 = vld [vmem:[%s3550 + $0xa9] sm:$0xff]
    %v4128 = vld [vmem:[%s3550 + $0xb1] sm:$0xff]
    %v4129 = vld [vmem:[%s3550 + $0xc1] sm:$0xff]
    %v4130 = vld [vmem:[%s3550 + $0xc9] sm:$0xff]
    %v4131 = vld [vmem:[%s3550 + $0xd9] sm:$0xff]
    %v4132 = vld [vmem:[%s3550 + $0xe1] sm:$0xff]
    %v4133 = vld [vmem:[%s3550 + $0xf1] sm:$0xff]
    %v4134 = vld [vmem:[%s3550 + $0xf9] sm:$0xff]
    %v4135 = vld [vmem:[%s3550 + $0x109] sm:$0xff]
    %v4136 = vld [vmem:[%s3550 + $0x111] sm:$0xff]
    %v4137 = vld [vmem:[%s3550 + $0x121] sm:$0xff]
    %v4138 = vld [vmem:[%s3550 + $0x129] sm:$0xff]
    %v4139 = vld [vmem:[%s3550 + $0x139] sm:$0xff]
    %v4140 = vld [vmem:[%s3550 + $0x141] sm:$0xff]
    %v4141 = vld [vmem:[%s3550 + $0x151] sm:$0xff]
    %v4142 = vld [vmem:[%s3550 + $0x159] sm:$0xff]
    %v4143 = vld [vmem:[%s3550 + $0x169] sm:$0xff]
    %v4144 = vld [vmem:[%s3550 + $0x171] sm:$0xff]
    %v4145 = vld [vmem:[%s3550 + $0x1b1] sm:$0xff]
    %v4146 = vld [vmem:[%s3550 + $0x1b9] sm:$0xff]
    %v4147 = vld [vmem:[%s3550 + $0x1c9] sm:$0xff]
    %v4148 = vld [vmem:[%s3550 + $0x1d1] sm:$0xff]
    %v4149 = vld [vmem:[%s3550 + $0x1e1] sm:$0xff]
    %v4150 = vld [vmem:[%s3550 + $0x1e9] sm:$0xff]
    %v4151 = vld [vmem:[%s3550 + $0x1f9] sm:$0xff]
    %v4152 = vld [vmem:[%s3550 + $0x201] sm:$0xff]
    %v4153 = vld [vmem:[%s3550 + $0x211] sm:$0xff]
    %v4154 = vld [vmem:[%s3550 + $0x219] sm:$0xff]
    %v4155 = vld [vmem:[%s3550 + $0x229] sm:$0xff]
    %v4156 = vld [vmem:[%s3550 + $0x231] sm:$0xff]
    %v4157 = vld [vmem:[%s3550 + $0x241] sm:$0xff]
    %v4158 = vld [vmem:[%s3550 + $0x249] sm:$0xff]
    %v4159 = vld [vmem:[%s3550 + $0x259] sm:$0xff]
    %v4160 = vld [vmem:[%s3550 + $0x261] sm:$0xff]
    %v4161 = vld [vmem:[%s3550 + $0x271] sm:$0xff]
    %v4162 = vld [vmem:[%s3550 + $0x279] sm:$0xff]
    %v4163 = vld [vmem:[%s3550 + $0x289] sm:$0xff]
    %v4164 = vld [vmem:[%s3550 + $0x291] sm:$0xff]
    %v4165 = vld [vmem:[%s3550 + $0x2a1] sm:$0xff]
    %v4166 = vld [vmem:[%s3550 + $0x2a9] sm:$0xff]
    %v4167 = vld [vmem:[%s3550 + $0x2b9] sm:$0xff]
    %v4168 = vld [vmem:[%s3550 + $0x2c1] sm:$0xff]
    %v4169 = vld [vmem:[%s3550 + $0x2d1] sm:$0xff]
    %v4170 = vld [vmem:[%s3550 + $0x2d9] sm:$0xff]
    %v4171 = vld [vmem:[%s3550 + $0x2e9] sm:$0xff]
    %v4172 = vld [vmem:[%s3550 + $0x2f1] sm:$0xff]
    %v4173 = vld [vmem:[%s3550 + $0x301] sm:$0xff]
    %v4174 = vld [vmem:[%s3550 + $0x309] sm:$0xff]
    %v4175 = vld [vmem:[%s3550 + $0x319] sm:$0xff]
    %v4176 = vld [vmem:[%s3550 + $0x321] sm:$0xff]
    %v4177 = vpack.c.bf16 %v4114, %v4113
    %v4178 = vpack.c.bf16 %v4116, %v4115
    %v4179 = vpack.c.bf16 %v4118, %v4117
    %v4180 = vpack.c.bf16 %v4120, %v4119
    %v4181 = vpack.c.bf16 %v4122, %v4121
    %v4182 = vpack.c.bf16 %v4124, %v4123
    %v4183 = vpack.c.bf16 %v4126, %v4125
    %v4184 = vpack.c.bf16 %v4128, %v4127
    %v4185 = vpack.c.bf16 %v4130, %v4129
    %v4186 = vpack.c.bf16 %v4132, %v4131
    %v4187 = vpack.c.bf16 %v4134, %v4133
    %v4188 = vpack.c.bf16 %v4136, %v4135
    %v4189 = vpack.c.bf16 %v4138, %v4137
    %v4190 = vpack.c.bf16 %v4140, %v4139
    %v4191 = vpack.c.bf16 %v4142, %v4141
    %v4192 = vpack.c.bf16 %v4144, %v4143
    %v4193 = vpack.c.bf16 %v4146, %v4145
    %v4194 = vpack.c.bf16 %v4148, %v4147
    %v4195 = vpack.c.bf16 %v4150, %v4149
    %v4196 = vpack.c.bf16 %v4152, %v4151
    %v4197 = vpack.c.bf16 %v4154, %v4153
    %v4198 = vpack.c.bf16 %v4156, %v4155
    %v4199 = vpack.c.bf16 %v4158, %v4157
    %v4200 = vpack.c.bf16 %v4160, %v4159
    %v4201 = vpack.c.bf16 %v4162, %v4161
    %v4202 = vpack.c.bf16 %v4164, %v4163
    %v4203 = vpack.c.bf16 %v4166, %v4165
    %v4204 = vpack.c.bf16 %v4168, %v4167
    %v4205 = vpack.c.bf16 %v4170, %v4169
    %v4206 = vpack.c.bf16 %v4172, %v4171
    %v4207 = vpack.c.bf16 %v4174, %v4173
    %v4208 = vpack.c.bf16 %v4176, %v4175
    %s4209 = scalar_lea.vmem [#allocation5], 112
    %v4210 = vld [vmem:[%s4209] sm:$0xf]
    %v4211 = vld [vmem:[%s4209 + $0x4] sm:$0xf]
    %v4212 = vld [vmem:[%s4209 + $0x8] sm:$0xf]
    %v4213 = vld [vmem:[%s4209 + $0xc] sm:$0xf]
    %v4218 = vunpack.c.l.b16 %v4210
    %v4219 = vunpack.c.l.b16 %v4211
    %v4220 = vunpack.c.l.b16 %v4212
    %v4221 = vunpack.c.l.b16 %v4213
    %v4222 = vpack.c.b16 %v4219, %v4218
    %v4223 = vpack.c.b16 %v4221, %v4220
    %v4227 = vsel %vm68, %v4177, 0
    %v4230 = vsel %vm68, %v4178, 0
    %v4233 = vsel %vm68, %v4179, 0
    %v4236 = vsel %vm68, %v4180, 0
    %v4239 = vsel %vm68, %v4181, 0
    %v4242 = vsel %vm68, %v4182, 0
    %v4245 = vsel %vm68, %v4183, 0
    %v4248 = vsel %vm68, %v4184, 0
    %v4251 = vsel %vm68, %v4185, 0
    %v4254 = vsel %vm68, %v4186, 0
    %v4257 = vsel %vm68, %v4187, 0
    %v4260 = vsel %vm68, %v4188, 0
    %v4263 = vsel %vm68, %v4189, 0
    %v4266 = vsel %vm68, %v4190, 0
    %v4269 = vsel %vm68, %v4191, 0
    %v4272 = vsel %vm68, %v4192, 0
    %v4275 = vsel %vm68, %v4193, 0
    %v4278 = vsel %vm68, %v4194, 0
    %v4281 = vsel %vm68, %v4195, 0
    %v4284 = vsel %vm68, %v4196, 0
    %v4287 = vsel %vm68, %v4197, 0
    %v4290 = vsel %vm68, %v4198, 0
    %v4293 = vsel %vm68, %v4199, 0
    %v4296 = vsel %vm68, %v4200, 0
    %v4299 = vsel %vm68, %v4201, 0
    %v4302 = vsel %vm68, %v4202, 0
    %v4305 = vsel %vm68, %v4203, 0
    %v4308 = vsel %vm68, %v4204, 0
    %v4311 = vsel %vm68, %v4205, 0
    %v4314 = vsel %vm68, %v4206, 0
    %v4317 = vsel %vm68, %v4207, 0
    %v4320 = vsel %vm68, %v4208, 0
    %4322 = vmatprep.subr.bf16.mxu0 0
    %4323 = vmatpush1.bf16.msra.mxu0 %v4222
    %4324 = vmatprep.subr.bf16.mxu0 0
    %4325 = vmatpush1.bf16.msra.mxu0 %v4223
    %4326 = vmatprep.subr.bf16.mxu0 0
    %4327 = vmatpush1.bf16.msra.mxu0 0
    %4328 = vmatprep.subr.bf16.mxu0 0
    %4329 = vmatpush1.bf16.msra.mxu0 0
    %4330 = vmatprep.subr.bf16.mxu0 0
    %4331 = vmatpush1.bf16.msra.mxu0 0
    %4332 = vmatprep.subr.bf16.mxu0 0
    %4333 = vmatpush1.bf16.msra.mxu0 0
    %4334 = vmatprep.subr.bf16.mxu0 0
    %4335 = vmatpush1.bf16.msra.mxu0 0
    %4336 = vmatprep.subr.bf16.mxu0 0
    %4337 = vmatpush1.bf16.msra.mxu0 0
    %4338 = vmatprep.subr.bf16.mxu0 0
    %4339 = vmatpush1.bf16.msra.mxu0 0
    %4340 = vmatprep.subr.bf16.mxu0 0
    %4341 = vmatpush1.bf16.msra.mxu0 0
    %4342 = vmatprep.subr.bf16.mxu0 0
    %4343 = vmatpush1.bf16.msra.mxu0 0
    %4344 = vmatprep.subr.bf16.mxu0 0
    %4345 = vmatpush1.bf16.msra.mxu0 0
    %4346 = vmatprep.subr.bf16.mxu0 0
    %4347 = vmatpush1.bf16.msra.mxu0 0
    %4348 = vmatprep.subr.bf16.mxu0 0
    %4349 = vmatpush1.bf16.msra.mxu0 0
    %4350 = vmatprep.subr.bf16.mxu0 0
    %4351 = vmatpush1.bf16.msra.mxu0 0
    %4352 = vmatprep.subr.bf16.mxu0 0
    %4353 = vmatpush1.bf16.msra.mxu0 0
    %4354 = vmatprep.mubr.bf16.mxu0 0
    %4355 = vmatmul.mubr.bf16.gmra.mrb[0].mxu0 %v4227
    %v4356 = vpop.f32.mrb[0].mxu0
    %v4357 = vadd.f32 0.0, %v4356
    %v4358 = vpop.f32.mrb[0].mxu0
    %v4359 = vpop.f32.mrb[0].mxu0
    %v4360 = vadd.f32 0.0, %v4359
    %v4361 = vpop.f32.mrb[0].mxu0
    %4362 = vmatprep.mubr.bf16.mxu0 0
    %4363 = vmatmul.mubr.bf16.gmra.mrb[0].mxu0 %v4230
    %v4364 = vpop.f32.mrb[0].mxu0
    %v4365 = vadd.f32 0.0, %v4364
    %v4366 = vpop.f32.mrb[0].mxu0
    %v4367 = vpop.f32.mrb[0].mxu0
    %v4368 = vadd.f32 0.0, %v4367
    %v4369 = vpop.f32.mrb[0].mxu0
    %4370 = vmatprep.mubr.bf16.mxu0 0
    %4371 = vmatmul.mubr.bf16.gmra.mrb[0].mxu0 %v4233
    %v4372 = vpop.f32.mrb[0].mxu0
    %v4373 = vadd.f32 0.0, %v4372
    %v4374 = vpop.f32.mrb[0].mxu0
    %v4375 = vpop.f32.mrb[0].mxu0
    %v4376 = vadd.f32 0.0, %v4375
    %v4377 = vpop.f32.mrb[0].mxu0
    %4378 = vmatprep.mubr.bf16.mxu0 0
    %4379 = vmatmul.mubr.bf16.gmra.mrb[0].mxu0 %v4236
    %v4380 = vpop.f32.mrb[0].mxu0
    %v4381 = vadd.f32 0.0, %v4380
    %v4382 = vpop.f32.mrb[0].mxu0
    %v4383 = vpop.f32.mrb[0].mxu0
    %v4384 = vadd.f32 0.0, %v4383
    %v4385 = vpop.f32.mrb[0].mxu0
    %4386 = vmatprep.mubr.bf16.mxu0 0
    %4387 = vmatmul.mubr.bf16.gmra.mrb[0].mxu0 %v4239
    %v4388 = vpop.f32.mrb[0].mxu0
    %v4389 = vadd.f32 0.0, %v4388
    %v4390 = vpop.f32.mrb[0].mxu0
    %v4391 = vpop.f32.mrb[0].mxu0
    %v4392 = vadd.f32 0.0, %v4391
    %v4393 = vpop.f32.mrb[0].mxu0
    %4394 = vmatprep.mubr.bf16.mxu0 0
    %4395 = vmatmul.mubr.bf16.gmra.mrb[0].mxu0 %v4242
    %v4396 = vpop.f32.mrb[0].mxu0
    %v4397 = vadd.f32 0.0, %v4396
    %v4398 = vpop.f32.mrb[0].mxu0
    %v4399 = vpop.f32.mrb[0].mxu0
    %v4400 = vadd.f32 0.0, %v4399
    %v4401 = vpop.f32.mrb[0].mxu0
    %4402 = vmatprep.mubr.bf16.mxu0 0
    %4403 = vmatmul.mubr.bf16.gmra.mrb[0].mxu0 %v4245
    %v4404 = vpop.f32.mrb[0].mxu0
    %v4405 = vadd.f32 0.0, %v4404
    %v4406 = vpop.f32.mrb[0].mxu0
    %v4407 = vpop.f32.mrb[0].mxu0
    %v4408 = vadd.f32 0.0, %v4407
    %v4409 = vpop.f32.mrb[0].mxu0
    %4410 = vmatprep.mubr.bf16.mxu0 0
    %4411 = vmatmul.mubr.bf16.gmra.mrb[0].mxu0 %v4248
    %v4412 = vpop.f32.mrb[0].mxu0
    %v4413 = vadd.f32 0.0, %v4412
    %v4414 = vpop.f32.mrb[0].mxu0
    %v4415 = vpop.f32.mrb[0].mxu0
    %v4416 = vadd.f32 0.0, %v4415
    %v4417 = vpop.f32.mrb[0].mxu0
    %4418 = vmatprep.mubr.bf16.mxu0 0
    %4419 = vmatmul.mubr.bf16.gmra.mrb[0].mxu0 %v4251
    %v4420 = vpop.f32.mrb[0].mxu0
    %v4421 = vadd.f32 0.0, %v4420
    %v4422 = vpop.f32.mrb[0].mxu0
    %v4423 = vpop.f32.mrb[0].mxu0
    %v4424 = vadd.f32 0.0, %v4423
    %v4425 = vpop.f32.mrb[0].mxu0
    %4426 = vmatprep.mubr.bf16.mxu0 0
    %4427 = vmatmul.mubr.bf16.gmra.mrb[0].mxu0 %v4254
    %v4428 = vpop.f32.mrb[0].mxu0
    %v4429 = vadd.f32 0.0, %v4428
    %v4430 = vpop.f32.mrb[0].mxu0
    %v4431 = vpop.f32.mrb[0].mxu0
    %v4432 = vadd.f32 0.0, %v4431
    %v4433 = vpop.f32.mrb[0].mxu0
    %4434 = vmatprep.mubr.bf16.mxu0 0
    %4435 = vmatmul.mubr.bf16.gmra.mrb[0].mxu0 %v4257
    %v4436 = vpop.f32.mrb[0].mxu0
    %v4437 = vadd.f32 0.0, %v4436
    %v4438 = vpop.f32.mrb[0].mxu0
    %v4439 = vpop.f32.mrb[0].mxu0
    %v4440 = vadd.f32 0.0, %v4439
    %v4441 = vpop.f32.mrb[0].mxu0
    %4442 = vmatprep.mubr.bf16.mxu0 0
    %4443 = vmatmul.mubr.bf16.gmra.mrb[0].mxu0 %v4260
    %v4444 = vpop.f32.mrb[0].mxu0
    %v4445 = vadd.f32 0.0, %v4444
    %v4446 = vpop.f32.mrb[0].mxu0
    %v4447 = vpop.f32.mrb[0].mxu0
    %v4448 = vadd.f32 0.0, %v4447
    %v4449 = vpop.f32.mrb[0].mxu0
    %4450 = vmatprep.mubr.bf16.mxu0 0
    %4451 = vmatmul.mubr.bf16.gmra.mrb[0].mxu0 %v4263
    %v4452 = vpop.f32.mrb[0].mxu0
    %v4453 = vadd.f32 0.0, %v4452
    %v4454 = vpop.f32.mrb[0].mxu0
    %v4455 = vpop.f32.mrb[0].mxu0
    %v4456 = vadd.f32 0.0, %v4455
    %v4457 = vpop.f32.mrb[0].mxu0
    %4458 = vmatprep.mubr.bf16.mxu0 0
    %4459 = vmatmul.mubr.bf16.gmra.mrb[0].mxu0 %v4266
    %v4460 = vpop.f32.mrb[0].mxu0
    %v4461 = vadd.f32 0.0, %v4460
    %v4462 = vpop.f32.mrb[0].mxu0
    %v4463 = vpop.f32.mrb[0].mxu0
    %v4464 = vadd.f32 0.0, %v4463
    %v4465 = vpop.f32.mrb[0].mxu0
    %4466 = vmatprep.mubr.bf16.mxu0 0
    %4467 = vmatmul.mubr.bf16.gmra.mrb[0].mxu0 %v4269
    %v4468 = vpop.f32.mrb[0].mxu0
    %v4469 = vadd.f32 0.0, %v4468
    %v4470 = vpop.f32.mrb[0].mxu0
    %v4471 = vpop.f32.mrb[0].mxu0
    %v4472 = vadd.f32 0.0, %v4471
    %v4473 = vpop.f32.mrb[0].mxu0
    %4474 = vmatprep.mubr.bf16.mxu0 0
    %4475 = vmatmul.mubr.bf16.gmra.mrb[0].mxu0 %v4272
    %v4476 = vpop.f32.mrb[0].mxu0
    %v4477 = vadd.f32 0.0, %v4476
    %v4478 = vpop.f32.mrb[0].mxu0
    %v4479 = vpop.f32.mrb[0].mxu0
    %v4480 = vadd.f32 0.0, %v4479
    %v4481 = vpop.f32.mrb[0].mxu0
    %4482 = vmatprep.mubr.bf16.mxu0 0
    %4483 = vmatmul.mubr.bf16.gmra.mrb[0].mxu0 %v4275
    %v4484 = vpop.f32.mrb[0].mxu0
    %v4485 = vadd.f32 0.0, %v4484
    %v4486 = vpop.f32.mrb[0].mxu0
    %v4487 = vpop.f32.mrb[0].mxu0
    %v4488 = vadd.f32 0.0, %v4487
    %v4489 = vpop.f32.mrb[0].mxu0
    %4490 = vmatprep.mubr.bf16.mxu0 0
    %4491 = vmatmul.mubr.bf16.gmra.mrb[0].mxu0 %v4278
    %v4492 = vpop.f32.mrb[0].mxu0
    %v4493 = vadd.f32 0.0, %v4492
    %v4494 = vpop.f32.mrb[0].mxu0
    %v4495 = vpop.f32.mrb[0].mxu0
    %v4496 = vadd.f32 0.0, %v4495
    %v4497 = vpop.f32.mrb[0].mxu0
    %4498 = vmatprep.mubr.bf16.mxu0 0
    %4499 = vmatmul.mubr.bf16.gmra.mrb[0].mxu0 %v4281
    %v4500 = vpop.f32.mrb[0].mxu0
    %v4501 = vadd.f32 0.0, %v4500
    %v4502 = vpop.f32.mrb[0].mxu0
    %v4503 = vpop.f32.mrb[0].mxu0
    %v4504 = vadd.f32 0.0, %v4503
    %v4505 = vpop.f32.mrb[0].mxu0
    %4506 = vmatprep.mubr.bf16.mxu0 0
    %4507 = vmatmul.mubr.bf16.gmra.mrb[0].mxu0 %v4284
    %v4508 = vpop.f32.mrb[0].mxu0
    %v4509 = vadd.f32 0.0, %v4508
    %v4510 = vpop.f32.mrb[0].mxu0
    %v4511 = vpop.f32.mrb[0].mxu0
    %v4512 = vadd.f32 0.0, %v4511
    %v4513 = vpop.f32.mrb[0].mxu0
    %4514 = vmatprep.mubr.bf16.mxu0 0
    %4515 = vmatmul.mubr.bf16.gmra.mrb[0].mxu0 %v4287
    %v4516 = vpop.f32.mrb[0].mxu0
    %v4517 = vadd.f32 0.0, %v4516
    %v4518 = vpop.f32.mrb[0].mxu0
    %v4519 = vpop.f32.mrb[0].mxu0
    %v4520 = vadd.f32 0.0, %v4519
    %v4521 = vpop.f32.mrb[0].mxu0
    %4522 = vmatprep.mubr.bf16.mxu0 0
    %4523 = vmatmul.mubr.bf16.gmra.mrb[0].mxu0 %v4290
    %v4524 = vpop.f32.mrb[0].mxu0
    %v4525 = vadd.f32 0.0, %v4524
    %v4526 = vpop.f32.mrb[0].mxu0
    %v4527 = vpop.f32.mrb[0].mxu0
    %v4528 = vadd.f32 0.0, %v4527
    %v4529 = vpop.f32.mrb[0].mxu0
    %4530 = vmatprep.mubr.bf16.mxu0 0
    %4531 = vmatmul.mubr.bf16.gmra.mrb[0].mxu0 %v4293
    %v4532 = vpop.f32.mrb[0].mxu0
    %v4533 = vadd.f32 0.0, %v4532
    %v4534 = vpop.f32.mrb[0].mxu0
    %v4535 = vpop.f32.mrb[0].mxu0
    %v4536 = vadd.f32 0.0, %v4535
    %v4537 = vpop.f32.mrb[0].mxu0
    %4538 = vmatprep.mubr.bf16.mxu0 0
    %4539 = vmatmul.mubr.bf16.gmra.mrb[0].mxu0 %v4296
    %v4540 = vpop.f32.mrb[0].mxu0
    %v4541 = vadd.f32 0.0, %v4540
    %v4542 = vpop.f32.mrb[0].mxu0
    %v4543 = vpop.f32.mrb[0].mxu0
    %v4544 = vadd.f32 0.0, %v4543
    %v4545 = vpop.f32.mrb[0].mxu0
    %4546 = vmatprep.mubr.bf16.mxu0 0
    %4547 = vmatmul.mubr.bf16.gmra.mrb[0].mxu0 %v4299
    %v4548 = vpop.f32.mrb[0].mxu0
    %v4549 = vadd.f32 0.0, %v4548
    %v4550 = vpop.f32.mrb[0].mxu0
    %v4551 = vpop.f32.mrb[0].mxu0
    %v4552 = vadd.f32 0.0, %v4551
    %v4553 = vpop.f32.mrb[0].mxu0
    %4554 = vmatprep.mubr.bf16.mxu0 0
    %4555 = vmatmul.mubr.bf16.gmra.mrb[0].mxu0 %v4302
    %v4556 = vpop.f32.mrb[0].mxu0
    %v4557 = vadd.f32 0.0, %v4556
    %v4558 = vpop.f32.mrb[0].mxu0
    %v4559 = vpop.f32.mrb[0].mxu0
    %v4560 = vadd.f32 0.0, %v4559
    %v4561 = vpop.f32.mrb[0].mxu0
    %4562 = vmatprep.mubr.bf16.mxu0 0
    %4563 = vmatmul.mubr.bf16.gmra.mrb[0].mxu0 %v4305
    %v4564 = vpop.f32.mrb[0].mxu0
    %v4565 = vadd.f32 0.0, %v4564
    %v4566 = vpop.f32.mrb[0].mxu0
    %v4567 = vpop.f32.mrb[0].mxu0
    %v4568 = vadd.f32 0.0, %v4567
    %v4569 = vpop.f32.mrb[0].mxu0
    %4570 = vmatprep.mubr.bf16.mxu0 0
    %4571 = vmatmul.mubr.bf16.gmra.mrb[0].mxu0 %v4308
    %v4572 = vpop.f32.mrb[0].mxu0
    %v4573 = vadd.f32 0.0, %v4572
    %v4574 = vpop.f32.mrb[0].mxu0
    %v4575 = vpop.f32.mrb[0].mxu0
    %v4576 = vadd.f32 0.0, %v4575
    %v4577 = vpop.f32.mrb[0].mxu0
    %4578 = vmatprep.mubr.bf16.mxu0 0
    %4579 = vmatmul.mubr.bf16.gmra.mrb[0].mxu0 %v4311
    %v4580 = vpop.f32.mrb[0].mxu0
    %v4581 = vadd.f32 0.0, %v4580
    %v4582 = vpop.f32.mrb[0].mxu0
    %v4583 = vpop.f32.mrb[0].mxu0
    %v4584 = vadd.f32 0.0, %v4583
    %v4585 = vpop.f32.mrb[0].mxu0
    %4586 = vmatprep.mubr.bf16.mxu0 0
    %4587 = vmatmul.mubr.bf16.gmra.mrb[0].mxu0 %v4314
    %v4588 = vpop.f32.mrb[0].mxu0
    %v4589 = vadd.f32 0.0, %v4588
    %v4590 = vpop.f32.mrb[0].mxu0
    %v4591 = vpop.f32.mrb[0].mxu0
    %v4592 = vadd.f32 0.0, %v4591
    %v4593 = vpop.f32.mrb[0].mxu0
    %4594 = vmatprep.mubr.bf16.mxu0 0
    %4595 = vmatmul.mubr.bf16.gmra.mrb[0].mxu0 %v4317
    %v4596 = vpop.f32.mrb[0].mxu0
    %v4597 = vadd.f32 0.0, %v4596
    %v4598 = vpop.f32.mrb[0].mxu0
    %v4599 = vpop.f32.mrb[0].mxu0
    %v4600 = vadd.f32 0.0, %v4599
    %v4601 = vpop.f32.mrb[0].mxu0
    %4602 = vmatprep.mubr.bf16.mxu0 0
    %4603 = vmatmul.mubr.bf16.gmra.mrb[0].mxu0 %v4320
    %v4604 = vpop.f32.mrb[0].mxu0
    %v4605 = vadd.f32 0.0, %v4604
    %v4606 = vpop.f32.mrb[0].mxu0
    %v4607 = vpop.f32.mrb[0].mxu0
    %v4608 = vadd.f32 0.0, %v4607
    %v4609 = vpop.f32.mrb[0].mxu0
    %4610 = vdwg.mxu0
    %v4611 = vadd.f32 %v4049, %v4357
    %v4612 = vadd.f32 %v4050, %v4360
    %v4613 = vadd.f32 %v4051, %v4365
    %v4614 = vadd.f32 %v4052, %v4368
    %v4615 = vadd.f32 %v4053, %v4373
    %v4616 = vadd.f32 %v4054, %v4376
    %v4617 = vadd.f32 %v4055, %v4381
    %v4618 = vadd.f32 %v4056, %v4384
    %v4619 = vadd.f32 %v4057, %v4389
    %v4620 = vadd.f32 %v4058, %v4392
    %v4621 = vadd.f32 %v4059, %v4397
    %v4622 = vadd.f32 %v4060, %v4400
    %v4623 = vadd.f32 %v4061, %v4405
    %v4624 = vadd.f32 %v4062, %v4408
    %v4625 = vadd.f32 %v4063, %v4413
    %v4626 = vadd.f32 %v4064, %v4416
    %v4627 = vadd.f32 %v4065, %v4421
    %v4628 = vadd.f32 %v4066, %v4424
    %v4629 = vadd.f32 %v4067, %v4429
    %v4630 = vadd.f32 %v4068, %v4432
    %v4631 = vadd.f32 %v4069, %v4437
    %v4632 = vadd.f32 %v4070, %v4440
    %v4633 = vadd.f32 %v4071, %v4445
    %v4634 = vadd.f32 %v4072, %v4448
    %v4635 = vadd.f32 %v4073, %v4453
    %v4636 = vadd.f32 %v4074, %v4456
    %v4637 = vadd.f32 %v4075, %v4461
    %v4638 = vadd.f32 %v4076, %v4464
    %v4639 = vadd.f32 %v4077, %v4469
    %v4640 = vadd.f32 %v4078, %v4472
    %v4641 = vadd.f32 %v4079, %v4477
    %v4642 = vadd.f32 %v4080, %v4480
    %v4643 = vadd.f32 %v4081, %v4485
    %v4644 = vadd.f32 %v4082, %v4488
    %v4645 = vadd.f32 %v4083, %v4493
    %v4646 = vadd.f32 %v4084, %v4496
    %v4647 = vadd.f32 %v4085, %v4501
    %v4648 = vadd.f32 %v4086, %v4504
    %v4649 = vadd.f32 %v4087, %v4509
    %v4650 = vadd.f32 %v4088, %v4512
    %v4651 = vadd.f32 %v4089, %v4517
    %v4652 = vadd.f32 %v4090, %v4520
    %v4653 = vadd.f32 %v4091, %v4525
    %v4654 = vadd.f32 %v4092, %v4528
    %v4655 = vadd.f32 %v4093, %v4533
    %v4656 = vadd.f32 %v4094, %v4536
    %v4657 = vadd.f32 %v4095, %v4541
    %v4658 = vadd.f32 %v4096, %v4544
    %v4659 = vadd.f32 %v4097, %v4549
    %v4660 = vadd.f32 %v4098, %v4552
    %v4661 = vadd.f32 %v4099, %v4557
    %v4662 = vadd.f32 %v4100, %v4560
    %v4663 = vadd.f32 %v4101, %v4565
    %v4664 = vadd.f32 %v4102, %v4568
    %v4665 = vadd.f32 %v4103, %v4573
    %v4666 = vadd.f32 %v4104, %v4576
    %v4667 = vadd.f32 %v4105, %v4581
    %v4668 = vadd.f32 %v4106, %v4584
    %v4669 = vadd.f32 %v4107, %v4589
    %v4670 = vadd.f32 %v4108, %v4592
    %v4671 = vadd.f32 %v4109, %v4597
    %v4672 = vadd.f32 %v4110, %v4600
    %v4673 = vadd.f32 %v4111, %v4605
    %v4674 = vadd.f32 %v4112, %v4608
    %v4675 = vld [vmem:[%s3550 + $0x2] sm:$0xff]
    %v4676 = vld [vmem:[%s3550 + $0xa] sm:$0xff]
    %v4677 = vld [vmem:[%s3550 + $0x1a] sm:$0xff]
    %v4678 = vld [vmem:[%s3550 + $0x22] sm:$0xff]
    %v4679 = vld [vmem:[%s3550 + $0x32] sm:$0xff]
    %v4680 = vld [vmem:[%s3550 + $0x3a] sm:$0xff]
    %v4681 = vld [vmem:[%s3550 + $0x4a] sm:$0xff]
    %v4682 = vld [vmem:[%s3550 + $0x52] sm:$0xff]
    %v4683 = vld [vmem:[%s3550 + $0x62] sm:$0xff]
    %v4684 = vld [vmem:[%s3550 + $0x6a] sm:$0xff]
    %v4685 = vld [vmem:[%s3550 + $0x7a] sm:$0xff]
    %v4686 = vld [vmem:[%s3550 + $0x82] sm:$0xff]
    %v4687 = vld [vmem:[%s3550 + $0x92] sm:$0xff]
    %v4688 = vld [vmem:[%s3550 + $0x9a] sm:$0xff]
    %v4689 = vld [vmem:[%s3550 + $0xaa] sm:$0xff]
    %v4690 = vld [vmem:[%s3550 + $0xb2] sm:$0xff]
    %v4691 = vld [vmem:[%s3550 + $0xc2] sm:$0xff]
    %v4692 = vld [vmem:[%s3550 + $0xca] sm:$0xff]
    %v4693 = vld [vmem:[%s3550 + $0xda] sm:$0xff]
    %v4694 = vld [vmem:[%s3550 + $0xe2] sm:$0xff]
    %v4695 = vld [vmem:[%s3550 + $0xf2] sm:$0xff]
    %v4696 = vld [vmem:[%s3550 + $0xfa] sm:$0xff]
    %v4697 = vld [vmem:[%s3550 + $0x10a] sm:$0xff]
    %v4698 = vld [vmem:[%s3550 + $0x112] sm:$0xff]
    %v4699 = vld [vmem:[%s3550 + $0x122] sm:$0xff]
    %v4700 = vld [vmem:[%s3550 + $0x12a] sm:$0xff]
    %v4701 = vld [vmem:[%s3550 + $0x13a] sm:$0xff]
    %v4702 = vld [vmem:[%s3550 + $0x142] sm:$0xff]
    %v4703 = vld [vmem:[%s3550 + $0x152] sm:$0xff]
    %v4704 = vld [vmem:[%s3550 + $0x15a] sm:$0xff]
    %v4705 = vld [vmem:[%s3550 + $0x16a] sm:$0xff]
    %v4706 = vld [vmem:[%s3550 + $0x172] sm:$0xff]
    %v4707 = vld [vmem:[%s3550 + $0x1b2] sm:$0xff]
    %v4708 = vld [vmem:[%s3550 + $0x1ba] sm:$0xff]
    %v4709 = vld [vmem:[%s3550 + $0x1ca] sm:$0xff]
    %v4710 = vld [vmem:[%s3550 + $0x1d2] sm:$0xff]
    %v4711 = vld [vmem:[%s3550 + $0x1e2] sm:$0xff]
    %v4712 = vld [vmem:[%s3550 + $0x1ea] sm:$0xff]
    %v4713 = vld [vmem:[%s3550 + $0x1fa] sm:$0xff]
    %v4714 = vld [vmem:[%s3550 + $0x202] sm:$0xff]
    %v4715 = vld [vmem:[%s3550 + $0x212] sm:$0xff]
    %v4716 = vld [vmem:[%s3550 + $0x21a] sm:$0xff]
    %v4717 = vld [vmem:[%s3550 + $0x22a] sm:$0xff]
    %v4718 = vld [vmem:[%s3550 + $0x232] sm:$0xff]
    %v4719 = vld [vmem:[%s3550 + $0x242] sm:$0xff]
    %v4720 = vld [vmem:[%s3550 + $0x24a] sm:$0xff]
    %v4721 = vld [vmem:[%s3550 + $0x25a] sm:$0xff]
    %v4722 = vld [vmem:[%s3550 + $0x262] sm:$0xff]
    %v4723 = vld [vmem:[%s3550 + $0x272] sm:$0xff]
    %v4724 = vld [vmem:[%s3550 + $0x27a] sm:$0xff]
    %v4725 = vld [vmem:[%s3550 + $0x28a] sm:$0xff]
    %v4726 = vld [vmem:[%s3550 + $0x292] sm:$0xff]
    %v4727 = vld [vmem:[%s3550 + $0x2a2] sm:$0xff]
    %v4728 = vld [vmem:[%s3550 + $0x2aa] sm:$0xff]
    %v4729 = vld [vmem:[%s3550 + $0x2ba] sm:$0xff]
    %v4730 = vld [vmem:[%s3550 + $0x2c2] sm:$0xff]
    %v4731 = vld [vmem:[%s3550 + $0x2d2] sm:$0xff]
    %v4732 = vld [vmem:[%s3550 + $0x2da] sm:$0xff]
    %v4733 = vld [vmem:[%s3550 + $0x2ea] sm:$0xff]
    %v4734 = vld [vmem:[%s3550 + $0x2f2] sm:$0xff]
    %v4735 = vld [vmem:[%s3550 + $0x302] sm:$0xff]
    %v4736 = vld [vmem:[%s3550 + $0x30a] sm:$0xff]
    %v4737 = vld [vmem:[%s3550 + $0x31a] sm:$0xff]
    %v4738 = vld [vmem:[%s3550 + $0x322] sm:$0xff]
    %v4739 = vpack.c.bf16 %v4676, %v4675
    %v4740 = vpack.c.bf16 %v4678, %v4677
    %v4741 = vpack.c.bf16 %v4680, %v4679
    %v4742 = vpack.c.bf16 %v4682, %v4681
    %v4743 = vpack.c.bf16 %v4684, %v4683
    %v4744 = vpack.c.bf16 %v4686, %v4685
    %v4745 = vpack.c.bf16 %v4688, %v4687
    %v4746 = vpack.c.bf16 %v4690, %v4689
    %v4747 = vpack.c.bf16 %v4692, %v4691
    %v4748 = vpack.c.bf16 %v4694, %v4693
    %v4749 = vpack.c.bf16 %v4696, %v4695
    %v4750 = vpack.c.bf16 %v4698, %v4697
    %v4751 = vpack.c.bf16 %v4700, %v4699
    %v4752 = vpack.c.bf16 %v4702, %v4701
    %v4753 = vpack.c.bf16 %v4704, %v4703
    %v4754 = vpack.c.bf16 %v4706, %v4705
    %v4755 = vpack.c.bf16 %v4708, %v4707
    %v4756 = vpack.c.bf16 %v4710, %v4709
    %v4757 = vpack.c.bf16 %v4712, %v4711
    %v4758 = vpack.c.bf16 %v4714, %v4713
    %v4759 = vpack.c.bf16 %v4716, %v4715
    %v4760 = vpack.c.bf16 %v4718, %v4717
    %v4761 = vpack.c.bf16 %v4720, %v4719
    %v4762 = vpack.c.bf16 %v4722, %v4721
    %v4763 = vpack.c.bf16 %v4724, %v4723
    %v4764 = vpack.c.bf16 %v4726, %v4725
    %v4765 = vpack.c.bf16 %v4728, %v4727
    %v4766 = vpack.c.bf16 %v4730, %v4729
    %v4767 = vpack.c.bf16 %v4732, %v4731
    %v4768 = vpack.c.bf16 %v4734, %v4733
    %v4769 = vpack.c.bf16 %v4736, %v4735
    %v4770 = vpack.c.bf16 %v4738, %v4737
    %s4771 = scalar_lea.vmem [#allocation5], 128
    %v4772 = vld [vmem:[%s4771] sm:$0xf]
    %v4773 = vld [vmem:[%s4771 + $0x4] sm:$0xf]
    %v4774 = vld [vmem:[%s4771 + $0x8] sm:$0xf]
    %v4775 = vld [vmem:[%s4771 + $0xc] sm:$0xf]
    %v4780 = vunpack.c.l.b16 %v4772
    %v4781 = vunpack.c.l.b16 %v4773
    %v4782 = vunpack.c.l.b16 %v4774
    %v4783 = vunpack.c.l.b16 %v4775
    %v4784 = vpack.c.b16 %v4781, %v4780
    %v4785 = vpack.c.b16 %v4783, %v4782
    %v4789 = vsel %vm68, %v4739, 0
    %v4792 = vsel %vm68, %v4740, 0
    %v4795 = vsel %vm68, %v4741, 0
    %v4798 = vsel %vm68, %v4742, 0
    %v4801 = vsel %vm68, %v4743, 0
    %v4804 = vsel %vm68, %v4744, 0
    %v4807 = vsel %vm68, %v4745, 0
    %v4810 = vsel %vm68, %v4746, 0
    %v4813 = vsel %vm68, %v4747, 0
    %v4816 = vsel %vm68, %v4748, 0
    %v4819 = vsel %vm68, %v4749, 0
    %v4822 = vsel %vm68, %v4750, 0
    %v4825 = vsel %vm68, %v4751, 0
    %v4828 = vsel %vm68, %v4752, 0
    %v4831 = vsel %vm68, %v4753, 0
    %v4834 = vsel %vm68, %v4754, 0
    %v4837 = vsel %vm68, %v4755, 0
    %v4840 = vsel %vm68, %v4756, 0
    %v4843 = vsel %vm68, %v4757, 0
    %v4846 = vsel %vm68, %v4758, 0
    %v4849 = vsel %vm68, %v4759, 0
    %v4852 = vsel %vm68, %v4760, 0
    %v4855 = vsel %vm68, %v4761, 0
    %v4858 = vsel %vm68, %v4762, 0
    %v4861 = vsel %vm68, %v4763, 0
    %v4864 = vsel %vm68, %v4764, 0
    %v4867 = vsel %vm68, %v4765, 0
    %v4870 = vsel %vm68, %v4766, 0
    %v4873 = vsel %vm68, %v4767, 0
    %v4876 = vsel %vm68, %v4768, 0
    %v4879 = vsel %vm68, %v4769, 0
    %v4882 = vsel %vm68, %v4770, 0
    %4884 = vmatprep.subr.bf16.mxu0 0
    %4885 = vmatpush1.bf16.msra.mxu0 %v4784
    %4886 = vmatprep.subr.bf16.mxu0 0
    %4887 = vmatpush1.bf16.msra.mxu0 %v4785
    %4888 = vmatprep.subr.bf16.mxu0 0
    %4889 = vmatpush1.bf16.msra.mxu0 0
    %4890 = vmatprep.subr.bf16.mxu0 0
    %4891 = vmatpush1.bf16.msra.mxu0 0
    %4892 = vmatprep.subr.bf16.mxu0 0
    %4893 = vmatpush1.bf16.msra.mxu0 0
    %4894 = vmatprep.subr.bf16.mxu0 0
    %4895 = vmatpush1.bf16.msra.mxu0 0
    %4896 = vmatprep.subr.bf16.mxu0 0
    %4897 = vmatpush1.bf16.msra.mxu0 0
    %4898 = vmatprep.subr.bf16.mxu0 0
    %4899 = vmatpush1.bf16.msra.mxu0 0
    %4900 = vmatprep.subr.bf16.mxu0 0
    %4901 = vmatpush1.bf16.msra.mxu0 0
    %4902 = vmatprep.subr.bf16.mxu0 0
    %4903 = vmatpush1.bf16.msra.mxu0 0
    %4904 = vmatprep.subr.bf16.mxu0 0
    %4905 = vmatpush1.bf16.msra.mxu0 0
    %4906 = vmatprep.subr.bf16.mxu0 0
    %4907 = vmatpush1.bf16.msra.mxu0 0
    %4908 = vmatprep.subr.bf16.mxu0 0
    %4909 = vmatpush1.bf16.msra.mxu0 0
    %4910 = vmatprep.subr.bf16.mxu0 0
    %4911 = vmatpush1.bf16.msra.mxu0 0
    %4912 = vmatprep.subr.bf16.mxu0 0
    %4913 = vmatpush1.bf16.msra.mxu0 0
    %4914 = vmatprep.subr.bf16.mxu0 0
    %4915 = vmatpush1.bf16.msra.mxu0 0
    %4916 = vmatprep.mubr.bf16.mxu0 0
    %4917 = vmatmul.mubr.bf16.gmra.mrb[0].mxu0 %v4789
    %v4918 = vpop.f32.mrb[0].mxu0
    %v4919 = vadd.f32 0.0, %v4918
    %v4920 = vpop.f32.mrb[0].mxu0
    %v4921 = vpop.f32.mrb[0].mxu0
    %v4922 = vadd.f32 0.0, %v4921
    %v4923 = vpop.f32.mrb[0].mxu0
    %4924 = vmatprep.mubr.bf16.mxu0 0
    %4925 = vmatmul.mubr.bf16.gmra.mrb[0].mxu0 %v4792
    %v4926 = vpop.f32.mrb[0].mxu0
    %v4927 = vadd.f32 0.0, %v4926
    %v4928 = vpop.f32.mrb[0].mxu0
    %v4929 = vpop.f32.mrb[0].mxu0
    %v4930 = vadd.f32 0.0, %v4929
    %v4931 = vpop.f32.mrb[0].mxu0
    %4932 = vmatprep.mubr.bf16.mxu0 0
    %4933 = vmatmul.mubr.bf16.gmra.mrb[0].mxu0 %v4795
    %v4934 = vpop.f32.mrb[0].mxu0
    %v4935 = vadd.f32 0.0, %v4934
    %v4936 = vpop.f32.mrb[0].mxu0
    %v4937 = vpop.f32.mrb[0].mxu0
    %v4938 = vadd.f32 0.0, %v4937
    %v4939 = vpop.f32.mrb[0].mxu0
    %4940 = vmatprep.mubr.bf16.mxu0 0
    %4941 = vmatmul.mubr.bf16.gmra.mrb[0].mxu0 %v4798
    %v4942 = vpop.f32.mrb[0].mxu0
    %v4943 = vadd.f32 0.0, %v4942
    %v4944 = vpop.f32.mrb[0].mxu0
    %v4945 = vpop.f32.mrb[0].mxu0
    %v4946 = vadd.f32 0.0, %v4945
    %v4947 = vpop.f32.mrb[0].mxu0
    %4948 = vmatprep.mubr.bf16.mxu0 0
    %4949 = vmatmul.mubr.bf16.gmra.mrb[0].mxu0 %v4801
    %v4950 = vpop.f32.mrb[0].mxu0
    %v4951 = vadd.f32 0.0, %v4950
    %v4952 = vpop.f32.mrb[0].mxu0
    %v4953 = vpop.f32.mrb[0].mxu0
    %v4954 = vadd.f32 0.0, %v4953
    %v4955 = vpop.f32.mrb[0].mxu0
    %4956 = vmatprep.mubr.bf16.mxu0 0
    %4957 = vmatmul.mubr.bf16.gmra.mrb[0].mxu0 %v4804
    %v4958 = vpop.f32.mrb[0].mxu0
    %v4959 = vadd.f32 0.0, %v4958
    %v4960 = vpop.f32.mrb[0].mxu0
    %v4961 = vpop.f32.mrb[0].mxu0
    %v4962 = vadd.f32 0.0, %v4961
    %v4963 = vpop.f32.mrb[0].mxu0
    %4964 = vmatprep.mubr.bf16.mxu0 0
    %4965 = vmatmul.mubr.bf16.gmra.mrb[0].mxu0 %v4807
    %v4966 = vpop.f32.mrb[0].mxu0
    %v4967 = vadd.f32 0.0, %v4966
    %v4968 = vpop.f32.mrb[0].mxu0
    %v4969 = vpop.f32.mrb[0].mxu0
    %v4970 = vadd.f32 0.0, %v4969
    %v4971 = vpop.f32.mrb[0].mxu0
    %4972 = vmatprep.mubr.bf16.mxu0 0
    %4973 = vmatmul.mubr.bf16.gmra.mrb[0].mxu0 %v4810
    %v4974 = vpop.f32.mrb[0].mxu0
    %v4975 = vadd.f32 0.0, %v4974
    %v4976 = vpop.f32.mrb[0].mxu0
    %v4977 = vpop.f32.mrb[0].mxu0
    %v4978 = vadd.f32 0.0, %v4977
    %v4979 = vpop.f32.mrb[0].mxu0
    %4980 = vmatprep.mubr.bf16.mxu0 0
    %4981 = vmatmul.mubr.bf16.gmra.mrb[0].mxu0 %v4813
    %v4982 = vpop.f32.mrb[0].mxu0
    %v4983 = vadd.f32 0.0, %v4982
    %v4984 = vpop.f32.mrb[0].mxu0
    %v4985 = vpop.f32.mrb[0].mxu0
    %v4986 = vadd.f32 0.0, %v4985
    %v4987 = vpop.f32.mrb[0].mxu0
    %4988 = vmatprep.mubr.bf16.mxu0 0
    %4989 = vmatmul.mubr.bf16.gmra.mrb[0].mxu0 %v4816
    %v4990 = vpop.f32.mrb[0].mxu0
    %v4991 = vadd.f32 0.0, %v4990
    %v4992 = vpop.f32.mrb[0].mxu0
    %v4993 = vpop.f32.mrb[0].mxu0
    %v4994 = vadd.f32 0.0, %v4993
    %v4995 = vpop.f32.mrb[0].mxu0
    %4996 = vmatprep.mubr.bf16.mxu0 0
    %4997 = vmatmul.mubr.bf16.gmra.mrb[0].mxu0 %v4819
    %v4998 = vpop.f32.mrb[0].mxu0
    %v4999 = vadd.f32 0.0, %v4998
    %v5000 = vpop.f32.mrb[0].mxu0
    %v5001 = vpop.f32.mrb[0].mxu0
    %v5002 = vadd.f32 0.0, %v5001
    %v5003 = vpop.f32.mrb[0].mxu0
    %5004 = vmatprep.mubr.bf16.mxu0 0
    %5005 = vmatmul.mubr.bf16.gmra.mrb[0].mxu0 %v4822
    %v5006 = vpop.f32.mrb[0].mxu0
    %v5007 = vadd.f32 0.0, %v5006
    %v5008 = vpop.f32.mrb[0].mxu0
    %v5009 = vpop.f32.mrb[0].mxu0
    %v5010 = vadd.f32 0.0, %v5009
    %v5011 = vpop.f32.mrb[0].mxu0
    %5012 = vmatprep.mubr.bf16.mxu0 0
    %5013 = vmatmul.mubr.bf16.gmra.mrb[0].mxu0 %v4825
    %v5014 = vpop.f32.mrb[0].mxu0
    %v5015 = vadd.f32 0.0, %v5014
    %v5016 = vpop.f32.mrb[0].mxu0
    %v5017 = vpop.f32.mrb[0].mxu0
    %v5018 = vadd.f32 0.0, %v5017
    %v5019 = vpop.f32.mrb[0].mxu0
    %5020 = vmatprep.mubr.bf16.mxu0 0
    %5021 = vmatmul.mubr.bf16.gmra.mrb[0].mxu0 %v4828
    %v5022 = vpop.f32.mrb[0].mxu0
    %v5023 = vadd.f32 0.0, %v5022
    %v5024 = vpop.f32.mrb[0].mxu0
    %v5025 = vpop.f32.mrb[0].mxu0
    %v5026 = vadd.f32 0.0, %v5025
    %v5027 = vpop.f32.mrb[0].mxu0
    %5028 = vmatprep.mubr.bf16.mxu0 0
    %5029 = vmatmul.mubr.bf16.gmra.mrb[0].mxu0 %v4831
    %v5030 = vpop.f32.mrb[0].mxu0
    %v5031 = vadd.f32 0.0, %v5030
    %v5032 = vpop.f32.mrb[0].mxu0
    %v5033 = vpop.f32.mrb[0].mxu0
    %v5034 = vadd.f32 0.0, %v5033
    %v5035 = vpop.f32.mrb[0].mxu0
    %5036 = vmatprep.mubr.bf16.mxu0 0
    %5037 = vmatmul.mubr.bf16.gmra.mrb[0].mxu0 %v4834
    %v5038 = vpop.f32.mrb[0].mxu0
    %v5039 = vadd.f32 0.0, %v5038
    %v5040 = vpop.f32.mrb[0].mxu0
    %v5041 = vpop.f32.mrb[0].mxu0
    %v5042 = vadd.f32 0.0, %v5041
    %v5043 = vpop.f32.mrb[0].mxu0
    %5044 = vmatprep.mubr.bf16.mxu0 0
    %5045 = vmatmul.mubr.bf16.gmra.mrb[0].mxu0 %v4837
    %v5046 = vpop.f32.mrb[0].mxu0
    %v5047 = vadd.f32 0.0, %v5046
    %v5048 = vpop.f32.mrb[0].mxu0
    %v5049 = vpop.f32.mrb[0].mxu0
    %v5050 = vadd.f32 0.0, %v5049
    %v5051 = vpop.f32.mrb[0].mxu0
    %5052 = vmatprep.mubr.bf16.mxu0 0
    %5053 = vmatmul.mubr.bf16.gmra.mrb[0].mxu0 %v4840
    %v5054 = vpop.f32.mrb[0].mxu0
    %v5055 = vadd.f32 0.0, %v5054
    %v5056 = vpop.f32.mrb[0].mxu0
    %v5057 = vpop.f32.mrb[0].mxu0
    %v5058 = vadd.f32 0.0, %v5057
    %v5059 = vpop.f32.mrb[0].mxu0
    %5060 = vmatprep.mubr.bf16.mxu0 0
    %5061 = vmatmul.mubr.bf16.gmra.mrb[0].mxu0 %v4843
    %v5062 = vpop.f32.mrb[0].mxu0
    %v5063 = vadd.f32 0.0, %v5062
    %v5064 = vpop.f32.mrb[0].mxu0
    %v5065 = vpop.f32.mrb[0].mxu0
    %v5066 = vadd.f32 0.0, %v5065
    %v5067 = vpop.f32.mrb[0].mxu0
    %5068 = vmatprep.mubr.bf16.mxu0 0
    %5069 = vmatmul.mubr.bf16.gmra.mrb[0].mxu0 %v4846
    %v5070 = vpop.f32.mrb[0].mxu0
    %v5071 = vadd.f32 0.0, %v5070
    %v5072 = vpop.f32.mrb[0].mxu0
    %v5073 = vpop.f32.mrb[0].mxu0
    %v5074 = vadd.f32 0.0, %v5073
    %v5075 = vpop.f32.mrb[0].mxu0
    %5076 = vmatprep.mubr.bf16.mxu0 0
    %5077 = vmatmul.mubr.bf16.gmra.mrb[0].mxu0 %v4849
    %v5078 = vpop.f32.mrb[0].mxu0
    %v5079 = vadd.f32 0.0, %v5078
    %v5080 = vpop.f32.mrb[0].mxu0
    %v5081 = vpop.f32.mrb[0].mxu0
    %v5082 = vadd.f32 0.0, %v5081
    %v5083 = vpop.f32.mrb[0].mxu0
    %5084 = vmatprep.mubr.bf16.mxu0 0
    %5085 = vmatmul.mubr.bf16.gmra.mrb[0].mxu0 %v4852
    %v5086 = vpop.f32.mrb[0].mxu0
    %v5087 = vadd.f32 0.0, %v5086
    %v5088 = vpop.f32.mrb[0].mxu0
    %v5089 = vpop.f32.mrb[0].mxu0
    %v5090 = vadd.f32 0.0, %v5089
    %v5091 = vpop.f32.mrb[0].mxu0
    %5092 = vmatprep.mubr.bf16.mxu0 0
    %5093 = vmatmul.mubr.bf16.gmra.mrb[0].mxu0 %v4855
    %v5094 = vpop.f32.mrb[0].mxu0
    %v5095 = vadd.f32 0.0, %v5094
    %v5096 = vpop.f32.mrb[0].mxu0
    %v5097 = vpop.f32.mrb[0].mxu0
    %v5098 = vadd.f32 0.0, %v5097
    %v5099 = vpop.f32.mrb[0].mxu0
    %5100 = vmatprep.mubr.bf16.mxu0 0
    %5101 = vmatmul.mubr.bf16.gmra.mrb[0].mxu0 %v4858
    %v5102 = vpop.f32.mrb[0].mxu0
    %v5103 = vadd.f32 0.0, %v5102
    %v5104 = vpop.f32.mrb[0].mxu0
    %v5105 = vpop.f32.mrb[0].mxu0
    %v5106 = vadd.f32 0.0, %v5105
    %v5107 = vpop.f32.mrb[0].mxu0
    %5108 = vmatprep.mubr.bf16.mxu0 0
    %5109 = vmatmul.mubr.bf16.gmra.mrb[0].mxu0 %v4861
    %v5110 = vpop.f32.mrb[0].mxu0
    %v5111 = vadd.f32 0.0, %v5110
    %v5112 = vpop.f32.mrb[0].mxu0
    %v5113 = vpop.f32.mrb[0].mxu0
    %v5114 = vadd.f32 0.0, %v5113
    %v5115 = vpop.f32.mrb[0].mxu0
    %5116 = vmatprep.mubr.bf16.mxu0 0
    %5117 = vmatmul.mubr.bf16.gmra.mrb[0].mxu0 %v4864
    %v5118 = vpop.f32.mrb[0].mxu0
    %v5119 = vadd.f32 0.0, %v5118
    %v5120 = vpop.f32.mrb[0].mxu0
    %v5121 = vpop.f32.mrb[0].mxu0
    %v5122 = vadd.f32 0.0, %v5121
    %v5123 = vpop.f32.mrb[0].mxu0
    %5124 = vmatprep.mubr.bf16.mxu0 0
    %5125 = vmatmul.mubr.bf16.gmra.mrb[0].mxu0 %v4867
    %v5126 = vpop.f32.mrb[0].mxu0
    %v5127 = vadd.f32 0.0, %v5126
    %v5128 = vpop.f32.mrb[0].mxu0
    %v5129 = vpop.f32.mrb[0].mxu0
    %v5130 = vadd.f32 0.0, %v5129
    %v5131 = vpop.f32.mrb[0].mxu0
    %5132 = vmatprep.mubr.bf16.mxu0 0
    %5133 = vmatmul.mubr.bf16.gmra.mrb[0].mxu0 %v4870
    %v5134 = vpop.f32.mrb[0].mxu0
    %v5135 = vadd.f32 0.0, %v5134
    %v5136 = vpop.f32.mrb[0].mxu0
    %v5137 = vpop.f32.mrb[0].mxu0
    %v5138 = vadd.f32 0.0, %v5137
    %v5139 = vpop.f32.mrb[0].mxu0
    %5140 = vmatprep.mubr.bf16.mxu0 0
    %5141 = vmatmul.mubr.bf16.gmra.mrb[0].mxu0 %v4873
    %v5142 = vpop.f32.mrb[0].mxu0
    %v5143 = vadd.f32 0.0, %v5142
    %v5144 = vpop.f32.mrb[0].mxu0
    %v5145 = vpop.f32.mrb[0].mxu0
    %v5146 = vadd.f32 0.0, %v5145
    %v5147 = vpop.f32.mrb[0].mxu0
    %5148 = vmatprep.mubr.bf16.mxu0 0
    %5149 = vmatmul.mubr.bf16.gmra.mrb[0].mxu0 %v4876
    %v5150 = vpop.f32.mrb[0].mxu0
    %v5151 = vadd.f32 0.0, %v5150
    %v5152 = vpop.f32.mrb[0].mxu0
    %v5153 = vpop.f32.mrb[0].mxu0
    %v5154 = vadd.f32 0.0, %v5153
    %v5155 = vpop.f32.mrb[0].mxu0
    %5156 = vmatprep.mubr.bf16.mxu0 0
    %5157 = vmatmul.mubr.bf16.gmra.mrb[0].mxu0 %v4879
    %v5158 = vpop.f32.mrb[0].mxu0
    %v5159 = vadd.f32 0.0, %v5158
    %v5160 = vpop.f32.mrb[0].mxu0
    %v5161 = vpop.f32.mrb[0].mxu0
    %v5162 = vadd.f32 0.0, %v5161
    %v5163 = vpop.f32.mrb[0].mxu0
    %5164 = vmatprep.mubr.bf16.mxu0 0
    %5165 = vmatmul.mubr.bf16.gmra.mrb[0].mxu0 %v4882
    %v5166 = vpop.f32.mrb[0].mxu0
    %v5167 = vadd.f32 0.0, %v5166
    %v5168 = vpop.f32.mrb[0].mxu0
    %v5169 = vpop.f32.mrb[0].mxu0
    %v5170 = vadd.f32 0.0, %v5169
    %v5171 = vpop.f32.mrb[0].mxu0
    %5172 = vdwg.mxu0
    %v5173 = vadd.f32 %v4611, %v4919
    %v5174 = vadd.f32 %v4612, %v4922
    %v5175 = vadd.f32 %v4613, %v4927
    %v5176 = vadd.f32 %v4614, %v4930
    %v5177 = vadd.f32 %v4615, %v4935
    %v5178 = vadd.f32 %v4616, %v4938
    %v5179 = vadd.f32 %v4617, %v4943
    %v5180 = vadd.f32 %v4618, %v4946
    %v5181 = vadd.f32 %v4619, %v4951
    %v5182 = vadd.f32 %v4620, %v4954
    %v5183 = vadd.f32 %v4621, %v4959
    %v5184 = vadd.f32 %v4622, %v4962
    %v5185 = vadd.f32 %v4623, %v4967
    %v5186 = vadd.f32 %v4624, %v4970
    %v5187 = vadd.f32 %v4625, %v4975
    %v5188 = vadd.f32 %v4626, %v4978
    %v5189 = vadd.f32 %v4627, %v4983
    %v5190 = vadd.f32 %v4628, %v4986
    %v5191 = vadd.f32 %v4629, %v4991
    %v5192 = vadd.f32 %v4630, %v4994
    %v5193 = vadd.f32 %v4631, %v4999
    %v5194 = vadd.f32 %v4632, %v5002
    %v5195 = vadd.f32 %v4633, %v5007
    %v5196 = vadd.f32 %v4634, %v5010
    %v5197 = vadd.f32 %v4635, %v5015
    %v5198 = vadd.f32 %v4636, %v5018
    %v5199 = vadd.f32 %v4637, %v5023
    %v5200 = vadd.f32 %v4638, %v5026
    %v5201 = vadd.f32 %v4639, %v5031
    %v5202 = vadd.f32 %v4640, %v5034
    %v5203 = vadd.f32 %v4641, %v5039
    %v5204 = vadd.f32 %v4642, %v5042
    %v5205 = vadd.f32 %v4643, %v5047
    %v5206 = vadd.f32 %v4644, %v5050
    %v5207 = vadd.f32 %v4645, %v5055
    %v5208 = vadd.f32 %v4646, %v5058
    %v5209 = vadd.f32 %v4647, %v5063
    %v5210 = vadd.f32 %v4648, %v5066
    %v5211 = vadd.f32 %v4649, %v5071
    %v5212 = vadd.f32 %v4650, %v5074
    %v5213 = vadd.f32 %v4651, %v5079
    %v5214 = vadd.f32 %v4652, %v5082
    %v5215 = vadd.f32 %v4653, %v5087
    %v5216 = vadd.f32 %v4654, %v5090
    %v5217 = vadd.f32 %v4655, %v5095
    %v5218 = vadd.f32 %v4656, %v5098
    %v5219 = vadd.f32 %v4657, %v5103
    %v5220 = vadd.f32 %v4658, %v5106
    %v5221 = vadd.f32 %v4659, %v5111
    %v5222 = vadd.f32 %v4660, %v5114
    %v5223 = vadd.f32 %v4661, %v5119
    %v5224 = vadd.f32 %v4662, %v5122
    %v5225 = vadd.f32 %v4663, %v5127
    %v5226 = vadd.f32 %v4664, %v5130
    %v5227 = vadd.f32 %v4665, %v5135
    %v5228 = vadd.f32 %v4666, %v5138
    %v5229 = vadd.f32 %v4667, %v5143
    %v5230 = vadd.f32 %v4668, %v5146
    %v5231 = vadd.f32 %v4669, %v5151
    %v5232 = vadd.f32 %v4670, %v5154
    %v5233 = vadd.f32 %v4671, %v5159
    %v5234 = vadd.f32 %v4672, %v5162
    %v5235 = vadd.f32 %v4673, %v5167
    %v5236 = vadd.f32 %v4674, %v5170
    %v5237 = vsel %vm68, %v5173, 0.0
    %v5238 = vsel %vm68, %v5174, 0.0
    %v5239 = vadd.f32 %v5237, %v5238
    %v5240 = vsel %vm68, %v5175, 0.0
    %v5241 = vadd.f32 %v5239, %v5240
    %v5242 = vsel %vm68, %v5176, 0.0
    %v5243 = vadd.f32 %v5241, %v5242
    %v5244 = vsel %vm68, %v5177, 0.0
    %v5245 = vadd.f32 %v5243, %v5244
    %v5246 = vsel %vm68, %v5178, 0.0
    %v5247 = vadd.f32 %v5245, %v5246
    %v5248 = vsel %vm68, %v5179, 0.0
    %v5249 = vadd.f32 %v5247, %v5248
    %v5250 = vsel %vm68, %v5180, 0.0
    %v5251 = vadd.f32 %v5249, %v5250
    %v5252 = vsel %vm68, %v5181, 0.0
    %v5253 = vadd.f32 %v5251, %v5252
    %v5254 = vsel %vm68, %v5182, 0.0
    %v5255 = vadd.f32 %v5253, %v5254
    %v5256 = vsel %vm68, %v5183, 0.0
    %v5257 = vadd.f32 %v5255, %v5256
    %v5258 = vsel %vm68, %v5184, 0.0
    %v5259 = vadd.f32 %v5257, %v5258
    %v5260 = vsel %vm68, %v5185, 0.0
    %v5261 = vadd.f32 %v5259, %v5260
    %v5262 = vsel %vm68, %v5186, 0.0
    %v5263 = vadd.f32 %v5261, %v5262
    %v5264 = vsel %vm68, %v5187, 0.0
    %v5265 = vadd.f32 %v5263, %v5264
    %v5266 = vsel %vm68, %v5188, 0.0
    %v5267 = vadd.f32 %v5265, %v5266
    %v5268 = vsel %vm68, %v5189, 0.0
    %v5269 = vadd.f32 %v5267, %v5268
    %v5270 = vsel %vm68, %v5190, 0.0
    %v5271 = vadd.f32 %v5269, %v5270
    %v5272 = vsel %vm68, %v5191, 0.0
    %v5273 = vadd.f32 %v5271, %v5272
    %v5274 = vsel %vm68, %v5192, 0.0
    %v5275 = vadd.f32 %v5273, %v5274
    %v5276 = vsel %vm68, %v5193, 0.0
    %v5277 = vadd.f32 %v5275, %v5276
    %v5278 = vsel %vm68, %v5194, 0.0
    %v5279 = vadd.f32 %v5277, %v5278
    %v5280 = vsel %vm68, %v5195, 0.0
    %v5281 = vadd.f32 %v5279, %v5280
    %v5282 = vsel %vm68, %v5196, 0.0
    %v5283 = vadd.f32 %v5281, %v5282
    %v5284 = vsel %vm68, %v5197, 0.0
    %v5285 = vadd.f32 %v5283, %v5284
    %v5286 = vsel %vm68, %v5198, 0.0
    %v5287 = vadd.f32 %v5285, %v5286
    %v5288 = vsel %vm68, %v5199, 0.0
    %v5289 = vadd.f32 %v5287, %v5288
    %v5290 = vsel %vm68, %v5200, 0.0
    %v5291 = vadd.f32 %v5289, %v5290
    %v5292 = vsel %vm68, %v5201, 0.0
    %v5293 = vadd.f32 %v5291, %v5292
    %v5294 = vsel %vm68, %v5202, 0.0
    %v5295 = vadd.f32 %v5293, %v5294
    %v5296 = vsel %vm68, %v5203, 0.0
    %v5297 = vadd.f32 %v5295, %v5296
    %v5298 = vsel %vm68, %v5204, 0.0
    %v5299 = vadd.f32 %v5297, %v5298
    %v5300 = vsel %vm68, %v5205, 0.0
    %v5301 = vadd.f32 %v5299, %v5300
    %v5302 = vsel %vm68, %v5206, 0.0
    %v5303 = vadd.f32 %v5301, %v5302
    %v5304 = vsel %vm68, %v5207, 0.0
    %v5305 = vadd.f32 %v5303, %v5304
    %v5306 = vsel %vm68, %v5208, 0.0
    %v5307 = vadd.f32 %v5305, %v5306
    %v5308 = vsel %vm68, %v5209, 0.0
    %v5309 = vadd.f32 %v5307, %v5308
    %v5310 = vsel %vm68, %v5210, 0.0
    %v5311 = vadd.f32 %v5309, %v5310
    %v5312 = vsel %vm68, %v5211, 0.0
    %v5313 = vadd.f32 %v5311, %v5312
    %v5314 = vsel %vm68, %v5212, 0.0
    %v5315 = vadd.f32 %v5313, %v5314
    %v5316 = vsel %vm68, %v5213, 0.0
    %v5317 = vadd.f32 %v5315, %v5316
    %v5318 = vsel %vm68, %v5214, 0.0
    %v5319 = vadd.f32 %v5317, %v5318
    %v5320 = vsel %vm68, %v5215, 0.0
    %v5321 = vadd.f32 %v5319, %v5320
    %v5322 = vsel %vm68, %v5216, 0.0
    %v5323 = vadd.f32 %v5321, %v5322
    %v5324 = vsel %vm68, %v5217, 0.0
    %v5325 = vadd.f32 %v5323, %v5324
    %v5326 = vsel %vm68, %v5218, 0.0
    %v5327 = vadd.f32 %v5325, %v5326
    %v5328 = vsel %vm68, %v5219, 0.0
    %v5329 = vadd.f32 %v5327, %v5328
    %v5330 = vsel %vm68, %v5220, 0.0
    %v5331 = vadd.f32 %v5329, %v5330
    %v5332 = vsel %vm68, %v5221, 0.0
    %v5333 = vadd.f32 %v5331, %v5332
    %v5334 = vsel %vm68, %v5222, 0.0
    %v5335 = vadd.f32 %v5333, %v5334
    %v5336 = vsel %vm68, %v5223, 0.0
    %v5337 = vadd.f32 %v5335, %v5336
    %v5338 = vsel %vm68, %v5224, 0.0
    %v5339 = vadd.f32 %v5337, %v5338
    %v5340 = vsel %vm68, %v5225, 0.0
    %v5341 = vadd.f32 %v5339, %v5340
    %v5342 = vsel %vm68, %v5226, 0.0
    %v5343 = vadd.f32 %v5341, %v5342
    %v5344 = vsel %vm68, %v5227, 0.0
    %v5345 = vadd.f32 %v5343, %v5344
    %v5346 = vsel %vm68, %v5228, 0.0
    %v5347 = vadd.f32 %v5345, %v5346
    %v5348 = vsel %vm68, %v5229, 0.0
    %v5349 = vadd.f32 %v5347, %v5348
    %v5350 = vsel %vm68, %v5230, 0.0
    %v5351 = vadd.f32 %v5349, %v5350
    %v5352 = vsel %vm68, %v5231, 0.0
    %v5353 = vadd.f32 %v5351, %v5352
    %v5354 = vsel %vm68, %v5232, 0.0
    %v5355 = vadd.f32 %v5353, %v5354
    %v5356 = vsel %vm68, %v5233, 0.0
    %v5357 = vadd.f32 %v5355, %v5356
    %v5358 = vsel %vm68, %v5234, 0.0
    %v5359 = vadd.f32 %v5357, %v5358
    %v5360 = vsel %vm68, %v5235, 0.0
    %v5361 = vadd.f32 %v5359, %v5360
    %v5362 = vsel %vm68, %v5236, 0.0
    %v5363 = vadd.f32 %v5361, %v5362
    %v5364 = vrot.slane %v5363, 4
    %v5365 = vadd.f32 %v5363, %v5364
    %v5366 = vrot.slane %v5365, 2
    %v5367 = vadd.f32 %v5365, %v5366
    %v5368 = vrot.slane %v5367, 1
    %v5369 = vadd.f32 %v5367, %v5368
    %v5370 = vrcp.pop 512.0
    %v5371 = vmul.f32 %v5369, %v5370
    %v5372 = vsub.f32 %v5173, %v5371
    %v5373 = vsub.f32 %v5174, %v5371
    %v5374 = vsub.f32 %v5175, %v5371
    %v5375 = vsub.f32 %v5176, %v5371
    %v5376 = vsub.f32 %v5177, %v5371
    %v5377 = vsub.f32 %v5178, %v5371
    %v5378 = vsub.f32 %v5179, %v5371
    %v5379 = vsub.f32 %v5180, %v5371
    %v5380 = vsub.f32 %v5181, %v5371
    %v5381 = vsub.f32 %v5182, %v5371
    %v5382 = vsub.f32 %v5183, %v5371
    %v5383 = vsub.f32 %v5184, %v5371
    %v5384 = vsub.f32 %v5185, %v5371
    %v5385 = vsub.f32 %v5186, %v5371
    %v5386 = vsub.f32 %v5187, %v5371
    %v5387 = vsub.f32 %v5188, %v5371
    %v5388 = vsub.f32 %v5189, %v5371
    %v5389 = vsub.f32 %v5190, %v5371
    %v5390 = vsub.f32 %v5191, %v5371
    %v5391 = vsub.f32 %v5192, %v5371
    %v5392 = vsub.f32 %v5193, %v5371
    %v5393 = vsub.f32 %v5194, %v5371
    %v5394 = vsub.f32 %v5195, %v5371
    %v5395 = vsub.f32 %v5196, %v5371
    %v5396 = vsub.f32 %v5197, %v5371
    %v5397 = vsub.f32 %v5198, %v5371
    %v5398 = vsub.f32 %v5199, %v5371
    %v5399 = vsub.f32 %v5200, %v5371
    %v5400 = vsub.f32 %v5201, %v5371
    %v5401 = vsub.f32 %v5202, %v5371
    %v5402 = vsub.f32 %v5203, %v5371
    %v5403 = vsub.f32 %v5204, %v5371
    %v5404 = vsub.f32 %v5205, %v5371
    %v5405 = vsub.f32 %v5206, %v5371
    %v5406 = vsub.f32 %v5207, %v5371
    %v5407 = vsub.f32 %v5208, %v5371
    %v5408 = vsub.f32 %v5209, %v5371
    %v5409 = vsub.f32 %v5210, %v5371
    %v5410 = vsub.f32 %v5211, %v5371
    %v5411 = vsub.f32 %v5212, %v5371
    %v5412 = vsub.f32 %v5213, %v5371
    %v5413 = vsub.f32 %v5214, %v5371
    %v5414 = vsub.f32 %v5215, %v5371
    %v5415 = vsub.f32 %v5216, %v5371
    %v5416 = vsub.f32 %v5217, %v5371
    %v5417 = vsub.f32 %v5218, %v5371
    %v5418 = vsub.f32 %v5219, %v5371
    %v5419 = vsub.f32 %v5220, %v5371
    %v5420 = vsub.f32 %v5221, %v5371
    %v5421 = vsub.f32 %v5222, %v5371
    %v5422 = vsub.f32 %v5223, %v5371
    %v5423 = vsub.f32 %v5224, %v5371
    %v5424 = vsub.f32 %v5225, %v5371
    %v5425 = vsub.f32 %v5226, %v5371
    %v5426 = vsub.f32 %v5227, %v5371
    %v5427 = vsub.f32 %v5228, %v5371
    %v5428 = vsub.f32 %v5229, %v5371
    %v5429 = vsub.f32 %v5230, %v5371
    %v5430 = vsub.f32 %v5231, %v5371
    %v5431 = vsub.f32 %v5232, %v5371
    %v5432 = vsub.f32 %v5233, %v5371
    %v5433 = vsub.f32 %v5234, %v5371
    %v5434 = vsub.f32 %v5235, %v5371
    %v5435 = vsub.f32 %v5236, %v5371
    %v5436 = vmul.f32 %v5372, %v5372
    %v5437 = vmul.f32 %v5373, %v5373
    %v5438 = vmul.f32 %v5374, %v5374
    %v5439 = vmul.f32 %v5375, %v5375
    %v5440 = vmul.f32 %v5376, %v5376
    %v5441 = vmul.f32 %v5377, %v5377
    %v5442 = vmul.f32 %v5378, %v5378
    %v5443 = vmul.f32 %v5379, %v5379
    %v5444 = vmul.f32 %v5380, %v5380
    %v5445 = vmul.f32 %v5381, %v5381
    %v5446 = vmul.f32 %v5382, %v5382
    %v5447 = vmul.f32 %v5383, %v5383
    %v5448 = vmul.f32 %v5384, %v5384
    %v5449 = vmul.f32 %v5385, %v5385
    %v5450 = vmul.f32 %v5386, %v5386
    %v5451 = vmul.f32 %v5387, %v5387
    %v5452 = vmul.f32 %v5388, %v5388
    %v5453 = vmul.f32 %v5389, %v5389
    %v5454 = vmul.f32 %v5390, %v5390
    %v5455 = vmul.f32 %v5391, %v5391
    %v5456 = vmul.f32 %v5392, %v5392
    %v5457 = vmul.f32 %v5393, %v5393
    %v5458 = vmul.f32 %v5394, %v5394
    %v5459 = vmul.f32 %v5395, %v5395
    %v5460 = vmul.f32 %v5396, %v5396
    %v5461 = vmul.f32 %v5397, %v5397
    %v5462 = vmul.f32 %v5398, %v5398
    %v5463 = vmul.f32 %v5399, %v5399
    %v5464 = vmul.f32 %v5400, %v5400
    %v5465 = vmul.f32 %v5401, %v5401
    %v5466 = vmul.f32 %v5402, %v5402
    %v5467 = vmul.f32 %v5403, %v5403
    %v5468 = vmul.f32 %v5404, %v5404
    %v5469 = vmul.f32 %v5405, %v5405
    %v5470 = vmul.f32 %v5406, %v5406
    %v5471 = vmul.f32 %v5407, %v5407
    %v5472 = vmul.f32 %v5408, %v5408
    %v5473 = vmul.f32 %v5409, %v5409
    %v5474 = vmul.f32 %v5410, %v5410
    %v5475 = vmul.f32 %v5411, %v5411
    %v5476 = vmul.f32 %v5412, %v5412
    %v5477 = vmul.f32 %v5413, %v5413
    %v5478 = vmul.f32 %v5414, %v5414
    %v5479 = vmul.f32 %v5415, %v5415
    %v5480 = vmul.f32 %v5416, %v5416
    %v5481 = vmul.f32 %v5417, %v5417
    %v5482 = vmul.f32 %v5418, %v5418
    %v5483 = vmul.f32 %v5419, %v5419
    %v5484 = vmul.f32 %v5420, %v5420
    %v5485 = vmul.f32 %v5421, %v5421
    %v5486 = vmul.f32 %v5422, %v5422
    %v5487 = vmul.f32 %v5423, %v5423
    %v5488 = vmul.f32 %v5424, %v5424
    %v5489 = vmul.f32 %v5425, %v5425
    %v5490 = vmul.f32 %v5426, %v5426
    %v5491 = vmul.f32 %v5427, %v5427
    %v5492 = vmul.f32 %v5428, %v5428
    %v5493 = vmul.f32 %v5429, %v5429
    %v5494 = vmul.f32 %v5430, %v5430
    %v5495 = vmul.f32 %v5431, %v5431
    %v5496 = vmul.f32 %v5432, %v5432
    %v5497 = vmul.f32 %v5433, %v5433
    %v5498 = vmul.f32 %v5434, %v5434
    %v5499 = vmul.f32 %v5435, %v5435
    %v5500 = vsel %vm68, %v5436, 0.0
    %v5501 = vsel %vm68, %v5437, 0.0
    %v5502 = vadd.f32 %v5500, %v5501
    %v5503 = vsel %vm68, %v5438, 0.0
    %v5504 = vadd.f32 %v5502, %v5503
    %v5505 = vsel %vm68, %v5439, 0.0
    %v5506 = vadd.f32 %v5504, %v5505
    %v5507 = vsel %vm68, %v5440, 0.0
    %v5508 = vadd.f32 %v5506, %v5507
    %v5509 = vsel %vm68, %v5441, 0.0
    %v5510 = vadd.f32 %v5508, %v5509
    %v5511 = vsel %vm68, %v5442, 0.0
    %v5512 = vadd.f32 %v5510, %v5511
    %v5513 = vsel %vm68, %v5443, 0.0
    %v5514 = vadd.f32 %v5512, %v5513
    %v5515 = vsel %vm68, %v5444, 0.0
    %v5516 = vadd.f32 %v5514, %v5515
    %v5517 = vsel %vm68, %v5445, 0.0
    %v5518 = vadd.f32 %v5516, %v5517
    %v5519 = vsel %vm68, %v5446, 0.0
    %v5520 = vadd.f32 %v5518, %v5519
    %v5521 = vsel %vm68, %v5447, 0.0
    %v5522 = vadd.f32 %v5520, %v5521
    %v5523 = vsel %vm68, %v5448, 0.0
    %v5524 = vadd.f32 %v5522, %v5523
    %v5525 = vsel %vm68, %v5449, 0.0
    %v5526 = vadd.f32 %v5524, %v5525
    %v5527 = vsel %vm68, %v5450, 0.0
    %v5528 = vadd.f32 %v5526, %v5527
    %v5529 = vsel %vm68, %v5451, 0.0
    %v5530 = vadd.f32 %v5528, %v5529
    %v5531 = vsel %vm68, %v5452, 0.0
    %v5532 = vadd.f32 %v5530, %v5531
    %v5533 = vsel %vm68, %v5453, 0.0
    %v5534 = vadd.f32 %v5532, %v5533
    %v5535 = vsel %vm68, %v5454, 0.0
    %v5536 = vadd.f32 %v5534, %v5535
    %v5537 = vsel %vm68, %v5455, 0.0
    %v5538 = vadd.f32 %v5536, %v5537
    %v5539 = vsel %vm68, %v5456, 0.0
    %v5540 = vadd.f32 %v5538, %v5539
    %v5541 = vsel %vm68, %v5457, 0.0
    %v5542 = vadd.f32 %v5540, %v5541
    %v5543 = vsel %vm68, %v5458, 0.0
    %v5544 = vadd.f32 %v5542, %v5543
    %v5545 = vsel %vm68, %v5459, 0.0
    %v5546 = vadd.f32 %v5544, %v5545
    %v5547 = vsel %vm68, %v5460, 0.0
    %v5548 = vadd.f32 %v5546, %v5547
    %v5549 = vsel %vm68, %v5461, 0.0
    %v5550 = vadd.f32 %v5548, %v5549
    %v5551 = vsel %vm68, %v5462, 0.0
    %v5552 = vadd.f32 %v5550, %v5551
    %v5553 = vsel %vm68, %v5463, 0.0
    %v5554 = vadd.f32 %v5552, %v5553
    %v5555 = vsel %vm68, %v5464, 0.0
    %v5556 = vadd.f32 %v5554, %v5555
    %v5557 = vsel %vm68, %v5465, 0.0
    %v5558 = vadd.f32 %v5556, %v5557
    %v5559 = vsel %vm68, %v5466, 0.0
    %v5560 = vadd.f32 %v5558, %v5559
    %v5561 = vsel %vm68, %v5467, 0.0
    %v5562 = vadd.f32 %v5560, %v5561
    %v5563 = vsel %vm68, %v5468, 0.0
    %v5564 = vadd.f32 %v5562, %v5563
    %v5565 = vsel %vm68, %v5469, 0.0
    %v5566 = vadd.f32 %v5564, %v5565
    %v5567 = vsel %vm68, %v5470, 0.0
    %v5568 = vadd.f32 %v5566, %v5567
    %v5569 = vsel %vm68, %v5471, 0.0
    %v5570 = vadd.f32 %v5568, %v5569
    %v5571 = vsel %vm68, %v5472, 0.0
    %v5572 = vadd.f32 %v5570, %v5571
    %v5573 = vsel %vm68, %v5473, 0.0
    %v5574 = vadd.f32 %v5572, %v5573
    %v5575 = vsel %vm68, %v5474, 0.0
    %v5576 = vadd.f32 %v5574, %v5575
    %v5577 = vsel %vm68, %v5475, 0.0
    %v5578 = vadd.f32 %v5576, %v5577
    %v5579 = vsel %vm68, %v5476, 0.0
    %v5580 = vadd.f32 %v5578, %v5579
    %v5581 = vsel %vm68, %v5477, 0.0
    %v5582 = vadd.f32 %v5580, %v5581
    %v5583 = vsel %vm68, %v5478, 0.0
    %v5584 = vadd.f32 %v5582, %v5583
    %v5585 = vsel %vm68, %v5479, 0.0
    %v5586 = vadd.f32 %v5584, %v5585
    %v5587 = vsel %vm68, %v5480, 0.0
    %v5588 = vadd.f32 %v5586, %v5587
    %v5589 = vsel %vm68, %v5481, 0.0
    %v5590 = vadd.f32 %v5588, %v5589
    %v5591 = vsel %vm68, %v5482, 0.0
    %v5592 = vadd.f32 %v5590, %v5591
    %v5593 = vsel %vm68, %v5483, 0.0
    %v5594 = vadd.f32 %v5592, %v5593
    %v5595 = vsel %vm68, %v5484, 0.0
    %v5596 = vadd.f32 %v5594, %v5595
    %v5597 = vsel %vm68, %v5485, 0.0
    %v5598 = vadd.f32 %v5596, %v5597
    %v5599 = vsel %vm68, %v5486, 0.0
    %v5600 = vadd.f32 %v5598, %v5599
    %v5601 = vsel %vm68, %v5487, 0.0
    %v5602 = vadd.f32 %v5600, %v5601
    %v5603 = vsel %vm68, %v5488, 0.0
    %v5604 = vadd.f32 %v5602, %v5603
    %v5605 = vsel %vm68, %v5489, 0.0
    %v5606 = vadd.f32 %v5604, %v5605
    %v5607 = vsel %vm68, %v5490, 0.0
    %v5608 = vadd.f32 %v5606, %v5607
    %v5609 = vsel %vm68, %v5491, 0.0
    %v5610 = vadd.f32 %v5608, %v5609
    %v5611 = vsel %vm68, %v5492, 0.0
    %v5612 = vadd.f32 %v5610, %v5611
    %v5613 = vsel %vm68, %v5493, 0.0
    %v5614 = vadd.f32 %v5612, %v5613
    %v5615 = vsel %vm68, %v5494, 0.0
    %v5616 = vadd.f32 %v5614, %v5615
    %v5617 = vsel %vm68, %v5495, 0.0
    %v5618 = vadd.f32 %v5616, %v5617
    %v5619 = vsel %vm68, %v5496, 0.0
    %v5620 = vadd.f32 %v5618, %v5619
    %v5621 = vsel %vm68, %v5497, 0.0
    %v5622 = vadd.f32 %v5620, %v5621
    %v5623 = vsel %vm68, %v5498, 0.0
    %v5624 = vadd.f32 %v5622, %v5623
    %v5625 = vsel %vm68, %v5499, 0.0
    %v5626 = vadd.f32 %v5624, %v5625
    %v5627 = vrot.slane %v5626, 4
    %v5628 = vadd.f32 %v5626, %v5627
    %v5629 = vrot.slane %v5628, 2
    %v5630 = vadd.f32 %v5628, %v5629
    %v5631 = vrot.slane %v5630, 1
    %v5632 = vadd.f32 %v5630, %v5631
    %v5633 = vmul.f32 %v5632, %v5370
    %v5634 = vadd.f32 %v5633, 1e-05
    %v5635 = vrsqrt.pop %v5634
    %v5636 = vld [vmem:[%s2] sm:$0x1]
    %v5637 = vmul.f32 %v5635, %v5636
    %v5638 = vlaneseq
    %v5639 = vshrl.u32 %v5638, 7
    %v5640 = vsub.s32 0, %v5639
    %v5641 = vrot.slane %v5637, %v5640
    %v5642 = vmul.f32 %v5372, %v5641
    %v5643 = vmul.f32 %v5373, %v5641
    %v5644 = vmul.f32 %v5374, %v5641
    %v5645 = vmul.f32 %v5375, %v5641
    %v5646 = vmul.f32 %v5376, %v5641
    %v5647 = vmul.f32 %v5377, %v5641
    %v5648 = vmul.f32 %v5378, %v5641
    %v5649 = vmul.f32 %v5379, %v5641
    %v5650 = vmul.f32 %v5380, %v5641
    %v5651 = vmul.f32 %v5381, %v5641
    %v5652 = vmul.f32 %v5382, %v5641
    %v5653 = vmul.f32 %v5383, %v5641
    %v5654 = vmul.f32 %v5384, %v5641
    %v5655 = vmul.f32 %v5385, %v5641
    %v5656 = vmul.f32 %v5386, %v5641
    %v5657 = vmul.f32 %v5387, %v5641
    %v5658 = vmul.f32 %v5388, %v5641
    %v5659 = vmul.f32 %v5389, %v5641
    %v5660 = vmul.f32 %v5390, %v5641
    %v5661 = vmul.f32 %v5391, %v5641
    %v5662 = vmul.f32 %v5392, %v5641
    %v5663 = vmul.f32 %v5393, %v5641
    %v5664 = vmul.f32 %v5394, %v5641
    %v5665 = vmul.f32 %v5395, %v5641
    %v5666 = vmul.f32 %v5396, %v5641
    %v5667 = vmul.f32 %v5397, %v5641
    %v5668 = vmul.f32 %v5398, %v5641
    %v5669 = vmul.f32 %v5399, %v5641
    %v5670 = vmul.f32 %v5400, %v5641
    %v5671 = vmul.f32 %v5401, %v5641
    %v5672 = vmul.f32 %v5402, %v5641
    %v5673 = vmul.f32 %v5403, %v5641
    %v5674 = vmul.f32 %v5404, %v5641
    %v5675 = vmul.f32 %v5405, %v5641
    %v5676 = vmul.f32 %v5406, %v5641
    %v5677 = vmul.f32 %v5407, %v5641
    %v5678 = vmul.f32 %v5408, %v5641
    %v5679 = vmul.f32 %v5409, %v5641
    %v5680 = vmul.f32 %v5410, %v5641
    %v5681 = vmul.f32 %v5411, %v5641
    %v5682 = vmul.f32 %v5412, %v5641
    %v5683 = vmul.f32 %v5413, %v5641
    %v5684 = vmul.f32 %v5414, %v5641
    %v5685 = vmul.f32 %v5415, %v5641
    %v5686 = vmul.f32 %v5416, %v5641
    %v5687 = vmul.f32 %v5417, %v5641
    %v5688 = vmul.f32 %v5418, %v5641
    %v5689 = vmul.f32 %v5419, %v5641
    %v5690 = vmul.f32 %v5420, %v5641
    %v5691 = vmul.f32 %v5421, %v5641
    %v5692 = vmul.f32 %v5422, %v5641
    %v5693 = vmul.f32 %v5423, %v5641
    %v5694 = vmul.f32 %v5424, %v5641
    %v5695 = vmul.f32 %v5425, %v5641
    %v5696 = vmul.f32 %v5426, %v5641
    %v5697 = vmul.f32 %v5427, %v5641
    %v5698 = vmul.f32 %v5428, %v5641
    %v5699 = vmul.f32 %v5429, %v5641
    %v5700 = vmul.f32 %v5430, %v5641
    %v5701 = vmul.f32 %v5431, %v5641
    %v5702 = vmul.f32 %v5432, %v5641
    %v5703 = vmul.f32 %v5433, %v5641
    %v5704 = vmul.f32 %v5434, %v5641
    %v5705 = vmul.f32 %v5435, %v5641
    %v5706 = vld [vmem:[%s3] sm:$0x1]
    %v5708 = vlaneseq
    %v5709 = vshrl.u32 %v5708, 7
    %v5710 = vsub.s32 0, %v5709
    %v5711 = vrot.slane %v5706, %v5710
    %v5713 = vadd.f32 %v5642, %v5711
    %v5714 = vadd.f32 %v5643, %v5711
    %v5715 = vadd.f32 %v5644, %v5711
    %v5716 = vadd.f32 %v5645, %v5711
    %v5717 = vadd.f32 %v5646, %v5711
    %v5718 = vadd.f32 %v5647, %v5711
    %v5719 = vadd.f32 %v5648, %v5711
    %v5720 = vadd.f32 %v5649, %v5711
    %v5721 = vadd.f32 %v5650, %v5711
    %v5722 = vadd.f32 %v5651, %v5711
    %v5723 = vadd.f32 %v5652, %v5711
    %v5724 = vadd.f32 %v5653, %v5711
    %v5725 = vadd.f32 %v5654, %v5711
    %v5726 = vadd.f32 %v5655, %v5711
    %v5727 = vadd.f32 %v5656, %v5711
    %v5728 = vadd.f32 %v5657, %v5711
    %v5729 = vadd.f32 %v5658, %v5711
    %v5730 = vadd.f32 %v5659, %v5711
    %v5731 = vadd.f32 %v5660, %v5711
    %v5732 = vadd.f32 %v5661, %v5711
    %v5733 = vadd.f32 %v5662, %v5711
    %v5734 = vadd.f32 %v5663, %v5711
    %v5735 = vadd.f32 %v5664, %v5711
    %v5736 = vadd.f32 %v5665, %v5711
    %v5737 = vadd.f32 %v5666, %v5711
    %v5738 = vadd.f32 %v5667, %v5711
    %v5739 = vadd.f32 %v5668, %v5711
    %v5740 = vadd.f32 %v5669, %v5711
    %v5741 = vadd.f32 %v5670, %v5711
    %v5742 = vadd.f32 %v5671, %v5711
    %v5743 = vadd.f32 %v5672, %v5711
    %v5744 = vadd.f32 %v5673, %v5711
    %v5745 = vadd.f32 %v5674, %v5711
    %v5746 = vadd.f32 %v5675, %v5711
    %v5747 = vadd.f32 %v5676, %v5711
    %v5748 = vadd.f32 %v5677, %v5711
    %v5749 = vadd.f32 %v5678, %v5711
    %v5750 = vadd.f32 %v5679, %v5711
    %v5751 = vadd.f32 %v5680, %v5711
    %v5752 = vadd.f32 %v5681, %v5711
    %v5753 = vadd.f32 %v5682, %v5711
    %v5754 = vadd.f32 %v5683, %v5711
    %v5755 = vadd.f32 %v5684, %v5711
    %v5756 = vadd.f32 %v5685, %v5711
    %v5757 = vadd.f32 %v5686, %v5711
    %v5758 = vadd.f32 %v5687, %v5711
    %v5759 = vadd.f32 %v5688, %v5711
    %v5760 = vadd.f32 %v5689, %v5711
    %v5761 = vadd.f32 %v5690, %v5711
    %v5762 = vadd.f32 %v5691, %v5711
    %v5763 = vadd.f32 %v5692, %v5711
    %v5764 = vadd.f32 %v5693, %v5711
    %v5765 = vadd.f32 %v5694, %v5711
    %v5766 = vadd.f32 %v5695, %v5711
    %v5767 = vadd.f32 %v5696, %v5711
    %v5768 = vadd.f32 %v5697, %v5711
    %v5769 = vadd.f32 %v5698, %v5711
    %v5770 = vadd.f32 %v5699, %v5711
    %v5771 = vadd.f32 %v5700, %v5711
    %v5772 = vadd.f32 %v5701, %v5711
    %v5773 = vadd.f32 %v5702, %v5711
    %v5774 = vadd.f32 %v5703, %v5711
    %v5775 = vadd.f32 %v5704, %v5711
    %v5776 = vadd.f32 %v5705, %v5711
    %v5777 = vmax.f32 %v5713, 0.0
    %v5778 = vmax.f32 %v5714, 0.0
    %v5779 = vmax.f32 %v5715, 0.0
    %v5780 = vmax.f32 %v5716, 0.0
    %v5781 = vmax.f32 %v5717, 0.0
    %v5782 = vmax.f32 %v5718, 0.0
    %v5783 = vmax.f32 %v5719, 0.0
    %v5784 = vmax.f32 %v5720, 0.0
    %v5785 = vmax.f32 %v5721, 0.0
    %v5786 = vmax.f32 %v5722, 0.0
    %v5787 = vmax.f32 %v5723, 0.0
    %v5788 = vmax.f32 %v5724, 0.0
    %v5789 = vmax.f32 %v5725, 0.0
    %v5790 = vmax.f32 %v5726, 0.0
    %v5791 = vmax.f32 %v5727, 0.0
    %v5792 = vmax.f32 %v5728, 0.0
    %v5793 = vmax.f32 %v5729, 0.0
    %v5794 = vmax.f32 %v5730, 0.0
    %v5795 = vmax.f32 %v5731, 0.0
    %v5796 = vmax.f32 %v5732, 0.0
    %v5797 = vmax.f32 %v5733, 0.0
    %v5798 = vmax.f32 %v5734, 0.0
    %v5799 = vmax.f32 %v5735, 0.0
    %v5800 = vmax.f32 %v5736, 0.0
    %v5801 = vmax.f32 %v5737, 0.0
    %v5802 = vmax.f32 %v5738, 0.0
    %v5803 = vmax.f32 %v5739, 0.0
    %v5804 = vmax.f32 %v5740, 0.0
    %v5805 = vmax.f32 %v5741, 0.0
    %v5806 = vmax.f32 %v5742, 0.0
    %v5807 = vmax.f32 %v5743, 0.0
    %v5808 = vmax.f32 %v5744, 0.0
    %v5809 = vmax.f32 %v5745, 0.0
    %v5810 = vmax.f32 %v5746, 0.0
    %v5811 = vmax.f32 %v5747, 0.0
    %v5812 = vmax.f32 %v5748, 0.0
    %v5813 = vmax.f32 %v5749, 0.0
    %v5814 = vmax.f32 %v5750, 0.0
    %v5815 = vmax.f32 %v5751, 0.0
    %v5816 = vmax.f32 %v5752, 0.0
    %v5817 = vmax.f32 %v5753, 0.0
    %v5818 = vmax.f32 %v5754, 0.0
    %v5819 = vmax.f32 %v5755, 0.0
    %v5820 = vmax.f32 %v5756, 0.0
    %v5821 = vmax.f32 %v5757, 0.0
    %v5822 = vmax.f32 %v5758, 0.0
    %v5823 = vmax.f32 %v5759, 0.0
    %v5824 = vmax.f32 %v5760, 0.0
    %v5825 = vmax.f32 %v5761, 0.0
    %v5826 = vmax.f32 %v5762, 0.0
    %v5827 = vmax.f32 %v5763, 0.0
    %v5828 = vmax.f32 %v5764, 0.0
    %v5829 = vmax.f32 %v5765, 0.0
    %v5830 = vmax.f32 %v5766, 0.0
    %v5831 = vmax.f32 %v5767, 0.0
    %v5832 = vmax.f32 %v5768, 0.0
    %v5833 = vmax.f32 %v5769, 0.0
    %v5834 = vmax.f32 %v5770, 0.0
    %v5835 = vmax.f32 %v5771, 0.0
    %v5836 = vmax.f32 %v5772, 0.0
    %v5837 = vmax.f32 %v5773, 0.0
    %v5838 = vmax.f32 %v5774, 0.0
    %v5839 = vmax.f32 %v5775, 0.0
    %v5840 = vmax.f32 %v5776, 0.0
    %5841 = vst.msk [vmem:[%s242 + $0x1] sm:$0xff] %vm68, %v5777
    %5842 = vst.msk [vmem:[%s242 + $0x9] sm:$0xff] %vm68, %v5778
    %5843 = vst.msk [vmem:[%s242 + $0x19] sm:$0xff] %vm68, %v5779
    %5844 = vst.msk [vmem:[%s242 + $0x21] sm:$0xff] %vm68, %v5780
    %5845 = vst.msk [vmem:[%s242 + $0x31] sm:$0xff] %vm68, %v5781
    %5846 = vst.msk [vmem:[%s242 + $0x39] sm:$0xff] %vm68, %v5782
    %5847 = vst.msk [vmem:[%s242 + $0x49] sm:$0xff] %vm68, %v5783
    %5848 = vst.msk [vmem:[%s242 + $0x51] sm:$0xff] %vm68, %v5784
    %5849 = vst.msk [vmem:[%s242 + $0x61] sm:$0xff] %vm68, %v5785
    %5850 = vst.msk [vmem:[%s242 + $0x69] sm:$0xff] %vm68, %v5786
    %5851 = vst.msk [vmem:[%s242 + $0x79] sm:$0xff] %vm68, %v5787
    %5852 = vst.msk [vmem:[%s242 + $0x81] sm:$0xff] %vm68, %v5788
    %5853 = vst.msk [vmem:[%s242 + $0x91] sm:$0xff] %vm68, %v5789
    %5854 = vst.msk [vmem:[%s242 + $0x99] sm:$0xff] %vm68, %v5790
    %5855 = vst.msk [vmem:[%s242 + $0xa9] sm:$0xff] %vm68, %v5791
    %5856 = vst.msk [vmem:[%s242 + $0xb1] sm:$0xff] %vm68, %v5792
    %5857 = vst.msk [vmem:[%s242 + $0xc1] sm:$0xff] %vm68, %v5793
    %5858 = vst.msk [vmem:[%s242 + $0xc9] sm:$0xff] %vm68, %v5794
    %5859 = vst.msk [vmem:[%s242 + $0xd9] sm:$0xff] %vm68, %v5795
    %5860 = vst.msk [vmem:[%s242 + $0xe1] sm:$0xff] %vm68, %v5796
    %5861 = vst.msk [vmem:[%s242 + $0xf1] sm:$0xff] %vm68, %v5797
    %5862 = vst.msk [vmem:[%s242 + $0xf9] sm:$0xff] %vm68, %v5798
    %5863 = vst.msk [vmem:[%s242 + $0x109] sm:$0xff] %vm68, %v5799
    %5864 = vst.msk [vmem:[%s242 + $0x111] sm:$0xff] %vm68, %v5800
    %5865 = vst.msk [vmem:[%s242 + $0x121] sm:$0xff] %vm68, %v5801
    %5866 = vst.msk [vmem:[%s242 + $0x129] sm:$0xff] %vm68, %v5802
    %5867 = vst.msk [vmem:[%s242 + $0x139] sm:$0xff] %vm68, %v5803
    %5868 = vst.msk [vmem:[%s242 + $0x141] sm:$0xff] %vm68, %v5804
    %5869 = vst.msk [vmem:[%s242 + $0x151] sm:$0xff] %vm68, %v5805
    %5870 = vst.msk [vmem:[%s242 + $0x159] sm:$0xff] %vm68, %v5806
    %5871 = vst.msk [vmem:[%s242 + $0x169] sm:$0xff] %vm68, %v5807
    %5872 = vst.msk [vmem:[%s242 + $0x171] sm:$0xff] %vm68, %v5808
    %5873 = vst.msk [vmem:[%s242 + $0x1b1] sm:$0xff] %vm68, %v5809
    %5874 = vst.msk [vmem:[%s242 + $0x1b9] sm:$0xff] %vm68, %v5810
    %5875 = vst.msk [vmem:[%s242 + $0x1c9] sm:$0xff] %vm68, %v5811
    %5876 = vst.msk [vmem:[%s242 + $0x1d1] sm:$0xff] %vm68, %v5812
    %5877 = vst.msk [vmem:[%s242 + $0x1e1] sm:$0xff] %vm68, %v5813
    %5878 = vst.msk [vmem:[%s242 + $0x1e9] sm:$0xff] %vm68, %v5814
    %5879 = vst.msk [vmem:[%s242 + $0x1f9] sm:$0xff] %vm68, %v5815
    %5880 = vst.msk [vmem:[%s242 + $0x201] sm:$0xff] %vm68, %v5816
    %5881 = vst.msk [vmem:[%s242 + $0x211] sm:$0xff] %vm68, %v5817
    %5882 = vst.msk [vmem:[%s242 + $0x219] sm:$0xff] %vm68, %v5818
    %5883 = vst.msk [vmem:[%s242 + $0x229] sm:$0xff] %vm68, %v5819
    %5884 = vst.msk [vmem:[%s242 + $0x231] sm:$0xff] %vm68, %v5820
    %5885 = vst.msk [vmem:[%s242 + $0x241] sm:$0xff] %vm68, %v5821
    %5886 = vst.msk [vmem:[%s242 + $0x249] sm:$0xff] %vm68, %v5822
    %5887 = vst.msk [vmem:[%s242 + $0x259] sm:$0xff] %vm68, %v5823
    %5888 = vst.msk [vmem:[%s242 + $0x261] sm:$0xff] %vm68, %v5824
    %5889 = vst.msk [vmem:[%s242 + $0x271] sm:$0xff] %vm68, %v5825
    %5890 = vst.msk [vmem:[%s242 + $0x279] sm:$0xff] %vm68, %v5826
    %5891 = vst.msk [vmem:[%s242 + $0x289] sm:$0xff] %vm68, %v5827
    %5892 = vst.msk [vmem:[%s242 + $0x291] sm:$0xff] %vm68, %v5828
    %5893 = vst.msk [vmem:[%s242 + $0x2a1] sm:$0xff] %vm68, %v5829
    %5894 = vst.msk [vmem:[%s242 + $0x2a9] sm:$0xff] %vm68, %v5830
    %5895 = vst.msk [vmem:[%s242 + $0x2b9] sm:$0xff] %vm68, %v5831
    %5896 = vst.msk [vmem:[%s242 + $0x2c1] sm:$0xff] %vm68, %v5832
    %5897 = vst.msk [vmem:[%s242 + $0x2d1] sm:$0xff] %vm68, %v5833
    %5898 = vst.msk [vmem:[%s242 + $0x2d9] sm:$0xff] %vm68, %v5834
    %5899 = vst.msk [vmem:[%s242 + $0x2e9] sm:$0xff] %vm68, %v5835
    %5900 = vst.msk [vmem:[%s242 + $0x2f1] sm:$0xff] %vm68, %v5836
    %5901 = vst.msk [vmem:[%s242 + $0x301] sm:$0xff] %vm68, %v5837
    %5902 = vst.msk [vmem:[%s242 + $0x309] sm:$0xff] %vm68, %v5838
    %5903 = vst.msk [vmem:[%s242 + $0x319] sm:$0xff] %vm68, %v5839
    %5904 = vst.msk [vmem:[%s242 + $0x321] sm:$0xff] %vm68, %v5840
    %v5905 = vld [vmem:[#allocation2] sm:$0xff]
    %v5906 = vld [vmem:[#allocation2 + $0x8] sm:$0xff]
    %v5907 = vld [vmem:[#allocation2 + $0x18] sm:$0xff]
    %v5908 = vld [vmem:[#allocation2 + $0x20] sm:$0xff]
    %v5909 = vld [vmem:[#allocation2 + $0x30] sm:$0xff]
    %v5910 = vld [vmem:[#allocation2 + $0x38] sm:$0xff]
    %v5911 = vld [vmem:[#allocation2 + $0x48] sm:$0xff]
    %v5912 = vld [vmem:[#allocation2 + $0x50] sm:$0xff]
    %v5913 = vld [vmem:[#allocation2 + $0x60] sm:$0xff]
    %v5914 = vld [vmem:[#allocation2 + $0x68] sm:$0xff]
    %v5915 = vld [vmem:[#allocation2 + $0x78] sm:$0xff]
    %v5916 = vld [vmem:[#allocation2 + $0x80] sm:$0xff]
    %v5917 = vld [vmem:[#allocation2 + $0x90] sm:$0xff]
    %v5918 = vld [vmem:[#allocation2 + $0x98] sm:$0xff]
    %v5919 = vld [vmem:[#allocation2 + $0xa8] sm:$0xff]
    %v5920 = vld [vmem:[#allocation2 + $0xb0] sm:$0xff]
    %v5921 = vld [vmem:[#allocation2 + $0xc0] sm:$0xff]
    %v5922 = vld [vmem:[#allocation2 + $0xc8] sm:$0xff]
    %v5923 = vld [vmem:[#allocation2 + $0xd8] sm:$0xff]
    %v5924 = vld [vmem:[#allocation2 + $0xe0] sm:$0xff]
    %v5925 = vld [vmem:[#allocation2 + $0xf0] sm:$0xff]
    %v5926 = vld [vmem:[#allocation2 + $0xf8] sm:$0xff]
    %v5927 = vld [vmem:[#allocation2 + $0x108] sm:$0xff]
    %v5928 = vld [vmem:[#allocation2 + $0x110] sm:$0xff]
    %v5929 = vld [vmem:[#allocation2 + $0x120] sm:$0xff]
    %v5930 = vld [vmem:[#allocation2 + $0x128] sm:$0xff]
    %v5931 = vld [vmem:[#allocation2 + $0x138] sm:$0xff]
    %v5932 = vld [vmem:[#allocation2 + $0x140] sm:$0xff]
    %v5933 = vld [vmem:[#allocation2 + $0x150] sm:$0xff]
    %v5934 = vld [vmem:[#allocation2 + $0x158] sm:$0xff]
    %v5935 = vld [vmem:[#allocation2 + $0x168] sm:$0xff]
    %v5936 = vld [vmem:[#allocation2 + $0x170] sm:$0xff]
    %v5937 = vld [vmem:[#allocation2 + $0x1b0] sm:$0xff]
    %v5938 = vld [vmem:[#allocation2 + $0x1b8] sm:$0xff]
    %v5939 = vld [vmem:[#allocation2 + $0x1c8] sm:$0xff]
    %v5940 = vld [vmem:[#allocation2 + $0x1d0] sm:$0xff]
    %v5941 = vld [vmem:[#allocation2 + $0x1e0] sm:$0xff]
    %v5942 = vld [vmem:[#allocation2 + $0x1e8] sm:$0xff]
    %v5943 = vld [vmem:[#allocation2 + $0x1f8] sm:$0xff]
    %v5944 = vld [vmem:[#allocation2 + $0x200] sm:$0xff]
    %v5945 = vld [vmem:[#allocation2 + $0x210] sm:$0xff]
    %v5946 = vld [vmem:[#allocation2 + $0x218] sm:$0xff]
    %v5947 = vld [vmem:[#allocation2 + $0x228] sm:$0xff]
    %v5948 = vld [vmem:[#allocation2 + $0x230] sm:$0xff]
    %v5949 = vld [vmem:[#allocation2 + $0x240] sm:$0xff]
    %v5950 = vld [vmem:[#allocation2 + $0x248] sm:$0xff]
    %v5951 = vld [vmem:[#allocation2 + $0x258] sm:$0xff]
    %v5952 = vld [vmem:[#allocation2 + $0x260] sm:$0xff]
    %v5953 = vld [vmem:[#allocation2 + $0x270] sm:$0xff]
    %v5954 = vld [vmem:[#allocation2 + $0x278] sm:$0xff]
    %v5955 = vld [vmem:[#allocation2 + $0x288] sm:$0xff]
    %v5956 = vld [vmem:[#allocation2 + $0x290] sm:$0xff]
    %v5957 = vld [vmem:[#allocation2 + $0x2a0] sm:$0xff]
    %v5958 = vld [vmem:[#allocation2 + $0x2a8] sm:$0xff]
    %v5959 = vld [vmem:[#allocation2 + $0x2b8] sm:$0xff]
    %v5960 = vld [vmem:[#allocation2 + $0x2c0] sm:$0xff]
    %v5961 = vld [vmem:[#allocation2 + $0x2d0] sm:$0xff]
    %v5962 = vld [vmem:[#allocation2 + $0x2d8] sm:$0xff]
    %v5963 = vld [vmem:[#allocation2 + $0x2e8] sm:$0xff]
    %v5964 = vld [vmem:[#allocation2 + $0x2f0] sm:$0xff]
    %v5965 = vld [vmem:[#allocation2 + $0x300] sm:$0xff]
    %v5966 = vld [vmem:[#allocation2 + $0x308] sm:$0xff]
    %v5967 = vld [vmem:[#allocation2 + $0x318] sm:$0xff]
    %v5968 = vld [vmem:[#allocation2 + $0x320] sm:$0xff]
    %v5969 = vpack.c.bf16 %v5906, %v5905
    %v5970 = vpack.c.bf16 %v5908, %v5907
    %v5971 = vpack.c.bf16 %v5910, %v5909
    %v5972 = vpack.c.bf16 %v5912, %v5911
    %v5973 = vpack.c.bf16 %v5914, %v5913
    %v5974 = vpack.c.bf16 %v5916, %v5915
    %v5975 = vpack.c.bf16 %v5918, %v5917
    %v5976 = vpack.c.bf16 %v5920, %v5919
    %v5977 = vpack.c.bf16 %v5922, %v5921
    %v5978 = vpack.c.bf16 %v5924, %v5923
    %v5979 = vpack.c.bf16 %v5926, %v5925
    %v5980 = vpack.c.bf16 %v5928, %v5927
    %v5981 = vpack.c.bf16 %v5930, %v5929
    %v5982 = vpack.c.bf16 %v5932, %v5931
    %v5983 = vpack.c.bf16 %v5934, %v5933
    %v5984 = vpack.c.bf16 %v5936, %v5935
    %v5985 = vpack.c.bf16 %v5938, %v5937
    %v5986 = vpack.c.bf16 %v5940, %v5939
    %v5987 = vpack.c.bf16 %v5942, %v5941
    %v5988 = vpack.c.bf16 %v5944, %v5943
    %v5989 = vpack.c.bf16 %v5946, %v5945
    %v5990 = vpack.c.bf16 %v5948, %v5947
    %v5991 = vpack.c.bf16 %v5950, %v5949
    %v5992 = vpack.c.bf16 %v5952, %v5951
    %v5993 = vpack.c.bf16 %v5954, %v5953
    %v5994 = vpack.c.bf16 %v5956, %v5955
    %v5995 = vpack.c.bf16 %v5958, %v5957
    %v5996 = vpack.c.bf16 %v5960, %v5959
    %v5997 = vpack.c.bf16 %v5962, %v5961
    %v5998 = vpack.c.bf16 %v5964, %v5963
    %v5999 = vpack.c.bf16 %v5966, %v5965
    %v6000 = vpack.c.bf16 %v5968, %v5967
    %v6001 = vld [vmem:[#allocation7] sm:$0xf]
    %v6002 = vld [vmem:[#allocation7 + $0x4] sm:$0xf]
    %v6003 = vld [vmem:[#allocation7 + $0x8] sm:$0xf]
    %v6004 = vld [vmem:[#allocation7 + $0xc] sm:$0xf]
    %v6005 = vld [vmem:[#allocation2 + $0x1] sm:$0xff]
    %v6006 = vld [vmem:[#allocation2 + $0x9] sm:$0xff]
    %v6007 = vld [vmem:[#allocation2 + $0x19] sm:$0xff]
    %v6008 = vld [vmem:[#allocation2 + $0x21] sm:$0xff]
    %v6009 = vld [vmem:[#allocation2 + $0x31] sm:$0xff]
    %v6010 = vld [vmem:[#allocation2 + $0x39] sm:$0xff]
    %v6011 = vld [vmem:[#allocation2 + $0x49] sm:$0xff]
    %v6012 = vld [vmem:[#allocation2 + $0x51] sm:$0xff]
    %v6013 = vld [vmem:[#allocation2 + $0x61] sm:$0xff]
    %v6014 = vld [vmem:[#allocation2 + $0x69] sm:$0xff]
    %v6015 = vld [vmem:[#allocation2 + $0x79] sm:$0xff]
    %v6016 = vld [vmem:[#allocation2 + $0x81] sm:$0xff]
    %v6017 = vld [vmem:[#allocation2 + $0x91] sm:$0xff]
    %v6018 = vld [vmem:[#allocation2 + $0x99] sm:$0xff]
    %v6019 = vld [vmem:[#allocation2 + $0xa9] sm:$0xff]
    %v6020 = vld [vmem:[#allocation2 + $0xb1] sm:$0xff]
    %v6021 = vld [vmem:[#allocation2 + $0xc1] sm:$0xff]
    %v6022 = vld [vmem:[#allocation2 + $0xc9] sm:$0xff]
    %v6023 = vld [vmem:[#allocation2 + $0xd9] sm:$0xff]
    %v6024 = vld [vmem:[#allocation2 + $0xe1] sm:$0xff]
    %v6025 = vld [vmem:[#allocation2 + $0xf1] sm:$0xff]
    %v6026 = vld [vmem:[#allocation2 + $0xf9] sm:$0xff]
    %v6027 = vld [vmem:[#allocation2 + $0x109] sm:$0xff]
    %v6028 = vld [vmem:[#allocation2 + $0x111] sm:$0xff]
    %v6029 = vld [vmem:[#allocation2 + $0x121] sm:$0xff]
    %v6030 = vld [vmem:[#allocation2 + $0x129] sm:$0xff]
    %v6031 = vld [vmem:[#allocation2 + $0x139] sm:$0xff]
    %v6032 = vld [vmem:[#allocation2 + $0x141] sm:$0xff]
    %v6033 = vld [vmem:[#allocation2 + $0x151] sm:$0xff]
    %v6034 = vld [vmem:[#allocation2 + $0x159] sm:$0xff]
    %v6035 = vld [vmem:[#allocation2 + $0x169] sm:$0xff]
    %v6036 = vld [vmem:[#allocation2 + $0x171] sm:$0xff]
    %v6037 = vld [vmem:[#allocation2 + $0x1b1] sm:$0xff]
    %v6038 = vld [vmem:[#allocation2 + $0x1b9] sm:$0xff]
    %v6039 = vld [vmem:[#allocation2 + $0x1c9] sm:$0xff]
    %v6040 = vld [vmem:[#allocation2 + $0x1d1] sm:$0xff]
    %v6041 = vld [vmem:[#allocation2 + $0x1e1] sm:$0xff]
    %v6042 = vld [vmem:[#allocation2 + $0x1e9] sm:$0xff]
    %v6043 = vld [vmem:[#allocation2 + $0x1f9] sm:$0xff]
    %v6044 = vld [vmem:[#allocation2 + $0x201] sm:$0xff]
    %v6045 = vld [vmem:[#allocation2 + $0x211] sm:$0xff]
    %v6046 = vld [vmem:[#allocation2 + $0x219] sm:$0xff]
    %v6047 = vld [vmem:[#allocation2 + $0x229] sm:$0xff]
    %v6048 = vld [vmem:[#allocation2 + $0x231] sm:$0xff]
    %v6049 = vld [vmem:[#allocation2 + $0x241] sm:$0xff]
    %v6050 = vld [vmem:[#allocation2 + $0x249] sm:$0xff]
    %v6051 = vld [vmem:[#allocation2 + $0x259] sm:$0xff]
    %v6052 = vld [vmem:[#allocation2 + $0x261] sm:$0xff]
    %v6053 = vld [vmem:[#allocation2 + $0x271] sm:$0xff]
    %v6054 = vld [vmem:[#allocation2 + $0x279] sm:$0xff]
    %v6055 = vld [vmem:[#allocation2 + $0x289] sm:$0xff]
    %v6056 = vld [vmem:[#allocation2 + $0x291] sm:$0xff]
    %v6057 = vld [vmem:[#allocation2 + $0x2a1] sm:$0xff]
    %v6058 = vld [vmem:[#allocation2 + $0x2a9] sm:$0xff]
    %v6059 = vld [vmem:[#allocation2 + $0x2b9] sm:$0xff]
    %v6060 = vld [vmem:[#allocation2 + $0x2c1] sm:$0xff]
    %v6061 = vld [vmem:[#allocation2 + $0x2d1] sm:$0xff]
    %v6062 = vld [vmem:[#allocation2 + $0x2d9] sm:$0xff]
    %v6063 = vld [vmem:[#allocation2 + $0x2e9] sm:$0xff]
    %v6064 = vld [vmem:[#allocation2 + $0x2f1] sm:$0xff]
    %v6065 = vld [vmem:[#allocation2 + $0x301] sm:$0xff]
    %v6066 = vld [vmem:[#allocation2 + $0x309] sm:$0xff]
    %v6067 = vld [vmem:[#allocation2 + $0x319] sm:$0xff]
    %v6068 = vld [vmem:[#allocation2 + $0x321] sm:$0xff]
    %v6069 = vpack.c.bf16 %v6006, %v6005
    %v6070 = vpack.c.bf16 %v6008, %v6007
    %v6071 = vpack.c.bf16 %v6010, %v6009
    %v6072 = vpack.c.bf16 %v6012, %v6011
    %v6073 = vpack.c.bf16 %v6014, %v6013
    %v6074 = vpack.c.bf16 %v6016, %v6015
    %v6075 = vpack.c.bf16 %v6018, %v6017
    %v6076 = vpack.c.bf16 %v6020, %v6019
    %v6077 = vpack.c.bf16 %v6022, %v6021
    %v6078 = vpack.c.bf16 %v6024, %v6023
    %v6079 = vpack.c.bf16 %v6026, %v6025
    %v6080 = vpack.c.bf16 %v6028, %v6027
    %v6081 = vpack.c.bf16 %v6030, %v6029
    %v6082 = vpack.c.bf16 %v6032, %v6031
    %v6083 = vpack.c.bf16 %v6034, %v6033
    %v6084 = vpack.c.bf16 %v6036, %v6035
    %v6085 = vpack.c.bf16 %v6038, %v6037
    %v6086 = vpack.c.bf16 %v6040, %v6039
    %v6087 = vpack.c.bf16 %v6042, %v6041
    %v6088 = vpack.c.bf16 %v6044, %v6043
    %v6089 = vpack.c.bf16 %v6046, %v6045
    %v6090 = vpack.c.bf16 %v6048, %v6047
    %v6091 = vpack.c.bf16 %v6050, %v6049
    %v6092 = vpack.c.bf16 %v6052, %v6051
    %v6093 = vpack.c.bf16 %v6054, %v6053
    %v6094 = vpack.c.bf16 %v6056, %v6055
    %v6095 = vpack.c.bf16 %v6058, %v6057
    %v6096 = vpack.c.bf16 %v6060, %v6059
    %v6097 = vpack.c.bf16 %v6062, %v6061
    %v6098 = vpack.c.bf16 %v6064, %v6063
    %v6099 = vpack.c.bf16 %v6066, %v6065
    %v6100 = vpack.c.bf16 %v6068, %v6067
    %s6101 = scalar_lea.vmem [#allocation7], 16
    %v6102 = vld [vmem:[%s6101] sm:$0xf]
    %v6103 = vld [vmem:[%s6101 + $0x4] sm:$0xf]
    %v6104 = vld [vmem:[%s6101 + $0x8] sm:$0xf]
    %v6105 = vld [vmem:[%s6101 + $0xc] sm:$0xf]
    %v6110 = vunpack.c.l.b16 %v6102
    %v6111 = vunpack.c.l.b16 %v6103
    %v6112 = vunpack.c.l.b16 %v6104
    %v6113 = vunpack.c.l.b16 %v6105
    %v6114 = vpack.c.b16 %v6111, %v6110
    %v6115 = vpack.c.b16 %v6113, %v6112
    %v6119 = vsel %vm68, %v6069, 0
    %v6122 = vsel %vm68, %v6070, 0
    %v6125 = vsel %vm68, %v6071, 0
    %v6128 = vsel %vm68, %v6072, 0
    %v6131 = vsel %vm68, %v6073, 0
    %v6134 = vsel %vm68, %v6074, 0
    %v6137 = vsel %vm68, %v6075, 0
    %v6140 = vsel %vm68, %v6076, 0
    %v6143 = vsel %vm68, %v6077, 0
    %v6146 = vsel %vm68, %v6078, 0
    %v6149 = vsel %vm68, %v6079, 0
    %v6152 = vsel %vm68, %v6080, 0
    %v6155 = vsel %vm68, %v6081, 0
    %v6158 = vsel %vm68, %v6082, 0
    %v6161 = vsel %vm68, %v6083, 0
    %v6164 = vsel %vm68, %v6084, 0
    %v6167 = vsel %vm68, %v6085, 0
    %v6170 = vsel %vm68, %v6086, 0
    %v6173 = vsel %vm68, %v6087, 0
    %v6176 = vsel %vm68, %v6088, 0
    %v6179 = vsel %vm68, %v6089, 0
    %v6182 = vsel %vm68, %v6090, 0
    %v6185 = vsel %vm68, %v6091, 0
    %v6188 = vsel %vm68, %v6092, 0
    %v6191 = vsel %vm68, %v6093, 0
    %v6194 = vsel %vm68, %v6094, 0
    %v6197 = vsel %vm68, %v6095, 0
    %v6200 = vsel %vm68, %v6096, 0
    %v6203 = vsel %vm68, %v6097, 0
    %v6206 = vsel %vm68, %v6098, 0
    %v6209 = vsel %vm68, %v6099, 0
    %v6212 = vsel %vm68, %v6100, 0
    %6214 = vmatprep.subr.bf16.mxu0 0
    %6215 = vmatpush1.bf16.msra.mxu0 %v6114
    %6216 = vmatprep.subr.bf16.mxu0 0
    %6217 = vmatpush1.bf16.msra.mxu0 %v6115
    %6218 = vmatprep.subr.bf16.mxu0 0
    %6219 = vmatpush1.bf16.msra.mxu0 0
    %6220 = vmatprep.subr.bf16.mxu0 0
    %6221 = vmatpush1.bf16.msra.mxu0 0
    %6222 = vmatprep.subr.bf16.mxu0 0
    %6223 = vmatpush1.bf16.msra.mxu0 0
    %6224 = vmatprep.subr.bf16.mxu0 0
    %6225 = vmatpush1.bf16.msra.mxu0 0
    %6226 = vmatprep.subr.bf16.mxu0 0
    %6227 = vmatpush1.bf16.msra.mxu0 0
    %6228 = vmatprep.subr.bf16.mxu0 0
    %6229 = vmatpush1.bf16.msra.mxu0 0
    %6230 = vmatprep.subr.bf16.mxu0 0
    %6231 = vmatpush1.bf16.msra.mxu0 0
    %6232 = vmatprep.subr.bf16.mxu0 0
    %6233 = vmatpush1.bf16.msra.mxu0 0
    %6234 = vmatprep.subr.bf16.mxu0 0
    %6235 = vmatpush1.bf16.msra.mxu0 0
    %6236 = vmatprep.subr.bf16.mxu0 0
    %6237 = vmatpush1.bf16.msra.mxu0 0
    %6238 = vmatprep.subr.bf16.mxu0 0
    %6239 = vmatpush1.bf16.msra.mxu0 0
    %6240 = vmatprep.subr.bf16.mxu0 0
    %6241 = vmatpush1.bf16.msra.mxu0 0
    %6242 = vmatprep.subr.bf16.mxu0 0
    %6243 = vmatpush1.bf16.msra.mxu0 0
    %6244 = vmatprep.subr.bf16.mxu0 0
    %6245 = vmatpush1.bf16.msra.mxu0 0
    %6246 = vmatprep.mubr.bf16.mxu0 0
    %6247 = vmatmul.mubr.bf16.gmra.mrb[0].mxu0 %v6119
    %v6248 = vpop.f32.mrb[0].mxu0
    %v6249 = vadd.f32 0.0, %v6248
    %v6250 = vpop.f32.mrb[0].mxu0
    %v6251 = vpop.f32.mrb[0].mxu0
    %v6252 = vadd.f32 0.0, %v6251
    %v6253 = vpop.f32.mrb[0].mxu0
    %6254 = vmatprep.mubr.bf16.mxu0 0
    %6255 = vmatmul.mubr.bf16.gmra.mrb[0].mxu0 %v6122
    %v6256 = vpop.f32.mrb[0].mxu0
    %v6257 = vadd.f32 0.0, %v6256
    %v6258 = vpop.f32.mrb[0].mxu0
    %v6259 = vpop.f32.mrb[0].mxu0
    %v6260 = vadd.f32 0.0, %v6259
    %v6261 = vpop.f32.mrb[0].mxu0
    %6262 = vmatprep.mubr.bf16.mxu0 0
    %6263 = vmatmul.mubr.bf16.gmra.mrb[0].mxu0 %v6125
    %v6264 = vpop.f32.mrb[0].mxu0
    %v6265 = vadd.f32 0.0, %v6264
    %v6266 = vpop.f32.mrb[0].mxu0
    %v6267 = vpop.f32.mrb[0].mxu0
    %v6268 = vadd.f32 0.0, %v6267
    %v6269 = vpop.f32.mrb[0].mxu0
    %6270 = vmatprep.mubr.bf16.mxu0 0
    %6271 = vmatmul.mubr.bf16.gmra.mrb[0].mxu0 %v6128
    %v6272 = vpop.f32.mrb[0].mxu0
    %v6273 = vadd.f32 0.0, %v6272
    %v6274 = vpop.f32.mrb[0].mxu0
    %v6275 = vpop.f32.mrb[0].mxu0
    %v6276 = vadd.f32 0.0, %v6275
    %v6277 = vpop.f32.mrb[0].mxu0
    %6278 = vmatprep.mubr.bf16.mxu0 0
    %6279 = vmatmul.mubr.bf16.gmra.mrb[0].mxu0 %v6131
    %v6280 = vpop.f32.mrb[0].mxu0
    %v6281 = vadd.f32 0.0, %v6280
    %v6282 = vpop.f32.mrb[0].mxu0
    %v6283 = vpop.f32.mrb[0].mxu0
    %v6284 = vadd.f32 0.0, %v6283
    %v6285 = vpop.f32.mrb[0].mxu0
    %6286 = vmatprep.mubr.bf16.mxu0 0
    %6287 = vmatmul.mubr.bf16.gmra.mrb[0].mxu0 %v6134
    %v6288 = vpop.f32.mrb[0].mxu0
    %v6289 = vadd.f32 0.0, %v6288
    %v6290 = vpop.f32.mrb[0].mxu0
    %v6291 = vpop.f32.mrb[0].mxu0
    %v6292 = vadd.f32 0.0, %v6291
    %v6293 = vpop.f32.mrb[0].mxu0
    %6294 = vmatprep.mubr.bf16.mxu0 0
    %6295 = vmatmul.mubr.bf16.gmra.mrb[0].mxu0 %v6137
    %v6296 = vpop.f32.mrb[0].mxu0
    %v6297 = vadd.f32 0.0, %v6296
    %v6298 = vpop.f32.mrb[0].mxu0
    %v6299 = vpop.f32.mrb[0].mxu0
    %v6300 = vadd.f32 0.0, %v6299
    %v6301 = vpop.f32.mrb[0].mxu0
    %6302 = vmatprep.mubr.bf16.mxu0 0
    %6303 = vmatmul.mubr.bf16.gmra.mrb[0].mxu0 %v6140
    %v6304 = vpop.f32.mrb[0].mxu0
    %v6305 = vadd.f32 0.0, %v6304
    %v6306 = vpop.f32.mrb[0].mxu0
    %v6307 = vpop.f32.mrb[0].mxu0
    %v6308 = vadd.f32 0.0, %v6307
    %v6309 = vpop.f32.mrb[0].mxu0
    %6310 = vmatprep.mubr.bf16.mxu0 0
    %6311 = vmatmul.mubr.bf16.gmra.mrb[0].mxu0 %v6143
    %v6312 = vpop.f32.mrb[0].mxu0
    %v6313 = vadd.f32 0.0, %v6312
    %v6314 = vpop.f32.mrb[0].mxu0
    %v6315 = vpop.f32.mrb[0].mxu0
    %v6316 = vadd.f32 0.0, %v6315
    %v6317 = vpop.f32.mrb[0].mxu0
    %6318 = vmatprep.mubr.bf16.mxu0 0
    %6319 = vmatmul.mubr.bf16.gmra.mrb[0].mxu0 %v6146
    %v6320 = vpop.f32.mrb[0].mxu0
    %v6321 = vadd.f32 0.0, %v6320
    %v6322 = vpop.f32.mrb[0].mxu0
    %v6323 = vpop.f32.mrb[0].mxu0
    %v6324 = vadd.f32 0.0, %v6323
    %v6325 = vpop.f32.mrb[0].mxu0
    %6326 = vmatprep.mubr.bf16.mxu0 0
    %6327 = vmatmul.mubr.bf16.gmra.mrb[0].mxu0 %v6149
    %v6328 = vpop.f32.mrb[0].mxu0
    %v6329 = vadd.f32 0.0, %v6328
    %v6330 = vpop.f32.mrb[0].mxu0
    %v6331 = vpop.f32.mrb[0].mxu0
    %v6332 = vadd.f32 0.0, %v6331
    %v6333 = vpop.f32.mrb[0].mxu0
    %6334 = vmatprep.mubr.bf16.mxu0 0
    %6335 = vmatmul.mubr.bf16.gmra.mrb[0].mxu0 %v6152
    %v6336 = vpop.f32.mrb[0].mxu0
    %v6337 = vadd.f32 0.0, %v6336
    %v6338 = vpop.f32.mrb[0].mxu0
    %v6339 = vpop.f32.mrb[0].mxu0
    %v6340 = vadd.f32 0.0, %v6339
    %v6341 = vpop.f32.mrb[0].mxu0
    %6342 = vmatprep.mubr.bf16.mxu0 0
    %6343 = vmatmul.mubr.bf16.gmra.mrb[0].mxu0 %v6155
    %v6344 = vpop.f32.mrb[0].mxu0
    %v6345 = vadd.f32 0.0, %v6344
    %v6346 = vpop.f32.mrb[0].mxu0
    %v6347 = vpop.f32.mrb[0].mxu0
    %v6348 = vadd.f32 0.0, %v6347
    %v6349 = vpop.f32.mrb[0].mxu0
    %6350 = vmatprep.mubr.bf16.mxu0 0
    %6351 = vmatmul.mubr.bf16.gmra.mrb[0].mxu0 %v6158
    %v6352 = vpop.f32.mrb[0].mxu0
    %v6353 = vadd.f32 0.0, %v6352
    %v6354 = vpop.f32.mrb[0].mxu0
    %v6355 = vpop.f32.mrb[0].mxu0
    %v6356 = vadd.f32 0.0, %v6355
    %v6357 = vpop.f32.mrb[0].mxu0
    %6358 = vmatprep.mubr.bf16.mxu0 0
    %6359 = vmatmul.mubr.bf16.gmra.mrb[0].mxu0 %v6161
    %v6360 = vpop.f32.mrb[0].mxu0
    %v6361 = vadd.f32 0.0, %v6360
    %v6362 = vpop.f32.mrb[0].mxu0
    %v6363 = vpop.f32.mrb[0].mxu0
    %v6364 = vadd.f32 0.0, %v6363
    %v6365 = vpop.f32.mrb[0].mxu0
    %6366 = vmatprep.mubr.bf16.mxu0 0
    %6367 = vmatmul.mubr.bf16.gmra.mrb[0].mxu0 %v6164
    %v6368 = vpop.f32.mrb[0].mxu0
    %v6369 = vadd.f32 0.0, %v6368
    %v6370 = vpop.f32.mrb[0].mxu0
    %v6371 = vpop.f32.mrb[0].mxu0
    %v6372 = vadd.f32 0.0, %v6371
    %v6373 = vpop.f32.mrb[0].mxu0
    %6374 = vmatprep.mubr.bf16.mxu0 0
    %6375 = vmatmul.mubr.bf16.gmra.mrb[0].mxu0 %v6167
    %v6376 = vpop.f32.mrb[0].mxu0
    %v6377 = vadd.f32 0.0, %v6376
    %v6378 = vpop.f32.mrb[0].mxu0
    %v6379 = vpop.f32.mrb[0].mxu0
    %v6380 = vadd.f32 0.0, %v6379
    %v6381 = vpop.f32.mrb[0].mxu0
    %6382 = vmatprep.mubr.bf16.mxu0 0
    %6383 = vmatmul.mubr.bf16.gmra.mrb[0].mxu0 %v6170
    %v6384 = vpop.f32.mrb[0].mxu0
    %v6385 = vadd.f32 0.0, %v6384
    %v6386 = vpop.f32.mrb[0].mxu0
    %v6387 = vpop.f32.mrb[0].mxu0
    %v6388 = vadd.f32 0.0, %v6387
    %v6389 = vpop.f32.mrb[0].mxu0
    %6390 = vmatprep.mubr.bf16.mxu0 0
    %6391 = vmatmul.mubr.bf16.gmra.mrb[0].mxu0 %v6173
    %v6392 = vpop.f32.mrb[0].mxu0
    %v6393 = vadd.f32 0.0, %v6392
    %v6394 = vpop.f32.mrb[0].mxu0
    %v6395 = vpop.f32.mrb[0].mxu0
    %v6396 = vadd.f32 0.0, %v6395
    %v6397 = vpop.f32.mrb[0].mxu0
    %6398 = vmatprep.mubr.bf16.mxu0 0
    %6399 = vmatmul.mubr.bf16.gmra.mrb[0].mxu0 %v6176
    %v6400 = vpop.f32.mrb[0].mxu0
    %v6401 = vadd.f32 0.0, %v6400
    %v6402 = vpop.f32.mrb[0].mxu0
    %v6403 = vpop.f32.mrb[0].mxu0
    %v6404 = vadd.f32 0.0, %v6403
    %v6405 = vpop.f32.mrb[0].mxu0
    %6406 = vmatprep.mubr.bf16.mxu0 0
    %6407 = vmatmul.mubr.bf16.gmra.mrb[0].mxu0 %v6179
    %v6408 = vpop.f32.mrb[0].mxu0
    %v6409 = vadd.f32 0.0, %v6408
    %v6410 = vpop.f32.mrb[0].mxu0
    %v6411 = vpop.f32.mrb[0].mxu0
    %v6412 = vadd.f32 0.0, %v6411
    %v6413 = vpop.f32.mrb[0].mxu0
    %6414 = vmatprep.mubr.bf16.mxu0 0
    %6415 = vmatmul.mubr.bf16.gmra.mrb[0].mxu0 %v6182
    %v6416 = vpop.f32.mrb[0].mxu0
    %v6417 = vadd.f32 0.0, %v6416
    %v6418 = vpop.f32.mrb[0].mxu0
    %v6419 = vpop.f32.mrb[0].mxu0
    %v6420 = vadd.f32 0.0, %v6419
    %v6421 = vpop.f32.mrb[0].mxu0
    %6422 = vmatprep.mubr.bf16.mxu0 0
    %6423 = vmatmul.mubr.bf16.gmra.mrb[0].mxu0 %v6185
    %v6424 = vpop.f32.mrb[0].mxu0
    %v6425 = vadd.f32 0.0, %v6424
    %v6426 = vpop.f32.mrb[0].mxu0
    %v6427 = vpop.f32.mrb[0].mxu0
    %v6428 = vadd.f32 0.0, %v6427
    %v6429 = vpop.f32.mrb[0].mxu0
    %6430 = vmatprep.mubr.bf16.mxu0 0
    %6431 = vmatmul.mubr.bf16.gmra.mrb[0].mxu0 %v6188
    %v6432 = vpop.f32.mrb[0].mxu0
    %v6433 = vadd.f32 0.0, %v6432
    %v6434 = vpop.f32.mrb[0].mxu0
    %v6435 = vpop.f32.mrb[0].mxu0
    %v6436 = vadd.f32 0.0, %v6435
    %v6437 = vpop.f32.mrb[0].mxu0
    %6438 = vmatprep.mubr.bf16.mxu0 0
    %6439 = vmatmul.mubr.bf16.gmra.mrb[0].mxu0 %v6191
    %v6440 = vpop.f32.mrb[0].mxu0
    %v6441 = vadd.f32 0.0, %v6440
    %v6442 = vpop.f32.mrb[0].mxu0
    %v6443 = vpop.f32.mrb[0].mxu0
    %v6444 = vadd.f32 0.0, %v6443
    %v6445 = vpop.f32.mrb[0].mxu0
    %6446 = vmatprep.mubr.bf16.mxu0 0
    %6447 = vmatmul.mubr.bf16.gmra.mrb[0].mxu0 %v6194
    %v6448 = vpop.f32.mrb[0].mxu0
    %v6449 = vadd.f32 0.0, %v6448
    %v6450 = vpop.f32.mrb[0].mxu0
    %v6451 = vpop.f32.mrb[0].mxu0
    %v6452 = vadd.f32 0.0, %v6451
    %v6453 = vpop.f32.mrb[0].mxu0
    %6454 = vmatprep.mubr.bf16.mxu0 0
    %6455 = vmatmul.mubr.bf16.gmra.mrb[0].mxu0 %v6197
    %v6456 = vpop.f32.mrb[0].mxu0
    %v6457 = vadd.f32 0.0, %v6456
    %v6458 = vpop.f32.mrb[0].mxu0
    %v6459 = vpop.f32.mrb[0].mxu0
    %v6460 = vadd.f32 0.0, %v6459
    %v6461 = vpop.f32.mrb[0].mxu0
    %6462 = vmatprep.mubr.bf16.mxu0 0
    %6463 = vmatmul.mubr.bf16.gmra.mrb[0].mxu0 %v6200
    %v6464 = vpop.f32.mrb[0].mxu0
    %v6465 = vadd.f32 0.0, %v6464
    %v6466 = vpop.f32.mrb[0].mxu0
    %v6467 = vpop.f32.mrb[0].mxu0
    %v6468 = vadd.f32 0.0, %v6467
    %v6469 = vpop.f32.mrb[0].mxu0
    %6470 = vmatprep.mubr.bf16.mxu0 0
    %6471 = vmatmul.mubr.bf16.gmra.mrb[0].mxu0 %v6203
    %v6472 = vpop.f32.mrb[0].mxu0
    %v6473 = vadd.f32 0.0, %v6472
    %v6474 = vpop.f32.mrb[0].mxu0
    %v6475 = vpop.f32.mrb[0].mxu0
    %v6476 = vadd.f32 0.0, %v6475
    %v6477 = vpop.f32.mrb[0].mxu0
    %6478 = vmatprep.mubr.bf16.mxu0 0
    %6479 = vmatmul.mubr.bf16.gmra.mrb[0].mxu0 %v6206
    %v6480 = vpop.f32.mrb[0].mxu0
    %v6481 = vadd.f32 0.0, %v6480
    %v6482 = vpop.f32.mrb[0].mxu0
    %v6483 = vpop.f32.mrb[0].mxu0
    %v6484 = vadd.f32 0.0, %v6483
    %v6485 = vpop.f32.mrb[0].mxu0
    %6486 = vmatprep.mubr.bf16.mxu0 0
    %6487 = vmatmul.mubr.bf16.gmra.mrb[0].mxu0 %v6209
    %v6488 = vpop.f32.mrb[0].mxu0
    %v6489 = vadd.f32 0.0, %v6488
    %v6490 = vpop.f32.mrb[0].mxu0
    %v6491 = vpop.f32.mrb[0].mxu0
    %v6492 = vadd.f32 0.0, %v6491
    %v6493 = vpop.f32.mrb[0].mxu0
    %6494 = vmatprep.mubr.bf16.mxu0 0
    %6495 = vmatmul.mubr.bf16.gmra.mrb[0].mxu0 %v6212
    %v6496 = vpop.f32.mrb[0].mxu0
    %v6497 = vadd.f32 0.0, %v6496
    %v6498 = vpop.f32.mrb[0].mxu0
    %v6499 = vpop.f32.mrb[0].mxu0
    %v6500 = vadd.f32 0.0, %v6499
    %v6501 = vpop.f32.mrb[0].mxu0
    %6502 = vdwg.mxu0
    %v6507 = vunpack.c.l.b16 %v6001
    %v6508 = vunpack.c.l.b16 %v6002
    %v6509 = vunpack.c.l.b16 %v6003
    %v6510 = vunpack.c.l.b16 %v6004
    %v6511 = vpack.c.b16 %v6508, %v6507
    %v6512 = vpack.c.b16 %v6510, %v6509
    %v6516 = vsel %vm68, %v5969, 0
    %v6519 = vsel %vm68, %v5970, 0
    %v6522 = vsel %vm68, %v5971, 0
    %v6525 = vsel %vm68, %v5972, 0
    %v6528 = vsel %vm68, %v5973, 0
    %v6531 = vsel %vm68, %v5974, 0
    %v6534 = vsel %vm68, %v5975, 0
    %v6537 = vsel %vm68, %v5976, 0
    %v6540 = vsel %vm68, %v5977, 0
    %v6543 = vsel %vm68, %v5978, 0
    %v6546 = vsel %vm68, %v5979, 0
    %v6549 = vsel %vm68, %v5980, 0
    %v6552 = vsel %vm68, %v5981, 0
    %v6555 = vsel %vm68, %v5982, 0
    %v6558 = vsel %vm68, %v5983, 0
    %v6561 = vsel %vm68, %v5984, 0
    %v6564 = vsel %vm68, %v5985, 0
    %v6567 = vsel %vm68, %v5986, 0
    %v6570 = vsel %vm68, %v5987, 0
    %v6573 = vsel %vm68, %v5988, 0
    %v6576 = vsel %vm68, %v5989, 0
    %v6579 = vsel %vm68, %v5990, 0
    %v6582 = vsel %vm68, %v5991, 0
    %v6585 = vsel %vm68, %v5992, 0
    %v6588 = vsel %vm68, %v5993, 0
    %v6591 = vsel %vm68, %v5994, 0
    %v6594 = vsel %vm68, %v5995, 0
    %v6597 = vsel %vm68, %v5996, 0
    %v6600 = vsel %vm68, %v5997, 0
    %v6603 = vsel %vm68, %v5998, 0
    %v6606 = vsel %vm68, %v5999, 0
    %v6609 = vsel %vm68, %v6000, 0
    %6611 = vmatprep.subr.bf16.mxu0 0
    %6612 = vmatpush1.bf16.msra.mxu0 %v6511
    %6613 = vmatprep.subr.bf16.mxu0 0
    %6614 = vmatpush1.bf16.msra.mxu0 %v6512
    %6615 = vmatprep.subr.bf16.mxu0 0
    %6616 = vmatpush1.bf16.msra.mxu0 0
    %6617 = vmatprep.subr.bf16.mxu0 0
    %6618 = vmatpush1.bf16.msra.mxu0 0
    %6619 = vmatprep.subr.bf16.mxu0 0
    %6620 = vmatpush1.bf16.msra.mxu0 0
    %6621 = vmatprep.subr.bf16.mxu0 0
    %6622 = vmatpush1.bf16.msra.mxu0 0
    %6623 = vmatprep.subr.bf16.mxu0 0
    %6624 = vmatpush1.bf16.msra.mxu0 0
    %6625 = vmatprep.subr.bf16.mxu0 0
    %6626 = vmatpush1.bf16.msra.mxu0 0
    %6627 = vmatprep.subr.bf16.mxu0 0
    %6628 = vmatpush1.bf16.msra.mxu0 0
    %6629 = vmatprep.subr.bf16.mxu0 0
    %6630 = vmatpush1.bf16.msra.mxu0 0
    %6631 = vmatprep.subr.bf16.mxu0 0
    %6632 = vmatpush1.bf16.msra.mxu0 0
    %6633 = vmatprep.subr.bf16.mxu0 0
    %6634 = vmatpush1.bf16.msra.mxu0 0
    %6635 = vmatprep.subr.bf16.mxu0 0
    %6636 = vmatpush1.bf16.msra.mxu0 0
    %6637 = vmatprep.subr.bf16.mxu0 0
    %6638 = vmatpush1.bf16.msra.mxu0 0
    %6639 = vmatprep.subr.bf16.mxu0 0
    %6640 = vmatpush1.bf16.msra.mxu0 0
    %6641 = vmatprep.subr.bf16.mxu0 0
    %6642 = vmatpush1.bf16.msra.mxu0 0
    %6643 = vmatprep.mubr.bf16.mxu0 0
    %6644 = vmatmul.mubr.bf16.gmra.mrb[0].mxu0 %v6516
    %v6645 = vpop.f32.mrb[0].mxu0
    %v6646 = vadd.f32 %v6249, %v6645
    %v6647 = vpop.f32.mrb[0].mxu0
    %v6648 = vpop.f32.mrb[0].mxu0
    %v6649 = vadd.f32 %v6252, %v6648
    %v6650 = vpop.f32.mrb[0].mxu0
    %6651 = vmatprep.mubr.bf16.mxu0 0
    %6652 = vmatmul.mubr.bf16.gmra.mrb[0].mxu0 %v6519
    %v6653 = vpop.f32.mrb[0].mxu0
    %v6654 = vadd.f32 %v6257, %v6653
    %v6655 = vpop.f32.mrb[0].mxu0
    %v6656 = vpop.f32.mrb[0].mxu0
    %v6657 = vadd.f32 %v6260, %v6656
    %v6658 = vpop.f32.mrb[0].mxu0
    %6659 = vmatprep.mubr.bf16.mxu0 0
    %6660 = vmatmul.mubr.bf16.gmra.mrb[0].mxu0 %v6522
    %v6661 = vpop.f32.mrb[0].mxu0
    %v6662 = vadd.f32 %v6265, %v6661
    %v6663 = vpop.f32.mrb[0].mxu0
    %v6664 = vpop.f32.mrb[0].mxu0
    %v6665 = vadd.f32 %v6268, %v6664
    %v6666 = vpop.f32.mrb[0].mxu0
    %6667 = vmatprep.mubr.bf16.mxu0 0
    %6668 = vmatmul.mubr.bf16.gmra.mrb[0].mxu0 %v6525
    %v6669 = vpop.f32.mrb[0].mxu0
    %v6670 = vadd.f32 %v6273, %v6669
    %v6671 = vpop.f32.mrb[0].mxu0
    %v6672 = vpop.f32.mrb[0].mxu0
    %v6673 = vadd.f32 %v6276, %v6672
    %v6674 = vpop.f32.mrb[0].mxu0
    %6675 = vmatprep.mubr.bf16.mxu0 0
    %6676 = vmatmul.mubr.bf16.gmra.mrb[0].mxu0 %v6528
    %v6677 = vpop.f32.mrb[0].mxu0
    %v6678 = vadd.f32 %v6281, %v6677
    %v6679 = vpop.f32.mrb[0].mxu0
    %v6680 = vpop.f32.mrb[0].mxu0
    %v6681 = vadd.f32 %v6284, %v6680
    %v6682 = vpop.f32.mrb[0].mxu0
    %6683 = vmatprep.mubr.bf16.mxu0 0
    %6684 = vmatmul.mubr.bf16.gmra.mrb[0].mxu0 %v6531
    %v6685 = vpop.f32.mrb[0].mxu0
    %v6686 = vadd.f32 %v6289, %v6685
    %v6687 = vpop.f32.mrb[0].mxu0
    %v6688 = vpop.f32.mrb[0].mxu0
    %v6689 = vadd.f32 %v6292, %v6688
    %v6690 = vpop.f32.mrb[0].mxu0
    %6691 = vmatprep.mubr.bf16.mxu0 0
    %6692 = vmatmul.mubr.bf16.gmra.mrb[0].mxu0 %v6534
    %v6693 = vpop.f32.mrb[0].mxu0
    %v6694 = vadd.f32 %v6297, %v6693
    %v6695 = vpop.f32.mrb[0].mxu0
    %v6696 = vpop.f32.mrb[0].mxu0
    %v6697 = vadd.f32 %v6300, %v6696
    %v6698 = vpop.f32.mrb[0].mxu0
    %6699 = vmatprep.mubr.bf16.mxu0 0
    %6700 = vmatmul.mubr.bf16.gmra.mrb[0].mxu0 %v6537
    %v6701 = vpop.f32.mrb[0].mxu0
    %v6702 = vadd.f32 %v6305, %v6701
    %v6703 = vpop.f32.mrb[0].mxu0
    %v6704 = vpop.f32.mrb[0].mxu0
    %v6705 = vadd.f32 %v6308, %v6704
    %v6706 = vpop.f32.mrb[0].mxu0
    %6707 = vmatprep.mubr.bf16.mxu0 0
    %6708 = vmatmul.mubr.bf16.gmra.mrb[0].mxu0 %v6540
    %v6709 = vpop.f32.mrb[0].mxu0
    %v6710 = vadd.f32 %v6313, %v6709
    %v6711 = vpop.f32.mrb[0].mxu0
    %v6712 = vpop.f32.mrb[0].mxu0
    %v6713 = vadd.f32 %v6316, %v6712
    %v6714 = vpop.f32.mrb[0].mxu0
    %6715 = vmatprep.mubr.bf16.mxu0 0
    %6716 = vmatmul.mubr.bf16.gmra.mrb[0].mxu0 %v6543
    %v6717 = vpop.f32.mrb[0].mxu0
    %v6718 = vadd.f32 %v6321, %v6717
    %v6719 = vpop.f32.mrb[0].mxu0
    %v6720 = vpop.f32.mrb[0].mxu0
    %v6721 = vadd.f32 %v6324, %v6720
    %v6722 = vpop.f32.mrb[0].mxu0
    %6723 = vmatprep.mubr.bf16.mxu0 0
    %6724 = vmatmul.mubr.bf16.gmra.mrb[0].mxu0 %v6546
    %v6725 = vpop.f32.mrb[0].mxu0
    %v6726 = vadd.f32 %v6329, %v6725
    %v6727 = vpop.f32.mrb[0].mxu0
    %v6728 = vpop.f32.mrb[0].mxu0
    %v6729 = vadd.f32 %v6332, %v6728
    %v6730 = vpop.f32.mrb[0].mxu0
    %6731 = vmatprep.mubr.bf16.mxu0 0
    %6732 = vmatmul.mubr.bf16.gmra.mrb[0].mxu0 %v6549
    %v6733 = vpop.f32.mrb[0].mxu0
    %v6734 = vadd.f32 %v6337, %v6733
    %v6735 = vpop.f32.mrb[0].mxu0
    %v6736 = vpop.f32.mrb[0].mxu0
    %v6737 = vadd.f32 %v6340, %v6736
    %v6738 = vpop.f32.mrb[0].mxu0
    %6739 = vmatprep.mubr.bf16.mxu0 0
    %6740 = vmatmul.mubr.bf16.gmra.mrb[0].mxu0 %v6552
    %v6741 = vpop.f32.mrb[0].mxu0
    %v6742 = vadd.f32 %v6345, %v6741
    %v6743 = vpop.f32.mrb[0].mxu0
    %v6744 = vpop.f32.mrb[0].mxu0
    %v6745 = vadd.f32 %v6348, %v6744
    %v6746 = vpop.f32.mrb[0].mxu0
    %6747 = vmatprep.mubr.bf16.mxu0 0
    %6748 = vmatmul.mubr.bf16.gmra.mrb[0].mxu0 %v6555
    %v6749 = vpop.f32.mrb[0].mxu0
    %v6750 = vadd.f32 %v6353, %v6749
    %v6751 = vpop.f32.mrb[0].mxu0
    %v6752 = vpop.f32.mrb[0].mxu0
    %v6753 = vadd.f32 %v6356, %v6752
    %v6754 = vpop.f32.mrb[0].mxu0
    %6755 = vmatprep.mubr.bf16.mxu0 0
    %6756 = vmatmul.mubr.bf16.gmra.mrb[0].mxu0 %v6558
    %v6757 = vpop.f32.mrb[0].mxu0
    %v6758 = vadd.f32 %v6361, %v6757
    %v6759 = vpop.f32.mrb[0].mxu0
    %v6760 = vpop.f32.mrb[0].mxu0
    %v6761 = vadd.f32 %v6364, %v6760
    %v6762 = vpop.f32.mrb[0].mxu0
    %6763 = vmatprep.mubr.bf16.mxu0 0
    %6764 = vmatmul.mubr.bf16.gmra.mrb[0].mxu0 %v6561
    %v6765 = vpop.f32.mrb[0].mxu0
    %v6766 = vadd.f32 %v6369, %v6765
    %v6767 = vpop.f32.mrb[0].mxu0
    %v6768 = vpop.f32.mrb[0].mxu0
    %v6769 = vadd.f32 %v6372, %v6768
    %v6770 = vpop.f32.mrb[0].mxu0
    %6771 = vmatprep.mubr.bf16.mxu0 0
    %6772 = vmatmul.mubr.bf16.gmra.mrb[0].mxu0 %v6564
    %v6773 = vpop.f32.mrb[0].mxu0
    %v6774 = vadd.f32 %v6377, %v6773
    %v6775 = vpop.f32.mrb[0].mxu0
    %v6776 = vpop.f32.mrb[0].mxu0
    %v6777 = vadd.f32 %v6380, %v6776
    %v6778 = vpop.f32.mrb[0].mxu0
    %6779 = vmatprep.mubr.bf16.mxu0 0
    %6780 = vmatmul.mubr.bf16.gmra.mrb[0].mxu0 %v6567
    %v6781 = vpop.f32.mrb[0].mxu0
    %v6782 = vadd.f32 %v6385, %v6781
    %v6783 = vpop.f32.mrb[0].mxu0
    %v6784 = vpop.f32.mrb[0].mxu0
    %v6785 = vadd.f32 %v6388, %v6784
    %v6786 = vpop.f32.mrb[0].mxu0
    %6787 = vmatprep.mubr.bf16.mxu0 0
    %6788 = vmatmul.mubr.bf16.gmra.mrb[0].mxu0 %v6570
    %v6789 = vpop.f32.mrb[0].mxu0
    %v6790 = vadd.f32 %v6393, %v6789
    %v6791 = vpop.f32.mrb[0].mxu0
    %v6792 = vpop.f32.mrb[0].mxu0
    %v6793 = vadd.f32 %v6396, %v6792
    %v6794 = vpop.f32.mrb[0].mxu0
    %6795 = vmatprep.mubr.bf16.mxu0 0
    %6796 = vmatmul.mubr.bf16.gmra.mrb[0].mxu0 %v6573
    %v6797 = vpop.f32.mrb[0].mxu0
    %v6798 = vadd.f32 %v6401, %v6797
    %v6799 = vpop.f32.mrb[0].mxu0
    %v6800 = vpop.f32.mrb[0].mxu0
    %v6801 = vadd.f32 %v6404, %v6800
    %v6802 = vpop.f32.mrb[0].mxu0
    %6803 = vmatprep.mubr.bf16.mxu0 0
    %6804 = vmatmul.mubr.bf16.gmra.mrb[0].mxu0 %v6576
    %v6805 = vpop.f32.mrb[0].mxu0
    %v6806 = vadd.f32 %v6409, %v6805
    %v6807 = vpop.f32.mrb[0].mxu0
    %v6808 = vpop.f32.mrb[0].mxu0
    %v6809 = vadd.f32 %v6412, %v6808
    %v6810 = vpop.f32.mrb[0].mxu0
    %6811 = vmatprep.mubr.bf16.mxu0 0
    %6812 = vmatmul.mubr.bf16.gmra.mrb[0].mxu0 %v6579
    %v6813 = vpop.f32.mrb[0].mxu0
    %v6814 = vadd.f32 %v6417, %v6813
    %v6815 = vpop.f32.mrb[0].mxu0
    %v6816 = vpop.f32.mrb[0].mxu0
    %v6817 = vadd.f32 %v6420, %v6816
    %v6818 = vpop.f32.mrb[0].mxu0
    %6819 = vmatprep.mubr.bf16.mxu0 0
    %6820 = vmatmul.mubr.bf16.gmra.mrb[0].mxu0 %v6582
    %v6821 = vpop.f32.mrb[0].mxu0
    %v6822 = vadd.f32 %v6425, %v6821
    %v6823 = vpop.f32.mrb[0].mxu0
    %v6824 = vpop.f32.mrb[0].mxu0
    %v6825 = vadd.f32 %v6428, %v6824
    %v6826 = vpop.f32.mrb[0].mxu0
    %6827 = vmatprep.mubr.bf16.mxu0 0
    %6828 = vmatmul.mubr.bf16.gmra.mrb[0].mxu0 %v6585
    %v6829 = vpop.f32.mrb[0].mxu0
    %v6830 = vadd.f32 %v6433, %v6829
    %v6831 = vpop.f32.mrb[0].mxu0
    %v6832 = vpop.f32.mrb[0].mxu0
    %v6833 = vadd.f32 %v6436, %v6832
    %v6834 = vpop.f32.mrb[0].mxu0
    %6835 = vmatprep.mubr.bf16.mxu0 0
    %6836 = vmatmul.mubr.bf16.gmra.mrb[0].mxu0 %v6588
    %v6837 = vpop.f32.mrb[0].mxu0
    %v6838 = vadd.f32 %v6441, %v6837
    %v6839 = vpop.f32.mrb[0].mxu0
    %v6840 = vpop.f32.mrb[0].mxu0
    %v6841 = vadd.f32 %v6444, %v6840
    %v6842 = vpop.f32.mrb[0].mxu0
    %6843 = vmatprep.mubr.bf16.mxu0 0
    %6844 = vmatmul.mubr.bf16.gmra.mrb[0].mxu0 %v6591
    %v6845 = vpop.f32.mrb[0].mxu0
    %v6846 = vadd.f32 %v6449, %v6845
    %v6847 = vpop.f32.mrb[0].mxu0
    %v6848 = vpop.f32.mrb[0].mxu0
    %v6849 = vadd.f32 %v6452, %v6848
    %v6850 = vpop.f32.mrb[0].mxu0
    %6851 = vmatprep.mubr.bf16.mxu0 0
    %6852 = vmatmul.mubr.bf16.gmra.mrb[0].mxu0 %v6594
    %v6853 = vpop.f32.mrb[0].mxu0
    %v6854 = vadd.f32 %v6457, %v6853
    %v6855 = vpop.f32.mrb[0].mxu0
    %v6856 = vpop.f32.mrb[0].mxu0
    %v6857 = vadd.f32 %v6460, %v6856
    %v6858 = vpop.f32.mrb[0].mxu0
    %6859 = vmatprep.mubr.bf16.mxu0 0
    %6860 = vmatmul.mubr.bf16.gmra.mrb[0].mxu0 %v6597
    %v6861 = vpop.f32.mrb[0].mxu0
    %v6862 = vadd.f32 %v6465, %v6861
    %v6863 = vpop.f32.mrb[0].mxu0
    %v6864 = vpop.f32.mrb[0].mxu0
    %v6865 = vadd.f32 %v6468, %v6864
    %v6866 = vpop.f32.mrb[0].mxu0
    %6867 = vmatprep.mubr.bf16.mxu0 0
    %6868 = vmatmul.mubr.bf16.gmra.mrb[0].mxu0 %v6600
    %v6869 = vpop.f32.mrb[0].mxu0
    %v6870 = vadd.f32 %v6473, %v6869
    %v6871 = vpop.f32.mrb[0].mxu0
    %v6872 = vpop.f32.mrb[0].mxu0
    %v6873 = vadd.f32 %v6476, %v6872
    %v6874 = vpop.f32.mrb[0].mxu0
    %6875 = vmatprep.mubr.bf16.mxu0 0
    %6876 = vmatmul.mubr.bf16.gmra.mrb[0].mxu0 %v6603
    %v6877 = vpop.f32.mrb[0].mxu0
    %v6878 = vadd.f32 %v6481, %v6877
    %v6879 = vpop.f32.mrb[0].mxu0
    %v6880 = vpop.f32.mrb[0].mxu0
    %v6881 = vadd.f32 %v6484, %v6880
    %v6882 = vpop.f32.mrb[0].mxu0
    %6883 = vmatprep.mubr.bf16.mxu0 0
    %6884 = vmatmul.mubr.bf16.gmra.mrb[0].mxu0 %v6606
    %v6885 = vpop.f32.mrb[0].mxu0
    %v6886 = vadd.f32 %v6489, %v6885
    %v6887 = vpop.f32.mrb[0].mxu0
    %v6888 = vpop.f32.mrb[0].mxu0
    %v6889 = vadd.f32 %v6492, %v6888
    %v6890 = vpop.f32.mrb[0].mxu0
    %6891 = vmatprep.mubr.bf16.mxu0 0
    %6892 = vmatmul.mubr.bf16.gmra.mrb[0].mxu0 %v6609
    %v6893 = vpop.f32.mrb[0].mxu0
    %v6894 = vadd.f32 %v6497, %v6893
    %v6895 = vpop.f32.mrb[0].mxu0
    %v6896 = vpop.f32.mrb[0].mxu0
    %v6897 = vadd.f32 %v6500, %v6896
    %v6898 = vpop.f32.mrb[0].mxu0
    %6899 = vdwg.mxu0
    %v6900 = vld [vmem:[#allocation2 + $0x2] sm:$0xff]
    %v6901 = vld [vmem:[#allocation2 + $0xa] sm:$0xff]
    %v6902 = vld [vmem:[#allocation2 + $0x1a] sm:$0xff]
    %v6903 = vld [vmem:[#allocation2 + $0x22] sm:$0xff]
    %v6904 = vld [vmem:[#allocation2 + $0x32] sm:$0xff]
    %v6905 = vld [vmem:[#allocation2 + $0x3a] sm:$0xff]
    %v6906 = vld [vmem:[#allocation2 + $0x4a] sm:$0xff]
    %v6907 = vld [vmem:[#allocation2 + $0x52] sm:$0xff]
    %v6908 = vld [vmem:[#allocation2 + $0x62] sm:$0xff]
    %v6909 = vld [vmem:[#allocation2 + $0x6a] sm:$0xff]
    %v6910 = vld [vmem:[#allocation2 + $0x7a] sm:$0xff]
    %v6911 = vld [vmem:[#allocation2 + $0x82] sm:$0xff]
    %v6912 = vld [vmem:[#allocation2 + $0x92] sm:$0xff]
    %v6913 = vld [vmem:[#allocation2 + $0x9a] sm:$0xff]
    %v6914 = vld [vmem:[#allocation2 + $0xaa] sm:$0xff]
    %v6915 = vld [vmem:[#allocation2 + $0xb2] sm:$0xff]
    %v6916 = vld [vmem:[#allocation2 + $0xc2] sm:$0xff]
    %v6917 = vld [vmem:[#allocation2 + $0xca] sm:$0xff]
    %v6918 = vld [vmem:[#allocation2 + $0xda] sm:$0xff]
    %v6919 = vld [vmem:[#allocation2 + $0xe2] sm:$0xff]
    %v6920 = vld [vmem:[#allocation2 + $0xf2] sm:$0xff]
    %v6921 = vld [vmem:[#allocation2 + $0xfa] sm:$0xff]
    %v6922 = vld [vmem:[#allocation2 + $0x10a] sm:$0xff]
    %v6923 = vld [vmem:[#allocation2 + $0x112] sm:$0xff]
    %v6924 = vld [vmem:[#allocation2 + $0x122] sm:$0xff]
    %v6925 = vld [vmem:[#allocation2 + $0x12a] sm:$0xff]
    %v6926 = vld [vmem:[#allocation2 + $0x13a] sm:$0xff]
    %v6927 = vld [vmem:[#allocation2 + $0x142] sm:$0xff]
    %v6928 = vld [vmem:[#allocation2 + $0x152] sm:$0xff]
    %v6929 = vld [vmem:[#allocation2 + $0x15a] sm:$0xff]
    %v6930 = vld [vmem:[#allocation2 + $0x16a] sm:$0xff]
    %v6931 = vld [vmem:[#allocation2 + $0x172] sm:$0xff]
    %v6932 = vld [vmem:[#allocation2 + $0x1b2] sm:$0xff]
    %v6933 = vld [vmem:[#allocation2 + $0x1ba] sm:$0xff]
    %v6934 = vld [vmem:[#allocation2 + $0x1ca] sm:$0xff]
    %v6935 = vld [vmem:[#allocation2 + $0x1d2] sm:$0xff]
    %v6936 = vld [vmem:[#allocation2 + $0x1e2] sm:$0xff]
    %v6937 = vld [vmem:[#allocation2 + $0x1ea] sm:$0xff]
    %v6938 = vld [vmem:[#allocation2 + $0x1fa] sm:$0xff]
    %v6939 = vld [vmem:[#allocation2 + $0x202] sm:$0xff]
    %v6940 = vld [vmem:[#allocation2 + $0x212] sm:$0xff]
    %v6941 = vld [vmem:[#allocation2 + $0x21a] sm:$0xff]
    %v6942 = vld [vmem:[#allocation2 + $0x22a] sm:$0xff]
    %v6943 = vld [vmem:[#allocation2 + $0x232] sm:$0xff]
    %v6944 = vld [vmem:[#allocation2 + $0x242] sm:$0xff]
    %v6945 = vld [vmem:[#allocation2 + $0x24a] sm:$0xff]
    %v6946 = vld [vmem:[#allocation2 + $0x25a] sm:$0xff]
    %v6947 = vld [vmem:[#allocation2 + $0x262] sm:$0xff]
    %v6948 = vld [vmem:[#allocation2 + $0x272] sm:$0xff]
    %v6949 = vld [vmem:[#allocation2 + $0x27a] sm:$0xff]
    %v6950 = vld [vmem:[#allocation2 + $0x28a] sm:$0xff]
    %v6951 = vld [vmem:[#allocation2 + $0x292] sm:$0xff]
    %v6952 = vld [vmem:[#allocation2 + $0x2a2] sm:$0xff]
    %v6953 = vld [vmem:[#allocation2 + $0x2aa] sm:$0xff]
    %v6954 = vld [vmem:[#allocation2 + $0x2ba] sm:$0xff]
    %v6955 = vld [vmem:[#allocation2 + $0x2c2] sm:$0xff]
    %v6956 = vld [vmem:[#allocation2 + $0x2d2] sm:$0xff]
    %v6957 = vld [vmem:[#allocation2 + $0x2da] sm:$0xff]
    %v6958 = vld [vmem:[#allocation2 + $0x2ea] sm:$0xff]
    %v6959 = vld [vmem:[#allocation2 + $0x2f2] sm:$0xff]
    %v6960 = vld [vmem:[#allocation2 + $0x302] sm:$0xff]
    %v6961 = vld [vmem:[#allocation2 + $0x30a] sm:$0xff]
    %v6962 = vld [vmem:[#allocation2 + $0x31a] sm:$0xff]
    %v6963 = vld [vmem:[#allocation2 + $0x322] sm:$0xff]
    %v6964 = vpack.c.bf16 %v6901, %v6900
    %v6965 = vpack.c.bf16 %v6903, %v6902
    %v6966 = vpack.c.bf16 %v6905, %v6904
    %v6967 = vpack.c.bf16 %v6907, %v6906
    %v6968 = vpack.c.bf16 %v6909, %v6908
    %v6969 = vpack.c.bf16 %v6911, %v6910
    %v6970 = vpack.c.bf16 %v6913, %v6912
    %v6971 = vpack.c.bf16 %v6915, %v6914
    %v6972 = vpack.c.bf16 %v6917, %v6916
    %v6973 = vpack.c.bf16 %v6919, %v6918
    %v6974 = vpack.c.bf16 %v6921, %v6920
    %v6975 = vpack.c.bf16 %v6923, %v6922
    %v6976 = vpack.c.bf16 %v6925, %v6924
    %v6977 = vpack.c.bf16 %v6927, %v6926
    %v6978 = vpack.c.bf16 %v6929, %v6928
    %v6979 = vpack.c.bf16 %v6931, %v6930
    %v6980 = vpack.c.bf16 %v6933, %v6932
    %v6981 = vpack.c.bf16 %v6935, %v6934
    %v6982 = vpack.c.bf16 %v6937, %v6936
    %v6983 = vpack.c.bf16 %v6939, %v6938
    %v6984 = vpack.c.bf16 %v6941, %v6940
    %v6985 = vpack.c.bf16 %v6943, %v6942
    %v6986 = vpack.c.bf16 %v6945, %v6944
    %v6987 = vpack.c.bf16 %v6947, %v6946
    %v6988 = vpack.c.bf16 %v6949, %v6948
    %v6989 = vpack.c.bf16 %v6951, %v6950
    %v6990 = vpack.c.bf16 %v6953, %v6952
    %v6991 = vpack.c.bf16 %v6955, %v6954
    %v6992 = vpack.c.bf16 %v6957, %v6956
    %v6993 = vpack.c.bf16 %v6959, %v6958
    %v6994 = vpack.c.bf16 %v6961, %v6960
    %v6995 = vpack.c.bf16 %v6963, %v6962
    %s6996 = scalar_lea.vmem [#allocation7], 32
    %v6997 = vld [vmem:[%s6996] sm:$0xf]
    %v6998 = vld [vmem:[%s6996 + $0x4] sm:$0xf]
    %v6999 = vld [vmem:[%s6996 + $0x8] sm:$0xf]
    %v7000 = vld [vmem:[%s6996 + $0xc] sm:$0xf]
    %v7005 = vunpack.c.l.b16 %v6997
    %v7006 = vunpack.c.l.b16 %v6998
    %v7007 = vunpack.c.l.b16 %v6999
    %v7008 = vunpack.c.l.b16 %v7000
    %v7009 = vpack.c.b16 %v7006, %v7005
    %v7010 = vpack.c.b16 %v7008, %v7007
    %v7014 = vsel %vm68, %v6964, 0
    %v7017 = vsel %vm68, %v6965, 0
    %v7020 = vsel %vm68, %v6966, 0
    %v7023 = vsel %vm68, %v6967, 0
    %v7026 = vsel %vm68, %v6968, 0
    %v7029 = vsel %vm68, %v6969, 0
    %v7032 = vsel %vm68, %v6970, 0
    %v7035 = vsel %vm68, %v6971, 0
    %v7038 = vsel %vm68, %v6972, 0
    %v7041 = vsel %vm68, %v6973, 0
    %v7044 = vsel %vm68, %v6974, 0
    %v7047 = vsel %vm68, %v6975, 0
    %v7050 = vsel %vm68, %v6976, 0
    %v7053 = vsel %vm68, %v6977, 0
    %v7056 = vsel %vm68, %v6978, 0
    %v7059 = vsel %vm68, %v6979, 0
    %v7062 = vsel %vm68, %v6980, 0
    %v7065 = vsel %vm68, %v6981, 0
    %v7068 = vsel %vm68, %v6982, 0
    %v7071 = vsel %vm68, %v6983, 0
    %v7074 = vsel %vm68, %v6984, 0
    %v7077 = vsel %vm68, %v6985, 0
    %v7080 = vsel %vm68, %v6986, 0
    %v7083 = vsel %vm68, %v6987, 0
    %v7086 = vsel %vm68, %v6988, 0
    %v7089 = vsel %vm68, %v6989, 0
    %v7092 = vsel %vm68, %v6990, 0
    %v7095 = vsel %vm68, %v6991, 0
    %v7098 = vsel %vm68, %v6992, 0
    %v7101 = vsel %vm68, %v6993, 0
    %v7104 = vsel %vm68, %v6994, 0
    %v7107 = vsel %vm68, %v6995, 0
    %7109 = vmatprep.subr.bf16.mxu0 0
    %7110 = vmatpush1.bf16.msra.mxu0 %v7009
    %7111 = vmatprep.subr.bf16.mxu0 0
    %7112 = vmatpush1.bf16.msra.mxu0 %v7010
    %7113 = vmatprep.subr.bf16.mxu0 0
    %7114 = vmatpush1.bf16.msra.mxu0 0
    %7115 = vmatprep.subr.bf16.mxu0 0
    %7116 = vmatpush1.bf16.msra.mxu0 0
    %7117 = vmatprep.subr.bf16.mxu0 0
    %7118 = vmatpush1.bf16.msra.mxu0 0
    %7119 = vmatprep.subr.bf16.mxu0 0
    %7120 = vmatpush1.bf16.msra.mxu0 0
    %7121 = vmatprep.subr.bf16.mxu0 0
    %7122 = vmatpush1.bf16.msra.mxu0 0
    %7123 = vmatprep.subr.bf16.mxu0 0
    %7124 = vmatpush1.bf16.msra.mxu0 0
    %7125 = vmatprep.subr.bf16.mxu0 0
    %7126 = vmatpush1.bf16.msra.mxu0 0
    %7127 = vmatprep.subr.bf16.mxu0 0
    %7128 = vmatpush1.bf16.msra.mxu0 0
    %7129 = vmatprep.subr.bf16.mxu0 0
    %7130 = vmatpush1.bf16.msra.mxu0 0
    %7131 = vmatprep.subr.bf16.mxu0 0
    %7132 = vmatpush1.bf16.msra.mxu0 0
    %7133 = vmatprep.subr.bf16.mxu0 0
    %7134 = vmatpush1.bf16.msra.mxu0 0
    %7135 = vmatprep.subr.bf16.mxu0 0
    %7136 = vmatpush1.bf16.msra.mxu0 0
    %7137 = vmatprep.subr.bf16.mxu0 0
    %7138 = vmatpush1.bf16.msra.mxu0 0
    %7139 = vmatprep.subr.bf16.mxu0 0
    %7140 = vmatpush1.bf16.msra.mxu0 0
    %7141 = vmatprep.mubr.bf16.mxu0 0
    %7142 = vmatmul.mubr.bf16.gmra.mrb[0].mxu0 %v7014
    %v7143 = vpop.f32.mrb[0].mxu0
    %v7144 = vadd.f32 0.0, %v7143
    %v7145 = vpop.f32.mrb[0].mxu0
    %v7146 = vpop.f32.mrb[0].mxu0
    %v7147 = vadd.f32 0.0, %v7146
    %v7148 = vpop.f32.mrb[0].mxu0
    %7149 = vmatprep.mubr.bf16.mxu0 0
    %7150 = vmatmul.mubr.bf16.gmra.mrb[0].mxu0 %v7017
    %v7151 = vpop.f32.mrb[0].mxu0
    %v7152 = vadd.f32 0.0, %v7151
    %v7153 = vpop.f32.mrb[0].mxu0
    %v7154 = vpop.f32.mrb[0].mxu0
    %v7155 = vadd.f32 0.0, %v7154
    %v7156 = vpop.f32.mrb[0].mxu0
    %7157 = vmatprep.mubr.bf16.mxu0 0
    %7158 = vmatmul.mubr.bf16.gmra.mrb[0].mxu0 %v7020
    %v7159 = vpop.f32.mrb[0].mxu0
    %v7160 = vadd.f32 0.0, %v7159
    %v7161 = vpop.f32.mrb[0].mxu0
    %v7162 = vpop.f32.mrb[0].mxu0
    %v7163 = vadd.f32 0.0, %v7162
    %v7164 = vpop.f32.mrb[0].mxu0
    %7165 = vmatprep.mubr.bf16.mxu0 0
    %7166 = vmatmul.mubr.bf16.gmra.mrb[0].mxu0 %v7023
    %v7167 = vpop.f32.mrb[0].mxu0
    %v7168 = vadd.f32 0.0, %v7167
    %v7169 = vpop.f32.mrb[0].mxu0
    %v7170 = vpop.f32.mrb[0].mxu0
    %v7171 = vadd.f32 0.0, %v7170
    %v7172 = vpop.f32.mrb[0].mxu0
    %7173 = vmatprep.mubr.bf16.mxu0 0
    %7174 = vmatmul.mubr.bf16.gmra.mrb[0].mxu0 %v7026
    %v7175 = vpop.f32.mrb[0].mxu0
    %v7176 = vadd.f32 0.0, %v7175
    %v7177 = vpop.f32.mrb[0].mxu0
    %v7178 = vpop.f32.mrb[0].mxu0
    %v7179 = vadd.f32 0.0, %v7178
    %v7180 = vpop.f32.mrb[0].mxu0
    %7181 = vmatprep.mubr.bf16.mxu0 0
    %7182 = vmatmul.mubr.bf16.gmra.mrb[0].mxu0 %v7029
    %v7183 = vpop.f32.mrb[0].mxu0
    %v7184 = vadd.f32 0.0, %v7183
    %v7185 = vpop.f32.mrb[0].mxu0
    %v7186 = vpop.f32.mrb[0].mxu0
    %v7187 = vadd.f32 0.0, %v7186
    %v7188 = vpop.f32.mrb[0].mxu0
    %7189 = vmatprep.mubr.bf16.mxu0 0
    %7190 = vmatmul.mubr.bf16.gmra.mrb[0].mxu0 %v7032
    %v7191 = vpop.f32.mrb[0].mxu0
    %v7192 = vadd.f32 0.0, %v7191
    %v7193 = vpop.f32.mrb[0].mxu0
    %v7194 = vpop.f32.mrb[0].mxu0
    %v7195 = vadd.f32 0.0, %v7194
    %v7196 = vpop.f32.mrb[0].mxu0
    %7197 = vmatprep.mubr.bf16.mxu0 0
    %7198 = vmatmul.mubr.bf16.gmra.mrb[0].mxu0 %v7035
    %v7199 = vpop.f32.mrb[0].mxu0
    %v7200 = vadd.f32 0.0, %v7199
    %v7201 = vpop.f32.mrb[0].mxu0
    %v7202 = vpop.f32.mrb[0].mxu0
    %v7203 = vadd.f32 0.0, %v7202
    %v7204 = vpop.f32.mrb[0].mxu0
    %7205 = vmatprep.mubr.bf16.mxu0 0
    %7206 = vmatmul.mubr.bf16.gmra.mrb[0].mxu0 %v7038
    %v7207 = vpop.f32.mrb[0].mxu0
    %v7208 = vadd.f32 0.0, %v7207
    %v7209 = vpop.f32.mrb[0].mxu0
    %v7210 = vpop.f32.mrb[0].mxu0
    %v7211 = vadd.f32 0.0, %v7210
    %v7212 = vpop.f32.mrb[0].mxu0
    %7213 = vmatprep.mubr.bf16.mxu0 0
    %7214 = vmatmul.mubr.bf16.gmra.mrb[0].mxu0 %v7041
    %v7215 = vpop.f32.mrb[0].mxu0
    %v7216 = vadd.f32 0.0, %v7215
    %v7217 = vpop.f32.mrb[0].mxu0
    %v7218 = vpop.f32.mrb[0].mxu0
    %v7219 = vadd.f32 0.0, %v7218
    %v7220 = vpop.f32.mrb[0].mxu0
    %7221 = vmatprep.mubr.bf16.mxu0 0
    %7222 = vmatmul.mubr.bf16.gmra.mrb[0].mxu0 %v7044
    %v7223 = vpop.f32.mrb[0].mxu0
    %v7224 = vadd.f32 0.0, %v7223
    %v7225 = vpop.f32.mrb[0].mxu0
    %v7226 = vpop.f32.mrb[0].mxu0
    %v7227 = vadd.f32 0.0, %v7226
    %v7228 = vpop.f32.mrb[0].mxu0
    %7229 = vmatprep.mubr.bf16.mxu0 0
    %7230 = vmatmul.mubr.bf16.gmra.mrb[0].mxu0 %v7047
    %v7231 = vpop.f32.mrb[0].mxu0
    %v7232 = vadd.f32 0.0, %v7231
    %v7233 = vpop.f32.mrb[0].mxu0
    %v7234 = vpop.f32.mrb[0].mxu0
    %v7235 = vadd.f32 0.0, %v7234
    %v7236 = vpop.f32.mrb[0].mxu0
    %7237 = vmatprep.mubr.bf16.mxu0 0
    %7238 = vmatmul.mubr.bf16.gmra.mrb[0].mxu0 %v7050
    %v7239 = vpop.f32.mrb[0].mxu0
    %v7240 = vadd.f32 0.0, %v7239
    %v7241 = vpop.f32.mrb[0].mxu0
    %v7242 = vpop.f32.mrb[0].mxu0
    %v7243 = vadd.f32 0.0, %v7242
    %v7244 = vpop.f32.mrb[0].mxu0
    %7245 = vmatprep.mubr.bf16.mxu0 0
    %7246 = vmatmul.mubr.bf16.gmra.mrb[0].mxu0 %v7053
    %v7247 = vpop.f32.mrb[0].mxu0
    %v7248 = vadd.f32 0.0, %v7247
    %v7249 = vpop.f32.mrb[0].mxu0
    %v7250 = vpop.f32.mrb[0].mxu0
    %v7251 = vadd.f32 0.0, %v7250
    %v7252 = vpop.f32.mrb[0].mxu0
    %7253 = vmatprep.mubr.bf16.mxu0 0
    %7254 = vmatmul.mubr.bf16.gmra.mrb[0].mxu0 %v7056
    %v7255 = vpop.f32.mrb[0].mxu0
    %v7256 = vadd.f32 0.0, %v7255
    %v7257 = vpop.f32.mrb[0].mxu0
    %v7258 = vpop.f32.mrb[0].mxu0
    %v7259 = vadd.f32 0.0, %v7258
    %v7260 = vpop.f32.mrb[0].mxu0
    %7261 = vmatprep.mubr.bf16.mxu0 0
    %7262 = vmatmul.mubr.bf16.gmra.mrb[0].mxu0 %v7059
    %v7263 = vpop.f32.mrb[0].mxu0
    %v7264 = vadd.f32 0.0, %v7263
    %v7265 = vpop.f32.mrb[0].mxu0
    %v7266 = vpop.f32.mrb[0].mxu0
    %v7267 = vadd.f32 0.0, %v7266
    %v7268 = vpop.f32.mrb[0].mxu0
    %7269 = vmatprep.mubr.bf16.mxu0 0
    %7270 = vmatmul.mubr.bf16.gmra.mrb[0].mxu0 %v7062
    %v7271 = vpop.f32.mrb[0].mxu0
    %v7272 = vadd.f32 0.0, %v7271
    %v7273 = vpop.f32.mrb[0].mxu0
    %v7274 = vpop.f32.mrb[0].mxu0
    %v7275 = vadd.f32 0.0, %v7274
    %v7276 = vpop.f32.mrb[0].mxu0
    %7277 = vmatprep.mubr.bf16.mxu0 0
    %7278 = vmatmul.mubr.bf16.gmra.mrb[0].mxu0 %v7065
    %v7279 = vpop.f32.mrb[0].mxu0
    %v7280 = vadd.f32 0.0, %v7279
    %v7281 = vpop.f32.mrb[0].mxu0
    %v7282 = vpop.f32.mrb[0].mxu0
    %v7283 = vadd.f32 0.0, %v7282
    %v7284 = vpop.f32.mrb[0].mxu0
    %7285 = vmatprep.mubr.bf16.mxu0 0
    %7286 = vmatmul.mubr.bf16.gmra.mrb[0].mxu0 %v7068
    %v7287 = vpop.f32.mrb[0].mxu0
    %v7288 = vadd.f32 0.0, %v7287
    %v7289 = vpop.f32.mrb[0].mxu0
    %v7290 = vpop.f32.mrb[0].mxu0
    %v7291 = vadd.f32 0.0, %v7290
    %v7292 = vpop.f32.mrb[0].mxu0
    %7293 = vmatprep.mubr.bf16.mxu0 0
    %7294 = vmatmul.mubr.bf16.gmra.mrb[0].mxu0 %v7071
    %v7295 = vpop.f32.mrb[0].mxu0
    %v7296 = vadd.f32 0.0, %v7295
    %v7297 = vpop.f32.mrb[0].mxu0
    %v7298 = vpop.f32.mrb[0].mxu0
    %v7299 = vadd.f32 0.0, %v7298
    %v7300 = vpop.f32.mrb[0].mxu0
    %7301 = vmatprep.mubr.bf16.mxu0 0
    %7302 = vmatmul.mubr.bf16.gmra.mrb[0].mxu0 %v7074
    %v7303 = vpop.f32.mrb[0].mxu0
    %v7304 = vadd.f32 0.0, %v7303
    %v7305 = vpop.f32.mrb[0].mxu0
    %v7306 = vpop.f32.mrb[0].mxu0
    %v7307 = vadd.f32 0.0, %v7306
    %v7308 = vpop.f32.mrb[0].mxu0
    %7309 = vmatprep.mubr.bf16.mxu0 0
    %7310 = vmatmul.mubr.bf16.gmra.mrb[0].mxu0 %v7077
    %v7311 = vpop.f32.mrb[0].mxu0
    %v7312 = vadd.f32 0.0, %v7311
    %v7313 = vpop.f32.mrb[0].mxu0
    %v7314 = vpop.f32.mrb[0].mxu0
    %v7315 = vadd.f32 0.0, %v7314
    %v7316 = vpop.f32.mrb[0].mxu0
    %7317 = vmatprep.mubr.bf16.mxu0 0
    %7318 = vmatmul.mubr.bf16.gmra.mrb[0].mxu0 %v7080
    %v7319 = vpop.f32.mrb[0].mxu0
    %v7320 = vadd.f32 0.0, %v7319
    %v7321 = vpop.f32.mrb[0].mxu0
    %v7322 = vpop.f32.mrb[0].mxu0
    %v7323 = vadd.f32 0.0, %v7322
    %v7324 = vpop.f32.mrb[0].mxu0
    %7325 = vmatprep.mubr.bf16.mxu0 0
    %7326 = vmatmul.mubr.bf16.gmra.mrb[0].mxu0 %v7083
    %v7327 = vpop.f32.mrb[0].mxu0
    %v7328 = vadd.f32 0.0, %v7327
    %v7329 = vpop.f32.mrb[0].mxu0
    %v7330 = vpop.f32.mrb[0].mxu0
    %v7331 = vadd.f32 0.0, %v7330
    %v7332 = vpop.f32.mrb[0].mxu0
    %7333 = vmatprep.mubr.bf16.mxu0 0
    %7334 = vmatmul.mubr.bf16.gmra.mrb[0].mxu0 %v7086
    %v7335 = vpop.f32.mrb[0].mxu0
    %v7336 = vadd.f32 0.0, %v7335
    %v7337 = vpop.f32.mrb[0].mxu0
    %v7338 = vpop.f32.mrb[0].mxu0
    %v7339 = vadd.f32 0.0, %v7338
    %v7340 = vpop.f32.mrb[0].mxu0
    %7341 = vmatprep.mubr.bf16.mxu0 0
    %7342 = vmatmul.mubr.bf16.gmra.mrb[0].mxu0 %v7089
    %v7343 = vpop.f32.mrb[0].mxu0
    %v7344 = vadd.f32 0.0, %v7343
    %v7345 = vpop.f32.mrb[0].mxu0
    %v7346 = vpop.f32.mrb[0].mxu0
    %v7347 = vadd.f32 0.0, %v7346
    %v7348 = vpop.f32.mrb[0].mxu0
    %7349 = vmatprep.mubr.bf16.mxu0 0
    %7350 = vmatmul.mubr.bf16.gmra.mrb[0].mxu0 %v7092
    %v7351 = vpop.f32.mrb[0].mxu0
    %v7352 = vadd.f32 0.0, %v7351
    %v7353 = vpop.f32.mrb[0].mxu0
    %v7354 = vpop.f32.mrb[0].mxu0
    %v7355 = vadd.f32 0.0, %v7354
    %v7356 = vpop.f32.mrb[0].mxu0
    %7357 = vmatprep.mubr.bf16.mxu0 0
    %7358 = vmatmul.mubr.bf16.gmra.mrb[0].mxu0 %v7095
    %v7359 = vpop.f32.mrb[0].mxu0
    %v7360 = vadd.f32 0.0, %v7359
    %v7361 = vpop.f32.mrb[0].mxu0
    %v7362 = vpop.f32.mrb[0].mxu0
    %v7363 = vadd.f32 0.0, %v7362
    %v7364 = vpop.f32.mrb[0].mxu0
    %7365 = vmatprep.mubr.bf16.mxu0 0
    %7366 = vmatmul.mubr.bf16.gmra.mrb[0].mxu0 %v7098
    %v7367 = vpop.f32.mrb[0].mxu0
    %v7368 = vadd.f32 0.0, %v7367
    %v7369 = vpop.f32.mrb[0].mxu0
    %v7370 = vpop.f32.mrb[0].mxu0
    %v7371 = vadd.f32 0.0, %v7370
    %v7372 = vpop.f32.mrb[0].mxu0
    %7373 = vmatprep.mubr.bf16.mxu0 0
    %7374 = vmatmul.mubr.bf16.gmra.mrb[0].mxu0 %v7101
    %v7375 = vpop.f32.mrb[0].mxu0
    %v7376 = vadd.f32 0.0, %v7375
    %v7377 = vpop.f32.mrb[0].mxu0
    %v7378 = vpop.f32.mrb[0].mxu0
    %v7379 = vadd.f32 0.0, %v7378
    %v7380 = vpop.f32.mrb[0].mxu0
    %7381 = vmatprep.mubr.bf16.mxu0 0
    %7382 = vmatmul.mubr.bf16.gmra.mrb[0].mxu0 %v7104
    %v7383 = vpop.f32.mrb[0].mxu0
    %v7384 = vadd.f32 0.0, %v7383
    %v7385 = vpop.f32.mrb[0].mxu0
    %v7386 = vpop.f32.mrb[0].mxu0
    %v7387 = vadd.f32 0.0, %v7386
    %v7388 = vpop.f32.mrb[0].mxu0
    %7389 = vmatprep.mubr.bf16.mxu0 0
    %7390 = vmatmul.mubr.bf16.gmra.mrb[0].mxu0 %v7107
    %v7391 = vpop.f32.mrb[0].mxu0
    %v7392 = vadd.f32 0.0, %v7391
    %v7393 = vpop.f32.mrb[0].mxu0
    %v7394 = vpop.f32.mrb[0].mxu0
    %v7395 = vadd.f32 0.0, %v7394
    %v7396 = vpop.f32.mrb[0].mxu0
    %7397 = vdwg.mxu0
    %v7398 = vadd.f32 %v6646, %v7144
    %v7399 = vadd.f32 %v6649, %v7147
    %v7400 = vadd.f32 %v6654, %v7152
    %v7401 = vadd.f32 %v6657, %v7155
    %v7402 = vadd.f32 %v6662, %v7160
    %v7403 = vadd.f32 %v6665, %v7163
    %v7404 = vadd.f32 %v6670, %v7168
    %v7405 = vadd.f32 %v6673, %v7171
    %v7406 = vadd.f32 %v6678, %v7176
    %v7407 = vadd.f32 %v6681, %v7179
    %v7408 = vadd.f32 %v6686, %v7184
    %v7409 = vadd.f32 %v6689, %v7187
    %v7410 = vadd.f32 %v6694, %v7192
    %v7411 = vadd.f32 %v6697, %v7195
    %v7412 = vadd.f32 %v6702, %v7200
    %v7413 = vadd.f32 %v6705, %v7203
    %v7414 = vadd.f32 %v6710, %v7208
    %v7415 = vadd.f32 %v6713, %v7211
    %v7416 = vadd.f32 %v6718, %v7216
    %v7417 = vadd.f32 %v6721, %v7219
    %v7418 = vadd.f32 %v6726, %v7224
    %v7419 = vadd.f32 %v6729, %v7227
    %v7420 = vadd.f32 %v6734, %v7232
    %v7421 = vadd.f32 %v6737, %v7235
    %v7422 = vadd.f32 %v6742, %v7240
    %v7423 = vadd.f32 %v6745, %v7243
    %v7424 = vadd.f32 %v6750, %v7248
    %v7425 = vadd.f32 %v6753, %v7251
    %v7426 = vadd.f32 %v6758, %v7256
    %v7427 = vadd.f32 %v6761, %v7259
    %v7428 = vadd.f32 %v6766, %v7264
    %v7429 = vadd.f32 %v6769, %v7267
    %v7430 = vadd.f32 %v6774, %v7272
    %v7431 = vadd.f32 %v6777, %v7275
    %v7432 = vadd.f32 %v6782, %v7280
    %v7433 = vadd.f32 %v6785, %v7283
    %v7434 = vadd.f32 %v6790, %v7288
    %v7435 = vadd.f32 %v6793, %v7291
    %v7436 = vadd.f32 %v6798, %v7296
    %v7437 = vadd.f32 %v6801, %v7299
    %v7438 = vadd.f32 %v6806, %v7304
    %v7439 = vadd.f32 %v6809, %v7307
    %v7440 = vadd.f32 %v6814, %v7312
    %v7441 = vadd.f32 %v6817, %v7315
    %v7442 = vadd.f32 %v6822, %v7320
    %v7443 = vadd.f32 %v6825, %v7323
    %v7444 = vadd.f32 %v6830, %v7328
    %v7445 = vadd.f32 %v6833, %v7331
    %v7446 = vadd.f32 %v6838, %v7336
    %v7447 = vadd.f32 %v6841, %v7339
    %v7448 = vadd.f32 %v6846, %v7344
    %v7449 = vadd.f32 %v6849, %v7347
    %v7450 = vadd.f32 %v6854, %v7352
    %v7451 = vadd.f32 %v6857, %v7355
    %v7452 = vadd.f32 %v6862, %v7360
    %v7453 = vadd.f32 %v6865, %v7363
    %v7454 = vadd.f32 %v6870, %v7368
    %v7455 = vadd.f32 %v6873, %v7371
    %v7456 = vadd.f32 %v6878, %v7376
    %v7457 = vadd.f32 %v6881, %v7379
    %v7458 = vadd.f32 %v6886, %v7384
    %v7459 = vadd.f32 %v6889, %v7387
    %v7460 = vadd.f32 %v6894, %v7392
    %v7461 = vadd.f32 %v6897, %v7395
    %v7462 = vld [vmem:[%s242] sm:$0xff]
    %v7463 = vld [vmem:[%s242 + $0x8] sm:$0xff]
    %v7464 = vld [vmem:[%s242 + $0x18] sm:$0xff]
    %v7465 = vld [vmem:[%s242 + $0x20] sm:$0xff]
    %v7466 = vld [vmem:[%s242 + $0x30] sm:$0xff]
    %v7467 = vld [vmem:[%s242 + $0x38] sm:$0xff]
    %v7468 = vld [vmem:[%s242 + $0x48] sm:$0xff]
    %v7469 = vld [vmem:[%s242 + $0x50] sm:$0xff]
    %v7470 = vld [vmem:[%s242 + $0x60] sm:$0xff]
    %v7471 = vld [vmem:[%s242 + $0x68] sm:$0xff]
    %v7472 = vld [vmem:[%s242 + $0x78] sm:$0xff]
    %v7473 = vld [vmem:[%s242 + $0x80] sm:$0xff]
    %v7474 = vld [vmem:[%s242 + $0x90] sm:$0xff]
    %v7475 = vld [vmem:[%s242 + $0x98] sm:$0xff]
    %v7476 = vld [vmem:[%s242 + $0xa8] sm:$0xff]
    %v7477 = vld [vmem:[%s242 + $0xb0] sm:$0xff]
    %v7478 = vld [vmem:[%s242 + $0xc0] sm:$0xff]
    %v7479 = vld [vmem:[%s242 + $0xc8] sm:$0xff]
    %v7480 = vld [vmem:[%s242 + $0xd8] sm:$0xff]
    %v7481 = vld [vmem:[%s242 + $0xe0] sm:$0xff]
    %v7482 = vld [vmem:[%s242 + $0xf0] sm:$0xff]
    %v7483 = vld [vmem:[%s242 + $0xf8] sm:$0xff]
    %v7484 = vld [vmem:[%s242 + $0x108] sm:$0xff]
    %v7485 = vld [vmem:[%s242 + $0x110] sm:$0xff]
    %v7486 = vld [vmem:[%s242 + $0x120] sm:$0xff]
    %v7487 = vld [vmem:[%s242 + $0x128] sm:$0xff]
    %v7488 = vld [vmem:[%s242 + $0x138] sm:$0xff]
    %v7489 = vld [vmem:[%s242 + $0x140] sm:$0xff]
    %v7490 = vld [vmem:[%s242 + $0x150] sm:$0xff]
    %v7491 = vld [vmem:[%s242 + $0x158] sm:$0xff]
    %v7492 = vld [vmem:[%s242 + $0x168] sm:$0xff]
    %v7493 = vld [vmem:[%s242 + $0x170] sm:$0xff]
    %v7494 = vld [vmem:[%s242 + $0x1b0] sm:$0xff]
    %v7495 = vld [vmem:[%s242 + $0x1b8] sm:$0xff]
    %v7496 = vld [vmem:[%s242 + $0x1c8] sm:$0xff]
    %v7497 = vld [vmem:[%s242 + $0x1d0] sm:$0xff]
    %v7498 = vld [vmem:[%s242 + $0x1e0] sm:$0xff]
    %v7499 = vld [vmem:[%s242 + $0x1e8] sm:$0xff]
    %v7500 = vld [vmem:[%s242 + $0x1f8] sm:$0xff]
    %v7501 = vld [vmem:[%s242 + $0x200] sm:$0xff]
    %v7502 = vld [vmem:[%s242 + $0x210] sm:$0xff]
    %v7503 = vld [vmem:[%s242 + $0x218] sm:$0xff]
    %v7504 = vld [vmem:[%s242 + $0x228] sm:$0xff]
    %v7505 = vld [vmem:[%s242 + $0x230] sm:$0xff]
    %v7506 = vld [vmem:[%s242 + $0x240] sm:$0xff]
    %v7507 = vld [vmem:[%s242 + $0x248] sm:$0xff]
    %v7508 = vld [vmem:[%s242 + $0x258] sm:$0xff]
    %v7509 = vld [vmem:[%s242 + $0x260] sm:$0xff]
    %v7510 = vld [vmem:[%s242 + $0x270] sm:$0xff]
    %v7511 = vld [vmem:[%s242 + $0x278] sm:$0xff]
    %v7512 = vld [vmem:[%s242 + $0x288] sm:$0xff]
    %v7513 = vld [vmem:[%s242 + $0x290] sm:$0xff]
    %v7514 = vld [vmem:[%s242 + $0x2a0] sm:$0xff]
    %v7515 = vld [vmem:[%s242 + $0x2a8] sm:$0xff]
    %v7516 = vld [vmem:[%s242 + $0x2b8] sm:$0xff]
    %v7517 = vld [vmem:[%s242 + $0x2c0] sm:$0xff]
    %v7518 = vld [vmem:[%s242 + $0x2d0] sm:$0xff]
    %v7519 = vld [vmem:[%s242 + $0x2d8] sm:$0xff]
    %v7520 = vld [vmem:[%s242 + $0x2e8] sm:$0xff]
    %v7521 = vld [vmem:[%s242 + $0x2f0] sm:$0xff]
    %v7522 = vld [vmem:[%s242 + $0x300] sm:$0xff]
    %v7523 = vld [vmem:[%s242 + $0x308] sm:$0xff]
    %v7524 = vld [vmem:[%s242 + $0x318] sm:$0xff]
    %v7525 = vld [vmem:[%s242 + $0x320] sm:$0xff]
    %v7526 = vpack.c.bf16 %v7463, %v7462
    %v7527 = vpack.c.bf16 %v7465, %v7464
    %v7528 = vpack.c.bf16 %v7467, %v7466
    %v7529 = vpack.c.bf16 %v7469, %v7468
    %v7530 = vpack.c.bf16 %v7471, %v7470
    %v7531 = vpack.c.bf16 %v7473, %v7472
    %v7532 = vpack.c.bf16 %v7475, %v7474
    %v7533 = vpack.c.bf16 %v7477, %v7476
    %v7534 = vpack.c.bf16 %v7479, %v7478
    %v7535 = vpack.c.bf16 %v7481, %v7480
    %v7536 = vpack.c.bf16 %v7483, %v7482
    %v7537 = vpack.c.bf16 %v7485, %v7484
    %v7538 = vpack.c.bf16 %v7487, %v7486
    %v7539 = vpack.c.bf16 %v7489, %v7488
    %v7540 = vpack.c.bf16 %v7491, %v7490
    %v7541 = vpack.c.bf16 %v7493, %v7492
    %v7542 = vpack.c.bf16 %v7495, %v7494
    %v7543 = vpack.c.bf16 %v7497, %v7496
    %v7544 = vpack.c.bf16 %v7499, %v7498
    %v7545 = vpack.c.bf16 %v7501, %v7500
    %v7546 = vpack.c.bf16 %v7503, %v7502
    %v7547 = vpack.c.bf16 %v7505, %v7504
    %v7548 = vpack.c.bf16 %v7507, %v7506
    %v7549 = vpack.c.bf16 %v7509, %v7508
    %v7550 = vpack.c.bf16 %v7511, %v7510
    %v7551 = vpack.c.bf16 %v7513, %v7512
    %v7552 = vpack.c.bf16 %v7515, %v7514
    %v7553 = vpack.c.bf16 %v7517, %v7516
    %v7554 = vpack.c.bf16 %v7519, %v7518
    %v7555 = vpack.c.bf16 %v7521, %v7520
    %v7556 = vpack.c.bf16 %v7523, %v7522
    %v7557 = vpack.c.bf16 %v7525, %v7524
    %s7558 = scalar_lea.vmem [#allocation7], 48
    %v7559 = vld [vmem:[%s7558] sm:$0xf]
    %v7560 = vld [vmem:[%s7558 + $0x4] sm:$0xf]
    %v7561 = vld [vmem:[%s7558 + $0x8] sm:$0xf]
    %v7562 = vld [vmem:[%s7558 + $0xc] sm:$0xf]
    %v7567 = vunpack.c.l.b16 %v7559
    %v7568 = vunpack.c.l.b16 %v7560
    %v7569 = vunpack.c.l.b16 %v7561
    %v7570 = vunpack.c.l.b16 %v7562
    %v7571 = vpack.c.b16 %v7568, %v7567
    %v7572 = vpack.c.b16 %v7570, %v7569
    %v7576 = vsel %vm68, %v7526, 0
    %v7579 = vsel %vm68, %v7527, 0
    %v7582 = vsel %vm68, %v7528, 0
    %v7585 = vsel %vm68, %v7529, 0
    %v7588 = vsel %vm68, %v7530, 0
    %v7591 = vsel %vm68, %v7531, 0
    %v7594 = vsel %vm68, %v7532, 0
    %v7597 = vsel %vm68, %v7533, 0
    %v7600 = vsel %vm68, %v7534, 0
    %v7603 = vsel %vm68, %v7535, 0
    %v7606 = vsel %vm68, %v7536, 0
    %v7609 = vsel %vm68, %v7537, 0
    %v7612 = vsel %vm68, %v7538, 0
    %v7615 = vsel %vm68, %v7539, 0
    %v7618 = vsel %vm68, %v7540, 0
    %v7621 = vsel %vm68, %v7541, 0
    %v7624 = vsel %vm68, %v7542, 0
    %v7627 = vsel %vm68, %v7543, 0
    %v7630 = vsel %vm68, %v7544, 0
    %v7633 = vsel %vm68, %v7545, 0
    %v7636 = vsel %vm68, %v7546, 0
    %v7639 = vsel %vm68, %v7547, 0
    %v7642 = vsel %vm68, %v7548, 0
    %v7645 = vsel %vm68, %v7549, 0
    %v7648 = vsel %vm68, %v7550, 0
    %v7651 = vsel %vm68, %v7551, 0
    %v7654 = vsel %vm68, %v7552, 0
    %v7657 = vsel %vm68, %v7553, 0
    %v7660 = vsel %vm68, %v7554, 0
    %v7663 = vsel %vm68, %v7555, 0
    %v7666 = vsel %vm68, %v7556, 0
    %v7669 = vsel %vm68, %v7557, 0
    %7671 = vmatprep.subr.bf16.mxu0 0
    %7672 = vmatpush1.bf16.msra.mxu0 %v7571
    %7673 = vmatprep.subr.bf16.mxu0 0
    %7674 = vmatpush1.bf16.msra.mxu0 %v7572
    %7675 = vmatprep.subr.bf16.mxu0 0
    %7676 = vmatpush1.bf16.msra.mxu0 0
    %7677 = vmatprep.subr.bf16.mxu0 0
    %7678 = vmatpush1.bf16.msra.mxu0 0
    %7679 = vmatprep.subr.bf16.mxu0 0
    %7680 = vmatpush1.bf16.msra.mxu0 0
    %7681 = vmatprep.subr.bf16.mxu0 0
    %7682 = vmatpush1.bf16.msra.mxu0 0
    %7683 = vmatprep.subr.bf16.mxu0 0
    %7684 = vmatpush1.bf16.msra.mxu0 0
    %7685 = vmatprep.subr.bf16.mxu0 0
    %7686 = vmatpush1.bf16.msra.mxu0 0
    %7687 = vmatprep.subr.bf16.mxu0 0
    %7688 = vmatpush1.bf16.msra.mxu0 0
    %7689 = vmatprep.subr.bf16.mxu0 0
    %7690 = vmatpush1.bf16.msra.mxu0 0
    %7691 = vmatprep.subr.bf16.mxu0 0
    %7692 = vmatpush1.bf16.msra.mxu0 0
    %7693 = vmatprep.subr.bf16.mxu0 0
    %7694 = vmatpush1.bf16.msra.mxu0 0
    %7695 = vmatprep.subr.bf16.mxu0 0
    %7696 = vmatpush1.bf16.msra.mxu0 0
    %7697 = vmatprep.subr.bf16.mxu0 0
    %7698 = vmatpush1.bf16.msra.mxu0 0
    %7699 = vmatprep.subr.bf16.mxu0 0
    %7700 = vmatpush1.bf16.msra.mxu0 0
    %7701 = vmatprep.subr.bf16.mxu0 0
    %7702 = vmatpush1.bf16.msra.mxu0 0
    %7703 = vmatprep.mubr.bf16.mxu0 0
    %7704 = vmatmul.mubr.bf16.gmra.mrb[0].mxu0 %v7576
    %v7705 = vpop.f32.mrb[0].mxu0
    %v7706 = vadd.f32 0.0, %v7705
    %v7707 = vpop.f32.mrb[0].mxu0
    %v7708 = vpop.f32.mrb[0].mxu0
    %v7709 = vadd.f32 0.0, %v7708
    %v7710 = vpop.f32.mrb[0].mxu0
    %7711 = vmatprep.mubr.bf16.mxu0 0
    %7712 = vmatmul.mubr.bf16.gmra.mrb[0].mxu0 %v7579
    %v7713 = vpop.f32.mrb[0].mxu0
    %v7714 = vadd.f32 0.0, %v7713
    %v7715 = vpop.f32.mrb[0].mxu0
    %v7716 = vpop.f32.mrb[0].mxu0
    %v7717 = vadd.f32 0.0, %v7716
    %v7718 = vpop.f32.mrb[0].mxu0
    %7719 = vmatprep.mubr.bf16.mxu0 0
    %7720 = vmatmul.mubr.bf16.gmra.mrb[0].mxu0 %v7582
    %v7721 = vpop.f32.mrb[0].mxu0
    %v7722 = vadd.f32 0.0, %v7721
    %v7723 = vpop.f32.mrb[0].mxu0
    %v7724 = vpop.f32.mrb[0].mxu0
    %v7725 = vadd.f32 0.0, %v7724
    %v7726 = vpop.f32.mrb[0].mxu0
    %7727 = vmatprep.mubr.bf16.mxu0 0
    %7728 = vmatmul.mubr.bf16.gmra.mrb[0].mxu0 %v7585
    %v7729 = vpop.f32.mrb[0].mxu0
    %v7730 = vadd.f32 0.0, %v7729
    %v7731 = vpop.f32.mrb[0].mxu0
    %v7732 = vpop.f32.mrb[0].mxu0
    %v7733 = vadd.f32 0.0, %v7732
    %v7734 = vpop.f32.mrb[0].mxu0
    %7735 = vmatprep.mubr.bf16.mxu0 0
    %7736 = vmatmul.mubr.bf16.gmra.mrb[0].mxu0 %v7588
    %v7737 = vpop.f32.mrb[0].mxu0
    %v7738 = vadd.f32 0.0, %v7737
    %v7739 = vpop.f32.mrb[0].mxu0
    %v7740 = vpop.f32.mrb[0].mxu0
    %v7741 = vadd.f32 0.0, %v7740
    %v7742 = vpop.f32.mrb[0].mxu0
    %7743 = vmatprep.mubr.bf16.mxu0 0
    %7744 = vmatmul.mubr.bf16.gmra.mrb[0].mxu0 %v7591
    %v7745 = vpop.f32.mrb[0].mxu0
    %v7746 = vadd.f32 0.0, %v7745
    %v7747 = vpop.f32.mrb[0].mxu0
    %v7748 = vpop.f32.mrb[0].mxu0
    %v7749 = vadd.f32 0.0, %v7748
    %v7750 = vpop.f32.mrb[0].mxu0
    %7751 = vmatprep.mubr.bf16.mxu0 0
    %7752 = vmatmul.mubr.bf16.gmra.mrb[0].mxu0 %v7594
    %v7753 = vpop.f32.mrb[0].mxu0
    %v7754 = vadd.f32 0.0, %v7753
    %v7755 = vpop.f32.mrb[0].mxu0
    %v7756 = vpop.f32.mrb[0].mxu0
    %v7757 = vadd.f32 0.0, %v7756
    %v7758 = vpop.f32.mrb[0].mxu0
    %7759 = vmatprep.mubr.bf16.mxu0 0
    %7760 = vmatmul.mubr.bf16.gmra.mrb[0].mxu0 %v7597
    %v7761 = vpop.f32.mrb[0].mxu0
    %v7762 = vadd.f32 0.0, %v7761
    %v7763 = vpop.f32.mrb[0].mxu0
    %v7764 = vpop.f32.mrb[0].mxu0
    %v7765 = vadd.f32 0.0, %v7764
    %v7766 = vpop.f32.mrb[0].mxu0
    %7767 = vmatprep.mubr.bf16.mxu0 0
    %7768 = vmatmul.mubr.bf16.gmra.mrb[0].mxu0 %v7600
    %v7769 = vpop.f32.mrb[0].mxu0
    %v7770 = vadd.f32 0.0, %v7769
    %v7771 = vpop.f32.mrb[0].mxu0
    %v7772 = vpop.f32.mrb[0].mxu0
    %v7773 = vadd.f32 0.0, %v7772
    %v7774 = vpop.f32.mrb[0].mxu0
    %7775 = vmatprep.mubr.bf16.mxu0 0
    %7776 = vmatmul.mubr.bf16.gmra.mrb[0].mxu0 %v7603
    %v7777 = vpop.f32.mrb[0].mxu0
    %v7778 = vadd.f32 0.0, %v7777
    %v7779 = vpop.f32.mrb[0].mxu0
    %v7780 = vpop.f32.mrb[0].mxu0
    %v7781 = vadd.f32 0.0, %v7780
    %v7782 = vpop.f32.mrb[0].mxu0
    %7783 = vmatprep.mubr.bf16.mxu0 0
    %7784 = vmatmul.mubr.bf16.gmra.mrb[0].mxu0 %v7606
    %v7785 = vpop.f32.mrb[0].mxu0
    %v7786 = vadd.f32 0.0, %v7785
    %v7787 = vpop.f32.mrb[0].mxu0
    %v7788 = vpop.f32.mrb[0].mxu0
    %v7789 = vadd.f32 0.0, %v7788
    %v7790 = vpop.f32.mrb[0].mxu0
    %7791 = vmatprep.mubr.bf16.mxu0 0
    %7792 = vmatmul.mubr.bf16.gmra.mrb[0].mxu0 %v7609
    %v7793 = vpop.f32.mrb[0].mxu0
    %v7794 = vadd.f32 0.0, %v7793
    %v7795 = vpop.f32.mrb[0].mxu0
    %v7796 = vpop.f32.mrb[0].mxu0
    %v7797 = vadd.f32 0.0, %v7796
    %v7798 = vpop.f32.mrb[0].mxu0
    %7799 = vmatprep.mubr.bf16.mxu0 0
    %7800 = vmatmul.mubr.bf16.gmra.mrb[0].mxu0 %v7612
    %v7801 = vpop.f32.mrb[0].mxu0
    %v7802 = vadd.f32 0.0, %v7801
    %v7803 = vpop.f32.mrb[0].mxu0
    %v7804 = vpop.f32.mrb[0].mxu0
    %v7805 = vadd.f32 0.0, %v7804
    %v7806 = vpop.f32.mrb[0].mxu0
    %7807 = vmatprep.mubr.bf16.mxu0 0
    %7808 = vmatmul.mubr.bf16.gmra.mrb[0].mxu0 %v7615
    %v7809 = vpop.f32.mrb[0].mxu0
    %v7810 = vadd.f32 0.0, %v7809
    %v7811 = vpop.f32.mrb[0].mxu0
    %v7812 = vpop.f32.mrb[0].mxu0
    %v7813 = vadd.f32 0.0, %v7812
    %v7814 = vpop.f32.mrb[0].mxu0
    %7815 = vmatprep.mubr.bf16.mxu0 0
    %7816 = vmatmul.mubr.bf16.gmra.mrb[0].mxu0 %v7618
    %v7817 = vpop.f32.mrb[0].mxu0
    %v7818 = vadd.f32 0.0, %v7817
    %v7819 = vpop.f32.mrb[0].mxu0
    %v7820 = vpop.f32.mrb[0].mxu0
    %v7821 = vadd.f32 0.0, %v7820
    %v7822 = vpop.f32.mrb[0].mxu0
    %7823 = vmatprep.mubr.bf16.mxu0 0
    %7824 = vmatmul.mubr.bf16.gmra.mrb[0].mxu0 %v7621
    %v7825 = vpop.f32.mrb[0].mxu0
    %v7826 = vadd.f32 0.0, %v7825
    %v7827 = vpop.f32.mrb[0].mxu0
    %v7828 = vpop.f32.mrb[0].mxu0
    %v7829 = vadd.f32 0.0, %v7828
    %v7830 = vpop.f32.mrb[0].mxu0
    %7831 = vmatprep.mubr.bf16.mxu0 0
    %7832 = vmatmul.mubr.bf16.gmra.mrb[0].mxu0 %v7624
    %v7833 = vpop.f32.mrb[0].mxu0
    %v7834 = vadd.f32 0.0, %v7833
    %v7835 = vpop.f32.mrb[0].mxu0
    %v7836 = vpop.f32.mrb[0].mxu0
    %v7837 = vadd.f32 0.0, %v7836
    %v7838 = vpop.f32.mrb[0].mxu0
    %7839 = vmatprep.mubr.bf16.mxu0 0
    %7840 = vmatmul.mubr.bf16.gmra.mrb[0].mxu0 %v7627
    %v7841 = vpop.f32.mrb[0].mxu0
    %v7842 = vadd.f32 0.0, %v7841
    %v7843 = vpop.f32.mrb[0].mxu0
    %v7844 = vpop.f32.mrb[0].mxu0
    %v7845 = vadd.f32 0.0, %v7844
    %v7846 = vpop.f32.mrb[0].mxu0
    %7847 = vmatprep.mubr.bf16.mxu0 0
    %7848 = vmatmul.mubr.bf16.gmra.mrb[0].mxu0 %v7630
    %v7849 = vpop.f32.mrb[0].mxu0
    %v7850 = vadd.f32 0.0, %v7849
    %v7851 = vpop.f32.mrb[0].mxu0
    %v7852 = vpop.f32.mrb[0].mxu0
    %v7853 = vadd.f32 0.0, %v7852
    %v7854 = vpop.f32.mrb[0].mxu0
    %7855 = vmatprep.mubr.bf16.mxu0 0
    %7856 = vmatmul.mubr.bf16.gmra.mrb[0].mxu0 %v7633
    %v7857 = vpop.f32.mrb[0].mxu0
    %v7858 = vadd.f32 0.0, %v7857
    %v7859 = vpop.f32.mrb[0].mxu0
    %v7860 = vpop.f32.mrb[0].mxu0
    %v7861 = vadd.f32 0.0, %v7860
    %v7862 = vpop.f32.mrb[0].mxu0
    %7863 = vmatprep.mubr.bf16.mxu0 0
    %7864 = vmatmul.mubr.bf16.gmra.mrb[0].mxu0 %v7636
    %v7865 = vpop.f32.mrb[0].mxu0
    %v7866 = vadd.f32 0.0, %v7865
    %v7867 = vpop.f32.mrb[0].mxu0
    %v7868 = vpop.f32.mrb[0].mxu0
    %v7869 = vadd.f32 0.0, %v7868
    %v7870 = vpop.f32.mrb[0].mxu0
    %7871 = vmatprep.mubr.bf16.mxu0 0
    %7872 = vmatmul.mubr.bf16.gmra.mrb[0].mxu0 %v7639
    %v7873 = vpop.f32.mrb[0].mxu0
    %v7874 = vadd.f32 0.0, %v7873
    %v7875 = vpop.f32.mrb[0].mxu0
    %v7876 = vpop.f32.mrb[0].mxu0
    %v7877 = vadd.f32 0.0, %v7876
    %v7878 = vpop.f32.mrb[0].mxu0
    %7879 = vmatprep.mubr.bf16.mxu0 0
    %7880 = vmatmul.mubr.bf16.gmra.mrb[0].mxu0 %v7642
    %v7881 = vpop.f32.mrb[0].mxu0
    %v7882 = vadd.f32 0.0, %v7881
    %v7883 = vpop.f32.mrb[0].mxu0
    %v7884 = vpop.f32.mrb[0].mxu0
    %v7885 = vadd.f32 0.0, %v7884
    %v7886 = vpop.f32.mrb[0].mxu0
    %7887 = vmatprep.mubr.bf16.mxu0 0
    %7888 = vmatmul.mubr.bf16.gmra.mrb[0].mxu0 %v7645
    %v7889 = vpop.f32.mrb[0].mxu0
    %v7890 = vadd.f32 0.0, %v7889
    %v7891 = vpop.f32.mrb[0].mxu0
    %v7892 = vpop.f32.mrb[0].mxu0
    %v7893 = vadd.f32 0.0, %v7892
    %v7894 = vpop.f32.mrb[0].mxu0
    %7895 = vmatprep.mubr.bf16.mxu0 0
    %7896 = vmatmul.mubr.bf16.gmra.mrb[0].mxu0 %v7648
    %v7897 = vpop.f32.mrb[0].mxu0
    %v7898 = vadd.f32 0.0, %v7897
    %v7899 = vpop.f32.mrb[0].mxu0
    %v7900 = vpop.f32.mrb[0].mxu0
    %v7901 = vadd.f32 0.0, %v7900
    %v7902 = vpop.f32.mrb[0].mxu0
    %7903 = vmatprep.mubr.bf16.mxu0 0
    %7904 = vmatmul.mubr.bf16.gmra.mrb[0].mxu0 %v7651
    %v7905 = vpop.f32.mrb[0].mxu0
    %v7906 = vadd.f32 0.0, %v7905
    %v7907 = vpop.f32.mrb[0].mxu0
    %v7908 = vpop.f32.mrb[0].mxu0
    %v7909 = vadd.f32 0.0, %v7908
    %v7910 = vpop.f32.mrb[0].mxu0
    %7911 = vmatprep.mubr.bf16.mxu0 0
    %7912 = vmatmul.mubr.bf16.gmra.mrb[0].mxu0 %v7654
    %v7913 = vpop.f32.mrb[0].mxu0
    %v7914 = vadd.f32 0.0, %v7913
    %v7915 = vpop.f32.mrb[0].mxu0
    %v7916 = vpop.f32.mrb[0].mxu0
    %v7917 = vadd.f32 0.0, %v7916
    %v7918 = vpop.f32.mrb[0].mxu0
    %7919 = vmatprep.mubr.bf16.mxu0 0
    %7920 = vmatmul.mubr.bf16.gmra.mrb[0].mxu0 %v7657
    %v7921 = vpop.f32.mrb[0].mxu0
    %v7922 = vadd.f32 0.0, %v7921
    %v7923 = vpop.f32.mrb[0].mxu0
    %v7924 = vpop.f32.mrb[0].mxu0
    %v7925 = vadd.f32 0.0, %v7924
    %v7926 = vpop.f32.mrb[0].mxu0
    %7927 = vmatprep.mubr.bf16.mxu0 0
    %7928 = vmatmul.mubr.bf16.gmra.mrb[0].mxu0 %v7660
    %v7929 = vpop.f32.mrb[0].mxu0
    %v7930 = vadd.f32 0.0, %v7929
    %v7931 = vpop.f32.mrb[0].mxu0
    %v7932 = vpop.f32.mrb[0].mxu0
    %v7933 = vadd.f32 0.0, %v7932
    %v7934 = vpop.f32.mrb[0].mxu0
    %7935 = vmatprep.mubr.bf16.mxu0 0
    %7936 = vmatmul.mubr.bf16.gmra.mrb[0].mxu0 %v7663
    %v7937 = vpop.f32.mrb[0].mxu0
    %v7938 = vadd.f32 0.0, %v7937
    %v7939 = vpop.f32.mrb[0].mxu0
    %v7940 = vpop.f32.mrb[0].mxu0
    %v7941 = vadd.f32 0.0, %v7940
    %v7942 = vpop.f32.mrb[0].mxu0
    %7943 = vmatprep.mubr.bf16.mxu0 0
    %7944 = vmatmul.mubr.bf16.gmra.mrb[0].mxu0 %v7666
    %v7945 = vpop.f32.mrb[0].mxu0
    %v7946 = vadd.f32 0.0, %v7945
    %v7947 = vpop.f32.mrb[0].mxu0
    %v7948 = vpop.f32.mrb[0].mxu0
    %v7949 = vadd.f32 0.0, %v7948
    %v7950 = vpop.f32.mrb[0].mxu0
    %7951 = vmatprep.mubr.bf16.mxu0 0
    %7952 = vmatmul.mubr.bf16.gmra.mrb[0].mxu0 %v7669
    %v7953 = vpop.f32.mrb[0].mxu0
    %v7954 = vadd.f32 0.0, %v7953
    %v7955 = vpop.f32.mrb[0].mxu0
    %v7956 = vpop.f32.mrb[0].mxu0
    %v7957 = vadd.f32 0.0, %v7956
    %v7958 = vpop.f32.mrb[0].mxu0
    %7959 = vdwg.mxu0
    %v7960 = vadd.f32 %v7398, %v7706
    %v7961 = vadd.f32 %v7399, %v7709
    %v7962 = vadd.f32 %v7400, %v7714
    %v7963 = vadd.f32 %v7401, %v7717
    %v7964 = vadd.f32 %v7402, %v7722
    %v7965 = vadd.f32 %v7403, %v7725
    %v7966 = vadd.f32 %v7404, %v7730
    %v7967 = vadd.f32 %v7405, %v7733
    %v7968 = vadd.f32 %v7406, %v7738
    %v7969 = vadd.f32 %v7407, %v7741
    %v7970 = vadd.f32 %v7408, %v7746
    %v7971 = vadd.f32 %v7409, %v7749
    %v7972 = vadd.f32 %v7410, %v7754
    %v7973 = vadd.f32 %v7411, %v7757
    %v7974 = vadd.f32 %v7412, %v7762
    %v7975 = vadd.f32 %v7413, %v7765
    %v7976 = vadd.f32 %v7414, %v7770
    %v7977 = vadd.f32 %v7415, %v7773
    %v7978 = vadd.f32 %v7416, %v7778
    %v7979 = vadd.f32 %v7417, %v7781
    %v7980 = vadd.f32 %v7418, %v7786
    %v7981 = vadd.f32 %v7419, %v7789
    %v7982 = vadd.f32 %v7420, %v7794
    %v7983 = vadd.f32 %v7421, %v7797
    %v7984 = vadd.f32 %v7422, %v7802
    %v7985 = vadd.f32 %v7423, %v7805
    %v7986 = vadd.f32 %v7424, %v7810
    %v7987 = vadd.f32 %v7425, %v7813
    %v7988 = vadd.f32 %v7426, %v7818
    %v7989 = vadd.f32 %v7427, %v7821
    %v7990 = vadd.f32 %v7428, %v7826
    %v7991 = vadd.f32 %v7429, %v7829
    %v7992 = vadd.f32 %v7430, %v7834
    %v7993 = vadd.f32 %v7431, %v7837
    %v7994 = vadd.f32 %v7432, %v7842
    %v7995 = vadd.f32 %v7433, %v7845
    %v7996 = vadd.f32 %v7434, %v7850
    %v7997 = vadd.f32 %v7435, %v7853
    %v7998 = vadd.f32 %v7436, %v7858
    %v7999 = vadd.f32 %v7437, %v7861
    %v8000 = vadd.f32 %v7438, %v7866
    %v8001 = vadd.f32 %v7439, %v7869
    %v8002 = vadd.f32 %v7440, %v7874
    %v8003 = vadd.f32 %v7441, %v7877
    %v8004 = vadd.f32 %v7442, %v7882
    %v8005 = vadd.f32 %v7443, %v7885
    %v8006 = vadd.f32 %v7444, %v7890
    %v8007 = vadd.f32 %v7445, %v7893
    %v8008 = vadd.f32 %v7446, %v7898
    %v8009 = vadd.f32 %v7447, %v7901
    %v8010 = vadd.f32 %v7448, %v7906
    %v8011 = vadd.f32 %v7449, %v7909
    %v8012 = vadd.f32 %v7450, %v7914
    %v8013 = vadd.f32 %v7451, %v7917
    %v8014 = vadd.f32 %v7452, %v7922
    %v8015 = vadd.f32 %v7453, %v7925
    %v8016 = vadd.f32 %v7454, %v7930
    %v8017 = vadd.f32 %v7455, %v7933
    %v8018 = vadd.f32 %v7456, %v7938
    %v8019 = vadd.f32 %v7457, %v7941
    %v8020 = vadd.f32 %v7458, %v7946
    %v8021 = vadd.f32 %v7459, %v7949
    %v8022 = vadd.f32 %v7460, %v7954
    %v8023 = vadd.f32 %v7461, %v7957
    %v8024 = vld [vmem:[%s242 + $0x1] sm:$0xff]
    %v8025 = vld [vmem:[%s242 + $0x9] sm:$0xff]
    %v8026 = vld [vmem:[%s242 + $0x19] sm:$0xff]
    %v8027 = vld [vmem:[%s242 + $0x21] sm:$0xff]
    %v8028 = vld [vmem:[%s242 + $0x31] sm:$0xff]
    %v8029 = vld [vmem:[%s242 + $0x39] sm:$0xff]
    %v8030 = vld [vmem:[%s242 + $0x49] sm:$0xff]
    %v8031 = vld [vmem:[%s242 + $0x51] sm:$0xff]
    %v8032 = vld [vmem:[%s242 + $0x61] sm:$0xff]
    %v8033 = vld [vmem:[%s242 + $0x69] sm:$0xff]
    %v8034 = vld [vmem:[%s242 + $0x79] sm:$0xff]
    %v8035 = vld [vmem:[%s242 + $0x81] sm:$0xff]
    %v8036 = vld [vmem:[%s242 + $0x91] sm:$0xff]
    %v8037 = vld [vmem:[%s242 + $0x99] sm:$0xff]
    %v8038 = vld [vmem:[%s242 + $0xa9] sm:$0xff]
    %v8039 = vld [vmem:[%s242 + $0xb1] sm:$0xff]
    %v8040 = vld [vmem:[%s242 + $0xc1] sm:$0xff]
    %v8041 = vld [vmem:[%s242 + $0xc9] sm:$0xff]
    %v8042 = vld [vmem:[%s242 + $0xd9] sm:$0xff]
    %v8043 = vld [vmem:[%s242 + $0xe1] sm:$0xff]
    %v8044 = vld [vmem:[%s242 + $0xf1] sm:$0xff]
    %v8045 = vld [vmem:[%s242 + $0xf9] sm:$0xff]
    %v8046 = vld [vmem:[%s242 + $0x109] sm:$0xff]
    %v8047 = vld [vmem:[%s242 + $0x111] sm:$0xff]
    %v8048 = vld [vmem:[%s242 + $0x121] sm:$0xff]
    %v8049 = vld [vmem:[%s242 + $0x129] sm:$0xff]
    %v8050 = vld [vmem:[%s242 + $0x139] sm:$0xff]
    %v8051 = vld [vmem:[%s242 + $0x141] sm:$0xff]
    %v8052 = vld [vmem:[%s242 + $0x151] sm:$0xff]
    %v8053 = vld [vmem:[%s242 + $0x159] sm:$0xff]
    %v8054 = vld [vmem:[%s242 + $0x169] sm:$0xff]
    %v8055 = vld [vmem:[%s242 + $0x171] sm:$0xff]
    %v8056 = vld [vmem:[%s242 + $0x1b1] sm:$0xff]
    %v8057 = vld [vmem:[%s242 + $0x1b9] sm:$0xff]
    %v8058 = vld [vmem:[%s242 + $0x1c9] sm:$0xff]
    %v8059 = vld [vmem:[%s242 + $0x1d1] sm:$0xff]
    %v8060 = vld [vmem:[%s242 + $0x1e1] sm:$0xff]
    %v8061 = vld [vmem:[%s242 + $0x1e9] sm:$0xff]
    %v8062 = vld [vmem:[%s242 + $0x1f9] sm:$0xff]
    %v8063 = vld [vmem:[%s242 + $0x201] sm:$0xff]
    %v8064 = vld [vmem:[%s242 + $0x211] sm:$0xff]
    %v8065 = vld [vmem:[%s242 + $0x219] sm:$0xff]
    %v8066 = vld [vmem:[%s242 + $0x229] sm:$0xff]
    %v8067 = vld [vmem:[%s242 + $0x231] sm:$0xff]
    %v8068 = vld [vmem:[%s242 + $0x241] sm:$0xff]
    %v8069 = vld [vmem:[%s242 + $0x249] sm:$0xff]
    %v8070 = vld [vmem:[%s242 + $0x259] sm:$0xff]
    %v8071 = vld [vmem:[%s242 + $0x261] sm:$0xff]
    %v8072 = vld [vmem:[%s242 + $0x271] sm:$0xff]
    %v8073 = vld [vmem:[%s242 + $0x279] sm:$0xff]
    %v8074 = vld [vmem:[%s242 + $0x289] sm:$0xff]
    %v8075 = vld [vmem:[%s242 + $0x291] sm:$0xff]
    %v8076 = vld [vmem:[%s242 + $0x2a1] sm:$0xff]
    %v8077 = vld [vmem:[%s242 + $0x2a9] sm:$0xff]
    %v8078 = vld [vmem:[%s242 + $0x2b9] sm:$0xff]
    %v8079 = vld [vmem:[%s242 + $0x2c1] sm:$0xff]
    %v8080 = vld [vmem:[%s242 + $0x2d1] sm:$0xff]
    %v8081 = vld [vmem:[%s242 + $0x2d9] sm:$0xff]
    %v8082 = vld [vmem:[%s242 + $0x2e9] sm:$0xff]
    %v8083 = vld [vmem:[%s242 + $0x2f1] sm:$0xff]
    %v8084 = vld [vmem:[%s242 + $0x301] sm:$0xff]
    %v8085 = vld [vmem:[%s242 + $0x309] sm:$0xff]
    %v8086 = vld [vmem:[%s242 + $0x319] sm:$0xff]
    %v8087 = vld [vmem:[%s242 + $0x321] sm:$0xff]
    %v8088 = vpack.c.bf16 %v8025, %v8024
    %v8089 = vpack.c.bf16 %v8027, %v8026
    %v8090 = vpack.c.bf16 %v8029, %v8028
    %v8091 = vpack.c.bf16 %v8031, %v8030
    %v8092 = vpack.c.bf16 %v8033, %v8032
    %v8093 = vpack.c.bf16 %v8035, %v8034
    %v8094 = vpack.c.bf16 %v8037, %v8036
    %v8095 = vpack.c.bf16 %v8039, %v8038
    %v8096 = vpack.c.bf16 %v8041, %v8040
    %v8097 = vpack.c.bf16 %v8043, %v8042
    %v8098 = vpack.c.bf16 %v8045, %v8044
    %v8099 = vpack.c.bf16 %v8047, %v8046
    %v8100 = vpack.c.bf16 %v8049, %v8048
    %v8101 = vpack.c.bf16 %v8051, %v8050
    %v8102 = vpack.c.bf16 %v8053, %v8052
    %v8103 = vpack.c.bf16 %v8055, %v8054
    %v8104 = vpack.c.bf16 %v8057, %v8056
    %v8105 = vpack.c.bf16 %v8059, %v8058
    %v8106 = vpack.c.bf16 %v8061, %v8060
    %v8107 = vpack.c.bf16 %v8063, %v8062
    %v8108 = vpack.c.bf16 %v8065, %v8064
    %v8109 = vpack.c.bf16 %v8067, %v8066
    %v8110 = vpack.c.bf16 %v8069, %v8068
    %v8111 = vpack.c.bf16 %v8071, %v8070
    %v8112 = vpack.c.bf16 %v8073, %v8072
    %v8113 = vpack.c.bf16 %v8075, %v8074
    %v8114 = vpack.c.bf16 %v8077, %v8076
    %v8115 = vpack.c.bf16 %v8079, %v8078
    %v8116 = vpack.c.bf16 %v8081, %v8080
    %v8117 = vpack.c.bf16 %v8083, %v8082
    %v8118 = vpack.c.bf16 %v8085, %v8084
    %v8119 = vpack.c.bf16 %v8087, %v8086
    %s8120 = scalar_lea.vmem [#allocation7], 64
    %v8121 = vld [vmem:[%s8120] sm:$0xf]
    %v8122 = vld [vmem:[%s8120 + $0x4] sm:$0xf]
    %v8123 = vld [vmem:[%s8120 + $0x8] sm:$0xf]
    %v8124 = vld [vmem:[%s8120 + $0xc] sm:$0xf]
    %v8129 = vunpack.c.l.b16 %v8121
    %v8130 = vunpack.c.l.b16 %v8122
    %v8131 = vunpack.c.l.b16 %v8123
    %v8132 = vunpack.c.l.b16 %v8124
    %v8133 = vpack.c.b16 %v8130, %v8129
    %v8134 = vpack.c.b16 %v8132, %v8131
    %v8138 = vsel %vm68, %v8088, 0
    %v8141 = vsel %vm68, %v8089, 0
    %v8144 = vsel %vm68, %v8090, 0
    %v8147 = vsel %vm68, %v8091, 0
    %v8150 = vsel %vm68, %v8092, 0
    %v8153 = vsel %vm68, %v8093, 0
    %v8156 = vsel %vm68, %v8094, 0
    %v8159 = vsel %vm68, %v8095, 0
    %v8162 = vsel %vm68, %v8096, 0
    %v8165 = vsel %vm68, %v8097, 0
    %v8168 = vsel %vm68, %v8098, 0
    %v8171 = vsel %vm68, %v8099, 0
    %v8174 = vsel %vm68, %v8100, 0
    %v8177 = vsel %vm68, %v8101, 0
    %v8180 = vsel %vm68, %v8102, 0
    %v8183 = vsel %vm68, %v8103, 0
    %v8186 = vsel %vm68, %v8104, 0
    %v8189 = vsel %vm68, %v8105, 0
    %v8192 = vsel %vm68, %v8106, 0
    %v8195 = vsel %vm68, %v8107, 0
    %v8198 = vsel %vm68, %v8108, 0
    %v8201 = vsel %vm68, %v8109, 0
    %v8204 = vsel %vm68, %v8110, 0
    %v8207 = vsel %vm68, %v8111, 0
    %v8210 = vsel %vm68, %v8112, 0
    %v8213 = vsel %vm68, %v8113, 0
    %v8216 = vsel %vm68, %v8114, 0
    %v8219 = vsel %vm68, %v8115, 0
    %v8222 = vsel %vm68, %v8116, 0
    %v8225 = vsel %vm68, %v8117, 0
    %v8228 = vsel %vm68, %v8118, 0
    %v8231 = vsel %vm68, %v8119, 0
    %8233 = vmatprep.subr.bf16.mxu0 0
    %8234 = vmatpush1.bf16.msra.mxu0 %v8133
    %8235 = vmatprep.subr.bf16.mxu0 0
    %8236 = vmatpush1.bf16.msra.mxu0 %v8134
    %8237 = vmatprep.subr.bf16.mxu0 0
    %8238 = vmatpush1.bf16.msra.mxu0 0
    %8239 = vmatprep.subr.bf16.mxu0 0
    %8240 = vmatpush1.bf16.msra.mxu0 0
    %8241 = vmatprep.subr.bf16.mxu0 0
    %8242 = vmatpush1.bf16.msra.mxu0 0
    %8243 = vmatprep.subr.bf16.mxu0 0
    %8244 = vmatpush1.bf16.msra.mxu0 0
    %8245 = vmatprep.subr.bf16.mxu0 0
    %8246 = vmatpush1.bf16.msra.mxu0 0
    %8247 = vmatprep.subr.bf16.mxu0 0
    %8248 = vmatpush1.bf16.msra.mxu0 0
    %8249 = vmatprep.subr.bf16.mxu0 0
    %8250 = vmatpush1.bf16.msra.mxu0 0
    %8251 = vmatprep.subr.bf16.mxu0 0
    %8252 = vmatpush1.bf16.msra.mxu0 0
    %8253 = vmatprep.subr.bf16.mxu0 0
    %8254 = vmatpush1.bf16.msra.mxu0 0
    %8255 = vmatprep.subr.bf16.mxu0 0
    %8256 = vmatpush1.bf16.msra.mxu0 0
    %8257 = vmatprep.subr.bf16.mxu0 0
    %8258 = vmatpush1.bf16.msra.mxu0 0
    %8259 = vmatprep.subr.bf16.mxu0 0
    %8260 = vmatpush1.bf16.msra.mxu0 0
    %8261 = vmatprep.subr.bf16.mxu0 0
    %8262 = vmatpush1.bf16.msra.mxu0 0
    %8263 = vmatprep.subr.bf16.mxu0 0
    %8264 = vmatpush1.bf16.msra.mxu0 0
    %8265 = vmatprep.mubr.bf16.mxu0 0
    %8266 = vmatmul.mubr.bf16.gmra.mrb[0].mxu0 %v8138
    %v8267 = vpop.f32.mrb[0].mxu0
    %v8268 = vadd.f32 0.0, %v8267
    %v8269 = vpop.f32.mrb[0].mxu0
    %v8270 = vpop.f32.mrb[0].mxu0
    %v8271 = vadd.f32 0.0, %v8270
    %v8272 = vpop.f32.mrb[0].mxu0
    %8273 = vmatprep.mubr.bf16.mxu0 0
    %8274 = vmatmul.mubr.bf16.gmra.mrb[0].mxu0 %v8141
    %v8275 = vpop.f32.mrb[0].mxu0
    %v8276 = vadd.f32 0.0, %v8275
    %v8277 = vpop.f32.mrb[0].mxu0
    %v8278 = vpop.f32.mrb[0].mxu0
    %v8279 = vadd.f32 0.0, %v8278
    %v8280 = vpop.f32.mrb[0].mxu0
    %8281 = vmatprep.mubr.bf16.mxu0 0
    %8282 = vmatmul.mubr.bf16.gmra.mrb[0].mxu0 %v8144
    %v8283 = vpop.f32.mrb[0].mxu0
    %v8284 = vadd.f32 0.0, %v8283
    %v8285 = vpop.f32.mrb[0].mxu0
    %v8286 = vpop.f32.mrb[0].mxu0
    %v8287 = vadd.f32 0.0, %v8286
    %v8288 = vpop.f32.mrb[0].mxu0
    %8289 = vmatprep.mubr.bf16.mxu0 0
    %8290 = vmatmul.mubr.bf16.gmra.mrb[0].mxu0 %v8147
    %v8291 = vpop.f32.mrb[0].mxu0
    %v8292 = vadd.f32 0.0, %v8291
    %v8293 = vpop.f32.mrb[0].mxu0
    %v8294 = vpop.f32.mrb[0].mxu0
    %v8295 = vadd.f32 0.0, %v8294
    %v8296 = vpop.f32.mrb[0].mxu0
    %8297 = vmatprep.mubr.bf16.mxu0 0
    %8298 = vmatmul.mubr.bf16.gmra.mrb[0].mxu0 %v8150
    %v8299 = vpop.f32.mrb[0].mxu0
    %v8300 = vadd.f32 0.0, %v8299
    %v8301 = vpop.f32.mrb[0].mxu0
    %v8302 = vpop.f32.mrb[0].mxu0
    %v8303 = vadd.f32 0.0, %v8302
    %v8304 = vpop.f32.mrb[0].mxu0
    %8305 = vmatprep.mubr.bf16.mxu0 0
    %8306 = vmatmul.mubr.bf16.gmra.mrb[0].mxu0 %v8153
    %v8307 = vpop.f32.mrb[0].mxu0
    %v8308 = vadd.f32 0.0, %v8307
    %v8309 = vpop.f32.mrb[0].mxu0
    %v8310 = vpop.f32.mrb[0].mxu0
    %v8311 = vadd.f32 0.0, %v8310
    %v8312 = vpop.f32.mrb[0].mxu0
    %8313 = vmatprep.mubr.bf16.mxu0 0
    %8314 = vmatmul.mubr.bf16.gmra.mrb[0].mxu0 %v8156
    %v8315 = vpop.f32.mrb[0].mxu0
    %v8316 = vadd.f32 0.0, %v8315
    %v8317 = vpop.f32.mrb[0].mxu0
    %v8318 = vpop.f32.mrb[0].mxu0
    %v8319 = vadd.f32 0.0, %v8318
    %v8320 = vpop.f32.mrb[0].mxu0
    %8321 = vmatprep.mubr.bf16.mxu0 0
    %8322 = vmatmul.mubr.bf16.gmra.mrb[0].mxu0 %v8159
    %v8323 = vpop.f32.mrb[0].mxu0
    %v8324 = vadd.f32 0.0, %v8323
    %v8325 = vpop.f32.mrb[0].mxu0
    %v8326 = vpop.f32.mrb[0].mxu0
    %v8327 = vadd.f32 0.0, %v8326
    %v8328 = vpop.f32.mrb[0].mxu0
    %8329 = vmatprep.mubr.bf16.mxu0 0
    %8330 = vmatmul.mubr.bf16.gmra.mrb[0].mxu0 %v8162
    %v8331 = vpop.f32.mrb[0].mxu0
    %v8332 = vadd.f32 0.0, %v8331
    %v8333 = vpop.f32.mrb[0].mxu0
    %v8334 = vpop.f32.mrb[0].mxu0
    %v8335 = vadd.f32 0.0, %v8334
    %v8336 = vpop.f32.mrb[0].mxu0
    %8337 = vmatprep.mubr.bf16.mxu0 0
    %8338 = vmatmul.mubr.bf16.gmra.mrb[0].mxu0 %v8165
    %v8339 = vpop.f32.mrb[0].mxu0
    %v8340 = vadd.f32 0.0, %v8339
    %v8341 = vpop.f32.mrb[0].mxu0
    %v8342 = vpop.f32.mrb[0].mxu0
    %v8343 = vadd.f32 0.0, %v8342
    %v8344 = vpop.f32.mrb[0].mxu0
    %8345 = vmatprep.mubr.bf16.mxu0 0
    %8346 = vmatmul.mubr.bf16.gmra.mrb[0].mxu0 %v8168
    %v8347 = vpop.f32.mrb[0].mxu0
    %v8348 = vadd.f32 0.0, %v8347
    %v8349 = vpop.f32.mrb[0].mxu0
    %v8350 = vpop.f32.mrb[0].mxu0
    %v8351 = vadd.f32 0.0, %v8350
    %v8352 = vpop.f32.mrb[0].mxu0
    %8353 = vmatprep.mubr.bf16.mxu0 0
    %8354 = vmatmul.mubr.bf16.gmra.mrb[0].mxu0 %v8171
    %v8355 = vpop.f32.mrb[0].mxu0
    %v8356 = vadd.f32 0.0, %v8355
    %v8357 = vpop.f32.mrb[0].mxu0
    %v8358 = vpop.f32.mrb[0].mxu0
    %v8359 = vadd.f32 0.0, %v8358
    %v8360 = vpop.f32.mrb[0].mxu0
    %8361 = vmatprep.mubr.bf16.mxu0 0
    %8362 = vmatmul.mubr.bf16.gmra.mrb[0].mxu0 %v8174
    %v8363 = vpop.f32.mrb[0].mxu0
    %v8364 = vadd.f32 0.0, %v8363
    %v8365 = vpop.f32.mrb[0].mxu0
    %v8366 = vpop.f32.mrb[0].mxu0
    %v8367 = vadd.f32 0.0, %v8366
    %v8368 = vpop.f32.mrb[0].mxu0
    %8369 = vmatprep.mubr.bf16.mxu0 0
    %8370 = vmatmul.mubr.bf16.gmra.mrb[0].mxu0 %v8177
    %v8371 = vpop.f32.mrb[0].mxu0
    %v8372 = vadd.f32 0.0, %v8371
    %v8373 = vpop.f32.mrb[0].mxu0
    %v8374 = vpop.f32.mrb[0].mxu0
    %v8375 = vadd.f32 0.0, %v8374
    %v8376 = vpop.f32.mrb[0].mxu0
    %8377 = vmatprep.mubr.bf16.mxu0 0
    %8378 = vmatmul.mubr.bf16.gmra.mrb[0].mxu0 %v8180
    %v8379 = vpop.f32.mrb[0].mxu0
    %v8380 = vadd.f32 0.0, %v8379
    %v8381 = vpop.f32.mrb[0].mxu0
    %v8382 = vpop.f32.mrb[0].mxu0
    %v8383 = vadd.f32 0.0, %v8382
    %v8384 = vpop.f32.mrb[0].mxu0
    %8385 = vmatprep.mubr.bf16.mxu0 0
    %8386 = vmatmul.mubr.bf16.gmra.mrb[0].mxu0 %v8183
    %v8387 = vpop.f32.mrb[0].mxu0
    %v8388 = vadd.f32 0.0, %v8387
    %v8389 = vpop.f32.mrb[0].mxu0
    %v8390 = vpop.f32.mrb[0].mxu0
    %v8391 = vadd.f32 0.0, %v8390
    %v8392 = vpop.f32.mrb[0].mxu0
    %8393 = vmatprep.mubr.bf16.mxu0 0
    %8394 = vmatmul.mubr.bf16.gmra.mrb[0].mxu0 %v8186
    %v8395 = vpop.f32.mrb[0].mxu0
    %v8396 = vadd.f32 0.0, %v8395
    %v8397 = vpop.f32.mrb[0].mxu0
    %v8398 = vpop.f32.mrb[0].mxu0
    %v8399 = vadd.f32 0.0, %v8398
    %v8400 = vpop.f32.mrb[0].mxu0
    %8401 = vmatprep.mubr.bf16.mxu0 0
    %8402 = vmatmul.mubr.bf16.gmra.mrb[0].mxu0 %v8189
    %v8403 = vpop.f32.mrb[0].mxu0
    %v8404 = vadd.f32 0.0, %v8403
    %v8405 = vpop.f32.mrb[0].mxu0
    %v8406 = vpop.f32.mrb[0].mxu0
    %v8407 = vadd.f32 0.0, %v8406
    %v8408 = vpop.f32.mrb[0].mxu0
    %8409 = vmatprep.mubr.bf16.mxu0 0
    %8410 = vmatmul.mubr.bf16.gmra.mrb[0].mxu0 %v8192
    %v8411 = vpop.f32.mrb[0].mxu0
    %v8412 = vadd.f32 0.0, %v8411
    %v8413 = vpop.f32.mrb[0].mxu0
    %v8414 = vpop.f32.mrb[0].mxu0
    %v8415 = vadd.f32 0.0, %v8414
    %v8416 = vpop.f32.mrb[0].mxu0
    %8417 = vmatprep.mubr.bf16.mxu0 0
    %8418 = vmatmul.mubr.bf16.gmra.mrb[0].mxu0 %v8195
    %v8419 = vpop.f32.mrb[0].mxu0
    %v8420 = vadd.f32 0.0, %v8419
    %v8421 = vpop.f32.mrb[0].mxu0
    %v8422 = vpop.f32.mrb[0].mxu0
    %v8423 = vadd.f32 0.0, %v8422
    %v8424 = vpop.f32.mrb[0].mxu0
    %8425 = vmatprep.mubr.bf16.mxu0 0
    %8426 = vmatmul.mubr.bf16.gmra.mrb[0].mxu0 %v8198
    %v8427 = vpop.f32.mrb[0].mxu0
    %v8428 = vadd.f32 0.0, %v8427
    %v8429 = vpop.f32.mrb[0].mxu0
    %v8430 = vpop.f32.mrb[0].mxu0
    %v8431 = vadd.f32 0.0, %v8430
    %v8432 = vpop.f32.mrb[0].mxu0
    %8433 = vmatprep.mubr.bf16.mxu0 0
    %8434 = vmatmul.mubr.bf16.gmra.mrb[0].mxu0 %v8201
    %v8435 = vpop.f32.mrb[0].mxu0
    %v8436 = vadd.f32 0.0, %v8435
    %v8437 = vpop.f32.mrb[0].mxu0
    %v8438 = vpop.f32.mrb[0].mxu0
    %v8439 = vadd.f32 0.0, %v8438
    %v8440 = vpop.f32.mrb[0].mxu0
    %8441 = vmatprep.mubr.bf16.mxu0 0
    %8442 = vmatmul.mubr.bf16.gmra.mrb[0].mxu0 %v8204
    %v8443 = vpop.f32.mrb[0].mxu0
    %v8444 = vadd.f32 0.0, %v8443
    %v8445 = vpop.f32.mrb[0].mxu0
    %v8446 = vpop.f32.mrb[0].mxu0
    %v8447 = vadd.f32 0.0, %v8446
    %v8448 = vpop.f32.mrb[0].mxu0
    %8449 = vmatprep.mubr.bf16.mxu0 0
    %8450 = vmatmul.mubr.bf16.gmra.mrb[0].mxu0 %v8207
    %v8451 = vpop.f32.mrb[0].mxu0
    %v8452 = vadd.f32 0.0, %v8451
    %v8453 = vpop.f32.mrb[0].mxu0
    %v8454 = vpop.f32.mrb[0].mxu0
    %v8455 = vadd.f32 0.0, %v8454
    %v8456 = vpop.f32.mrb[0].mxu0
    %8457 = vmatprep.mubr.bf16.mxu0 0
    %8458 = vmatmul.mubr.bf16.gmra.mrb[0].mxu0 %v8210
    %v8459 = vpop.f32.mrb[0].mxu0
    %v8460 = vadd.f32 0.0, %v8459
    %v8461 = vpop.f32.mrb[0].mxu0
    %v8462 = vpop.f32.mrb[0].mxu0
    %v8463 = vadd.f32 0.0, %v8462
    %v8464 = vpop.f32.mrb[0].mxu0
    %8465 = vmatprep.mubr.bf16.mxu0 0
    %8466 = vmatmul.mubr.bf16.gmra.mrb[0].mxu0 %v8213
    %v8467 = vpop.f32.mrb[0].mxu0
    %v8468 = vadd.f32 0.0, %v8467
    %v8469 = vpop.f32.mrb[0].mxu0
    %v8470 = vpop.f32.mrb[0].mxu0
    %v8471 = vadd.f32 0.0, %v8470
    %v8472 = vpop.f32.mrb[0].mxu0
    %8473 = vmatprep.mubr.bf16.mxu0 0
    %8474 = vmatmul.mubr.bf16.gmra.mrb[0].mxu0 %v8216
    %v8475 = vpop.f32.mrb[0].mxu0
    %v8476 = vadd.f32 0.0, %v8475
    %v8477 = vpop.f32.mrb[0].mxu0
    %v8478 = vpop.f32.mrb[0].mxu0
    %v8479 = vadd.f32 0.0, %v8478
    %v8480 = vpop.f32.mrb[0].mxu0
    %8481 = vmatprep.mubr.bf16.mxu0 0
    %8482 = vmatmul.mubr.bf16.gmra.mrb[0].mxu0 %v8219
    %v8483 = vpop.f32.mrb[0].mxu0
    %v8484 = vadd.f32 0.0, %v8483
    %v8485 = vpop.f32.mrb[0].mxu0
    %v8486 = vpop.f32.mrb[0].mxu0
    %v8487 = vadd.f32 0.0, %v8486
    %v8488 = vpop.f32.mrb[0].mxu0
    %8489 = vmatprep.mubr.bf16.mxu0 0
    %8490 = vmatmul.mubr.bf16.gmra.mrb[0].mxu0 %v8222
    %v8491 = vpop.f32.mrb[0].mxu0
    %v8492 = vadd.f32 0.0, %v8491
    %v8493 = vpop.f32.mrb[0].mxu0
    %v8494 = vpop.f32.mrb[0].mxu0
    %v8495 = vadd.f32 0.0, %v8494
    %v8496 = vpop.f32.mrb[0].mxu0
    %8497 = vmatprep.mubr.bf16.mxu0 0
    %8498 = vmatmul.mubr.bf16.gmra.mrb[0].mxu0 %v8225
    %v8499 = vpop.f32.mrb[0].mxu0
    %v8500 = vadd.f32 0.0, %v8499
    %v8501 = vpop.f32.mrb[0].mxu0
    %v8502 = vpop.f32.mrb[0].mxu0
    %v8503 = vadd.f32 0.0, %v8502
    %v8504 = vpop.f32.mrb[0].mxu0
    %8505 = vmatprep.mubr.bf16.mxu0 0
    %8506 = vmatmul.mubr.bf16.gmra.mrb[0].mxu0 %v8228
    %v8507 = vpop.f32.mrb[0].mxu0
    %v8508 = vadd.f32 0.0, %v8507
    %v8509 = vpop.f32.mrb[0].mxu0
    %v8510 = vpop.f32.mrb[0].mxu0
    %v8511 = vadd.f32 0.0, %v8510
    %v8512 = vpop.f32.mrb[0].mxu0
    %8513 = vmatprep.mubr.bf16.mxu0 0
    %8514 = vmatmul.mubr.bf16.gmra.mrb[0].mxu0 %v8231
    %v8515 = vpop.f32.mrb[0].mxu0
    %v8516 = vadd.f32 0.0, %v8515
    %v8517 = vpop.f32.mrb[0].mxu0
    %v8518 = vpop.f32.mrb[0].mxu0
    %v8519 = vadd.f32 0.0, %v8518
    %v8520 = vpop.f32.mrb[0].mxu0
    %8521 = vdwg.mxu0
    %v8522 = vadd.f32 %v7960, %v8268
    %v8523 = vadd.f32 %v7961, %v8271
    %v8524 = vadd.f32 %v7962, %v8276
    %v8525 = vadd.f32 %v7963, %v8279
    %v8526 = vadd.f32 %v7964, %v8284
    %v8527 = vadd.f32 %v7965, %v8287
    %v8528 = vadd.f32 %v7966, %v8292
    %v8529 = vadd.f32 %v7967, %v8295
    %v8530 = vadd.f32 %v7968, %v8300
    %v8531 = vadd.f32 %v7969, %v8303
    %v8532 = vadd.f32 %v7970, %v8308
    %v8533 = vadd.f32 %v7971, %v8311
    %v8534 = vadd.f32 %v7972, %v8316
    %v8535 = vadd.f32 %v7973, %v8319
    %v8536 = vadd.f32 %v7974, %v8324
    %v8537 = vadd.f32 %v7975, %v8327
    %v8538 = vadd.f32 %v7976, %v8332
    %v8539 = vadd.f32 %v7977, %v8335
    %v8540 = vadd.f32 %v7978, %v8340
    %v8541 = vadd.f32 %v7979, %v8343
    %v8542 = vadd.f32 %v7980, %v8348
    %v8543 = vadd.f32 %v7981, %v8351
    %v8544 = vadd.f32 %v7982, %v8356
    %v8545 = vadd.f32 %v7983, %v8359
    %v8546 = vadd.f32 %v7984, %v8364
    %v8547 = vadd.f32 %v7985, %v8367
    %v8548 = vadd.f32 %v7986, %v8372
    %v8549 = vadd.f32 %v7987, %v8375
    %v8550 = vadd.f32 %v7988, %v8380
    %v8551 = vadd.f32 %v7989, %v8383
    %v8552 = vadd.f32 %v7990, %v8388
    %v8553 = vadd.f32 %v7991, %v8391
    %v8554 = vadd.f32 %v7992, %v8396
    %v8555 = vadd.f32 %v7993, %v8399
    %v8556 = vadd.f32 %v7994, %v8404
    %v8557 = vadd.f32 %v7995, %v8407
    %v8558 = vadd.f32 %v7996, %v8412
    %v8559 = vadd.f32 %v7997, %v8415
    %v8560 = vadd.f32 %v7998, %v8420
    %v8561 = vadd.f32 %v7999, %v8423
    %v8562 = vadd.f32 %v8000, %v8428
    %v8563 = vadd.f32 %v8001, %v8431
    %v8564 = vadd.f32 %v8002, %v8436
    %v8565 = vadd.f32 %v8003, %v8439
    %v8566 = vadd.f32 %v8004, %v8444
    %v8567 = vadd.f32 %v8005, %v8447
    %v8568 = vadd.f32 %v8006, %v8452
    %v8569 = vadd.f32 %v8007, %v8455
    %v8570 = vadd.f32 %v8008, %v8460
    %v8571 = vadd.f32 %v8009, %v8463
    %v8572 = vadd.f32 %v8010, %v8468
    %v8573 = vadd.f32 %v8011, %v8471
    %v8574 = vadd.f32 %v8012, %v8476
    %v8575 = vadd.f32 %v8013, %v8479
    %v8576 = vadd.f32 %v8014, %v8484
    %v8577 = vadd.f32 %v8015, %v8487
    %v8578 = vadd.f32 %v8016, %v8492
    %v8579 = vadd.f32 %v8017, %v8495
    %v8580 = vadd.f32 %v8018, %v8500
    %v8581 = vadd.f32 %v8019, %v8503
    %v8582 = vadd.f32 %v8020, %v8508
    %v8583 = vadd.f32 %v8021, %v8511
    %v8584 = vadd.f32 %v8022, %v8516
    %v8585 = vadd.f32 %v8023, %v8519
    %v8586 = vld [vmem:[%s242 + $0x2] sm:$0xff]
    %v8587 = vld [vmem:[%s242 + $0xa] sm:$0xff]
    %v8588 = vld [vmem:[%s242 + $0x1a] sm:$0xff]
    %v8589 = vld [vmem:[%s242 + $0x22] sm:$0xff]
    %v8590 = vld [vmem:[%s242 + $0x32] sm:$0xff]
    %v8591 = vld [vmem:[%s242 + $0x3a] sm:$0xff]
    %v8592 = vld [vmem:[%s242 + $0x4a] sm:$0xff]
    %v8593 = vld [vmem:[%s242 + $0x52] sm:$0xff]
    %v8594 = vld [vmem:[%s242 + $0x62] sm:$0xff]
    %v8595 = vld [vmem:[%s242 + $0x6a] sm:$0xff]
    %v8596 = vld [vmem:[%s242 + $0x7a] sm:$0xff]
    %v8597 = vld [vmem:[%s242 + $0x82] sm:$0xff]
    %v8598 = vld [vmem:[%s242 + $0x92] sm:$0xff]
    %v8599 = vld [vmem:[%s242 + $0x9a] sm:$0xff]
    %v8600 = vld [vmem:[%s242 + $0xaa] sm:$0xff]
    %v8601 = vld [vmem:[%s242 + $0xb2] sm:$0xff]
    %v8602 = vld [vmem:[%s242 + $0xc2] sm:$0xff]
    %v8603 = vld [vmem:[%s242 + $0xca] sm:$0xff]
    %v8604 = vld [vmem:[%s242 + $0xda] sm:$0xff]
    %v8605 = vld [vmem:[%s242 + $0xe2] sm:$0xff]
    %v8606 = vld [vmem:[%s242 + $0xf2] sm:$0xff]
    %v8607 = vld [vmem:[%s242 + $0xfa] sm:$0xff]
    %v8608 = vld [vmem:[%s242 + $0x10a] sm:$0xff]
    %v8609 = vld [vmem:[%s242 + $0x112] sm:$0xff]
    %v8610 = vld [vmem:[%s242 + $0x122] sm:$0xff]
    %v8611 = vld [vmem:[%s242 + $0x12a] sm:$0xff]
    %v8612 = vld [vmem:[%s242 + $0x13a] sm:$0xff]
    %v8613 = vld [vmem:[%s242 + $0x142] sm:$0xff]
    %v8614 = vld [vmem:[%s242 + $0x152] sm:$0xff]
    %v8615 = vld [vmem:[%s242 + $0x15a] sm:$0xff]
    %v8616 = vld [vmem:[%s242 + $0x16a] sm:$0xff]
    %v8617 = vld [vmem:[%s242 + $0x172] sm:$0xff]
    %v8618 = vld [vmem:[%s242 + $0x1b2] sm:$0xff]
    %v8619 = vld [vmem:[%s242 + $0x1ba] sm:$0xff]
    %v8620 = vld [vmem:[%s242 + $0x1ca] sm:$0xff]
    %v8621 = vld [vmem:[%s242 + $0x1d2] sm:$0xff]
    %v8622 = vld [vmem:[%s242 + $0x1e2] sm:$0xff]
    %v8623 = vld [vmem:[%s242 + $0x1ea] sm:$0xff]
    %v8624 = vld [vmem:[%s242 + $0x1fa] sm:$0xff]
    %v8625 = vld [vmem:[%s242 + $0x202] sm:$0xff]
    %v8626 = vld [vmem:[%s242 + $0x212] sm:$0xff]
    %v8627 = vld [vmem:[%s242 + $0x21a] sm:$0xff]
    %v8628 = vld [vmem:[%s242 + $0x22a] sm:$0xff]
    %v8629 = vld [vmem:[%s242 + $0x232] sm:$0xff]
    %v8630 = vld [vmem:[%s242 + $0x242] sm:$0xff]
    %v8631 = vld [vmem:[%s242 + $0x24a] sm:$0xff]
    %v8632 = vld [vmem:[%s242 + $0x25a] sm:$0xff]
    %v8633 = vld [vmem:[%s242 + $0x262] sm:$0xff]
    %v8634 = vld [vmem:[%s242 + $0x272] sm:$0xff]
    %v8635 = vld [vmem:[%s242 + $0x27a] sm:$0xff]
    %v8636 = vld [vmem:[%s242 + $0x28a] sm:$0xff]
    %v8637 = vld [vmem:[%s242 + $0x292] sm:$0xff]
    %v8638 = vld [vmem:[%s242 + $0x2a2] sm:$0xff]
    %v8639 = vld [vmem:[%s242 + $0x2aa] sm:$0xff]
    %v8640 = vld [vmem:[%s242 + $0x2ba] sm:$0xff]
    %v8641 = vld [vmem:[%s242 + $0x2c2] sm:$0xff]
    %v8642 = vld [vmem:[%s242 + $0x2d2] sm:$0xff]
    %v8643 = vld [vmem:[%s242 + $0x2da] sm:$0xff]
    %v8644 = vld [vmem:[%s242 + $0x2ea] sm:$0xff]
    %v8645 = vld [vmem:[%s242 + $0x2f2] sm:$0xff]
    %v8646 = vld [vmem:[%s242 + $0x302] sm:$0xff]
    %v8647 = vld [vmem:[%s242 + $0x30a] sm:$0xff]
    %v8648 = vld [vmem:[%s242 + $0x31a] sm:$0xff]
    %v8649 = vld [vmem:[%s242 + $0x322] sm:$0xff]
    %v8650 = vpack.c.bf16 %v8587, %v8586
    %v8651 = vpack.c.bf16 %v8589, %v8588
    %v8652 = vpack.c.bf16 %v8591, %v8590
    %v8653 = vpack.c.bf16 %v8593, %v8592
    %v8654 = vpack.c.bf16 %v8595, %v8594
    %v8655 = vpack.c.bf16 %v8597, %v8596
    %v8656 = vpack.c.bf16 %v8599, %v8598
    %v8657 = vpack.c.bf16 %v8601, %v8600
    %v8658 = vpack.c.bf16 %v8603, %v8602
    %v8659 = vpack.c.bf16 %v8605, %v8604
    %v8660 = vpack.c.bf16 %v8607, %v8606
    %v8661 = vpack.c.bf16 %v8609, %v8608
    %v8662 = vpack.c.bf16 %v8611, %v8610
    %v8663 = vpack.c.bf16 %v8613, %v8612
    %v8664 = vpack.c.bf16 %v8615, %v8614
    %v8665 = vpack.c.bf16 %v8617, %v8616
    %v8666 = vpack.c.bf16 %v8619, %v8618
    %v8667 = vpack.c.bf16 %v8621, %v8620
    %v8668 = vpack.c.bf16 %v8623, %v8622
    %v8669 = vpack.c.bf16 %v8625, %v8624
    %v8670 = vpack.c.bf16 %v8627, %v8626
    %v8671 = vpack.c.bf16 %v8629, %v8628
    %v8672 = vpack.c.bf16 %v8631, %v8630
    %v8673 = vpack.c.bf16 %v8633, %v8632
    %v8674 = vpack.c.bf16 %v8635, %v8634
    %v8675 = vpack.c.bf16 %v8637, %v8636
    %v8676 = vpack.c.bf16 %v8639, %v8638
    %v8677 = vpack.c.bf16 %v8641, %v8640
    %v8678 = vpack.c.bf16 %v8643, %v8642
    %v8679 = vpack.c.bf16 %v8645, %v8644
    %v8680 = vpack.c.bf16 %v8647, %v8646
    %v8681 = vpack.c.bf16 %v8649, %v8648
    %s8682 = scalar_lea.vmem [#allocation7], 80
    %v8683 = vld [vmem:[%s8682] sm:$0xf]
    %v8684 = vld [vmem:[%s8682 + $0x4] sm:$0xf]
    %v8685 = vld [vmem:[%s8682 + $0x8] sm:$0xf]
    %v8686 = vld [vmem:[%s8682 + $0xc] sm:$0xf]
    %v8691 = vunpack.c.l.b16 %v8683
    %v8692 = vunpack.c.l.b16 %v8684
    %v8693 = vunpack.c.l.b16 %v8685
    %v8694 = vunpack.c.l.b16 %v8686
    %v8695 = vpack.c.b16 %v8692, %v8691
    %v8696 = vpack.c.b16 %v8694, %v8693
    %v8700 = vsel %vm68, %v8650, 0
    %v8703 = vsel %vm68, %v8651, 0
    %v8706 = vsel %vm68, %v8652, 0
    %v8709 = vsel %vm68, %v8653, 0
    %v8712 = vsel %vm68, %v8654, 0
    %v8715 = vsel %vm68, %v8655, 0
    %v8718 = vsel %vm68, %v8656, 0
    %v8721 = vsel %vm68, %v8657, 0
    %v8724 = vsel %vm68, %v8658, 0
    %v8727 = vsel %vm68, %v8659, 0
    %v8730 = vsel %vm68, %v8660, 0
    %v8733 = vsel %vm68, %v8661, 0
    %v8736 = vsel %vm68, %v8662, 0
    %v8739 = vsel %vm68, %v8663, 0
    %v8742 = vsel %vm68, %v8664, 0
    %v8745 = vsel %vm68, %v8665, 0
    %v8748 = vsel %vm68, %v8666, 0
    %v8751 = vsel %vm68, %v8667, 0
    %v8754 = vsel %vm68, %v8668, 0
    %v8757 = vsel %vm68, %v8669, 0
    %v8760 = vsel %vm68, %v8670, 0
    %v8763 = vsel %vm68, %v8671, 0
    %v8766 = vsel %vm68, %v8672, 0
    %v8769 = vsel %vm68, %v8673, 0
    %v8772 = vsel %vm68, %v8674, 0
    %v8775 = vsel %vm68, %v8675, 0
    %v8778 = vsel %vm68, %v8676, 0
    %v8781 = vsel %vm68, %v8677, 0
    %v8784 = vsel %vm68, %v8678, 0
    %v8787 = vsel %vm68, %v8679, 0
    %v8790 = vsel %vm68, %v8680, 0
    %v8793 = vsel %vm68, %v8681, 0
    %8795 = vmatprep.subr.bf16.mxu0 0
    %8796 = vmatpush1.bf16.msra.mxu0 %v8695
    %8797 = vmatprep.subr.bf16.mxu0 0
    %8798 = vmatpush1.bf16.msra.mxu0 %v8696
    %8799 = vmatprep.subr.bf16.mxu0 0
    %8800 = vmatpush1.bf16.msra.mxu0 0
    %8801 = vmatprep.subr.bf16.mxu0 0
    %8802 = vmatpush1.bf16.msra.mxu0 0
    %8803 = vmatprep.subr.bf16.mxu0 0
    %8804 = vmatpush1.bf16.msra.mxu0 0
    %8805 = vmatprep.subr.bf16.mxu0 0
    %8806 = vmatpush1.bf16.msra.mxu0 0
    %8807 = vmatprep.subr.bf16.mxu0 0
    %8808 = vmatpush1.bf16.msra.mxu0 0
    %8809 = vmatprep.subr.bf16.mxu0 0
    %8810 = vmatpush1.bf16.msra.mxu0 0
    %8811 = vmatprep.subr.bf16.mxu0 0
    %8812 = vmatpush1.bf16.msra.mxu0 0
    %8813 = vmatprep.subr.bf16.mxu0 0
    %8814 = vmatpush1.bf16.msra.mxu0 0
    %8815 = vmatprep.subr.bf16.mxu0 0
    %8816 = vmatpush1.bf16.msra.mxu0 0
    %8817 = vmatprep.subr.bf16.mxu0 0
    %8818 = vmatpush1.bf16.msra.mxu0 0
    %8819 = vmatprep.subr.bf16.mxu0 0
    %8820 = vmatpush1.bf16.msra.mxu0 0
    %8821 = vmatprep.subr.bf16.mxu0 0
    %8822 = vmatpush1.bf16.msra.mxu0 0
    %8823 = vmatprep.subr.bf16.mxu0 0
    %8824 = vmatpush1.bf16.msra.mxu0 0
    %8825 = vmatprep.subr.bf16.mxu0 0
    %8826 = vmatpush1.bf16.msra.mxu0 0
    %8827 = vmatprep.mubr.bf16.mxu0 0
    %8828 = vmatmul.mubr.bf16.gmra.mrb[0].mxu0 %v8700
    %v8829 = vpop.f32.mrb[0].mxu0
    %v8830 = vadd.f32 0.0, %v8829
    %v8831 = vpop.f32.mrb[0].mxu0
    %v8832 = vpop.f32.mrb[0].mxu0
    %v8833 = vadd.f32 0.0, %v8832
    %v8834 = vpop.f32.mrb[0].mxu0
    %8835 = vmatprep.mubr.bf16.mxu0 0
    %8836 = vmatmul.mubr.bf16.gmra.mrb[0].mxu0 %v8703
    %v8837 = vpop.f32.mrb[0].mxu0
    %v8838 = vadd.f32 0.0, %v8837
    %v8839 = vpop.f32.mrb[0].mxu0
    %v8840 = vpop.f32.mrb[0].mxu0
    %v8841 = vadd.f32 0.0, %v8840
    %v8842 = vpop.f32.mrb[0].mxu0
    %8843 = vmatprep.mubr.bf16.mxu0 0
    %8844 = vmatmul.mubr.bf16.gmra.mrb[0].mxu0 %v8706
    %v8845 = vpop.f32.mrb[0].mxu0
    %v8846 = vadd.f32 0.0, %v8845
    %v8847 = vpop.f32.mrb[0].mxu0
    %v8848 = vpop.f32.mrb[0].mxu0
    %v8849 = vadd.f32 0.0, %v8848
    %v8850 = vpop.f32.mrb[0].mxu0
    %8851 = vmatprep.mubr.bf16.mxu0 0
    %8852 = vmatmul.mubr.bf16.gmra.mrb[0].mxu0 %v8709
    %v8853 = vpop.f32.mrb[0].mxu0
    %v8854 = vadd.f32 0.0, %v8853
    %v8855 = vpop.f32.mrb[0].mxu0
    %v8856 = vpop.f32.mrb[0].mxu0
    %v8857 = vadd.f32 0.0, %v8856
    %v8858 = vpop.f32.mrb[0].mxu0
    %8859 = vmatprep.mubr.bf16.mxu0 0
    %8860 = vmatmul.mubr.bf16.gmra.mrb[0].mxu0 %v8712
    %v8861 = vpop.f32.mrb[0].mxu0
    %v8862 = vadd.f32 0.0, %v8861
    %v8863 = vpop.f32.mrb[0].mxu0
    %v8864 = vpop.f32.mrb[0].mxu0
    %v8865 = vadd.f32 0.0, %v8864
    %v8866 = vpop.f32.mrb[0].mxu0
    %8867 = vmatprep.mubr.bf16.mxu0 0
    %8868 = vmatmul.mubr.bf16.gmra.mrb[0].mxu0 %v8715
    %v8869 = vpop.f32.mrb[0].mxu0
    %v8870 = vadd.f32 0.0, %v8869
    %v8871 = vpop.f32.mrb[0].mxu0
    %v8872 = vpop.f32.mrb[0].mxu0
    %v8873 = vadd.f32 0.0, %v8872
    %v8874 = vpop.f32.mrb[0].mxu0
    %8875 = vmatprep.mubr.bf16.mxu0 0
    %8876 = vmatmul.mubr.bf16.gmra.mrb[0].mxu0 %v8718
    %v8877 = vpop.f32.mrb[0].mxu0
    %v8878 = vadd.f32 0.0, %v8877
    %v8879 = vpop.f32.mrb[0].mxu0
    %v8880 = vpop.f32.mrb[0].mxu0
    %v8881 = vadd.f32 0.0, %v8880
    %v8882 = vpop.f32.mrb[0].mxu0
    %8883 = vmatprep.mubr.bf16.mxu0 0
    %8884 = vmatmul.mubr.bf16.gmra.mrb[0].mxu0 %v8721
    %v8885 = vpop.f32.mrb[0].mxu0
    %v8886 = vadd.f32 0.0, %v8885
    %v8887 = vpop.f32.mrb[0].mxu0
    %v8888 = vpop.f32.mrb[0].mxu0
    %v8889 = vadd.f32 0.0, %v8888
    %v8890 = vpop.f32.mrb[0].mxu0
    %8891 = vmatprep.mubr.bf16.mxu0 0
    %8892 = vmatmul.mubr.bf16.gmra.mrb[0].mxu0 %v8724
    %v8893 = vpop.f32.mrb[0].mxu0
    %v8894 = vadd.f32 0.0, %v8893
    %v8895 = vpop.f32.mrb[0].mxu0
    %v8896 = vpop.f32.mrb[0].mxu0
    %v8897 = vadd.f32 0.0, %v8896
    %v8898 = vpop.f32.mrb[0].mxu0
    %8899 = vmatprep.mubr.bf16.mxu0 0
    %8900 = vmatmul.mubr.bf16.gmra.mrb[0].mxu0 %v8727
    %v8901 = vpop.f32.mrb[0].mxu0
    %v8902 = vadd.f32 0.0, %v8901
    %v8903 = vpop.f32.mrb[0].mxu0
    %v8904 = vpop.f32.mrb[0].mxu0
    %v8905 = vadd.f32 0.0, %v8904
    %v8906 = vpop.f32.mrb[0].mxu0
    %8907 = vmatprep.mubr.bf16.mxu0 0
    %8908 = vmatmul.mubr.bf16.gmra.mrb[0].mxu0 %v8730
    %v8909 = vpop.f32.mrb[0].mxu0
    %v8910 = vadd.f32 0.0, %v8909
    %v8911 = vpop.f32.mrb[0].mxu0
    %v8912 = vpop.f32.mrb[0].mxu0
    %v8913 = vadd.f32 0.0, %v8912
    %v8914 = vpop.f32.mrb[0].mxu0
    %8915 = vmatprep.mubr.bf16.mxu0 0
    %8916 = vmatmul.mubr.bf16.gmra.mrb[0].mxu0 %v8733
    %v8917 = vpop.f32.mrb[0].mxu0
    %v8918 = vadd.f32 0.0, %v8917
    %v8919 = vpop.f32.mrb[0].mxu0
    %v8920 = vpop.f32.mrb[0].mxu0
    %v8921 = vadd.f32 0.0, %v8920
    %v8922 = vpop.f32.mrb[0].mxu0
    %8923 = vmatprep.mubr.bf16.mxu0 0
    %8924 = vmatmul.mubr.bf16.gmra.mrb[0].mxu0 %v8736
    %v8925 = vpop.f32.mrb[0].mxu0
    %v8926 = vadd.f32 0.0, %v8925
    %v8927 = vpop.f32.mrb[0].mxu0
    %v8928 = vpop.f32.mrb[0].mxu0
    %v8929 = vadd.f32 0.0, %v8928
    %v8930 = vpop.f32.mrb[0].mxu0
    %8931 = vmatprep.mubr.bf16.mxu0 0
    %8932 = vmatmul.mubr.bf16.gmra.mrb[0].mxu0 %v8739
    %v8933 = vpop.f32.mrb[0].mxu0
    %v8934 = vadd.f32 0.0, %v8933
    %v8935 = vpop.f32.mrb[0].mxu0
    %v8936 = vpop.f32.mrb[0].mxu0
    %v8937 = vadd.f32 0.0, %v8936
    %v8938 = vpop.f32.mrb[0].mxu0
    %8939 = vmatprep.mubr.bf16.mxu0 0
    %8940 = vmatmul.mubr.bf16.gmra.mrb[0].mxu0 %v8742
    %v8941 = vpop.f32.mrb[0].mxu0
    %v8942 = vadd.f32 0.0, %v8941
    %v8943 = vpop.f32.mrb[0].mxu0
    %v8944 = vpop.f32.mrb[0].mxu0
    %v8945 = vadd.f32 0.0, %v8944
    %v8946 = vpop.f32.mrb[0].mxu0
    %8947 = vmatprep.mubr.bf16.mxu0 0
    %8948 = vmatmul.mubr.bf16.gmra.mrb[0].mxu0 %v8745
    %v8949 = vpop.f32.mrb[0].mxu0
    %v8950 = vadd.f32 0.0, %v8949
    %v8951 = vpop.f32.mrb[0].mxu0
    %v8952 = vpop.f32.mrb[0].mxu0
    %v8953 = vadd.f32 0.0, %v8952
    %v8954 = vpop.f32.mrb[0].mxu0
    %8955 = vmatprep.mubr.bf16.mxu0 0
    %8956 = vmatmul.mubr.bf16.gmra.mrb[0].mxu0 %v8748
    %v8957 = vpop.f32.mrb[0].mxu0
    %v8958 = vadd.f32 0.0, %v8957
    %v8959 = vpop.f32.mrb[0].mxu0
    %v8960 = vpop.f32.mrb[0].mxu0
    %v8961 = vadd.f32 0.0, %v8960
    %v8962 = vpop.f32.mrb[0].mxu0
    %8963 = vmatprep.mubr.bf16.mxu0 0
    %8964 = vmatmul.mubr.bf16.gmra.mrb[0].mxu0 %v8751
    %v8965 = vpop.f32.mrb[0].mxu0
    %v8966 = vadd.f32 0.0, %v8965
    %v8967 = vpop.f32.mrb[0].mxu0
    %v8968 = vpop.f32.mrb[0].mxu0
    %v8969 = vadd.f32 0.0, %v8968
    %v8970 = vpop.f32.mrb[0].mxu0
    %8971 = vmatprep.mubr.bf16.mxu0 0
    %8972 = vmatmul.mubr.bf16.gmra.mrb[0].mxu0 %v8754
    %v8973 = vpop.f32.mrb[0].mxu0
    %v8974 = vadd.f32 0.0, %v8973
    %v8975 = vpop.f32.mrb[0].mxu0
    %v8976 = vpop.f32.mrb[0].mxu0
    %v8977 = vadd.f32 0.0, %v8976
    %v8978 = vpop.f32.mrb[0].mxu0
    %8979 = vmatprep.mubr.bf16.mxu0 0
    %8980 = vmatmul.mubr.bf16.gmra.mrb[0].mxu0 %v8757
    %v8981 = vpop.f32.mrb[0].mxu0
    %v8982 = vadd.f32 0.0, %v8981
    %v8983 = vpop.f32.mrb[0].mxu0
    %v8984 = vpop.f32.mrb[0].mxu0
    %v8985 = vadd.f32 0.0, %v8984
    %v8986 = vpop.f32.mrb[0].mxu0
    %8987 = vmatprep.mubr.bf16.mxu0 0
    %8988 = vmatmul.mubr.bf16.gmra.mrb[0].mxu0 %v8760
    %v8989 = vpop.f32.mrb[0].mxu0
    %v8990 = vadd.f32 0.0, %v8989
    %v8991 = vpop.f32.mrb[0].mxu0
    %v8992 = vpop.f32.mrb[0].mxu0
    %v8993 = vadd.f32 0.0, %v8992
    %v8994 = vpop.f32.mrb[0].mxu0
    %8995 = vmatprep.mubr.bf16.mxu0 0
    %8996 = vmatmul.mubr.bf16.gmra.mrb[0].mxu0 %v8763
    %v8997 = vpop.f32.mrb[0].mxu0
    %v8998 = vadd.f32 0.0, %v8997
    %v8999 = vpop.f32.mrb[0].mxu0
    %v9000 = vpop.f32.mrb[0].mxu0
    %v9001 = vadd.f32 0.0, %v9000
    %v9002 = vpop.f32.mrb[0].mxu0
    %9003 = vmatprep.mubr.bf16.mxu0 0
    %9004 = vmatmul.mubr.bf16.gmra.mrb[0].mxu0 %v8766
    %v9005 = vpop.f32.mrb[0].mxu0
    %v9006 = vadd.f32 0.0, %v9005
    %v9007 = vpop.f32.mrb[0].mxu0
    %v9008 = vpop.f32.mrb[0].mxu0
    %v9009 = vadd.f32 0.0, %v9008
    %v9010 = vpop.f32.mrb[0].mxu0
    %9011 = vmatprep.mubr.bf16.mxu0 0
    %9012 = vmatmul.mubr.bf16.gmra.mrb[0].mxu0 %v8769
    %v9013 = vpop.f32.mrb[0].mxu0
    %v9014 = vadd.f32 0.0, %v9013
    %v9015 = vpop.f32.mrb[0].mxu0
    %v9016 = vpop.f32.mrb[0].mxu0
    %v9017 = vadd.f32 0.0, %v9016
    %v9018 = vpop.f32.mrb[0].mxu0
    %9019 = vmatprep.mubr.bf16.mxu0 0
    %9020 = vmatmul.mubr.bf16.gmra.mrb[0].mxu0 %v8772
    %v9021 = vpop.f32.mrb[0].mxu0
    %v9022 = vadd.f32 0.0, %v9021
    %v9023 = vpop.f32.mrb[0].mxu0
    %v9024 = vpop.f32.mrb[0].mxu0
    %v9025 = vadd.f32 0.0, %v9024
    %v9026 = vpop.f32.mrb[0].mxu0
    %9027 = vmatprep.mubr.bf16.mxu0 0
    %9028 = vmatmul.mubr.bf16.gmra.mrb[0].mxu0 %v8775
    %v9029 = vpop.f32.mrb[0].mxu0
    %v9030 = vadd.f32 0.0, %v9029
    %v9031 = vpop.f32.mrb[0].mxu0
    %v9032 = vpop.f32.mrb[0].mxu0
    %v9033 = vadd.f32 0.0, %v9032
    %v9034 = vpop.f32.mrb[0].mxu0
    %9035 = vmatprep.mubr.bf16.mxu0 0
    %9036 = vmatmul.mubr.bf16.gmra.mrb[0].mxu0 %v8778
    %v9037 = vpop.f32.mrb[0].mxu0
    %v9038 = vadd.f32 0.0, %v9037
    %v9039 = vpop.f32.mrb[0].mxu0
    %v9040 = vpop.f32.mrb[0].mxu0
    %v9041 = vadd.f32 0.0, %v9040
    %v9042 = vpop.f32.mrb[0].mxu0
    %9043 = vmatprep.mubr.bf16.mxu0 0
    %9044 = vmatmul.mubr.bf16.gmra.mrb[0].mxu0 %v8781
    %v9045 = vpop.f32.mrb[0].mxu0
    %v9046 = vadd.f32 0.0, %v9045
    %v9047 = vpop.f32.mrb[0].mxu0
    %v9048 = vpop.f32.mrb[0].mxu0
    %v9049 = vadd.f32 0.0, %v9048
    %v9050 = vpop.f32.mrb[0].mxu0
    %9051 = vmatprep.mubr.bf16.mxu0 0
    %9052 = vmatmul.mubr.bf16.gmra.mrb[0].mxu0 %v8784
    %v9053 = vpop.f32.mrb[0].mxu0
    %v9054 = vadd.f32 0.0, %v9053
    %v9055 = vpop.f32.mrb[0].mxu0
    %v9056 = vpop.f32.mrb[0].mxu0
    %v9057 = vadd.f32 0.0, %v9056
    %v9058 = vpop.f32.mrb[0].mxu0
    %9059 = vmatprep.mubr.bf16.mxu0 0
    %9060 = vmatmul.mubr.bf16.gmra.mrb[0].mxu0 %v8787
    %v9061 = vpop.f32.mrb[0].mxu0
    %v9062 = vadd.f32 0.0, %v9061
    %v9063 = vpop.f32.mrb[0].mxu0
    %v9064 = vpop.f32.mrb[0].mxu0
    %v9065 = vadd.f32 0.0, %v9064
    %v9066 = vpop.f32.mrb[0].mxu0
    %9067 = vmatprep.mubr.bf16.mxu0 0
    %9068 = vmatmul.mubr.bf16.gmra.mrb[0].mxu0 %v8790
    %v9069 = vpop.f32.mrb[0].mxu0
    %v9070 = vadd.f32 0.0, %v9069
    %v9071 = vpop.f32.mrb[0].mxu0
    %v9072 = vpop.f32.mrb[0].mxu0
    %v9073 = vadd.f32 0.0, %v9072
    %v9074 = vpop.f32.mrb[0].mxu0
    %9075 = vmatprep.mubr.bf16.mxu0 0
    %9076 = vmatmul.mubr.bf16.gmra.mrb[0].mxu0 %v8793
    %v9077 = vpop.f32.mrb[0].mxu0
    %v9078 = vadd.f32 0.0, %v9077
    %v9079 = vpop.f32.mrb[0].mxu0
    %v9080 = vpop.f32.mrb[0].mxu0
    %v9081 = vadd.f32 0.0, %v9080
    %v9082 = vpop.f32.mrb[0].mxu0
    %9083 = vdwg.mxu0
    %v9084 = vadd.f32 %v8522, %v8830
    %v9085 = vadd.f32 %v8523, %v8833
    %v9086 = vadd.f32 %v8524, %v8838
    %v9087 = vadd.f32 %v8525, %v8841
    %v9088 = vadd.f32 %v8526, %v8846
    %v9089 = vadd.f32 %v8527, %v8849
    %v9090 = vadd.f32 %v8528, %v8854
    %v9091 = vadd.f32 %v8529, %v8857
    %v9092 = vadd.f32 %v8530, %v8862
    %v9093 = vadd.f32 %v8531, %v8865
    %v9094 = vadd.f32 %v8532, %v8870
    %v9095 = vadd.f32 %v8533, %v8873
    %v9096 = vadd.f32 %v8534, %v8878
    %v9097 = vadd.f32 %v8535, %v8881
    %v9098 = vadd.f32 %v8536, %v8886
    %v9099 = vadd.f32 %v8537, %v8889
    %v9100 = vadd.f32 %v8538, %v8894
    %v9101 = vadd.f32 %v8539, %v8897
    %v9102 = vadd.f32 %v8540, %v8902
    %v9103 = vadd.f32 %v8541, %v8905
    %v9104 = vadd.f32 %v8542, %v8910
    %v9105 = vadd.f32 %v8543, %v8913
    %v9106 = vadd.f32 %v8544, %v8918
    %v9107 = vadd.f32 %v8545, %v8921
    %v9108 = vadd.f32 %v8546, %v8926
    %v9109 = vadd.f32 %v8547, %v8929
    %v9110 = vadd.f32 %v8548, %v8934
    %v9111 = vadd.f32 %v8549, %v8937
    %v9112 = vadd.f32 %v8550, %v8942
    %v9113 = vadd.f32 %v8551, %v8945
    %v9114 = vadd.f32 %v8552, %v8950
    %v9115 = vadd.f32 %v8553, %v8953
    %v9116 = vadd.f32 %v8554, %v8958
    %v9117 = vadd.f32 %v8555, %v8961
    %v9118 = vadd.f32 %v8556, %v8966
    %v9119 = vadd.f32 %v8557, %v8969
    %v9120 = vadd.f32 %v8558, %v8974
    %v9121 = vadd.f32 %v8559, %v8977
    %v9122 = vadd.f32 %v8560, %v8982
    %v9123 = vadd.f32 %v8561, %v8985
    %v9124 = vadd.f32 %v8562, %v8990
    %v9125 = vadd.f32 %v8563, %v8993
    %v9126 = vadd.f32 %v8564, %v8998
    %v9127 = vadd.f32 %v8565, %v9001
    %v9128 = vadd.f32 %v8566, %v9006
    %v9129 = vadd.f32 %v8567, %v9009
    %v9130 = vadd.f32 %v8568, %v9014
    %v9131 = vadd.f32 %v8569, %v9017
    %v9132 = vadd.f32 %v8570, %v9022
    %v9133 = vadd.f32 %v8571, %v9025
    %v9134 = vadd.f32 %v8572, %v9030
    %v9135 = vadd.f32 %v8573, %v9033
    %v9136 = vadd.f32 %v8574, %v9038
    %v9137 = vadd.f32 %v8575, %v9041
    %v9138 = vadd.f32 %v8576, %v9046
    %v9139 = vadd.f32 %v8577, %v9049
    %v9140 = vadd.f32 %v8578, %v9054
    %v9141 = vadd.f32 %v8579, %v9057
    %v9142 = vadd.f32 %v8580, %v9062
    %v9143 = vadd.f32 %v8581, %v9065
    %v9144 = vadd.f32 %v8582, %v9070
    %v9145 = vadd.f32 %v8583, %v9073
    %v9146 = vadd.f32 %v8584, %v9078
    %v9147 = vadd.f32 %v8585, %v9081
    %v9148 = vld [vmem:[%s3550] sm:$0xff]
    %v9149 = vld [vmem:[%s3550 + $0x8] sm:$0xff]
    %v9150 = vld [vmem:[%s3550 + $0x18] sm:$0xff]
    %v9151 = vld [vmem:[%s3550 + $0x20] sm:$0xff]
    %v9152 = vld [vmem:[%s3550 + $0x30] sm:$0xff]
    %v9153 = vld [vmem:[%s3550 + $0x38] sm:$0xff]
    %v9154 = vld [vmem:[%s3550 + $0x48] sm:$0xff]
    %v9155 = vld [vmem:[%s3550 + $0x50] sm:$0xff]
    %v9156 = vld [vmem:[%s3550 + $0x60] sm:$0xff]
    %v9157 = vld [vmem:[%s3550 + $0x68] sm:$0xff]
    %v9158 = vld [vmem:[%s3550 + $0x78] sm:$0xff]
    %v9159 = vld [vmem:[%s3550 + $0x80] sm:$0xff]
    %v9160 = vld [vmem:[%s3550 + $0x90] sm:$0xff]
    %v9161 = vld [vmem:[%s3550 + $0x98] sm:$0xff]
    %v9162 = vld [vmem:[%s3550 + $0xa8] sm:$0xff]
    %v9163 = vld [vmem:[%s3550 + $0xb0] sm:$0xff]
    %v9164 = vld [vmem:[%s3550 + $0xc0] sm:$0xff]
    %v9165 = vld [vmem:[%s3550 + $0xc8] sm:$0xff]
    %v9166 = vld [vmem:[%s3550 + $0xd8] sm:$0xff]
    %v9167 = vld [vmem:[%s3550 + $0xe0] sm:$0xff]
    %v9168 = vld [vmem:[%s3550 + $0xf0] sm:$0xff]
    %v9169 = vld [vmem:[%s3550 + $0xf8] sm:$0xff]
    %v9170 = vld [vmem:[%s3550 + $0x108] sm:$0xff]
    %v9171 = vld [vmem:[%s3550 + $0x110] sm:$0xff]
    %v9172 = vld [vmem:[%s3550 + $0x120] sm:$0xff]
    %v9173 = vld [vmem:[%s3550 + $0x128] sm:$0xff]
    %v9174 = vld [vmem:[%s3550 + $0x138] sm:$0xff]
    %v9175 = vld [vmem:[%s3550 + $0x140] sm:$0xff]
    %v9176 = vld [vmem:[%s3550 + $0x150] sm:$0xff]
    %v9177 = vld [vmem:[%s3550 + $0x158] sm:$0xff]
    %v9178 = vld [vmem:[%s3550 + $0x168] sm:$0xff]
    %v9179 = vld [vmem:[%s3550 + $0x170] sm:$0xff]
    %v9180 = vld [vmem:[%s3550 + $0x1b0] sm:$0xff]
    %v9181 = vld [vmem:[%s3550 + $0x1b8] sm:$0xff]
    %v9182 = vld [vmem:[%s3550 + $0x1c8] sm:$0xff]
    %v9183 = vld [vmem:[%s3550 + $0x1d0] sm:$0xff]
    %v9184 = vld [vmem:[%s3550 + $0x1e0] sm:$0xff]
    %v9185 = vld [vmem:[%s3550 + $0x1e8] sm:$0xff]
    %v9186 = vld [vmem:[%s3550 + $0x1f8] sm:$0xff]
    %v9187 = vld [vmem:[%s3550 + $0x200] sm:$0xff]
    %v9188 = vld [vmem:[%s3550 + $0x210] sm:$0xff]
    %v9189 = vld [vmem:[%s3550 + $0x218] sm:$0xff]
    %v9190 = vld [vmem:[%s3550 + $0x228] sm:$0xff]
    %v9191 = vld [vmem:[%s3550 + $0x230] sm:$0xff]
    %v9192 = vld [vmem:[%s3550 + $0x240] sm:$0xff]
    %v9193 = vld [vmem:[%s3550 + $0x248] sm:$0xff]
    %v9194 = vld [vmem:[%s3550 + $0x258] sm:$0xff]
    %v9195 = vld [vmem:[%s3550 + $0x260] sm:$0xff]
    %v9196 = vld [vmem:[%s3550 + $0x270] sm:$0xff]
    %v9197 = vld [vmem:[%s3550 + $0x278] sm:$0xff]
    %v9198 = vld [vmem:[%s3550 + $0x288] sm:$0xff]
    %v9199 = vld [vmem:[%s3550 + $0x290] sm:$0xff]
    %v9200 = vld [vmem:[%s3550 + $0x2a0] sm:$0xff]
    %v9201 = vld [vmem:[%s3550 + $0x2a8] sm:$0xff]
    %v9202 = vld [vmem:[%s3550 + $0x2b8] sm:$0xff]
    %v9203 = vld [vmem:[%s3550 + $0x2c0] sm:$0xff]
    %v9204 = vld [vmem:[%s3550 + $0x2d0] sm:$0xff]
    %v9205 = vld [vmem:[%s3550 + $0x2d8] sm:$0xff]
    %v9206 = vld [vmem:[%s3550 + $0x2e8] sm:$0xff]
    %v9207 = vld [vmem:[%s3550 + $0x2f0] sm:$0xff]
    %v9208 = vld [vmem:[%s3550 + $0x300] sm:$0xff]
    %v9209 = vld [vmem:[%s3550 + $0x308] sm:$0xff]
    %v9210 = vld [vmem:[%s3550 + $0x318] sm:$0xff]
    %v9211 = vld [vmem:[%s3550 + $0x320] sm:$0xff]
    %v9212 = vpack.c.bf16 %v9149, %v9148
    %v9213 = vpack.c.bf16 %v9151, %v9150
    %v9214 = vpack.c.bf16 %v9153, %v9152
    %v9215 = vpack.c.bf16 %v9155, %v9154
    %v9216 = vpack.c.bf16 %v9157, %v9156
    %v9217 = vpack.c.bf16 %v9159, %v9158
    %v9218 = vpack.c.bf16 %v9161, %v9160
    %v9219 = vpack.c.bf16 %v9163, %v9162
    %v9220 = vpack.c.bf16 %v9165, %v9164
    %v9221 = vpack.c.bf16 %v9167, %v9166
    %v9222 = vpack.c.bf16 %v9169, %v9168
    %v9223 = vpack.c.bf16 %v9171, %v9170
    %v9224 = vpack.c.bf16 %v9173, %v9172
    %v9225 = vpack.c.bf16 %v9175, %v9174
    %v9226 = vpack.c.bf16 %v9177, %v9176
    %v9227 = vpack.c.bf16 %v9179, %v9178
    %v9228 = vpack.c.bf16 %v9181, %v9180
    %v9229 = vpack.c.bf16 %v9183, %v9182
    %v9230 = vpack.c.bf16 %v9185, %v9184
    %v9231 = vpack.c.bf16 %v9187, %v9186
    %v9232 = vpack.c.bf16 %v9189, %v9188
    %v9233 = vpack.c.bf16 %v9191, %v9190
    %v9234 = vpack.c.bf16 %v9193, %v9192
    %v9235 = vpack.c.bf16 %v9195, %v9194
    %v9236 = vpack.c.bf16 %v9197, %v9196
    %v9237 = vpack.c.bf16 %v9199, %v9198
    %v9238 = vpack.c.bf16 %v9201, %v9200
    %v9239 = vpack.c.bf16 %v9203, %v9202
    %v9240 = vpack.c.bf16 %v9205, %v9204
    %v9241 = vpack.c.bf16 %v9207, %v9206
    %v9242 = vpack.c.bf16 %v9209, %v9208
    %v9243 = vpack.c.bf16 %v9211, %v9210
    %s9244 = scalar_lea.vmem [#allocation7], 96
    %v9245 = vld [vmem:[%s9244] sm:$0xf]
    %v9246 = vld [vmem:[%s9244 + $0x4] sm:$0xf]
    %v9247 = vld [vmem:[%s9244 + $0x8] sm:$0xf]
    %v9248 = vld [vmem:[%s9244 + $0xc] sm:$0xf]
    %v9253 = vunpack.c.l.b16 %v9245
    %v9254 = vunpack.c.l.b16 %v9246
    %v9255 = vunpack.c.l.b16 %v9247
    %v9256 = vunpack.c.l.b16 %v9248
    %v9257 = vpack.c.b16 %v9254, %v9253
    %v9258 = vpack.c.b16 %v9256, %v9255
    %v9262 = vsel %vm68, %v9212, 0
    %v9265 = vsel %vm68, %v9213, 0
    %v9268 = vsel %vm68, %v9214, 0
    %v9271 = vsel %vm68, %v9215, 0
    %v9274 = vsel %vm68, %v9216, 0
    %v9277 = vsel %vm68, %v9217, 0
    %v9280 = vsel %vm68, %v9218, 0
    %v9283 = vsel %vm68, %v9219, 0
    %v9286 = vsel %vm68, %v9220, 0
    %v9289 = vsel %vm68, %v9221, 0
    %v9292 = vsel %vm68, %v9222, 0
    %v9295 = vsel %vm68, %v9223, 0
    %v9298 = vsel %vm68, %v9224, 0
    %v9301 = vsel %vm68, %v9225, 0
    %v9304 = vsel %vm68, %v9226, 0
    %v9307 = vsel %vm68, %v9227, 0
    %v9310 = vsel %vm68, %v9228, 0
    %v9313 = vsel %vm68, %v9229, 0
    %v9316 = vsel %vm68, %v9230, 0
    %v9319 = vsel %vm68, %v9231, 0
    %v9322 = vsel %vm68, %v9232, 0
    %v9325 = vsel %vm68, %v9233, 0
    %v9328 = vsel %vm68, %v9234, 0
    %v9331 = vsel %vm68, %v9235, 0
    %v9334 = vsel %vm68, %v9236, 0
    %v9337 = vsel %vm68, %v9237, 0
    %v9340 = vsel %vm68, %v9238, 0
    %v9343 = vsel %vm68, %v9239, 0
    %v9346 = vsel %vm68, %v9240, 0
    %v9349 = vsel %vm68, %v9241, 0
    %v9352 = vsel %vm68, %v9242, 0
    %v9355 = vsel %vm68, %v9243, 0
    %9357 = vmatprep.subr.bf16.mxu0 0
    %9358 = vmatpush1.bf16.msra.mxu0 %v9257
    %9359 = vmatprep.subr.bf16.mxu0 0
    %9360 = vmatpush1.bf16.msra.mxu0 %v9258
    %9361 = vmatprep.subr.bf16.mxu0 0
    %9362 = vmatpush1.bf16.msra.mxu0 0
    %9363 = vmatprep.subr.bf16.mxu0 0
    %9364 = vmatpush1.bf16.msra.mxu0 0
    %9365 = vmatprep.subr.bf16.mxu0 0
    %9366 = vmatpush1.bf16.msra.mxu0 0
    %9367 = vmatprep.subr.bf16.mxu0 0
    %9368 = vmatpush1.bf16.msra.mxu0 0
    %9369 = vmatprep.subr.bf16.mxu0 0
    %9370 = vmatpush1.bf16.msra.mxu0 0
    %9371 = vmatprep.subr.bf16.mxu0 0
    %9372 = vmatpush1.bf16.msra.mxu0 0
    %9373 = vmatprep.subr.bf16.mxu0 0
    %9374 = vmatpush1.bf16.msra.mxu0 0
    %9375 = vmatprep.subr.bf16.mxu0 0
    %9376 = vmatpush1.bf16.msra.mxu0 0
    %9377 = vmatprep.subr.bf16.mxu0 0
    %9378 = vmatpush1.bf16.msra.mxu0 0
    %9379 = vmatprep.subr.bf16.mxu0 0
    %9380 = vmatpush1.bf16.msra.mxu0 0
    %9381 = vmatprep.subr.bf16.mxu0 0
    %9382 = vmatpush1.bf16.msra.mxu0 0
    %9383 = vmatprep.subr.bf16.mxu0 0
    %9384 = vmatpush1.bf16.msra.mxu0 0
    %9385 = vmatprep.subr.bf16.mxu0 0
    %9386 = vmatpush1.bf16.msra.mxu0 0
    %9387 = vmatprep.subr.bf16.mxu0 0
    %9388 = vmatpush1.bf16.msra.mxu0 0
    %9389 = vmatprep.mubr.bf16.mxu0 0
    %9390 = vmatmul.mubr.bf16.gmra.mrb[0].mxu0 %v9262
    %v9391 = vpop.f32.mrb[0].mxu0
    %v9392 = vadd.f32 0.0, %v9391
    %v9393 = vpop.f32.mrb[0].mxu0
    %v9394 = vpop.f32.mrb[0].mxu0
    %v9395 = vadd.f32 0.0, %v9394
    %v9396 = vpop.f32.mrb[0].mxu0
    %9397 = vmatprep.mubr.bf16.mxu0 0
    %9398 = vmatmul.mubr.bf16.gmra.mrb[0].mxu0 %v9265
    %v9399 = vpop.f32.mrb[0].mxu0
    %v9400 = vadd.f32 0.0, %v9399
    %v9401 = vpop.f32.mrb[0].mxu0
    %v9402 = vpop.f32.mrb[0].mxu0
    %v9403 = vadd.f32 0.0, %v9402
    %v9404 = vpop.f32.mrb[0].mxu0
    %9405 = vmatprep.mubr.bf16.mxu0 0
    %9406 = vmatmul.mubr.bf16.gmra.mrb[0].mxu0 %v9268
    %v9407 = vpop.f32.mrb[0].mxu0
    %v9408 = vadd.f32 0.0, %v9407
    %v9409 = vpop.f32.mrb[0].mxu0
    %v9410 = vpop.f32.mrb[0].mxu0
    %v9411 = vadd.f32 0.0, %v9410
    %v9412 = vpop.f32.mrb[0].mxu0
    %9413 = vmatprep.mubr.bf16.mxu0 0
    %9414 = vmatmul.mubr.bf16.gmra.mrb[0].mxu0 %v9271
    %v9415 = vpop.f32.mrb[0].mxu0
    %v9416 = vadd.f32 0.0, %v9415
    %v9417 = vpop.f32.mrb[0].mxu0
    %v9418 = vpop.f32.mrb[0].mxu0
    %v9419 = vadd.f32 0.0, %v9418
    %v9420 = vpop.f32.mrb[0].mxu0
    %9421 = vmatprep.mubr.bf16.mxu0 0
    %9422 = vmatmul.mubr.bf16.gmra.mrb[0].mxu0 %v9274
    %v9423 = vpop.f32.mrb[0].mxu0
    %v9424 = vadd.f32 0.0, %v9423
    %v9425 = vpop.f32.mrb[0].mxu0
    %v9426 = vpop.f32.mrb[0].mxu0
    %v9427 = vadd.f32 0.0, %v9426
    %v9428 = vpop.f32.mrb[0].mxu0
    %9429 = vmatprep.mubr.bf16.mxu0 0
    %9430 = vmatmul.mubr.bf16.gmra.mrb[0].mxu0 %v9277
    %v9431 = vpop.f32.mrb[0].mxu0
    %v9432 = vadd.f32 0.0, %v9431
    %v9433 = vpop.f32.mrb[0].mxu0
    %v9434 = vpop.f32.mrb[0].mxu0
    %v9435 = vadd.f32 0.0, %v9434
    %v9436 = vpop.f32.mrb[0].mxu0
    %9437 = vmatprep.mubr.bf16.mxu0 0
    %9438 = vmatmul.mubr.bf16.gmra.mrb[0].mxu0 %v9280
    %v9439 = vpop.f32.mrb[0].mxu0
    %v9440 = vadd.f32 0.0, %v9439
    %v9441 = vpop.f32.mrb[0].mxu0
    %v9442 = vpop.f32.mrb[0].mxu0
    %v9443 = vadd.f32 0.0, %v9442
    %v9444 = vpop.f32.mrb[0].mxu0
    %9445 = vmatprep.mubr.bf16.mxu0 0
    %9446 = vmatmul.mubr.bf16.gmra.mrb[0].mxu0 %v9283
    %v9447 = vpop.f32.mrb[0].mxu0
    %v9448 = vadd.f32 0.0, %v9447
    %v9449 = vpop.f32.mrb[0].mxu0
    %v9450 = vpop.f32.mrb[0].mxu0
    %v9451 = vadd.f32 0.0, %v9450
    %v9452 = vpop.f32.mrb[0].mxu0
    %9453 = vmatprep.mubr.bf16.mxu0 0
    %9454 = vmatmul.mubr.bf16.gmra.mrb[0].mxu0 %v9286
    %v9455 = vpop.f32.mrb[0].mxu0
    %v9456 = vadd.f32 0.0, %v9455
    %v9457 = vpop.f32.mrb[0].mxu0
    %v9458 = vpop.f32.mrb[0].mxu0
    %v9459 = vadd.f32 0.0, %v9458
    %v9460 = vpop.f32.mrb[0].mxu0
    %9461 = vmatprep.mubr.bf16.mxu0 0
    %9462 = vmatmul.mubr.bf16.gmra.mrb[0].mxu0 %v9289
    %v9463 = vpop.f32.mrb[0].mxu0
    %v9464 = vadd.f32 0.0, %v9463
    %v9465 = vpop.f32.mrb[0].mxu0
    %v9466 = vpop.f32.mrb[0].mxu0
    %v9467 = vadd.f32 0.0, %v9466
    %v9468 = vpop.f32.mrb[0].mxu0
    %9469 = vmatprep.mubr.bf16.mxu0 0
    %9470 = vmatmul.mubr.bf16.gmra.mrb[0].mxu0 %v9292
    %v9471 = vpop.f32.mrb[0].mxu0
    %v9472 = vadd.f32 0.0, %v9471
    %v9473 = vpop.f32.mrb[0].mxu0
    %v9474 = vpop.f32.mrb[0].mxu0
    %v9475 = vadd.f32 0.0, %v9474
    %v9476 = vpop.f32.mrb[0].mxu0
    %9477 = vmatprep.mubr.bf16.mxu0 0
    %9478 = vmatmul.mubr.bf16.gmra.mrb[0].mxu0 %v9295
    %v9479 = vpop.f32.mrb[0].mxu0
    %v9480 = vadd.f32 0.0, %v9479
    %v9481 = vpop.f32.mrb[0].mxu0
    %v9482 = vpop.f32.mrb[0].mxu0
    %v9483 = vadd.f32 0.0, %v9482
    %v9484 = vpop.f32.mrb[0].mxu0
    %9485 = vmatprep.mubr.bf16.mxu0 0
    %9486 = vmatmul.mubr.bf16.gmra.mrb[0].mxu0 %v9298
    %v9487 = vpop.f32.mrb[0].mxu0
    %v9488 = vadd.f32 0.0, %v9487
    %v9489 = vpop.f32.mrb[0].mxu0
    %v9490 = vpop.f32.mrb[0].mxu0
    %v9491 = vadd.f32 0.0, %v9490
    %v9492 = vpop.f32.mrb[0].mxu0
    %9493 = vmatprep.mubr.bf16.mxu0 0
    %9494 = vmatmul.mubr.bf16.gmra.mrb[0].mxu0 %v9301
    %v9495 = vpop.f32.mrb[0].mxu0
    %v9496 = vadd.f32 0.0, %v9495
    %v9497 = vpop.f32.mrb[0].mxu0
    %v9498 = vpop.f32.mrb[0].mxu0
    %v9499 = vadd.f32 0.0, %v9498
    %v9500 = vpop.f32.mrb[0].mxu0
    %9501 = vmatprep.mubr.bf16.mxu0 0
    %9502 = vmatmul.mubr.bf16.gmra.mrb[0].mxu0 %v9304
    %v9503 = vpop.f32.mrb[0].mxu0
    %v9504 = vadd.f32 0.0, %v9503
    %v9505 = vpop.f32.mrb[0].mxu0
    %v9506 = vpop.f32.mrb[0].mxu0
    %v9507 = vadd.f32 0.0, %v9506
    %v9508 = vpop.f32.mrb[0].mxu0
    %9509 = vmatprep.mubr.bf16.mxu0 0
    %9510 = vmatmul.mubr.bf16.gmra.mrb[0].mxu0 %v9307
    %v9511 = vpop.f32.mrb[0].mxu0
    %v9512 = vadd.f32 0.0, %v9511
    %v9513 = vpop.f32.mrb[0].mxu0
    %v9514 = vpop.f32.mrb[0].mxu0
    %v9515 = vadd.f32 0.0, %v9514
    %v9516 = vpop.f32.mrb[0].mxu0
    %9517 = vmatprep.mubr.bf16.mxu0 0
    %9518 = vmatmul.mubr.bf16.gmra.mrb[0].mxu0 %v9310
    %v9519 = vpop.f32.mrb[0].mxu0
    %v9520 = vadd.f32 0.0, %v9519
    %v9521 = vpop.f32.mrb[0].mxu0
    %v9522 = vpop.f32.mrb[0].mxu0
    %v9523 = vadd.f32 0.0, %v9522
    %v9524 = vpop.f32.mrb[0].mxu0
    %9525 = vmatprep.mubr.bf16.mxu0 0
    %9526 = vmatmul.mubr.bf16.gmra.mrb[0].mxu0 %v9313
    %v9527 = vpop.f32.mrb[0].mxu0
    %v9528 = vadd.f32 0.0, %v9527
    %v9529 = vpop.f32.mrb[0].mxu0
    %v9530 = vpop.f32.mrb[0].mxu0
    %v9531 = vadd.f32 0.0, %v9530
    %v9532 = vpop.f32.mrb[0].mxu0
    %9533 = vmatprep.mubr.bf16.mxu0 0
    %9534 = vmatmul.mubr.bf16.gmra.mrb[0].mxu0 %v9316
    %v9535 = vpop.f32.mrb[0].mxu0
    %v9536 = vadd.f32 0.0, %v9535
    %v9537 = vpop.f32.mrb[0].mxu0
    %v9538 = vpop.f32.mrb[0].mxu0
    %v9539 = vadd.f32 0.0, %v9538
    %v9540 = vpop.f32.mrb[0].mxu0
    %9541 = vmatprep.mubr.bf16.mxu0 0
    %9542 = vmatmul.mubr.bf16.gmra.mrb[0].mxu0 %v9319
    %v9543 = vpop.f32.mrb[0].mxu0
    %v9544 = vadd.f32 0.0, %v9543
    %v9545 = vpop.f32.mrb[0].mxu0
    %v9546 = vpop.f32.mrb[0].mxu0
    %v9547 = vadd.f32 0.0, %v9546
    %v9548 = vpop.f32.mrb[0].mxu0
    %9549 = vmatprep.mubr.bf16.mxu0 0
    %9550 = vmatmul.mubr.bf16.gmra.mrb[0].mxu0 %v9322
    %v9551 = vpop.f32.mrb[0].mxu0
    %v9552 = vadd.f32 0.0, %v9551
    %v9553 = vpop.f32.mrb[0].mxu0
    %v9554 = vpop.f32.mrb[0].mxu0
    %v9555 = vadd.f32 0.0, %v9554
    %v9556 = vpop.f32.mrb[0].mxu0
    %9557 = vmatprep.mubr.bf16.mxu0 0
    %9558 = vmatmul.mubr.bf16.gmra.mrb[0].mxu0 %v9325
    %v9559 = vpop.f32.mrb[0].mxu0
    %v9560 = vadd.f32 0.0, %v9559
    %v9561 = vpop.f32.mrb[0].mxu0
    %v9562 = vpop.f32.mrb[0].mxu0
    %v9563 = vadd.f32 0.0, %v9562
    %v9564 = vpop.f32.mrb[0].mxu0
    %9565 = vmatprep.mubr.bf16.mxu0 0
    %9566 = vmatmul.mubr.bf16.gmra.mrb[0].mxu0 %v9328
    %v9567 = vpop.f32.mrb[0].mxu0
    %v9568 = vadd.f32 0.0, %v9567
    %v9569 = vpop.f32.mrb[0].mxu0
    %v9570 = vpop.f32.mrb[0].mxu0
    %v9571 = vadd.f32 0.0, %v9570
    %v9572 = vpop.f32.mrb[0].mxu0
    %9573 = vmatprep.mubr.bf16.mxu0 0
    %9574 = vmatmul.mubr.bf16.gmra.mrb[0].mxu0 %v9331
    %v9575 = vpop.f32.mrb[0].mxu0
    %v9576 = vadd.f32 0.0, %v9575
    %v9577 = vpop.f32.mrb[0].mxu0
    %v9578 = vpop.f32.mrb[0].mxu0
    %v9579 = vadd.f32 0.0, %v9578
    %v9580 = vpop.f32.mrb[0].mxu0
    %9581 = vmatprep.mubr.bf16.mxu0 0
    %9582 = vmatmul.mubr.bf16.gmra.mrb[0].mxu0 %v9334
    %v9583 = vpop.f32.mrb[0].mxu0
    %v9584 = vadd.f32 0.0, %v9583
    %v9585 = vpop.f32.mrb[0].mxu0
    %v9586 = vpop.f32.mrb[0].mxu0
    %v9587 = vadd.f32 0.0, %v9586
    %v9588 = vpop.f32.mrb[0].mxu0
    %9589 = vmatprep.mubr.bf16.mxu0 0
    %9590 = vmatmul.mubr.bf16.gmra.mrb[0].mxu0 %v9337
    %v9591 = vpop.f32.mrb[0].mxu0
    %v9592 = vadd.f32 0.0, %v9591
    %v9593 = vpop.f32.mrb[0].mxu0
    %v9594 = vpop.f32.mrb[0].mxu0
    %v9595 = vadd.f32 0.0, %v9594
    %v9596 = vpop.f32.mrb[0].mxu0
    %9597 = vmatprep.mubr.bf16.mxu0 0
    %9598 = vmatmul.mubr.bf16.gmra.mrb[0].mxu0 %v9340
    %v9599 = vpop.f32.mrb[0].mxu0
    %v9600 = vadd.f32 0.0, %v9599
    %v9601 = vpop.f32.mrb[0].mxu0
    %v9602 = vpop.f32.mrb[0].mxu0
    %v9603 = vadd.f32 0.0, %v9602
    %v9604 = vpop.f32.mrb[0].mxu0
    %9605 = vmatprep.mubr.bf16.mxu0 0
    %9606 = vmatmul.mubr.bf16.gmra.mrb[0].mxu0 %v9343
    %v9607 = vpop.f32.mrb[0].mxu0
    %v9608 = vadd.f32 0.0, %v9607
    %v9609 = vpop.f32.mrb[0].mxu0
    %v9610 = vpop.f32.mrb[0].mxu0
    %v9611 = vadd.f32 0.0, %v9610
    %v9612 = vpop.f32.mrb[0].mxu0
    %9613 = vmatprep.mubr.bf16.mxu0 0
    %9614 = vmatmul.mubr.bf16.gmra.mrb[0].mxu0 %v9346
    %v9615 = vpop.f32.mrb[0].mxu0
    %v9616 = vadd.f32 0.0, %v9615
    %v9617 = vpop.f32.mrb[0].mxu0
    %v9618 = vpop.f32.mrb[0].mxu0
    %v9619 = vadd.f32 0.0, %v9618
    %v9620 = vpop.f32.mrb[0].mxu0
    %9621 = vmatprep.mubr.bf16.mxu0 0
    %9622 = vmatmul.mubr.bf16.gmra.mrb[0].mxu0 %v9349
    %v9623 = vpop.f32.mrb[0].mxu0
    %v9624 = vadd.f32 0.0, %v9623
    %v9625 = vpop.f32.mrb[0].mxu0
    %v9626 = vpop.f32.mrb[0].mxu0
    %v9627 = vadd.f32 0.0, %v9626
    %v9628 = vpop.f32.mrb[0].mxu0
    %9629 = vmatprep.mubr.bf16.mxu0 0
    %9630 = vmatmul.mubr.bf16.gmra.mrb[0].mxu0 %v9352
    %v9631 = vpop.f32.mrb[0].mxu0
    %v9632 = vadd.f32 0.0, %v9631
    %v9633 = vpop.f32.mrb[0].mxu0
    %v9634 = vpop.f32.mrb[0].mxu0
    %v9635 = vadd.f32 0.0, %v9634
    %v9636 = vpop.f32.mrb[0].mxu0
    %9637 = vmatprep.mubr.bf16.mxu0 0
    %9638 = vmatmul.mubr.bf16.gmra.mrb[0].mxu0 %v9355
    %v9639 = vpop.f32.mrb[0].mxu0
    %v9640 = vadd.f32 0.0, %v9639
    %v9641 = vpop.f32.mrb[0].mxu0
    %v9642 = vpop.f32.mrb[0].mxu0
    %v9643 = vadd.f32 0.0, %v9642
    %v9644 = vpop.f32.mrb[0].mxu0
    %9645 = vdwg.mxu0
    %v9646 = vadd.f32 %v9084, %v9392
    %v9647 = vadd.f32 %v9085, %v9395
    %v9648 = vadd.f32 %v9086, %v9400
    %v9649 = vadd.f32 %v9087, %v9403
    %v9650 = vadd.f32 %v9088, %v9408
    %v9651 = vadd.f32 %v9089, %v9411
    %v9652 = vadd.f32 %v9090, %v9416
    %v9653 = vadd.f32 %v9091, %v9419
    %v9654 = vadd.f32 %v9092, %v9424
    %v9655 = vadd.f32 %v9093, %v9427
    %v9656 = vadd.f32 %v9094, %v9432
    %v9657 = vadd.f32 %v9095, %v9435
    %v9658 = vadd.f32 %v9096, %v9440
    %v9659 = vadd.f32 %v9097, %v9443
    %v9660 = vadd.f32 %v9098, %v9448
    %v9661 = vadd.f32 %v9099, %v9451
    %v9662 = vadd.f32 %v9100, %v9456
    %v9663 = vadd.f32 %v9101, %v9459
    %v9664 = vadd.f32 %v9102, %v9464
    %v9665 = vadd.f32 %v9103, %v9467
    %v9666 = vadd.f32 %v9104, %v9472
    %v9667 = vadd.f32 %v9105, %v9475
    %v9668 = vadd.f32 %v9106, %v9480
    %v9669 = vadd.f32 %v9107, %v9483
    %v9670 = vadd.f32 %v9108, %v9488
    %v9671 = vadd.f32 %v9109, %v9491
    %v9672 = vadd.f32 %v9110, %v9496
    %v9673 = vadd.f32 %v9111, %v9499
    %v9674 = vadd.f32 %v9112, %v9504
    %v9675 = vadd.f32 %v9113, %v9507
    %v9676 = vadd.f32 %v9114, %v9512
    %v9677 = vadd.f32 %v9115, %v9515
    %v9678 = vadd.f32 %v9116, %v9520
    %v9679 = vadd.f32 %v9117, %v9523
    %v9680 = vadd.f32 %v9118, %v9528
    %v9681 = vadd.f32 %v9119, %v9531
    %v9682 = vadd.f32 %v9120, %v9536
    %v9683 = vadd.f32 %v9121, %v9539
    %v9684 = vadd.f32 %v9122, %v9544
    %v9685 = vadd.f32 %v9123, %v9547
    %v9686 = vadd.f32 %v9124, %v9552
    %v9687 = vadd.f32 %v9125, %v9555
    %v9688 = vadd.f32 %v9126, %v9560
    %v9689 = vadd.f32 %v9127, %v9563
    %v9690 = vadd.f32 %v9128, %v9568
    %v9691 = vadd.f32 %v9129, %v9571
    %v9692 = vadd.f32 %v9130, %v9576
    %v9693 = vadd.f32 %v9131, %v9579
    %v9694 = vadd.f32 %v9132, %v9584
    %v9695 = vadd.f32 %v9133, %v9587
    %v9696 = vadd.f32 %v9134, %v9592
    %v9697 = vadd.f32 %v9135, %v9595
    %v9698 = vadd.f32 %v9136, %v9600
    %v9699 = vadd.f32 %v9137, %v9603
    %v9700 = vadd.f32 %v9138, %v9608
    %v9701 = vadd.f32 %v9139, %v9611
    %v9702 = vadd.f32 %v9140, %v9616
    %v9703 = vadd.f32 %v9141, %v9619
    %v9704 = vadd.f32 %v9142, %v9624
    %v9705 = vadd.f32 %v9143, %v9627
    %v9706 = vadd.f32 %v9144, %v9632
    %v9707 = vadd.f32 %v9145, %v9635
    %v9708 = vadd.f32 %v9146, %v9640
    %v9709 = vadd.f32 %v9147, %v9643
    %v9710 = vld [vmem:[%s3550 + $0x1] sm:$0xff]
    %v9711 = vld [vmem:[%s3550 + $0x9] sm:$0xff]
    %v9712 = vld [vmem:[%s3550 + $0x19] sm:$0xff]
    %v9713 = vld [vmem:[%s3550 + $0x21] sm:$0xff]
    %v9714 = vld [vmem:[%s3550 + $0x31] sm:$0xff]
    %v9715 = vld [vmem:[%s3550 + $0x39] sm:$0xff]
    %v9716 = vld [vmem:[%s3550 + $0x49] sm:$0xff]
    %v9717 = vld [vmem:[%s3550 + $0x51] sm:$0xff]
    %v9718 = vld [vmem:[%s3550 + $0x61] sm:$0xff]
    %v9719 = vld [vmem:[%s3550 + $0x69] sm:$0xff]
    %v9720 = vld [vmem:[%s3550 + $0x79] sm:$0xff]
    %v9721 = vld [vmem:[%s3550 + $0x81] sm:$0xff]
    %v9722 = vld [vmem:[%s3550 + $0x91] sm:$0xff]
    %v9723 = vld [vmem:[%s3550 + $0x99] sm:$0xff]
    %v9724 = vld [vmem:[%s3550 + $0xa9] sm:$0xff]
    %v9725 = vld [vmem:[%s3550 + $0xb1] sm:$0xff]
    %v9726 = vld [vmem:[%s3550 + $0xc1] sm:$0xff]
    %v9727 = vld [vmem:[%s3550 + $0xc9] sm:$0xff]
    %v9728 = vld [vmem:[%s3550 + $0xd9] sm:$0xff]
    %v9729 = vld [vmem:[%s3550 + $0xe1] sm:$0xff]
    %v9730 = vld [vmem:[%s3550 + $0xf1] sm:$0xff]
    %v9731 = vld [vmem:[%s3550 + $0xf9] sm:$0xff]
    %v9732 = vld [vmem:[%s3550 + $0x109] sm:$0xff]
    %v9733 = vld [vmem:[%s3550 + $0x111] sm:$0xff]
    %v9734 = vld [vmem:[%s3550 + $0x121] sm:$0xff]
    %v9735 = vld [vmem:[%s3550 + $0x129] sm:$0xff]
    %v9736 = vld [vmem:[%s3550 + $0x139] sm:$0xff]
    %v9737 = vld [vmem:[%s3550 + $0x141] sm:$0xff]
    %v9738 = vld [vmem:[%s3550 + $0x151] sm:$0xff]
    %v9739 = vld [vmem:[%s3550 + $0x159] sm:$0xff]
    %v9740 = vld [vmem:[%s3550 + $0x169] sm:$0xff]
    %v9741 = vld [vmem:[%s3550 + $0x171] sm:$0xff]
    %v9742 = vld [vmem:[%s3550 + $0x1b1] sm:$0xff]
    %v9743 = vld [vmem:[%s3550 + $0x1b9] sm:$0xff]
    %v9744 = vld [vmem:[%s3550 + $0x1c9] sm:$0xff]
    %v9745 = vld [vmem:[%s3550 + $0x1d1] sm:$0xff]
    %v9746 = vld [vmem:[%s3550 + $0x1e1] sm:$0xff]
    %v9747 = vld [vmem:[%s3550 + $0x1e9] sm:$0xff]
    %v9748 = vld [vmem:[%s3550 + $0x1f9] sm:$0xff]
    %v9749 = vld [vmem:[%s3550 + $0x201] sm:$0xff]
    %v9750 = vld [vmem:[%s3550 + $0x211] sm:$0xff]
    %v9751 = vld [vmem:[%s3550 + $0x219] sm:$0xff]
    %v9752 = vld [vmem:[%s3550 + $0x229] sm:$0xff]
    %v9753 = vld [vmem:[%s3550 + $0x231] sm:$0xff]
    %v9754 = vld [vmem:[%s3550 + $0x241] sm:$0xff]
    %v9755 = vld [vmem:[%s3550 + $0x249] sm:$0xff]
    %v9756 = vld [vmem:[%s3550 + $0x259] sm:$0xff]
    %v9757 = vld [vmem:[%s3550 + $0x261] sm:$0xff]
    %v9758 = vld [vmem:[%s3550 + $0x271] sm:$0xff]
    %v9759 = vld [vmem:[%s3550 + $0x279] sm:$0xff]
    %v9760 = vld [vmem:[%s3550 + $0x289] sm:$0xff]
    %v9761 = vld [vmem:[%s3550 + $0x291] sm:$0xff]
    %v9762 = vld [vmem:[%s3550 + $0x2a1] sm:$0xff]
    %v9763 = vld [vmem:[%s3550 + $0x2a9] sm:$0xff]
    %v9764 = vld [vmem:[%s3550 + $0x2b9] sm:$0xff]
    %v9765 = vld [vmem:[%s3550 + $0x2c1] sm:$0xff]
    %v9766 = vld [vmem:[%s3550 + $0x2d1] sm:$0xff]
    %v9767 = vld [vmem:[%s3550 + $0x2d9] sm:$0xff]
    %v9768 = vld [vmem:[%s3550 + $0x2e9] sm:$0xff]
    %v9769 = vld [vmem:[%s3550 + $0x2f1] sm:$0xff]
    %v9770 = vld [vmem:[%s3550 + $0x301] sm:$0xff]
    %v9771 = vld [vmem:[%s3550 + $0x309] sm:$0xff]
    %v9772 = vld [vmem:[%s3550 + $0x319] sm:$0xff]
    %v9773 = vld [vmem:[%s3550 + $0x321] sm:$0xff]
    %v9774 = vpack.c.bf16 %v9711, %v9710
    %v9775 = vpack.c.bf16 %v9713, %v9712
    %v9776 = vpack.c.bf16 %v9715, %v9714
    %v9777 = vpack.c.bf16 %v9717, %v9716
    %v9778 = vpack.c.bf16 %v9719, %v9718
    %v9779 = vpack.c.bf16 %v9721, %v9720
    %v9780 = vpack.c.bf16 %v9723, %v9722
    %v9781 = vpack.c.bf16 %v9725, %v9724
    %v9782 = vpack.c.bf16 %v9727, %v9726
    %v9783 = vpack.c.bf16 %v9729, %v9728
    %v9784 = vpack.c.bf16 %v9731, %v9730
    %v9785 = vpack.c.bf16 %v9733, %v9732
    %v9786 = vpack.c.bf16 %v9735, %v9734
    %v9787 = vpack.c.bf16 %v9737, %v9736
    %v9788 = vpack.c.bf16 %v9739, %v9738
    %v9789 = vpack.c.bf16 %v9741, %v9740
    %v9790 = vpack.c.bf16 %v9743, %v9742
    %v9791 = vpack.c.bf16 %v9745, %v9744
    %v9792 = vpack.c.bf16 %v9747, %v9746
    %v9793 = vpack.c.bf16 %v9749, %v9748
    %v9794 = vpack.c.bf16 %v9751, %v9750
    %v9795 = vpack.c.bf16 %v9753, %v9752
    %v9796 = vpack.c.bf16 %v9755, %v9754
    %v9797 = vpack.c.bf16 %v9757, %v9756
    %v9798 = vpack.c.bf16 %v9759, %v9758
    %v9799 = vpack.c.bf16 %v9761, %v9760
    %v9800 = vpack.c.bf16 %v9763, %v9762
    %v9801 = vpack.c.bf16 %v9765, %v9764
    %v9802 = vpack.c.bf16 %v9767, %v9766
    %v9803 = vpack.c.bf16 %v9769, %v9768
    %v9804 = vpack.c.bf16 %v9771, %v9770
    %v9805 = vpack.c.bf16 %v9773, %v9772
    %s9806 = scalar_lea.vmem [#allocation7], 112
    %v9807 = vld [vmem:[%s9806] sm:$0xf]
    %v9808 = vld [vmem:[%s9806 + $0x4] sm:$0xf]
    %v9809 = vld [vmem:[%s9806 + $0x8] sm:$0xf]
    %v9810 = vld [vmem:[%s9806 + $0xc] sm:$0xf]
    %v9815 = vunpack.c.l.b16 %v9807
    %v9816 = vunpack.c.l.b16 %v9808
    %v9817 = vunpack.c.l.b16 %v9809
    %v9818 = vunpack.c.l.b16 %v9810
    %v9819 = vpack.c.b16 %v9816, %v9815
    %v9820 = vpack.c.b16 %v9818, %v9817
    %v9824 = vsel %vm68, %v9774, 0
    %v9827 = vsel %vm68, %v9775, 0
    %v9830 = vsel %vm68, %v9776, 0
    %v9833 = vsel %vm68, %v9777, 0
    %v9836 = vsel %vm68, %v9778, 0
    %v9839 = vsel %vm68, %v9779, 0
    %v9842 = vsel %vm68, %v9780, 0
    %v9845 = vsel %vm68, %v9781, 0
    %v9848 = vsel %vm68, %v9782, 0
    %v9851 = vsel %vm68, %v9783, 0
    %v9854 = vsel %vm68, %v9784, 0
    %v9857 = vsel %vm68, %v9785, 0
    %v9860 = vsel %vm68, %v9786, 0
    %v9863 = vsel %vm68, %v9787, 0
    %v9866 = vsel %vm68, %v9788, 0
    %v9869 = vsel %vm68, %v9789, 0
    %v9872 = vsel %vm68, %v9790, 0
    %v9875 = vsel %vm68, %v9791, 0
    %v9878 = vsel %vm68, %v9792, 0
    %v9881 = vsel %vm68, %v9793, 0
    %v9884 = vsel %vm68, %v9794, 0
    %v9887 = vsel %vm68, %v9795, 0
    %v9890 = vsel %vm68, %v9796, 0
    %v9893 = vsel %vm68, %v9797, 0
    %v9896 = vsel %vm68, %v9798, 0
    %v9899 = vsel %vm68, %v9799, 0
    %v9902 = vsel %vm68, %v9800, 0
    %v9905 = vsel %vm68, %v9801, 0
    %v9908 = vsel %vm68, %v9802, 0
    %v9911 = vsel %vm68, %v9803, 0
    %v9914 = vsel %vm68, %v9804, 0
    %v9917 = vsel %vm68, %v9805, 0
    %9919 = vmatprep.subr.bf16.mxu0 0
    %9920 = vmatpush1.bf16.msra.mxu0 %v9819
    %9921 = vmatprep.subr.bf16.mxu0 0
    %9922 = vmatpush1.bf16.msra.mxu0 %v9820
    %9923 = vmatprep.subr.bf16.mxu0 0
    %9924 = vmatpush1.bf16.msra.mxu0 0
    %9925 = vmatprep.subr.bf16.mxu0 0
    %9926 = vmatpush1.bf16.msra.mxu0 0
    %9927 = vmatprep.subr.bf16.mxu0 0
    %9928 = vmatpush1.bf16.msra.mxu0 0
    %9929 = vmatprep.subr.bf16.mxu0 0
    %9930 = vmatpush1.bf16.msra.mxu0 0
    %9931 = vmatprep.subr.bf16.mxu0 0
    %9932 = vmatpush1.bf16.msra.mxu0 0
    %9933 = vmatprep.subr.bf16.mxu0 0
    %9934 = vmatpush1.bf16.msra.mxu0 0
    %9935 = vmatprep.subr.bf16.mxu0 0
    %9936 = vmatpush1.bf16.msra.mxu0 0
    %9937 = vmatprep.subr.bf16.mxu0 0
    %9938 = vmatpush1.bf16.msra.mxu0 0
    %9939 = vmatprep.subr.bf16.mxu0 0
    %9940 = vmatpush1.bf16.msra.mxu0 0
    %9941 = vmatprep.subr.bf16.mxu0 0
    %9942 = vmatpush1.bf16.msra.mxu0 0
    %9943 = vmatprep.subr.bf16.mxu0 0
    %9944 = vmatpush1.bf16.msra.mxu0 0
    %9945 = vmatprep.subr.bf16.mxu0 0
    %9946 = vmatpush1.bf16.msra.mxu0 0
    %9947 = vmatprep.subr.bf16.mxu0 0
    %9948 = vmatpush1.bf16.msra.mxu0 0
    %9949 = vmatprep.subr.bf16.mxu0 0
    %9950 = vmatpush1.bf16.msra.mxu0 0
    %9951 = vmatprep.mubr.bf16.mxu0 0
    %9952 = vmatmul.mubr.bf16.gmra.mrb[0].mxu0 %v9824
    %v9953 = vpop.f32.mrb[0].mxu0
    %v9954 = vadd.f32 0.0, %v9953
    %v9955 = vpop.f32.mrb[0].mxu0
    %v9956 = vpop.f32.mrb[0].mxu0
    %v9957 = vadd.f32 0.0, %v9956
    %v9958 = vpop.f32.mrb[0].mxu0
    %9959 = vmatprep.mubr.bf16.mxu0 0
    %9960 = vmatmul.mubr.bf16.gmra.mrb[0].mxu0 %v9827
    %v9961 = vpop.f32.mrb[0].mxu0
    %v9962 = vadd.f32 0.0, %v9961
    %v9963 = vpop.f32.mrb[0].mxu0
    %v9964 = vpop.f32.mrb[0].mxu0
    %v9965 = vadd.f32 0.0, %v9964
    %v9966 = vpop.f32.mrb[0].mxu0
    %9967 = vmatprep.mubr.bf16.mxu0 0
    %9968 = vmatmul.mubr.bf16.gmra.mrb[0].mxu0 %v9830
    %v9969 = vpop.f32.mrb[0].mxu0
    %v9970 = vadd.f32 0.0, %v9969
    %v9971 = vpop.f32.mrb[0].mxu0
    %v9972 = vpop.f32.mrb[0].mxu0
    %v9973 = vadd.f32 0.0, %v9972
    %v9974 = vpop.f32.mrb[0].mxu0
    %9975 = vmatprep.mubr.bf16.mxu0 0
    %9976 = vmatmul.mubr.bf16.gmra.mrb[0].mxu0 %v9833
    %v9977 = vpop.f32.mrb[0].mxu0
    %v9978 = vadd.f32 0.0, %v9977
    %v9979 = vpop.f32.mrb[0].mxu0
    %v9980 = vpop.f32.mrb[0].mxu0
    %v9981 = vadd.f32 0.0, %v9980
    %v9982 = vpop.f32.mrb[0].mxu0
    %9983 = vmatprep.mubr.bf16.mxu0 0
    %9984 = vmatmul.mubr.bf16.gmra.mrb[0].mxu0 %v9836
    %v9985 = vpop.f32.mrb[0].mxu0
    %v9986 = vadd.f32 0.0, %v9985
    %v9987 = vpop.f32.mrb[0].mxu0
    %v9988 = vpop.f32.mrb[0].mxu0
    %v9989 = vadd.f32 0.0, %v9988
    %v9990 = vpop.f32.mrb[0].mxu0
    %9991 = vmatprep.mubr.bf16.mxu0 0
    %9992 = vmatmul.mubr.bf16.gmra.mrb[0].mxu0 %v9839
    %v9993 = vpop.f32.mrb[0].mxu0
    %v9994 = vadd.f32 0.0, %v9993
    %v9995 = vpop.f32.mrb[0].mxu0
    %v9996 = vpop.f32.mrb[0].mxu0
    %v9997 = vadd.f32 0.0, %v9996
    %v9998 = vpop.f32.mrb[0].mxu0
    %9999 = vmatprep.mubr.bf16.mxu0 0
    %10000 = vmatmul.mubr.bf16.gmra.mrb[0].mxu0 %v9842
    %v10001 = vpop.f32.mrb[0].mxu0
    %v10002 = vadd.f32 0.0, %v10001
    %v10003 = vpop.f32.mrb[0].mxu0
    %v10004 = vpop.f32.mrb[0].mxu0
    %v10005 = vadd.f32 0.0, %v10004
    %v10006 = vpop.f32.mrb[0].mxu0
    %10007 = vmatprep.mubr.bf16.mxu0 0
    %10008 = vmatmul.mubr.bf16.gmra.mrb[0].mxu0 %v9845
    %v10009 = vpop.f32.mrb[0].mxu0
    %v10010 = vadd.f32 0.0, %v10009
    %v10011 = vpop.f32.mrb[0].mxu0
    %v10012 = vpop.f32.mrb[0].mxu0
    %v10013 = vadd.f32 0.0, %v10012
    %v10014 = vpop.f32.mrb[0].mxu0
    %10015 = vmatprep.mubr.bf16.mxu0 0
    %10016 = vmatmul.mubr.bf16.gmra.mrb[0].mxu0 %v9848
    %v10017 = vpop.f32.mrb[0].mxu0
    %v10018 = vadd.f32 0.0, %v10017
    %v10019 = vpop.f32.mrb[0].mxu0
    %v10020 = vpop.f32.mrb[0].mxu0
    %v10021 = vadd.f32 0.0, %v10020
    %v10022 = vpop.f32.mrb[0].mxu0
    %10023 = vmatprep.mubr.bf16.mxu0 0
    %10024 = vmatmul.mubr.bf16.gmra.mrb[0].mxu0 %v9851
    %v10025 = vpop.f32.mrb[0].mxu0
    %v10026 = vadd.f32 0.0, %v10025
    %v10027 = vpop.f32.mrb[0].mxu0
    %v10028 = vpop.f32.mrb[0].mxu0
    %v10029 = vadd.f32 0.0, %v10028
    %v10030 = vpop.f32.mrb[0].mxu0
    %10031 = vmatprep.mubr.bf16.mxu0 0
    %10032 = vmatmul.mubr.bf16.gmra.mrb[0].mxu0 %v9854
    %v10033 = vpop.f32.mrb[0].mxu0
    %v10034 = vadd.f32 0.0, %v10033
    %v10035 = vpop.f32.mrb[0].mxu0
    %v10036 = vpop.f32.mrb[0].mxu0
    %v10037 = vadd.f32 0.0, %v10036
    %v10038 = vpop.f32.mrb[0].mxu0
    %10039 = vmatprep.mubr.bf16.mxu0 0
    %10040 = vmatmul.mubr.bf16.gmra.mrb[0].mxu0 %v9857
    %v10041 = vpop.f32.mrb[0].mxu0
    %v10042 = vadd.f32 0.0, %v10041
    %v10043 = vpop.f32.mrb[0].mxu0
    %v10044 = vpop.f32.mrb[0].mxu0
    %v10045 = vadd.f32 0.0, %v10044
    %v10046 = vpop.f32.mrb[0].mxu0
    %10047 = vmatprep.mubr.bf16.mxu0 0
    %10048 = vmatmul.mubr.bf16.gmra.mrb[0].mxu0 %v9860
    %v10049 = vpop.f32.mrb[0].mxu0
    %v10050 = vadd.f32 0.0, %v10049
    %v10051 = vpop.f32.mrb[0].mxu0
    %v10052 = vpop.f32.mrb[0].mxu0
    %v10053 = vadd.f32 0.0, %v10052
    %v10054 = vpop.f32.mrb[0].mxu0
    %10055 = vmatprep.mubr.bf16.mxu0 0
    %10056 = vmatmul.mubr.bf16.gmra.mrb[0].mxu0 %v9863
    %v10057 = vpop.f32.mrb[0].mxu0
    %v10058 = vadd.f32 0.0, %v10057
    %v10059 = vpop.f32.mrb[0].mxu0
    %v10060 = vpop.f32.mrb[0].mxu0
    %v10061 = vadd.f32 0.0, %v10060
    %v10062 = vpop.f32.mrb[0].mxu0
    %10063 = vmatprep.mubr.bf16.mxu0 0
    %10064 = vmatmul.mubr.bf16.gmra.mrb[0].mxu0 %v9866
    %v10065 = vpop.f32.mrb[0].mxu0
    %v10066 = vadd.f32 0.0, %v10065
    %v10067 = vpop.f32.mrb[0].mxu0
    %v10068 = vpop.f32.mrb[0].mxu0
    %v10069 = vadd.f32 0.0, %v10068
    %v10070 = vpop.f32.mrb[0].mxu0
    %10071 = vmatprep.mubr.bf16.mxu0 0
    %10072 = vmatmul.mubr.bf16.gmra.mrb[0].mxu0 %v9869
    %v10073 = vpop.f32.mrb[0].mxu0
    %v10074 = vadd.f32 0.0, %v10073
    %v10075 = vpop.f32.mrb[0].mxu0
    %v10076 = vpop.f32.mrb[0].mxu0
    %v10077 = vadd.f32 0.0, %v10076
    %v10078 = vpop.f32.mrb[0].mxu0
    %10079 = vmatprep.mubr.bf16.mxu0 0
    %10080 = vmatmul.mubr.bf16.gmra.mrb[0].mxu0 %v9872
    %v10081 = vpop.f32.mrb[0].mxu0
    %v10082 = vadd.f32 0.0, %v10081
    %v10083 = vpop.f32.mrb[0].mxu0
    %v10084 = vpop.f32.mrb[0].mxu0
    %v10085 = vadd.f32 0.0, %v10084
    %v10086 = vpop.f32.mrb[0].mxu0
    %10087 = vmatprep.mubr.bf16.mxu0 0
    %10088 = vmatmul.mubr.bf16.gmra.mrb[0].mxu0 %v9875
    %v10089 = vpop.f32.mrb[0].mxu0
    %v10090 = vadd.f32 0.0, %v10089
    %v10091 = vpop.f32.mrb[0].mxu0
    %v10092 = vpop.f32.mrb[0].mxu0
    %v10093 = vadd.f32 0.0, %v10092
    %v10094 = vpop.f32.mrb[0].mxu0
    %10095 = vmatprep.mubr.bf16.mxu0 0
    %10096 = vmatmul.mubr.bf16.gmra.mrb[0].mxu0 %v9878
    %v10097 = vpop.f32.mrb[0].mxu0
    %v10098 = vadd.f32 0.0, %v10097
    %v10099 = vpop.f32.mrb[0].mxu0
    %v10100 = vpop.f32.mrb[0].mxu0
    %v10101 = vadd.f32 0.0, %v10100
    %v10102 = vpop.f32.mrb[0].mxu0
    %10103 = vmatprep.mubr.bf16.mxu0 0
    %10104 = vmatmul.mubr.bf16.gmra.mrb[0].mxu0 %v9881
    %v10105 = vpop.f32.mrb[0].mxu0
    %v10106 = vadd.f32 0.0, %v10105
    %v10107 = vpop.f32.mrb[0].mxu0
    %v10108 = vpop.f32.mrb[0].mxu0
    %v10109 = vadd.f32 0.0, %v10108
    %v10110 = vpop.f32.mrb[0].mxu0
    %10111 = vmatprep.mubr.bf16.mxu0 0
    %10112 = vmatmul.mubr.bf16.gmra.mrb[0].mxu0 %v9884
    %v10113 = vpop.f32.mrb[0].mxu0
    %v10114 = vadd.f32 0.0, %v10113
    %v10115 = vpop.f32.mrb[0].mxu0
    %v10116 = vpop.f32.mrb[0].mxu0
    %v10117 = vadd.f32 0.0, %v10116
    %v10118 = vpop.f32.mrb[0].mxu0
    %10119 = vmatprep.mubr.bf16.mxu0 0
    %10120 = vmatmul.mubr.bf16.gmra.mrb[0].mxu0 %v9887
    %v10121 = vpop.f32.mrb[0].mxu0
    %v10122 = vadd.f32 0.0, %v10121
    %v10123 = vpop.f32.mrb[0].mxu0
    %v10124 = vpop.f32.mrb[0].mxu0
    %v10125 = vadd.f32 0.0, %v10124
    %v10126 = vpop.f32.mrb[0].mxu0
    %10127 = vmatprep.mubr.bf16.mxu0 0
    %10128 = vmatmul.mubr.bf16.gmra.mrb[0].mxu0 %v9890
    %v10129 = vpop.f32.mrb[0].mxu0
    %v10130 = vadd.f32 0.0, %v10129
    %v10131 = vpop.f32.mrb[0].mxu0
    %v10132 = vpop.f32.mrb[0].mxu0
    %v10133 = vadd.f32 0.0, %v10132
    %v10134 = vpop.f32.mrb[0].mxu0
    %10135 = vmatprep.mubr.bf16.mxu0 0
    %10136 = vmatmul.mubr.bf16.gmra.mrb[0].mxu0 %v9893
    %v10137 = vpop.f32.mrb[0].mxu0
    %v10138 = vadd.f32 0.0, %v10137
    %v10139 = vpop.f32.mrb[0].mxu0
    %v10140 = vpop.f32.mrb[0].mxu0
    %v10141 = vadd.f32 0.0, %v10140
    %v10142 = vpop.f32.mrb[0].mxu0
    %10143 = vmatprep.mubr.bf16.mxu0 0
    %10144 = vmatmul.mubr.bf16.gmra.mrb[0].mxu0 %v9896
    %v10145 = vpop.f32.mrb[0].mxu0
    %v10146 = vadd.f32 0.0, %v10145
    %v10147 = vpop.f32.mrb[0].mxu0
    %v10148 = vpop.f32.mrb[0].mxu0
    %v10149 = vadd.f32 0.0, %v10148
    %v10150 = vpop.f32.mrb[0].mxu0
    %10151 = vmatprep.mubr.bf16.mxu0 0
    %10152 = vmatmul.mubr.bf16.gmra.mrb[0].mxu0 %v9899
    %v10153 = vpop.f32.mrb[0].mxu0
    %v10154 = vadd.f32 0.0, %v10153
    %v10155 = vpop.f32.mrb[0].mxu0
    %v10156 = vpop.f32.mrb[0].mxu0
    %v10157 = vadd.f32 0.0, %v10156
    %v10158 = vpop.f32.mrb[0].mxu0
    %10159 = vmatprep.mubr.bf16.mxu0 0
    %10160 = vmatmul.mubr.bf16.gmra.mrb[0].mxu0 %v9902
    %v10161 = vpop.f32.mrb[0].mxu0
    %v10162 = vadd.f32 0.0, %v10161
    %v10163 = vpop.f32.mrb[0].mxu0
    %v10164 = vpop.f32.mrb[0].mxu0
    %v10165 = vadd.f32 0.0, %v10164
    %v10166 = vpop.f32.mrb[0].mxu0
    %10167 = vmatprep.mubr.bf16.mxu0 0
    %10168 = vmatmul.mubr.bf16.gmra.mrb[0].mxu0 %v9905
    %v10169 = vpop.f32.mrb[0].mxu0
    %v10170 = vadd.f32 0.0, %v10169
    %v10171 = vpop.f32.mrb[0].mxu0
    %v10172 = vpop.f32.mrb[0].mxu0
    %v10173 = vadd.f32 0.0, %v10172
    %v10174 = vpop.f32.mrb[0].mxu0
    %10175 = vmatprep.mubr.bf16.mxu0 0
    %10176 = vmatmul.mubr.bf16.gmra.mrb[0].mxu0 %v9908
    %v10177 = vpop.f32.mrb[0].mxu0
    %v10178 = vadd.f32 0.0, %v10177
    %v10179 = vpop.f32.mrb[0].mxu0
    %v10180 = vpop.f32.mrb[0].mxu0
    %v10181 = vadd.f32 0.0, %v10180
    %v10182 = vpop.f32.mrb[0].mxu0
    %10183 = vmatprep.mubr.bf16.mxu0 0
    %10184 = vmatmul.mubr.bf16.gmra.mrb[0].mxu0 %v9911
    %v10185 = vpop.f32.mrb[0].mxu0
    %v10186 = vadd.f32 0.0, %v10185
    %v10187 = vpop.f32.mrb[0].mxu0
    %v10188 = vpop.f32.mrb[0].mxu0
    %v10189 = vadd.f32 0.0, %v10188
    %v10190 = vpop.f32.mrb[0].mxu0
    %10191 = vmatprep.mubr.bf16.mxu0 0
    %10192 = vmatmul.mubr.bf16.gmra.mrb[0].mxu0 %v9914
    %v10193 = vpop.f32.mrb[0].mxu0
    %v10194 = vadd.f32 0.0, %v10193
    %v10195 = vpop.f32.mrb[0].mxu0
    %v10196 = vpop.f32.mrb[0].mxu0
    %v10197 = vadd.f32 0.0, %v10196
    %v10198 = vpop.f32.mrb[0].mxu0
    %10199 = vmatprep.mubr.bf16.mxu0 0
    %10200 = vmatmul.mubr.bf16.gmra.mrb[0].mxu0 %v9917
    %v10201 = vpop.f32.mrb[0].mxu0
    %v10202 = vadd.f32 0.0, %v10201
    %v10203 = vpop.f32.mrb[0].mxu0
    %v10204 = vpop.f32.mrb[0].mxu0
    %v10205 = vadd.f32 0.0, %v10204
    %v10206 = vpop.f32.mrb[0].mxu0
    %10207 = vdwg.mxu0
    %v10208 = vadd.f32 %v9646, %v9954
    %v10209 = vadd.f32 %v9647, %v9957
    %v10210 = vadd.f32 %v9648, %v9962
    %v10211 = vadd.f32 %v9649, %v9965
    %v10212 = vadd.f32 %v9650, %v9970
    %v10213 = vadd.f32 %v9651, %v9973
    %v10214 = vadd.f32 %v9652, %v9978
    %v10215 = vadd.f32 %v9653, %v9981
    %v10216 = vadd.f32 %v9654, %v9986
    %v10217 = vadd.f32 %v9655, %v9989
    %v10218 = vadd.f32 %v9656, %v9994
    %v10219 = vadd.f32 %v9657, %v9997
    %v10220 = vadd.f32 %v9658, %v10002
    %v10221 = vadd.f32 %v9659, %v10005
    %v10222 = vadd.f32 %v9660, %v10010
    %v10223 = vadd.f32 %v9661, %v10013
    %v10224 = vadd.f32 %v9662, %v10018
    %v10225 = vadd.f32 %v9663, %v10021
    %v10226 = vadd.f32 %v9664, %v10026
    %v10227 = vadd.f32 %v9665, %v10029
    %v10228 = vadd.f32 %v9666, %v10034
    %v10229 = vadd.f32 %v9667, %v10037
    %v10230 = vadd.f32 %v9668, %v10042
    %v10231 = vadd.f32 %v9669, %v10045
    %v10232 = vadd.f32 %v9670, %v10050
    %v10233 = vadd.f32 %v9671, %v10053
    %v10234 = vadd.f32 %v9672, %v10058
    %v10235 = vadd.f32 %v9673, %v10061
    %v10236 = vadd.f32 %v9674, %v10066
    %v10237 = vadd.f32 %v9675, %v10069
    %v10238 = vadd.f32 %v9676, %v10074
    %v10239 = vadd.f32 %v9677, %v10077
    %v10240 = vadd.f32 %v9678, %v10082
    %v10241 = vadd.f32 %v9679, %v10085
    %v10242 = vadd.f32 %v9680, %v10090
    %v10243 = vadd.f32 %v9681, %v10093
    %v10244 = vadd.f32 %v9682, %v10098
    %v10245 = vadd.f32 %v9683, %v10101
    %v10246 = vadd.f32 %v9684, %v10106
    %v10247 = vadd.f32 %v9685, %v10109
    %v10248 = vadd.f32 %v9686, %v10114
    %v10249 = vadd.f32 %v9687, %v10117
    %v10250 = vadd.f32 %v9688, %v10122
    %v10251 = vadd.f32 %v9689, %v10125
    %v10252 = vadd.f32 %v9690, %v10130
    %v10253 = vadd.f32 %v9691, %v10133
    %v10254 = vadd.f32 %v9692, %v10138
    %v10255 = vadd.f32 %v9693, %v10141
    %v10256 = vadd.f32 %v9694, %v10146
    %v10257 = vadd.f32 %v9695, %v10149
    %v10258 = vadd.f32 %v9696, %v10154
    %v10259 = vadd.f32 %v9697, %v10157
    %v10260 = vadd.f32 %v9698, %v10162
    %v10261 = vadd.f32 %v9699, %v10165
    %v10262 = vadd.f32 %v9700, %v10170
    %v10263 = vadd.f32 %v9701, %v10173
    %v10264 = vadd.f32 %v9702, %v10178
    %v10265 = vadd.f32 %v9703, %v10181
    %v10266 = vadd.f32 %v9704, %v10186
    %v10267 = vadd.f32 %v9705, %v10189
    %v10268 = vadd.f32 %v9706, %v10194
    %v10269 = vadd.f32 %v9707, %v10197
    %v10270 = vadd.f32 %v9708, %v10202
    %v10271 = vadd.f32 %v9709, %v10205
    %v10272 = vld [vmem:[%s3550 + $0x2] sm:$0xff]
    %v10273 = vld [vmem:[%s3550 + $0xa] sm:$0xff]
    %v10274 = vld [vmem:[%s3550 + $0x1a] sm:$0xff]
    %v10275 = vld [vmem:[%s3550 + $0x22] sm:$0xff]
    %v10276 = vld [vmem:[%s3550 + $0x32] sm:$0xff]
    %v10277 = vld [vmem:[%s3550 + $0x3a] sm:$0xff]
    %v10278 = vld [vmem:[%s3550 + $0x4a] sm:$0xff]
    %v10279 = vld [vmem:[%s3550 + $0x52] sm:$0xff]
    %v10280 = vld [vmem:[%s3550 + $0x62] sm:$0xff]
    %v10281 = vld [vmem:[%s3550 + $0x6a] sm:$0xff]
    %v10282 = vld [vmem:[%s3550 + $0x7a] sm:$0xff]
    %v10283 = vld [vmem:[%s3550 + $0x82] sm:$0xff]
    %v10284 = vld [vmem:[%s3550 + $0x92] sm:$0xff]
    %v10285 = vld [vmem:[%s3550 + $0x9a] sm:$0xff]
    %v10286 = vld [vmem:[%s3550 + $0xaa] sm:$0xff]
    %v10287 = vld [vmem:[%s3550 + $0xb2] sm:$0xff]
    %v10288 = vld [vmem:[%s3550 + $0xc2] sm:$0xff]
    %v10289 = vld [vmem:[%s3550 + $0xca] sm:$0xff]
    %v10290 = vld [vmem:[%s3550 + $0xda] sm:$0xff]
    %v10291 = vld [vmem:[%s3550 + $0xe2] sm:$0xff]
    %v10292 = vld [vmem:[%s3550 + $0xf2] sm:$0xff]
    %v10293 = vld [vmem:[%s3550 + $0xfa] sm:$0xff]
    %v10294 = vld [vmem:[%s3550 + $0x10a] sm:$0xff]
    %v10295 = vld [vmem:[%s3550 + $0x112] sm:$0xff]
    %v10296 = vld [vmem:[%s3550 + $0x122] sm:$0xff]
    %v10297 = vld [vmem:[%s3550 + $0x12a] sm:$0xff]
    %v10298 = vld [vmem:[%s3550 + $0x13a] sm:$0xff]
    %v10299 = vld [vmem:[%s3550 + $0x142] sm:$0xff]
    %v10300 = vld [vmem:[%s3550 + $0x152] sm:$0xff]
    %v10301 = vld [vmem:[%s3550 + $0x15a] sm:$0xff]
    %v10302 = vld [vmem:[%s3550 + $0x16a] sm:$0xff]
    %v10303 = vld [vmem:[%s3550 + $0x172] sm:$0xff]
    %v10304 = vld [vmem:[%s3550 + $0x1b2] sm:$0xff]
    %v10305 = vld [vmem:[%s3550 + $0x1ba] sm:$0xff]
    %v10306 = vld [vmem:[%s3550 + $0x1ca] sm:$0xff]
    %v10307 = vld [vmem:[%s3550 + $0x1d2] sm:$0xff]
    %v10308 = vld [vmem:[%s3550 + $0x1e2] sm:$0xff]
    %v10309 = vld [vmem:[%s3550 + $0x1ea] sm:$0xff]
    %v10310 = vld [vmem:[%s3550 + $0x1fa] sm:$0xff]
    %v10311 = vld [vmem:[%s3550 + $0x202] sm:$0xff]
    %v10312 = vld [vmem:[%s3550 + $0x212] sm:$0xff]
    %v10313 = vld [vmem:[%s3550 + $0x21a] sm:$0xff]
    %v10314 = vld [vmem:[%s3550 + $0x22a] sm:$0xff]
    %v10315 = vld [vmem:[%s3550 + $0x232] sm:$0xff]
    %v10316 = vld [vmem:[%s3550 + $0x242] sm:$0xff]
    %v10317 = vld [vmem:[%s3550 + $0x24a] sm:$0xff]
    %v10318 = vld [vmem:[%s3550 + $0x25a] sm:$0xff]
    %v10319 = vld [vmem:[%s3550 + $0x262] sm:$0xff]
    %v10320 = vld [vmem:[%s3550 + $0x272] sm:$0xff]
    %v10321 = vld [vmem:[%s3550 + $0x27a] sm:$0xff]
    %v10322 = vld [vmem:[%s3550 + $0x28a] sm:$0xff]
    %v10323 = vld [vmem:[%s3550 + $0x292] sm:$0xff]
    %v10324 = vld [vmem:[%s3550 + $0x2a2] sm:$0xff]
    %v10325 = vld [vmem:[%s3550 + $0x2aa] sm:$0xff]
    %v10326 = vld [vmem:[%s3550 + $0x2ba] sm:$0xff]
    %v10327 = vld [vmem:[%s3550 + $0x2c2] sm:$0xff]
    %v10328 = vld [vmem:[%s3550 + $0x2d2] sm:$0xff]
    %v10329 = vld [vmem:[%s3550 + $0x2da] sm:$0xff]
    %v10330 = vld [vmem:[%s3550 + $0x2ea] sm:$0xff]
    %v10331 = vld [vmem:[%s3550 + $0x2f2] sm:$0xff]
    %v10332 = vld [vmem:[%s3550 + $0x302] sm:$0xff]
    %v10333 = vld [vmem:[%s3550 + $0x30a] sm:$0xff]
    %v10334 = vld [vmem:[%s3550 + $0x31a] sm:$0xff]
    %v10335 = vld [vmem:[%s3550 + $0x322] sm:$0xff]
    %v10336 = vpack.c.bf16 %v10273, %v10272
    %v10337 = vpack.c.bf16 %v10275, %v10274
    %v10338 = vpack.c.bf16 %v10277, %v10276
    %v10339 = vpack.c.bf16 %v10279, %v10278
    %v10340 = vpack.c.bf16 %v10281, %v10280
    %v10341 = vpack.c.bf16 %v10283, %v10282
    %v10342 = vpack.c.bf16 %v10285, %v10284
    %v10343 = vpack.c.bf16 %v10287, %v10286
    %v10344 = vpack.c.bf16 %v10289, %v10288
    %v10345 = vpack.c.bf16 %v10291, %v10290
    %v10346 = vpack.c.bf16 %v10293, %v10292
    %v10347 = vpack.c.bf16 %v10295, %v10294
    %v10348 = vpack.c.bf16 %v10297, %v10296
    %v10349 = vpack.c.bf16 %v10299, %v10298
    %v10350 = vpack.c.bf16 %v10301, %v10300
    %v10351 = vpack.c.bf16 %v10303, %v10302
    %v10352 = vpack.c.bf16 %v10305, %v10304
    %v10353 = vpack.c.bf16 %v10307, %v10306
    %v10354 = vpack.c.bf16 %v10309, %v10308
    %v10355 = vpack.c.bf16 %v10311, %v10310
    %v10356 = vpack.c.bf16 %v10313, %v10312
    %v10357 = vpack.c.bf16 %v10315, %v10314
    %v10358 = vpack.c.bf16 %v10317, %v10316
    %v10359 = vpack.c.bf16 %v10319, %v10318
    %v10360 = vpack.c.bf16 %v10321, %v10320
    %v10361 = vpack.c.bf16 %v10323, %v10322
    %v10362 = vpack.c.bf16 %v10325, %v10324
    %v10363 = vpack.c.bf16 %v10327, %v10326
    %v10364 = vpack.c.bf16 %v10329, %v10328
    %v10365 = vpack.c.bf16 %v10331, %v10330
    %v10366 = vpack.c.bf16 %v10333, %v10332
    %v10367 = vpack.c.bf16 %v10335, %v10334
    %s10368 = scalar_lea.vmem [#allocation7], 128
    %v10369 = vld [vmem:[%s10368] sm:$0xf]
    %v10370 = vld [vmem:[%s10368 + $0x4] sm:$0xf]
    %v10371 = vld [vmem:[%s10368 + $0x8] sm:$0xf]
    %v10372 = vld [vmem:[%s10368 + $0xc] sm:$0xf]
    %v10377 = vunpack.c.l.b16 %v10369
    %v10378 = vunpack.c.l.b16 %v10370
    %v10379 = vunpack.c.l.b16 %v10371
    %v10380 = vunpack.c.l.b16 %v10372
    %v10381 = vpack.c.b16 %v10378, %v10377
    %v10382 = vpack.c.b16 %v10380, %v10379
    %v10386 = vsel %vm68, %v10336, 0
    %v10389 = vsel %vm68, %v10337, 0
    %v10392 = vsel %vm68, %v10338, 0
    %v10395 = vsel %vm68, %v10339, 0
    %v10398 = vsel %vm68, %v10340, 0
    %v10401 = vsel %vm68, %v10341, 0
    %v10404 = vsel %vm68, %v10342, 0
    %v10407 = vsel %vm68, %v10343, 0
    %v10410 = vsel %vm68, %v10344, 0
    %v10413 = vsel %vm68, %v10345, 0
    %v10416 = vsel %vm68, %v10346, 0
    %v10419 = vsel %vm68, %v10347, 0
    %v10422 = vsel %vm68, %v10348, 0
    %v10425 = vsel %vm68, %v10349, 0
    %v10428 = vsel %vm68, %v10350, 0
    %v10431 = vsel %vm68, %v10351, 0
    %v10434 = vsel %vm68, %v10352, 0
    %v10437 = vsel %vm68, %v10353, 0
    %v10440 = vsel %vm68, %v10354, 0
    %v10443 = vsel %vm68, %v10355, 0
    %v10446 = vsel %vm68, %v10356, 0
    %v10449 = vsel %vm68, %v10357, 0
    %v10452 = vsel %vm68, %v10358, 0
    %v10455 = vsel %vm68, %v10359, 0
    %v10458 = vsel %vm68, %v10360, 0
    %v10461 = vsel %vm68, %v10361, 0
    %v10464 = vsel %vm68, %v10362, 0
    %v10467 = vsel %vm68, %v10363, 0
    %v10470 = vsel %vm68, %v10364, 0
    %v10473 = vsel %vm68, %v10365, 0
    %v10476 = vsel %vm68, %v10366, 0
    %v10479 = vsel %vm68, %v10367, 0
    %10481 = vmatprep.subr.bf16.mxu0 0
    %10482 = vmatpush1.bf16.msra.mxu0 %v10381
    %10483 = vmatprep.subr.bf16.mxu0 0
    %10484 = vmatpush1.bf16.msra.mxu0 %v10382
    %10485 = vmatprep.subr.bf16.mxu0 0
    %10486 = vmatpush1.bf16.msra.mxu0 0
    %10487 = vmatprep.subr.bf16.mxu0 0
    %10488 = vmatpush1.bf16.msra.mxu0 0
    %10489 = vmatprep.subr.bf16.mxu0 0
    %10490 = vmatpush1.bf16.msra.mxu0 0
    %10491 = vmatprep.subr.bf16.mxu0 0
    %10492 = vmatpush1.bf16.msra.mxu0 0
    %10493 = vmatprep.subr.bf16.mxu0 0
    %10494 = vmatpush1.bf16.msra.mxu0 0
    %10495 = vmatprep.subr.bf16.mxu0 0
    %10496 = vmatpush1.bf16.msra.mxu0 0
    %10497 = vmatprep.subr.bf16.mxu0 0
    %10498 = vmatpush1.bf16.msra.mxu0 0
    %10499 = vmatprep.subr.bf16.mxu0 0
    %10500 = vmatpush1.bf16.msra.mxu0 0
    %10501 = vmatprep.subr.bf16.mxu0 0
    %10502 = vmatpush1.bf16.msra.mxu0 0
    %10503 = vmatprep.subr.bf16.mxu0 0
    %10504 = vmatpush1.bf16.msra.mxu0 0
    %10505 = vmatprep.subr.bf16.mxu0 0
    %10506 = vmatpush1.bf16.msra.mxu0 0
    %10507 = vmatprep.subr.bf16.mxu0 0
    %10508 = vmatpush1.bf16.msra.mxu0 0
    %10509 = vmatprep.subr.bf16.mxu0 0
    %10510 = vmatpush1.bf16.msra.mxu0 0
    %10511 = vmatprep.subr.bf16.mxu0 0
    %10512 = vmatpush1.bf16.msra.mxu0 0
    %10513 = vmatprep.mubr.bf16.mxu0 0
    %10514 = vmatmul.mubr.bf16.gmra.mrb[0].mxu0 %v10386
    %v10515 = vpop.f32.mrb[0].mxu0
    %v10516 = vadd.f32 0.0, %v10515
    %v10517 = vpop.f32.mrb[0].mxu0
    %v10518 = vpop.f32.mrb[0].mxu0
    %v10519 = vadd.f32 0.0, %v10518
    %v10520 = vpop.f32.mrb[0].mxu0
    %10521 = vmatprep.mubr.bf16.mxu0 0
    %10522 = vmatmul.mubr.bf16.gmra.mrb[0].mxu0 %v10389
    %v10523 = vpop.f32.mrb[0].mxu0
    %v10524 = vadd.f32 0.0, %v10523
    %v10525 = vpop.f32.mrb[0].mxu0
    %v10526 = vpop.f32.mrb[0].mxu0
    %v10527 = vadd.f32 0.0, %v10526
    %v10528 = vpop.f32.mrb[0].mxu0
    %10529 = vmatprep.mubr.bf16.mxu0 0
    %10530 = vmatmul.mubr.bf16.gmra.mrb[0].mxu0 %v10392
    %v10531 = vpop.f32.mrb[0].mxu0
    %v10532 = vadd.f32 0.0, %v10531
    %v10533 = vpop.f32.mrb[0].mxu0
    %v10534 = vpop.f32.mrb[0].mxu0
    %v10535 = vadd.f32 0.0, %v10534
    %v10536 = vpop.f32.mrb[0].mxu0
    %10537 = vmatprep.mubr.bf16.mxu0 0
    %10538 = vmatmul.mubr.bf16.gmra.mrb[0].mxu0 %v10395
    %v10539 = vpop.f32.mrb[0].mxu0
    %v10540 = vadd.f32 0.0, %v10539
    %v10541 = vpop.f32.mrb[0].mxu0
    %v10542 = vpop.f32.mrb[0].mxu0
    %v10543 = vadd.f32 0.0, %v10542
    %v10544 = vpop.f32.mrb[0].mxu0
    %10545 = vmatprep.mubr.bf16.mxu0 0
    %10546 = vmatmul.mubr.bf16.gmra.mrb[0].mxu0 %v10398
    %v10547 = vpop.f32.mrb[0].mxu0
    %v10548 = vadd.f32 0.0, %v10547
    %v10549 = vpop.f32.mrb[0].mxu0
    %v10550 = vpop.f32.mrb[0].mxu0
    %v10551 = vadd.f32 0.0, %v10550
    %v10552 = vpop.f32.mrb[0].mxu0
    %10553 = vmatprep.mubr.bf16.mxu0 0
    %10554 = vmatmul.mubr.bf16.gmra.mrb[0].mxu0 %v10401
    %v10555 = vpop.f32.mrb[0].mxu0
    %v10556 = vadd.f32 0.0, %v10555
    %v10557 = vpop.f32.mrb[0].mxu0
    %v10558 = vpop.f32.mrb[0].mxu0
    %v10559 = vadd.f32 0.0, %v10558
    %v10560 = vpop.f32.mrb[0].mxu0
    %10561 = vmatprep.mubr.bf16.mxu0 0
    %10562 = vmatmul.mubr.bf16.gmra.mrb[0].mxu0 %v10404
    %v10563 = vpop.f32.mrb[0].mxu0
    %v10564 = vadd.f32 0.0, %v10563
    %v10565 = vpop.f32.mrb[0].mxu0
    %v10566 = vpop.f32.mrb[0].mxu0
    %v10567 = vadd.f32 0.0, %v10566
    %v10568 = vpop.f32.mrb[0].mxu0
    %10569 = vmatprep.mubr.bf16.mxu0 0
    %10570 = vmatmul.mubr.bf16.gmra.mrb[0].mxu0 %v10407
    %v10571 = vpop.f32.mrb[0].mxu0
    %v10572 = vadd.f32 0.0, %v10571
    %v10573 = vpop.f32.mrb[0].mxu0
    %v10574 = vpop.f32.mrb[0].mxu0
    %v10575 = vadd.f32 0.0, %v10574
    %v10576 = vpop.f32.mrb[0].mxu0
    %10577 = vmatprep.mubr.bf16.mxu0 0
    %10578 = vmatmul.mubr.bf16.gmra.mrb[0].mxu0 %v10410
    %v10579 = vpop.f32.mrb[0].mxu0
    %v10580 = vadd.f32 0.0, %v10579
    %v10581 = vpop.f32.mrb[0].mxu0
    %v10582 = vpop.f32.mrb[0].mxu0
    %v10583 = vadd.f32 0.0, %v10582
    %v10584 = vpop.f32.mrb[0].mxu0
    %10585 = vmatprep.mubr.bf16.mxu0 0
    %10586 = vmatmul.mubr.bf16.gmra.mrb[0].mxu0 %v10413
    %v10587 = vpop.f32.mrb[0].mxu0
    %v10588 = vadd.f32 0.0, %v10587
    %v10589 = vpop.f32.mrb[0].mxu0
    %v10590 = vpop.f32.mrb[0].mxu0
    %v10591 = vadd.f32 0.0, %v10590
    %v10592 = vpop.f32.mrb[0].mxu0
    %10593 = vmatprep.mubr.bf16.mxu0 0
    %10594 = vmatmul.mubr.bf16.gmra.mrb[0].mxu0 %v10416
    %v10595 = vpop.f32.mrb[0].mxu0
    %v10596 = vadd.f32 0.0, %v10595
    %v10597 = vpop.f32.mrb[0].mxu0
    %v10598 = vpop.f32.mrb[0].mxu0
    %v10599 = vadd.f32 0.0, %v10598
    %v10600 = vpop.f32.mrb[0].mxu0
    %10601 = vmatprep.mubr.bf16.mxu0 0
    %10602 = vmatmul.mubr.bf16.gmra.mrb[0].mxu0 %v10419
    %v10603 = vpop.f32.mrb[0].mxu0
    %v10604 = vadd.f32 0.0, %v10603
    %v10605 = vpop.f32.mrb[0].mxu0
    %v10606 = vpop.f32.mrb[0].mxu0
    %v10607 = vadd.f32 0.0, %v10606
    %v10608 = vpop.f32.mrb[0].mxu0
    %10609 = vmatprep.mubr.bf16.mxu0 0
    %10610 = vmatmul.mubr.bf16.gmra.mrb[0].mxu0 %v10422
    %v10611 = vpop.f32.mrb[0].mxu0
    %v10612 = vadd.f32 0.0, %v10611
    %v10613 = vpop.f32.mrb[0].mxu0
    %v10614 = vpop.f32.mrb[0].mxu0
    %v10615 = vadd.f32 0.0, %v10614
    %v10616 = vpop.f32.mrb[0].mxu0
    %10617 = vmatprep.mubr.bf16.mxu0 0
    %10618 = vmatmul.mubr.bf16.gmra.mrb[0].mxu0 %v10425
    %v10619 = vpop.f32.mrb[0].mxu0
    %v10620 = vadd.f32 0.0, %v10619
    %v10621 = vpop.f32.mrb[0].mxu0
    %v10622 = vpop.f32.mrb[0].mxu0
    %v10623 = vadd.f32 0.0, %v10622
    %v10624 = vpop.f32.mrb[0].mxu0
    %10625 = vmatprep.mubr.bf16.mxu0 0
    %10626 = vmatmul.mubr.bf16.gmra.mrb[0].mxu0 %v10428
    %v10627 = vpop.f32.mrb[0].mxu0
    %v10628 = vadd.f32 0.0, %v10627
    %v10629 = vpop.f32.mrb[0].mxu0
    %v10630 = vpop.f32.mrb[0].mxu0
    %v10631 = vadd.f32 0.0, %v10630
    %v10632 = vpop.f32.mrb[0].mxu0
    %10633 = vmatprep.mubr.bf16.mxu0 0
    %10634 = vmatmul.mubr.bf16.gmra.mrb[0].mxu0 %v10431
    %v10635 = vpop.f32.mrb[0].mxu0
    %v10636 = vadd.f32 0.0, %v10635
    %v10637 = vpop.f32.mrb[0].mxu0
    %v10638 = vpop.f32.mrb[0].mxu0
    %v10639 = vadd.f32 0.0, %v10638
    %v10640 = vpop.f32.mrb[0].mxu0
    %10641 = vmatprep.mubr.bf16.mxu0 0
    %10642 = vmatmul.mubr.bf16.gmra.mrb[0].mxu0 %v10434
    %v10643 = vpop.f32.mrb[0].mxu0
    %v10644 = vadd.f32 0.0, %v10643
    %v10645 = vpop.f32.mrb[0].mxu0
    %v10646 = vpop.f32.mrb[0].mxu0
    %v10647 = vadd.f32 0.0, %v10646
    %v10648 = vpop.f32.mrb[0].mxu0
    %10649 = vmatprep.mubr.bf16.mxu0 0
    %10650 = vmatmul.mubr.bf16.gmra.mrb[0].mxu0 %v10437
    %v10651 = vpop.f32.mrb[0].mxu0
    %v10652 = vadd.f32 0.0, %v10651
    %v10653 = vpop.f32.mrb[0].mxu0
    %v10654 = vpop.f32.mrb[0].mxu0
    %v10655 = vadd.f32 0.0, %v10654
    %v10656 = vpop.f32.mrb[0].mxu0
    %10657 = vmatprep.mubr.bf16.mxu0 0
    %10658 = vmatmul.mubr.bf16.gmra.mrb[0].mxu0 %v10440
    %v10659 = vpop.f32.mrb[0].mxu0
    %v10660 = vadd.f32 0.0, %v10659
    %v10661 = vpop.f32.mrb[0].mxu0
    %v10662 = vpop.f32.mrb[0].mxu0
    %v10663 = vadd.f32 0.0, %v10662
    %v10664 = vpop.f32.mrb[0].mxu0
    %10665 = vmatprep.mubr.bf16.mxu0 0
    %10666 = vmatmul.mubr.bf16.gmra.mrb[0].mxu0 %v10443
    %v10667 = vpop.f32.mrb[0].mxu0
    %v10668 = vadd.f32 0.0, %v10667
    %v10669 = vpop.f32.mrb[0].mxu0
    %v10670 = vpop.f32.mrb[0].mxu0
    %v10671 = vadd.f32 0.0, %v10670
    %v10672 = vpop.f32.mrb[0].mxu0
    %10673 = vmatprep.mubr.bf16.mxu0 0
    %10674 = vmatmul.mubr.bf16.gmra.mrb[0].mxu0 %v10446
    %v10675 = vpop.f32.mrb[0].mxu0
    %v10676 = vadd.f32 0.0, %v10675
    %v10677 = vpop.f32.mrb[0].mxu0
    %v10678 = vpop.f32.mrb[0].mxu0
    %v10679 = vadd.f32 0.0, %v10678
    %v10680 = vpop.f32.mrb[0].mxu0
    %10681 = vmatprep.mubr.bf16.mxu0 0
    %10682 = vmatmul.mubr.bf16.gmra.mrb[0].mxu0 %v10449
    %v10683 = vpop.f32.mrb[0].mxu0
    %v10684 = vadd.f32 0.0, %v10683
    %v10685 = vpop.f32.mrb[0].mxu0
    %v10686 = vpop.f32.mrb[0].mxu0
    %v10687 = vadd.f32 0.0, %v10686
    %v10688 = vpop.f32.mrb[0].mxu0
    %10689 = vmatprep.mubr.bf16.mxu0 0
    %10690 = vmatmul.mubr.bf16.gmra.mrb[0].mxu0 %v10452
    %v10691 = vpop.f32.mrb[0].mxu0
    %v10692 = vadd.f32 0.0, %v10691
    %v10693 = vpop.f32.mrb[0].mxu0
    %v10694 = vpop.f32.mrb[0].mxu0
    %v10695 = vadd.f32 0.0, %v10694
    %v10696 = vpop.f32.mrb[0].mxu0
    %10697 = vmatprep.mubr.bf16.mxu0 0
    %10698 = vmatmul.mubr.bf16.gmra.mrb[0].mxu0 %v10455
    %v10699 = vpop.f32.mrb[0].mxu0
    %v10700 = vadd.f32 0.0, %v10699
    %v10701 = vpop.f32.mrb[0].mxu0
    %v10702 = vpop.f32.mrb[0].mxu0
    %v10703 = vadd.f32 0.0, %v10702
    %v10704 = vpop.f32.mrb[0].mxu0
    %10705 = vmatprep.mubr.bf16.mxu0 0
    %10706 = vmatmul.mubr.bf16.gmra.mrb[0].mxu0 %v10458
    %v10707 = vpop.f32.mrb[0].mxu0
    %v10708 = vadd.f32 0.0, %v10707
    %v10709 = vpop.f32.mrb[0].mxu0
    %v10710 = vpop.f32.mrb[0].mxu0
    %v10711 = vadd.f32 0.0, %v10710
    %v10712 = vpop.f32.mrb[0].mxu0
    %10713 = vmatprep.mubr.bf16.mxu0 0
    %10714 = vmatmul.mubr.bf16.gmra.mrb[0].mxu0 %v10461
    %v10715 = vpop.f32.mrb[0].mxu0
    %v10716 = vadd.f32 0.0, %v10715
    %v10717 = vpop.f32.mrb[0].mxu0
    %v10718 = vpop.f32.mrb[0].mxu0
    %v10719 = vadd.f32 0.0, %v10718
    %v10720 = vpop.f32.mrb[0].mxu0
    %10721 = vmatprep.mubr.bf16.mxu0 0
    %10722 = vmatmul.mubr.bf16.gmra.mrb[0].mxu0 %v10464
    %v10723 = vpop.f32.mrb[0].mxu0
    %v10724 = vadd.f32 0.0, %v10723
    %v10725 = vpop.f32.mrb[0].mxu0
    %v10726 = vpop.f32.mrb[0].mxu0
    %v10727 = vadd.f32 0.0, %v10726
    %v10728 = vpop.f32.mrb[0].mxu0
    %10729 = vmatprep.mubr.bf16.mxu0 0
    %10730 = vmatmul.mubr.bf16.gmra.mrb[0].mxu0 %v10467
    %v10731 = vpop.f32.mrb[0].mxu0
    %v10732 = vadd.f32 0.0, %v10731
    %v10733 = vpop.f32.mrb[0].mxu0
    %v10734 = vpop.f32.mrb[0].mxu0
    %v10735 = vadd.f32 0.0, %v10734
    %v10736 = vpop.f32.mrb[0].mxu0
    %10737 = vmatprep.mubr.bf16.mxu0 0
    %10738 = vmatmul.mubr.bf16.gmra.mrb[0].mxu0 %v10470
    %v10739 = vpop.f32.mrb[0].mxu0
    %v10740 = vadd.f32 0.0, %v10739
    %v10741 = vpop.f32.mrb[0].mxu0
    %v10742 = vpop.f32.mrb[0].mxu0
    %v10743 = vadd.f32 0.0, %v10742
    %v10744 = vpop.f32.mrb[0].mxu0
    %10745 = vmatprep.mubr.bf16.mxu0 0
    %10746 = vmatmul.mubr.bf16.gmra.mrb[0].mxu0 %v10473
    %v10747 = vpop.f32.mrb[0].mxu0
    %v10748 = vadd.f32 0.0, %v10747
    %v10749 = vpop.f32.mrb[0].mxu0
    %v10750 = vpop.f32.mrb[0].mxu0
    %v10751 = vadd.f32 0.0, %v10750
    %v10752 = vpop.f32.mrb[0].mxu0
    %10753 = vmatprep.mubr.bf16.mxu0 0
    %10754 = vmatmul.mubr.bf16.gmra.mrb[0].mxu0 %v10476
    %v10755 = vpop.f32.mrb[0].mxu0
    %v10756 = vadd.f32 0.0, %v10755
    %v10757 = vpop.f32.mrb[0].mxu0
    %v10758 = vpop.f32.mrb[0].mxu0
    %v10759 = vadd.f32 0.0, %v10758
    %v10760 = vpop.f32.mrb[0].mxu0
    %10761 = vmatprep.mubr.bf16.mxu0 0
    %10762 = vmatmul.mubr.bf16.gmra.mrb[0].mxu0 %v10479
    %v10763 = vpop.f32.mrb[0].mxu0
    %v10764 = vadd.f32 0.0, %v10763
    %v10765 = vpop.f32.mrb[0].mxu0
    %v10766 = vpop.f32.mrb[0].mxu0
    %v10767 = vadd.f32 0.0, %v10766
    %v10768 = vpop.f32.mrb[0].mxu0
    %10769 = vdwg.mxu0
    %v10770 = vadd.f32 %v10208, %v10516
    %v10771 = vadd.f32 %v10209, %v10519
    %v10772 = vadd.f32 %v10210, %v10524
    %v10773 = vadd.f32 %v10211, %v10527
    %v10774 = vadd.f32 %v10212, %v10532
    %v10775 = vadd.f32 %v10213, %v10535
    %v10776 = vadd.f32 %v10214, %v10540
    %v10777 = vadd.f32 %v10215, %v10543
    %v10778 = vadd.f32 %v10216, %v10548
    %v10779 = vadd.f32 %v10217, %v10551
    %v10780 = vadd.f32 %v10218, %v10556
    %v10781 = vadd.f32 %v10219, %v10559
    %v10782 = vadd.f32 %v10220, %v10564
    %v10783 = vadd.f32 %v10221, %v10567
    %v10784 = vadd.f32 %v10222, %v10572
    %v10785 = vadd.f32 %v10223, %v10575
    %v10786 = vadd.f32 %v10224, %v10580
    %v10787 = vadd.f32 %v10225, %v10583
    %v10788 = vadd.f32 %v10226, %v10588
    %v10789 = vadd.f32 %v10227, %v10591
    %v10790 = vadd.f32 %v10228, %v10596
    %v10791 = vadd.f32 %v10229, %v10599
    %v10792 = vadd.f32 %v10230, %v10604
    %v10793 = vadd.f32 %v10231, %v10607
    %v10794 = vadd.f32 %v10232, %v10612
    %v10795 = vadd.f32 %v10233, %v10615
    %v10796 = vadd.f32 %v10234, %v10620
    %v10797 = vadd.f32 %v10235, %v10623
    %v10798 = vadd.f32 %v10236, %v10628
    %v10799 = vadd.f32 %v10237, %v10631
    %v10800 = vadd.f32 %v10238, %v10636
    %v10801 = vadd.f32 %v10239, %v10639
    %v10802 = vadd.f32 %v10240, %v10644
    %v10803 = vadd.f32 %v10241, %v10647
    %v10804 = vadd.f32 %v10242, %v10652
    %v10805 = vadd.f32 %v10243, %v10655
    %v10806 = vadd.f32 %v10244, %v10660
    %v10807 = vadd.f32 %v10245, %v10663
    %v10808 = vadd.f32 %v10246, %v10668
    %v10809 = vadd.f32 %v10247, %v10671
    %v10810 = vadd.f32 %v10248, %v10676
    %v10811 = vadd.f32 %v10249, %v10679
    %v10812 = vadd.f32 %v10250, %v10684
    %v10813 = vadd.f32 %v10251, %v10687
    %v10814 = vadd.f32 %v10252, %v10692
    %v10815 = vadd.f32 %v10253, %v10695
    %v10816 = vadd.f32 %v10254, %v10700
    %v10817 = vadd.f32 %v10255, %v10703
    %v10818 = vadd.f32 %v10256, %v10708
    %v10819 = vadd.f32 %v10257, %v10711
    %v10820 = vadd.f32 %v10258, %v10716
    %v10821 = vadd.f32 %v10259, %v10719
    %v10822 = vadd.f32 %v10260, %v10724
    %v10823 = vadd.f32 %v10261, %v10727
    %v10824 = vadd.f32 %v10262, %v10732
    %v10825 = vadd.f32 %v10263, %v10735
    %v10826 = vadd.f32 %v10264, %v10740
    %v10827 = vadd.f32 %v10265, %v10743
    %v10828 = vadd.f32 %v10266, %v10748
    %v10829 = vadd.f32 %v10267, %v10751
    %v10830 = vadd.f32 %v10268, %v10756
    %v10831 = vadd.f32 %v10269, %v10759
    %v10832 = vadd.f32 %v10270, %v10764
    %v10833 = vadd.f32 %v10271, %v10767
    %v10834 = vsel %vm68, %v10770, 0.0
    %v10835 = vsel %vm68, %v10771, 0.0
    %v10836 = vadd.f32 %v10834, %v10835
    %v10837 = vsel %vm68, %v10772, 0.0
    %v10838 = vadd.f32 %v10836, %v10837
    %v10839 = vsel %vm68, %v10773, 0.0
    %v10840 = vadd.f32 %v10838, %v10839
    %v10841 = vsel %vm68, %v10774, 0.0
    %v10842 = vadd.f32 %v10840, %v10841
    %v10843 = vsel %vm68, %v10775, 0.0
    %v10844 = vadd.f32 %v10842, %v10843
    %v10845 = vsel %vm68, %v10776, 0.0
    %v10846 = vadd.f32 %v10844, %v10845
    %v10847 = vsel %vm68, %v10777, 0.0
    %v10848 = vadd.f32 %v10846, %v10847
    %v10849 = vsel %vm68, %v10778, 0.0
    %v10850 = vadd.f32 %v10848, %v10849
    %v10851 = vsel %vm68, %v10779, 0.0
    %v10852 = vadd.f32 %v10850, %v10851
    %v10853 = vsel %vm68, %v10780, 0.0
    %v10854 = vadd.f32 %v10852, %v10853
    %v10855 = vsel %vm68, %v10781, 0.0
    %v10856 = vadd.f32 %v10854, %v10855
    %v10857 = vsel %vm68, %v10782, 0.0
    %v10858 = vadd.f32 %v10856, %v10857
    %v10859 = vsel %vm68, %v10783, 0.0
    %v10860 = vadd.f32 %v10858, %v10859
    %v10861 = vsel %vm68, %v10784, 0.0
    %v10862 = vadd.f32 %v10860, %v10861
    %v10863 = vsel %vm68, %v10785, 0.0
    %v10864 = vadd.f32 %v10862, %v10863
    %v10865 = vsel %vm68, %v10786, 0.0
    %v10866 = vadd.f32 %v10864, %v10865
    %v10867 = vsel %vm68, %v10787, 0.0
    %v10868 = vadd.f32 %v10866, %v10867
    %v10869 = vsel %vm68, %v10788, 0.0
    %v10870 = vadd.f32 %v10868, %v10869
    %v10871 = vsel %vm68, %v10789, 0.0
    %v10872 = vadd.f32 %v10870, %v10871
    %v10873 = vsel %vm68, %v10790, 0.0
    %v10874 = vadd.f32 %v10872, %v10873
    %v10875 = vsel %vm68, %v10791, 0.0
    %v10876 = vadd.f32 %v10874, %v10875
    %v10877 = vsel %vm68, %v10792, 0.0
    %v10878 = vadd.f32 %v10876, %v10877
    %v10879 = vsel %vm68, %v10793, 0.0
    %v10880 = vadd.f32 %v10878, %v10879
    %v10881 = vsel %vm68, %v10794, 0.0
    %v10882 = vadd.f32 %v10880, %v10881
    %v10883 = vsel %vm68, %v10795, 0.0
    %v10884 = vadd.f32 %v10882, %v10883
    %v10885 = vsel %vm68, %v10796, 0.0
    %v10886 = vadd.f32 %v10884, %v10885
    %v10887 = vsel %vm68, %v10797, 0.0
    %v10888 = vadd.f32 %v10886, %v10887
    %v10889 = vsel %vm68, %v10798, 0.0
    %v10890 = vadd.f32 %v10888, %v10889
    %v10891 = vsel %vm68, %v10799, 0.0
    %v10892 = vadd.f32 %v10890, %v10891
    %v10893 = vsel %vm68, %v10800, 0.0
    %v10894 = vadd.f32 %v10892, %v10893
    %v10895 = vsel %vm68, %v10801, 0.0
    %v10896 = vadd.f32 %v10894, %v10895
    %v10897 = vsel %vm68, %v10802, 0.0
    %v10898 = vadd.f32 %v10896, %v10897
    %v10899 = vsel %vm68, %v10803, 0.0
    %v10900 = vadd.f32 %v10898, %v10899
    %v10901 = vsel %vm68, %v10804, 0.0
    %v10902 = vadd.f32 %v10900, %v10901
    %v10903 = vsel %vm68, %v10805, 0.0
    %v10904 = vadd.f32 %v10902, %v10903
    %v10905 = vsel %vm68, %v10806, 0.0
    %v10906 = vadd.f32 %v10904, %v10905
    %v10907 = vsel %vm68, %v10807, 0.0
    %v10908 = vadd.f32 %v10906, %v10907
    %v10909 = vsel %vm68, %v10808, 0.0
    %v10910 = vadd.f32 %v10908, %v10909
    %v10911 = vsel %vm68, %v10809, 0.0
    %v10912 = vadd.f32 %v10910, %v10911
    %v10913 = vsel %vm68, %v10810, 0.0
    %v10914 = vadd.f32 %v10912, %v10913
    %v10915 = vsel %vm68, %v10811, 0.0
    %v10916 = vadd.f32 %v10914, %v10915
    %v10917 = vsel %vm68, %v10812, 0.0
    %v10918 = vadd.f32 %v10916, %v10917
    %v10919 = vsel %vm68, %v10813, 0.0
    %v10920 = vadd.f32 %v10918, %v10919
    %v10921 = vsel %vm68, %v10814, 0.0
    %v10922 = vadd.f32 %v10920, %v10921
    %v10923 = vsel %vm68, %v10815, 0.0
    %v10924 = vadd.f32 %v10922, %v10923
    %v10925 = vsel %vm68, %v10816, 0.0
    %v10926 = vadd.f32 %v10924, %v10925
    %v10927 = vsel %vm68, %v10817, 0.0
    %v10928 = vadd.f32 %v10926, %v10927
    %v10929 = vsel %vm68, %v10818, 0.0
    %v10930 = vadd.f32 %v10928, %v10929
    %v10931 = vsel %vm68, %v10819, 0.0
    %v10932 = vadd.f32 %v10930, %v10931
    %v10933 = vsel %vm68, %v10820, 0.0
    %v10934 = vadd.f32 %v10932, %v10933
    %v10935 = vsel %vm68, %v10821, 0.0
    %v10936 = vadd.f32 %v10934, %v10935
    %v10937 = vsel %vm68, %v10822, 0.0
    %v10938 = vadd.f32 %v10936, %v10937
    %v10939 = vsel %vm68, %v10823, 0.0
    %v10940 = vadd.f32 %v10938, %v10939
    %v10941 = vsel %vm68, %v10824, 0.0
    %v10942 = vadd.f32 %v10940, %v10941
    %v10943 = vsel %vm68, %v10825, 0.0
    %v10944 = vadd.f32 %v10942, %v10943
    %v10945 = vsel %vm68, %v10826, 0.0
    %v10946 = vadd.f32 %v10944, %v10945
    %v10947 = vsel %vm68, %v10827, 0.0
    %v10948 = vadd.f32 %v10946, %v10947
    %v10949 = vsel %vm68, %v10828, 0.0
    %v10950 = vadd.f32 %v10948, %v10949
    %v10951 = vsel %vm68, %v10829, 0.0
    %v10952 = vadd.f32 %v10950, %v10951
    %v10953 = vsel %vm68, %v10830, 0.0
    %v10954 = vadd.f32 %v10952, %v10953
    %v10955 = vsel %vm68, %v10831, 0.0
    %v10956 = vadd.f32 %v10954, %v10955
    %v10957 = vsel %vm68, %v10832, 0.0
    %v10958 = vadd.f32 %v10956, %v10957
    %v10959 = vsel %vm68, %v10833, 0.0
    %v10960 = vadd.f32 %v10958, %v10959
    %v10961 = vrot.slane %v10960, 4
    %v10962 = vadd.f32 %v10960, %v10961
    %v10963 = vrot.slane %v10962, 2
    %v10964 = vadd.f32 %v10962, %v10963
    %v10965 = vrot.slane %v10964, 1
    %v10966 = vadd.f32 %v10964, %v10965
    %v10967 = vmul.f32 %v10966, %v5370
    %v10968 = vsub.f32 %v10770, %v10967
    %v10969 = vsub.f32 %v10771, %v10967
    %v10970 = vsub.f32 %v10772, %v10967
    %v10971 = vsub.f32 %v10773, %v10967
    %v10972 = vsub.f32 %v10774, %v10967
    %v10973 = vsub.f32 %v10775, %v10967
    %v10974 = vsub.f32 %v10776, %v10967
    %v10975 = vsub.f32 %v10777, %v10967
    %v10976 = vsub.f32 %v10778, %v10967
    %v10977 = vsub.f32 %v10779, %v10967
    %v10978 = vsub.f32 %v10780, %v10967
    %v10979 = vsub.f32 %v10781, %v10967
    %v10980 = vsub.f32 %v10782, %v10967
    %v10981 = vsub.f32 %v10783, %v10967
    %v10982 = vsub.f32 %v10784, %v10967
    %v10983 = vsub.f32 %v10785, %v10967
    %v10984 = vsub.f32 %v10786, %v10967
    %v10985 = vsub.f32 %v10787, %v10967
    %v10986 = vsub.f32 %v10788, %v10967
    %v10987 = vsub.f32 %v10789, %v10967
    %v10988 = vsub.f32 %v10790, %v10967
    %v10989 = vsub.f32 %v10791, %v10967
    %v10990 = vsub.f32 %v10792, %v10967
    %v10991 = vsub.f32 %v10793, %v10967
    %v10992 = vsub.f32 %v10794, %v10967
    %v10993 = vsub.f32 %v10795, %v10967
    %v10994 = vsub.f32 %v10796, %v10967
    %v10995 = vsub.f32 %v10797, %v10967
    %v10996 = vsub.f32 %v10798, %v10967
    %v10997 = vsub.f32 %v10799, %v10967
    %v10998 = vsub.f32 %v10800, %v10967
    %v10999 = vsub.f32 %v10801, %v10967
    %v11000 = vsub.f32 %v10802, %v10967
    %v11001 = vsub.f32 %v10803, %v10967
    %v11002 = vsub.f32 %v10804, %v10967
    %v11003 = vsub.f32 %v10805, %v10967
    %v11004 = vsub.f32 %v10806, %v10967
    %v11005 = vsub.f32 %v10807, %v10967
    %v11006 = vsub.f32 %v10808, %v10967
    %v11007 = vsub.f32 %v10809, %v10967
    %v11008 = vsub.f32 %v10810, %v10967
    %v11009 = vsub.f32 %v10811, %v10967
    %v11010 = vsub.f32 %v10812, %v10967
    %v11011 = vsub.f32 %v10813, %v10967
    %v11012 = vsub.f32 %v10814, %v10967
    %v11013 = vsub.f32 %v10815, %v10967
    %v11014 = vsub.f32 %v10816, %v10967
    %v11015 = vsub.f32 %v10817, %v10967
    %v11016 = vsub.f32 %v10818, %v10967
    %v11017 = vsub.f32 %v10819, %v10967
    %v11018 = vsub.f32 %v10820, %v10967
    %v11019 = vsub.f32 %v10821, %v10967
    %v11020 = vsub.f32 %v10822, %v10967
    %v11021 = vsub.f32 %v10823, %v10967
    %v11022 = vsub.f32 %v10824, %v10967
    %v11023 = vsub.f32 %v10825, %v10967
    %v11024 = vsub.f32 %v10826, %v10967
    %v11025 = vsub.f32 %v10827, %v10967
    %v11026 = vsub.f32 %v10828, %v10967
    %v11027 = vsub.f32 %v10829, %v10967
    %v11028 = vsub.f32 %v10830, %v10967
    %v11029 = vsub.f32 %v10831, %v10967
    %v11030 = vsub.f32 %v10832, %v10967
    %v11031 = vsub.f32 %v10833, %v10967
    %v11032 = vmul.f32 %v10968, %v10968
    %v11033 = vmul.f32 %v10969, %v10969
    %v11034 = vmul.f32 %v10970, %v10970
    %v11035 = vmul.f32 %v10971, %v10971
    %v11036 = vmul.f32 %v10972, %v10972
    %v11037 = vmul.f32 %v10973, %v10973
    %v11038 = vmul.f32 %v10974, %v10974
    %v11039 = vmul.f32 %v10975, %v10975
    %v11040 = vmul.f32 %v10976, %v10976
    %v11041 = vmul.f32 %v10977, %v10977
    %v11042 = vmul.f32 %v10978, %v10978
    %v11043 = vmul.f32 %v10979, %v10979
    %v11044 = vmul.f32 %v10980, %v10980
    %v11045 = vmul.f32 %v10981, %v10981
    %v11046 = vmul.f32 %v10982, %v10982
    %v11047 = vmul.f32 %v10983, %v10983
    %v11048 = vmul.f32 %v10984, %v10984
    %v11049 = vmul.f32 %v10985, %v10985
    %v11050 = vmul.f32 %v10986, %v10986
    %v11051 = vmul.f32 %v10987, %v10987
    %v11052 = vmul.f32 %v10988, %v10988
    %v11053 = vmul.f32 %v10989, %v10989
    %v11054 = vmul.f32 %v10990, %v10990
    %v11055 = vmul.f32 %v10991, %v10991
    %v11056 = vmul.f32 %v10992, %v10992
    %v11057 = vmul.f32 %v10993, %v10993
    %v11058 = vmul.f32 %v10994, %v10994
    %v11059 = vmul.f32 %v10995, %v10995
    %v11060 = vmul.f32 %v10996, %v10996
    %v11061 = vmul.f32 %v10997, %v10997
    %v11062 = vmul.f32 %v10998, %v10998
    %v11063 = vmul.f32 %v10999, %v10999
    %v11064 = vmul.f32 %v11000, %v11000
    %v11065 = vmul.f32 %v11001, %v11001
    %v11066 = vmul.f32 %v11002, %v11002
    %v11067 = vmul.f32 %v11003, %v11003
    %v11068 = vmul.f32 %v11004, %v11004
    %v11069 = vmul.f32 %v11005, %v11005
    %v11070 = vmul.f32 %v11006, %v11006
    %v11071 = vmul.f32 %v11007, %v11007
    %v11072 = vmul.f32 %v11008, %v11008
    %v11073 = vmul.f32 %v11009, %v11009
    %v11074 = vmul.f32 %v11010, %v11010
    %v11075 = vmul.f32 %v11011, %v11011
    %v11076 = vmul.f32 %v11012, %v11012
    %v11077 = vmul.f32 %v11013, %v11013
    %v11078 = vmul.f32 %v11014, %v11014
    %v11079 = vmul.f32 %v11015, %v11015
    %v11080 = vmul.f32 %v11016, %v11016
    %v11081 = vmul.f32 %v11017, %v11017
    %v11082 = vmul.f32 %v11018, %v11018
    %v11083 = vmul.f32 %v11019, %v11019
    %v11084 = vmul.f32 %v11020, %v11020
    %v11085 = vmul.f32 %v11021, %v11021
    %v11086 = vmul.f32 %v11022, %v11022
    %v11087 = vmul.f32 %v11023, %v11023
    %v11088 = vmul.f32 %v11024, %v11024
    %v11089 = vmul.f32 %v11025, %v11025
    %v11090 = vmul.f32 %v11026, %v11026
    %v11091 = vmul.f32 %v11027, %v11027
    %v11092 = vmul.f32 %v11028, %v11028
    %v11093 = vmul.f32 %v11029, %v11029
    %v11094 = vmul.f32 %v11030, %v11030
    %v11095 = vmul.f32 %v11031, %v11031
    %v11096 = vsel %vm68, %v11032, 0.0
    %v11097 = vsel %vm68, %v11033, 0.0
    %v11098 = vadd.f32 %v11096, %v11097
    %v11099 = vsel %vm68, %v11034, 0.0
    %v11100 = vadd.f32 %v11098, %v11099
    %v11101 = vsel %vm68, %v11035, 0.0
    %v11102 = vadd.f32 %v11100, %v11101
    %v11103 = vsel %vm68, %v11036, 0.0
    %v11104 = vadd.f32 %v11102, %v11103
    %v11105 = vsel %vm68, %v11037, 0.0
    %v11106 = vadd.f32 %v11104, %v11105
    %v11107 = vsel %vm68, %v11038, 0.0
    %v11108 = vadd.f32 %v11106, %v11107
    %v11109 = vsel %vm68, %v11039, 0.0
    %v11110 = vadd.f32 %v11108, %v11109
    %v11111 = vsel %vm68, %v11040, 0.0
    %v11112 = vadd.f32 %v11110, %v11111
    %v11113 = vsel %vm68, %v11041, 0.0
    %v11114 = vadd.f32 %v11112, %v11113
    %v11115 = vsel %vm68, %v11042, 0.0
    %v11116 = vadd.f32 %v11114, %v11115
    %v11117 = vsel %vm68, %v11043, 0.0
    %v11118 = vadd.f32 %v11116, %v11117
    %v11119 = vsel %vm68, %v11044, 0.0
    %v11120 = vadd.f32 %v11118, %v11119
    %v11121 = vsel %vm68, %v11045, 0.0
    %v11122 = vadd.f32 %v11120, %v11121
    %v11123 = vsel %vm68, %v11046, 0.0
    %v11124 = vadd.f32 %v11122, %v11123
    %v11125 = vsel %vm68, %v11047, 0.0
    %v11126 = vadd.f32 %v11124, %v11125
    %v11127 = vsel %vm68, %v11048, 0.0
    %v11128 = vadd.f32 %v11126, %v11127
    %v11129 = vsel %vm68, %v11049, 0.0
    %v11130 = vadd.f32 %v11128, %v11129
    %v11131 = vsel %vm68, %v11050, 0.0
    %v11132 = vadd.f32 %v11130, %v11131
    %v11133 = vsel %vm68, %v11051, 0.0
    %v11134 = vadd.f32 %v11132, %v11133
    %v11135 = vsel %vm68, %v11052, 0.0
    %v11136 = vadd.f32 %v11134, %v11135
    %v11137 = vsel %vm68, %v11053, 0.0
    %v11138 = vadd.f32 %v11136, %v11137
    %v11139 = vsel %vm68, %v11054, 0.0
    %v11140 = vadd.f32 %v11138, %v11139
    %v11141 = vsel %vm68, %v11055, 0.0
    %v11142 = vadd.f32 %v11140, %v11141
    %v11143 = vsel %vm68, %v11056, 0.0
    %v11144 = vadd.f32 %v11142, %v11143
    %v11145 = vsel %vm68, %v11057, 0.0
    %v11146 = vadd.f32 %v11144, %v11145
    %v11147 = vsel %vm68, %v11058, 0.0
    %v11148 = vadd.f32 %v11146, %v11147
    %v11149 = vsel %vm68, %v11059, 0.0
    %v11150 = vadd.f32 %v11148, %v11149
    %v11151 = vsel %vm68, %v11060, 0.0
    %v11152 = vadd.f32 %v11150, %v11151
    %v11153 = vsel %vm68, %v11061, 0.0
    %v11154 = vadd.f32 %v11152, %v11153
    %v11155 = vsel %vm68, %v11062, 0.0
    %v11156 = vadd.f32 %v11154, %v11155
    %v11157 = vsel %vm68, %v11063, 0.0
    %v11158 = vadd.f32 %v11156, %v11157
    %v11159 = vsel %vm68, %v11064, 0.0
    %v11160 = vadd.f32 %v11158, %v11159
    %v11161 = vsel %vm68, %v11065, 0.0
    %v11162 = vadd.f32 %v11160, %v11161
    %v11163 = vsel %vm68, %v11066, 0.0
    %v11164 = vadd.f32 %v11162, %v11163
    %v11165 = vsel %vm68, %v11067, 0.0
    %v11166 = vadd.f32 %v11164, %v11165
    %v11167 = vsel %vm68, %v11068, 0.0
    %v11168 = vadd.f32 %v11166, %v11167
    %v11169 = vsel %vm68, %v11069, 0.0
    %v11170 = vadd.f32 %v11168, %v11169
    %v11171 = vsel %vm68, %v11070, 0.0
    %v11172 = vadd.f32 %v11170, %v11171
    %v11173 = vsel %vm68, %v11071, 0.0
    %v11174 = vadd.f32 %v11172, %v11173
    %v11175 = vsel %vm68, %v11072, 0.0
    %v11176 = vadd.f32 %v11174, %v11175
    %v11177 = vsel %vm68, %v11073, 0.0
    %v11178 = vadd.f32 %v11176, %v11177
    %v11179 = vsel %vm68, %v11074, 0.0
    %v11180 = vadd.f32 %v11178, %v11179
    %v11181 = vsel %vm68, %v11075, 0.0
    %v11182 = vadd.f32 %v11180, %v11181
    %v11183 = vsel %vm68, %v11076, 0.0
    %v11184 = vadd.f32 %v11182, %v11183
    %v11185 = vsel %vm68, %v11077, 0.0
    %v11186 = vadd.f32 %v11184, %v11185
    %v11187 = vsel %vm68, %v11078, 0.0
    %v11188 = vadd.f32 %v11186, %v11187
    %v11189 = vsel %vm68, %v11079, 0.0
    %v11190 = vadd.f32 %v11188, %v11189
    %v11191 = vsel %vm68, %v11080, 0.0
    %v11192 = vadd.f32 %v11190, %v11191
    %v11193 = vsel %vm68, %v11081, 0.0
    %v11194 = vadd.f32 %v11192, %v11193
    %v11195 = vsel %vm68, %v11082, 0.0
    %v11196 = vadd.f32 %v11194, %v11195
    %v11197 = vsel %vm68, %v11083, 0.0
    %v11198 = vadd.f32 %v11196, %v11197
    %v11199 = vsel %vm68, %v11084, 0.0
    %v11200 = vadd.f32 %v11198, %v11199
    %v11201 = vsel %vm68, %v11085, 0.0
    %v11202 = vadd.f32 %v11200, %v11201
    %v11203 = vsel %vm68, %v11086, 0.0
    %v11204 = vadd.f32 %v11202, %v11203
    %v11205 = vsel %vm68, %v11087, 0.0
    %v11206 = vadd.f32 %v11204, %v11205
    %v11207 = vsel %vm68, %v11088, 0.0
    %v11208 = vadd.f32 %v11206, %v11207
    %v11209 = vsel %vm68, %v11089, 0.0
    %v11210 = vadd.f32 %v11208, %v11209
    %v11211 = vsel %vm68, %v11090, 0.0
    %v11212 = vadd.f32 %v11210, %v11211
    %v11213 = vsel %vm68, %v11091, 0.0
    %v11214 = vadd.f32 %v11212, %v11213
    %v11215 = vsel %vm68, %v11092, 0.0
    %v11216 = vadd.f32 %v11214, %v11215
    %v11217 = vsel %vm68, %v11093, 0.0
    %v11218 = vadd.f32 %v11216, %v11217
    %v11219 = vsel %vm68, %v11094, 0.0
    %v11220 = vadd.f32 %v11218, %v11219
    %v11221 = vsel %vm68, %v11095, 0.0
    %v11222 = vadd.f32 %v11220, %v11221
    %v11223 = vrot.slane %v11222, 4
    %v11224 = vadd.f32 %v11222, %v11223
    %v11225 = vrot.slane %v11224, 2
    %v11226 = vadd.f32 %v11224, %v11225
    %v11227 = vrot.slane %v11226, 1
    %v11228 = vadd.f32 %v11226, %v11227
    %v11229 = vmul.f32 %v11228, %v5370
    %v11230 = vadd.f32 %v11229, 1e-05
    %v11231 = vrsqrt.pop %v11230
    %v11232 = vld [vmem:[%s5] sm:$0x1]
    %v11233 = vmul.f32 %v11231, %v11232
    %v11234 = vlaneseq
    %v11235 = vshrl.u32 %v11234, 7
    %v11236 = vsub.s32 0, %v11235
    %v11237 = vrot.slane %v11233, %v11236
    %v11238 = vmul.f32 %v10968, %v11237
    %v11239 = vmul.f32 %v10969, %v11237
    %v11240 = vmul.f32 %v10970, %v11237
    %v11241 = vmul.f32 %v10971, %v11237
    %v11242 = vmul.f32 %v10972, %v11237
    %v11243 = vmul.f32 %v10973, %v11237
    %v11244 = vmul.f32 %v10974, %v11237
    %v11245 = vmul.f32 %v10975, %v11237
    %v11246 = vmul.f32 %v10976, %v11237
    %v11247 = vmul.f32 %v10977, %v11237
    %v11248 = vmul.f32 %v10978, %v11237
    %v11249 = vmul.f32 %v10979, %v11237
    %v11250 = vmul.f32 %v10980, %v11237
    %v11251 = vmul.f32 %v10981, %v11237
    %v11252 = vmul.f32 %v10982, %v11237
    %v11253 = vmul.f32 %v10983, %v11237
    %v11254 = vmul.f32 %v10984, %v11237
    %v11255 = vmul.f32 %v10985, %v11237
    %v11256 = vmul.f32 %v10986, %v11237
    %v11257 = vmul.f32 %v10987, %v11237
    %v11258 = vmul.f32 %v10988, %v11237
    %v11259 = vmul.f32 %v10989, %v11237
    %v11260 = vmul.f32 %v10990, %v11237
    %v11261 = vmul.f32 %v10991, %v11237
    %v11262 = vmul.f32 %v10992, %v11237
    %v11263 = vmul.f32 %v10993, %v11237
    %v11264 = vmul.f32 %v10994, %v11237
    %v11265 = vmul.f32 %v10995, %v11237
    %v11266 = vmul.f32 %v10996, %v11237
    %v11267 = vmul.f32 %v10997, %v11237
    %v11268 = vmul.f32 %v10998, %v11237
    %v11269 = vmul.f32 %v10999, %v11237
    %v11270 = vmul.f32 %v11000, %v11237
    %v11271 = vmul.f32 %v11001, %v11237
    %v11272 = vmul.f32 %v11002, %v11237
    %v11273 = vmul.f32 %v11003, %v11237
    %v11274 = vmul.f32 %v11004, %v11237
    %v11275 = vmul.f32 %v11005, %v11237
    %v11276 = vmul.f32 %v11006, %v11237
    %v11277 = vmul.f32 %v11007, %v11237
    %v11278 = vmul.f32 %v11008, %v11237
    %v11279 = vmul.f32 %v11009, %v11237
    %v11280 = vmul.f32 %v11010, %v11237
    %v11281 = vmul.f32 %v11011, %v11237
    %v11282 = vmul.f32 %v11012, %v11237
    %v11283 = vmul.f32 %v11013, %v11237
    %v11284 = vmul.f32 %v11014, %v11237
    %v11285 = vmul.f32 %v11015, %v11237
    %v11286 = vmul.f32 %v11016, %v11237
    %v11287 = vmul.f32 %v11017, %v11237
    %v11288 = vmul.f32 %v11018, %v11237
    %v11289 = vmul.f32 %v11019, %v11237
    %v11290 = vmul.f32 %v11020, %v11237
    %v11291 = vmul.f32 %v11021, %v11237
    %v11292 = vmul.f32 %v11022, %v11237
    %v11293 = vmul.f32 %v11023, %v11237
    %v11294 = vmul.f32 %v11024, %v11237
    %v11295 = vmul.f32 %v11025, %v11237
    %v11296 = vmul.f32 %v11026, %v11237
    %v11297 = vmul.f32 %v11027, %v11237
    %v11298 = vmul.f32 %v11028, %v11237
    %v11299 = vmul.f32 %v11029, %v11237
    %v11300 = vmul.f32 %v11030, %v11237
    %v11301 = vmul.f32 %v11031, %v11237
    %v11302 = vld [vmem:[%s6] sm:$0x1]
    %v11304 = vlaneseq
    %v11305 = vshrl.u32 %v11304, 7
    %v11306 = vsub.s32 0, %v11305
    %v11307 = vrot.slane %v11302, %v11306
    %v11309 = vadd.f32 %v11238, %v11307
    %v11310 = vadd.f32 %v11239, %v11307
    %v11311 = vadd.f32 %v11240, %v11307
    %v11312 = vadd.f32 %v11241, %v11307
    %v11313 = vadd.f32 %v11242, %v11307
    %v11314 = vadd.f32 %v11243, %v11307
    %v11315 = vadd.f32 %v11244, %v11307
    %v11316 = vadd.f32 %v11245, %v11307
    %v11317 = vadd.f32 %v11246, %v11307
    %v11318 = vadd.f32 %v11247, %v11307
    %v11319 = vadd.f32 %v11248, %v11307
    %v11320 = vadd.f32 %v11249, %v11307
    %v11321 = vadd.f32 %v11250, %v11307
    %v11322 = vadd.f32 %v11251, %v11307
    %v11323 = vadd.f32 %v11252, %v11307
    %v11324 = vadd.f32 %v11253, %v11307
    %v11325 = vadd.f32 %v11254, %v11307
    %v11326 = vadd.f32 %v11255, %v11307
    %v11327 = vadd.f32 %v11256, %v11307
    %v11328 = vadd.f32 %v11257, %v11307
    %v11329 = vadd.f32 %v11258, %v11307
    %v11330 = vadd.f32 %v11259, %v11307
    %v11331 = vadd.f32 %v11260, %v11307
    %v11332 = vadd.f32 %v11261, %v11307
    %v11333 = vadd.f32 %v11262, %v11307
    %v11334 = vadd.f32 %v11263, %v11307
    %v11335 = vadd.f32 %v11264, %v11307
    %v11336 = vadd.f32 %v11265, %v11307
    %v11337 = vadd.f32 %v11266, %v11307
    %v11338 = vadd.f32 %v11267, %v11307
    %v11339 = vadd.f32 %v11268, %v11307
    %v11340 = vadd.f32 %v11269, %v11307
    %v11341 = vadd.f32 %v11270, %v11307
    %v11342 = vadd.f32 %v11271, %v11307
    %v11343 = vadd.f32 %v11272, %v11307
    %v11344 = vadd.f32 %v11273, %v11307
    %v11345 = vadd.f32 %v11274, %v11307
    %v11346 = vadd.f32 %v11275, %v11307
    %v11347 = vadd.f32 %v11276, %v11307
    %v11348 = vadd.f32 %v11277, %v11307
    %v11349 = vadd.f32 %v11278, %v11307
    %v11350 = vadd.f32 %v11279, %v11307
    %v11351 = vadd.f32 %v11280, %v11307
    %v11352 = vadd.f32 %v11281, %v11307
    %v11353 = vadd.f32 %v11282, %v11307
    %v11354 = vadd.f32 %v11283, %v11307
    %v11355 = vadd.f32 %v11284, %v11307
    %v11356 = vadd.f32 %v11285, %v11307
    %v11357 = vadd.f32 %v11286, %v11307
    %v11358 = vadd.f32 %v11287, %v11307
    %v11359 = vadd.f32 %v11288, %v11307
    %v11360 = vadd.f32 %v11289, %v11307
    %v11361 = vadd.f32 %v11290, %v11307
    %v11362 = vadd.f32 %v11291, %v11307
    %v11363 = vadd.f32 %v11292, %v11307
    %v11364 = vadd.f32 %v11293, %v11307
    %v11365 = vadd.f32 %v11294, %v11307
    %v11366 = vadd.f32 %v11295, %v11307
    %v11367 = vadd.f32 %v11296, %v11307
    %v11368 = vadd.f32 %v11297, %v11307
    %v11369 = vadd.f32 %v11298, %v11307
    %v11370 = vadd.f32 %v11299, %v11307
    %v11371 = vadd.f32 %v11300, %v11307
    %v11372 = vadd.f32 %v11301, %v11307
    %v11373 = vadd.f32 %v11309, %v178
    %v11374 = vadd.f32 %v11310, %v179
    %v11375 = vadd.f32 %v11311, %v180
    %v11376 = vadd.f32 %v11312, %v181
    %v11377 = vadd.f32 %v11313, %v182
    %v11378 = vadd.f32 %v11314, %v183
    %v11379 = vadd.f32 %v11315, %v184
    %v11380 = vadd.f32 %v11316, %v185
    %v11381 = vadd.f32 %v11317, %v186
    %v11382 = vadd.f32 %v11318, %v187
    %v11383 = vadd.f32 %v11319, %v188
    %v11384 = vadd.f32 %v11320, %v189
    %v11385 = vadd.f32 %v11321, %v190
    %v11386 = vadd.f32 %v11322, %v191
    %v11387 = vadd.f32 %v11323, %v192
    %v11388 = vadd.f32 %v11324, %v193
    %v11389 = vadd.f32 %v11325, %v194
    %v11390 = vadd.f32 %v11326, %v195
    %v11391 = vadd.f32 %v11327, %v196
    %v11392 = vadd.f32 %v11328, %v197
    %v11393 = vadd.f32 %v11329, %v198
    %v11394 = vadd.f32 %v11330, %v199
    %v11395 = vadd.f32 %v11331, %v200
    %v11396 = vadd.f32 %v11332, %v201
    %v11397 = vadd.f32 %v11333, %v202
    %v11398 = vadd.f32 %v11334, %v203
    %v11399 = vadd.f32 %v11335, %v204
    %v11400 = vadd.f32 %v11336, %v205
    %v11401 = vadd.f32 %v11337, %v206
    %v11402 = vadd.f32 %v11338, %v207
    %v11403 = vadd.f32 %v11339, %v208
    %v11404 = vadd.f32 %v11340, %v209
    %v11405 = vadd.f32 %v11341, %v210
    %v11406 = vadd.f32 %v11342, %v211
    %v11407 = vadd.f32 %v11343, %v212
    %v11408 = vadd.f32 %v11344, %v213
    %v11409 = vadd.f32 %v11345, %v214
    %v11410 = vadd.f32 %v11346, %v215
    %v11411 = vadd.f32 %v11347, %v216
    %v11412 = vadd.f32 %v11348, %v217
    %v11413 = vadd.f32 %v11349, %v218
    %v11414 = vadd.f32 %v11350, %v219
    %v11415 = vadd.f32 %v11351, %v220
    %v11416 = vadd.f32 %v11352, %v221
    %v11417 = vadd.f32 %v11353, %v222
    %v11418 = vadd.f32 %v11354, %v223
    %v11419 = vadd.f32 %v11355, %v224
    %v11420 = vadd.f32 %v11356, %v225
    %v11421 = vadd.f32 %v11357, %v226
    %v11422 = vadd.f32 %v11358, %v227
    %v11423 = vadd.f32 %v11359, %v228
    %v11424 = vadd.f32 %v11360, %v229
    %v11425 = vadd.f32 %v11361, %v230
    %v11426 = vadd.f32 %v11362, %v231
    %v11427 = vadd.f32 %v11363, %v232
    %v11428 = vadd.f32 %v11364, %v233
    %v11429 = vadd.f32 %v11365, %v234
    %v11430 = vadd.f32 %v11366, %v235
    %v11431 = vadd.f32 %v11367, %v236
    %v11432 = vadd.f32 %v11368, %v237
    %v11433 = vadd.f32 %v11369, %v238
    %v11434 = vadd.f32 %v11370, %v239
    %v11435 = vadd.f32 %v11371, %v240
    %v11436 = vadd.f32 %v11372, %v241
    %v11437 = vmax.f32 %v11373, 0.0
    %v11438 = vmax.f32 %v11374, 0.0
    %v11439 = vmax.f32 %v11375, 0.0
    %v11440 = vmax.f32 %v11376, 0.0
    %v11441 = vmax.f32 %v11377, 0.0
    %v11442 = vmax.f32 %v11378, 0.0
    %v11443 = vmax.f32 %v11379, 0.0
    %v11444 = vmax.f32 %v11380, 0.0
    %v11445 = vmax.f32 %v11381, 0.0
    %v11446 = vmax.f32 %v11382, 0.0
    %v11447 = vmax.f32 %v11383, 0.0
    %v11448 = vmax.f32 %v11384, 0.0
    %v11449 = vmax.f32 %v11385, 0.0
    %v11450 = vmax.f32 %v11386, 0.0
    %v11451 = vmax.f32 %v11387, 0.0
    %v11452 = vmax.f32 %v11388, 0.0
    %v11453 = vmax.f32 %v11389, 0.0
    %v11454 = vmax.f32 %v11390, 0.0
    %v11455 = vmax.f32 %v11391, 0.0
    %v11456 = vmax.f32 %v11392, 0.0
    %v11457 = vmax.f32 %v11393, 0.0
    %v11458 = vmax.f32 %v11394, 0.0
    %v11459 = vmax.f32 %v11395, 0.0
    %v11460 = vmax.f32 %v11396, 0.0
    %v11461 = vmax.f32 %v11397, 0.0
    %v11462 = vmax.f32 %v11398, 0.0
    %v11463 = vmax.f32 %v11399, 0.0
    %v11464 = vmax.f32 %v11400, 0.0
    %v11465 = vmax.f32 %v11401, 0.0
    %v11466 = vmax.f32 %v11402, 0.0
    %v11467 = vmax.f32 %v11403, 0.0
    %v11468 = vmax.f32 %v11404, 0.0
    %v11469 = vmax.f32 %v11405, 0.0
    %v11470 = vmax.f32 %v11406, 0.0
    %v11471 = vmax.f32 %v11407, 0.0
    %v11472 = vmax.f32 %v11408, 0.0
    %v11473 = vmax.f32 %v11409, 0.0
    %v11474 = vmax.f32 %v11410, 0.0
    %v11475 = vmax.f32 %v11411, 0.0
    %v11476 = vmax.f32 %v11412, 0.0
    %v11477 = vmax.f32 %v11413, 0.0
    %v11478 = vmax.f32 %v11414, 0.0
    %v11479 = vmax.f32 %v11415, 0.0
    %v11480 = vmax.f32 %v11416, 0.0
    %v11481 = vmax.f32 %v11417, 0.0
    %v11482 = vmax.f32 %v11418, 0.0
    %v11483 = vmax.f32 %v11419, 0.0
    %v11484 = vmax.f32 %v11420, 0.0
    %v11485 = vmax.f32 %v11421, 0.0
    %v11486 = vmax.f32 %v11422, 0.0
    %v11487 = vmax.f32 %v11423, 0.0
    %v11488 = vmax.f32 %v11424, 0.0
    %v11489 = vmax.f32 %v11425, 0.0
    %v11490 = vmax.f32 %v11426, 0.0
    %v11491 = vmax.f32 %v11427, 0.0
    %v11492 = vmax.f32 %v11428, 0.0
    %v11493 = vmax.f32 %v11429, 0.0
    %v11494 = vmax.f32 %v11430, 0.0
    %v11495 = vmax.f32 %v11431, 0.0
    %v11496 = vmax.f32 %v11432, 0.0
    %v11497 = vmax.f32 %v11433, 0.0
    %v11498 = vmax.f32 %v11434, 0.0
    %v11499 = vmax.f32 %v11435, 0.0
    %v11500 = vmax.f32 %v11436, 0.0
    %11501 = vst.msk [vmem:[%s7] sm:$0xff] %vm68, %v11437
    %11502 = vst.msk [vmem:[%s7 + $0x8] sm:$0xff] %vm68, %v11438
    %11503 = vst.msk [vmem:[%s7 + $0x10] sm:$0xff] %vm68, %v11439
    %11504 = vst.msk [vmem:[%s7 + $0x18] sm:$0xff] %vm68, %v11440
    %11505 = vst.msk [vmem:[%s7 + $0x20] sm:$0xff] %vm68, %v11441
    %11506 = vst.msk [vmem:[%s7 + $0x28] sm:$0xff] %vm68, %v11442
    %11507 = vst.msk [vmem:[%s7 + $0x30] sm:$0xff] %vm68, %v11443
    %11508 = vst.msk [vmem:[%s7 + $0x38] sm:$0xff] %vm68, %v11444
    %11509 = vst.msk [vmem:[%s7 + $0x40] sm:$0xff] %vm68, %v11445
    %11510 = vst.msk [vmem:[%s7 + $0x48] sm:$0xff] %vm68, %v11446
    %11511 = vst.msk [vmem:[%s7 + $0x50] sm:$0xff] %vm68, %v11447
    %11512 = vst.msk [vmem:[%s7 + $0x58] sm:$0xff] %vm68, %v11448
    %11513 = vst.msk [vmem:[%s7 + $0x60] sm:$0xff] %vm68, %v11449
    %11514 = vst.msk [vmem:[%s7 + $0x68] sm:$0xff] %vm68, %v11450
    %11515 = vst.msk [vmem:[%s7 + $0x70] sm:$0xff] %vm68, %v11451
    %11516 = vst.msk [vmem:[%s7 + $0x78] sm:$0xff] %vm68, %v11452
    %11517 = vst.msk [vmem:[%s7 + $0x80] sm:$0xff] %vm68, %v11453
    %11518 = vst.msk [vmem:[%s7 + $0x88] sm:$0xff] %vm68, %v11454
    %11519 = vst.msk [vmem:[%s7 + $0x90] sm:$0xff] %vm68, %v11455
    %11520 = vst.msk [vmem:[%s7 + $0x98] sm:$0xff] %vm68, %v11456
    %11521 = vst.msk [vmem:[%s7 + $0xa0] sm:$0xff] %vm68, %v11457
    %11522 = vst.msk [vmem:[%s7 + $0xa8] sm:$0xff] %vm68, %v11458
    %11523 = vst.msk [vmem:[%s7 + $0xb0] sm:$0xff] %vm68, %v11459
    %11524 = vst.msk [vmem:[%s7 + $0xb8] sm:$0xff] %vm68, %v11460
    %11525 = vst.msk [vmem:[%s7 + $0xc0] sm:$0xff] %vm68, %v11461
    %11526 = vst.msk [vmem:[%s7 + $0xc8] sm:$0xff] %vm68, %v11462
    %11527 = vst.msk [vmem:[%s7 + $0xd0] sm:$0xff] %vm68, %v11463
    %11528 = vst.msk [vmem:[%s7 + $0xd8] sm:$0xff] %vm68, %v11464
    %11529 = vst.msk [vmem:[%s7 + $0xe0] sm:$0xff] %vm68, %v11465
    %11530 = vst.msk [vmem:[%s7 + $0xe8] sm:$0xff] %vm68, %v11466
    %11531 = vst.msk [vmem:[%s7 + $0xf0] sm:$0xff] %vm68, %v11467
    %11532 = vst.msk [vmem:[%s7 + $0xf8] sm:$0xff] %vm68, %v11468
    %11533 = vst.msk [vmem:[%s7 + $0x100] sm:$0xff] %vm68, %v11469
    %11534 = vst.msk [vmem:[%s7 + $0x108] sm:$0xff] %vm68, %v11470
    %11535 = vst.msk [vmem:[%s7 + $0x110] sm:$0xff] %vm68, %v11471
    %11536 = vst.msk [vmem:[%s7 + $0x118] sm:$0xff] %vm68, %v11472
    %11537 = vst.msk [vmem:[%s7 + $0x120] sm:$0xff] %vm68, %v11473
    %11538 = vst.msk [vmem:[%s7 + $0x128] sm:$0xff] %vm68, %v11474
    %11539 = vst.msk [vmem:[%s7 + $0x130] sm:$0xff] %vm68, %v11475
    %11540 = vst.msk [vmem:[%s7 + $0x138] sm:$0xff] %vm68, %v11476
    %11541 = vst.msk [vmem:[%s7 + $0x140] sm:$0xff] %vm68, %v11477
    %11542 = vst.msk [vmem:[%s7 + $0x148] sm:$0xff] %vm68, %v11478
    %11543 = vst.msk [vmem:[%s7 + $0x150] sm:$0xff] %vm68, %v11479
    %11544 = vst.msk [vmem:[%s7 + $0x158] sm:$0xff] %vm68, %v11480
    %11545 = vst.msk [vmem:[%s7 + $0x160] sm:$0xff] %vm68, %v11481
    %11546 = vst.msk [vmem:[%s7 + $0x168] sm:$0xff] %vm68, %v11482
    %11547 = vst.msk [vmem:[%s7 + $0x170] sm:$0xff] %vm68, %v11483
    %11548 = vst.msk [vmem:[%s7 + $0x178] sm:$0xff] %vm68, %v11484
    %11549 = vst.msk [vmem:[%s7 + $0x180] sm:$0xff] %vm68, %v11485
    %11550 = vst.msk [vmem:[%s7 + $0x188] sm:$0xff] %vm68, %v11486
    %11551 = vst.msk [vmem:[%s7 + $0x190] sm:$0xff] %vm68, %v11487
    %11552 = vst.msk [vmem:[%s7 + $0x198] sm:$0xff] %vm68, %v11488
    %11553 = vst.msk [vmem:[%s7 + $0x1a0] sm:$0xff] %vm68, %v11489
    %11554 = vst.msk [vmem:[%s7 + $0x1a8] sm:$0xff] %vm68, %v11490
    %11555 = vst.msk [vmem:[%s7 + $0x1b0] sm:$0xff] %vm68, %v11491
    %11556 = vst.msk [vmem:[%s7 + $0x1b8] sm:$0xff] %vm68, %v11492
    %11557 = vst.msk [vmem:[%s7 + $0x1c0] sm:$0xff] %vm68, %v11493
    %11558 = vst.msk [vmem:[%s7 + $0x1c8] sm:$0xff] %vm68, %v11494
    %11559 = vst.msk [vmem:[%s7 + $0x1d0] sm:$0xff] %vm68, %v11495
    %11560 = vst.msk [vmem:[%s7 + $0x1d8] sm:$0xff] %vm68, %v11496
    %11561 = vst.msk [vmem:[%s7 + $0x1e0] sm:$0xff] %vm68, %v11497
    %11562 = vst.msk [vmem:[%s7 + $0x1e8] sm:$0xff] %vm68, %v11498
    %11563 = vst.msk [vmem:[%s7 + $0x1f0] sm:$0xff] %vm68, %v11499
    %11564 = vst.msk [vmem:[%s7 + $0x1f8] sm:$0xff] %vm68, %v11500
    // Predicated region
    $region42: #{tpu_custom_call.1} parent=1 // pred_check
      _
    $region43: #{tpu_custom_call.1} parent=1 // pred_check_branch
      %11566 = sbr.rel (0) target = $region45
    $region44: #{tpu_custom_call.1} parent=1 // pred_region
      _
    $region45: #{tpu_custom_call.1} parent=1 // pred_fallthru
      _
    // Predicated region
    $region46: #{tpu_custom_call.1} parent=1 // pred_check
      _
    $region47: #{tpu_custom_call.1} parent=1 // pred_check_branch
      %11568 = sbr.rel (0) target = $region49
    $region48: #{tpu_custom_call.1} parent=1 // pred_region
      _
    $region49: #{tpu_custom_call.1} parent=1 // pred_fallthru
      _
    %11569 = vsyncpa [#allocation4], 1
    %11570 = vsyncpa [#allocation6], 1

</llo_original>
